<compile_context>
chip_gen: v6e
topology: v6e:2x2x1
jax: 0.10.0
libtpu: 0.0.40
codegen_flags: <defaults>
</compile_context>

<pallas_src>
import functools

import jax
import jax.numpy as jnp
from jax import lax
from jax.experimental import pallas as pl
from jax.experimental.pallas import tpu as pltpu

_NUM_PARTIALS = 2  # pass-1 gram partials (== TensorCores per chip on v7x)


# ---------------------------------------------------------------------------
# Kernels
# ---------------------------------------------------------------------------
def _gram_kernel(x_ref, g_ref, *, total_bc, need_mask):
    """Pass 1: partial gram  g[p] += sum_t x[t] @ x[t]^T  over this core's blocks.

      x_ref : (TBC, D, M)   M = H*W; x_ref[t] == x_prine_block^T (lane-dense)
      g_ref : (1, D, D) f32 partial accumulator, resident across the
                            "arbitrary" grid axis (init at j == 0).
    """
    j = pl.program_id(1)

    @pl.when(j == 0)
    def _init():
        g_ref[...] = jnp.zeros_like(g_ref)

    x = x_ref[...]                                               # (TBC, D, M)
    if need_mask:
        # cdiv grid: zero out rows past the end of the real B*C range (also
        # covers fully out-of-range blocks whose index_map was clamped).
        tbc = x.shape[0]
        blk = pl.program_id(0) * pl.num_programs(1) + j
        t_ids = blk * tbc + lax.broadcasted_iota(jnp.int32, (tbc, 1, 1), 0)
        x = jnp.where(t_ids < total_bc, x, 0.0)

    # One batched MXU contraction over the whole block (no per-slab scalar
    # loop, no per-iteration VMEM read-modify-write of the accumulator).
    # NOTE: the gram is accumulated unscaled in f32 (scales folded into w_eff);
    # fine for the magnitudes here, rescale per-block if N grows enormously.
    g = lax.dot_general(x, x, (((2,), (2,)), ((0,), (0,))),
                        preferred_element_type=jnp.float32)      # (TBC, D, D)
    g_ref[...] += jnp.sum(g, axis=0, keepdims=True)              # (1, D, D)


def _attention_kernel(covt_ref, x_ref, o_ref):
    """Pass 2: o[t] = sigmoid(cov2^T @ x[t]) for a whole (TBC, D, M) block."""
    x = x_ref[...]                                               # (TBC, D, M)
    covt = jnp.broadcast_to(covt_ref[...], (x.shape[0],) + covt_ref.shape)
    att = lax.dot_general(covt, x, (((2,), (1,)), ((0,), (0,))),
                          preferred_element_type=jnp.float32)    # (TBC, D, M)
    o_ref[...] = pl.reciprocal(1.0 + jnp.exp(-att)).astype(o_ref.dtype)


def _fused_kernel(x_ref, wt_ref, bt_ref, o_ref):
    """Fused path (x resident in VMEM): gram + folded Linear + sigmoid(x@cov2)."""
    x = x_ref[...]                                               # (BC, D, M)
    g = lax.dot_general(x, x, (((2,), (2,)), ((0,), (0,))),
                        preferred_element_type=jnp.float32)      # (BC, D, D)
    gram = jnp.sum(g, axis=0)                                    # (D, D) symmetric
    covt = (jnp.dot(wt_ref[...], gram, preferred_element_type=jnp.float32)
            + bt_ref[...])                                       # (D, D) == cov2^T
    covt_b = jnp.broadcast_to(covt, (x.shape[0],) + covt.shape)
    att = lax.dot_general(covt_b, x, (((2,), (1,)), ((0,), (0,))),
                          preferred_element_type=jnp.float32)    # (BC, D, M)
    o_ref[...] = pl.reciprocal(1.0 + jnp.exp(-att)).astype(o_ref.dtype)


# ---------------------------------------------------------------------------
# Wrapper helpers
# ---------------------------------------------------------------------------
def _vmem_capacity_bytes():
    try:
        cap = int(pltpu.get_tpu_info().vmem_capacity_bytes)
        if cap > 0:
            return cap
    except Exception:
        pass
    return 64 * 1024 * 1024            # conservative default (v7x per-core VMEM)


def _plan_blocks(bc, d, m, target_bytes):
    """bc-tile size: as big as target_bytes allows, but small enough that the
    grid has >= max(4, 2*_NUM_PARTIALS) steps (pipelining + v7x megacore)."""
    per_bc = d * m * 4                               # f32 bytes of one (D, M) slab
    tbc_cap = max(1, target_bytes // per_bc)
    min_blocks = max(4, 2 * _NUM_PARTIALS)
    tbc = max(1, min(tbc_cap, pl.cdiv(bc, min_blocks)))
    nb = pl.cdiv(bc, tbc)                            # no divisor requirement
    nb_p1 = _NUM_PARTIALS * pl.cdiv(nb, _NUM_PARTIALS)
    return tbc, nb, nb_p1


def _restore_module_layout(o3, b0, b1, d, h, w):
    # Pure permutation matching the module's view/swapaxes chain (XLA fuses it
    # into one copy).  It cannot be removed without changing the module's
    # output contract.
    # TODO(synk): if the downstream consumer can take the lane-dense
    # (B, C, D, H, W) layout directly, drop this copy (it re-touches the whole
    # output and ends with a lane-narrow W-wide last dim).
    att = jnp.transpose(o3.reshape(b0, b1, d, h, w), (0, 1, 3, 4, 2))  # (B,C,H,W,D)
    att = att.reshape(b0, b1, w, 1, h * d)
    att = jnp.swapaxes(att, 4, 3)
    att = jnp.swapaxes(att, 3, 2)
    att = jnp.swapaxes(att, 4, 3)
    return att                                        # (B, C, H*D, 1, W)


# ---------------------------------------------------------------------------
# Public wrapper
# ---------------------------------------------------------------------------
def self_attention_pallas(x_hat, weight, bias, n_heads, *, force_two_pass=False):
    """SelfAttention forward.  x_hat: (B, C, D, H, W) with D == in_channels;
    weight: (D*n_heads, D) (PyTorch (out, in) convention); bias: (D*n_heads,)."""
    b0, b1, d, h, w = x_hat.shape
    bc, m = b0 * b1, h * w

    # Free view: x3[t] == x_prine_block^T -- no transposed copy of x in HBM.
    x3 = x_hat.reshape(bc, d, m)

    # Fold Linear weight, head-averaging and both 1/D scales (exact algebra).
    # Using gram symmetry we build cov2^T directly so no kernel transposes:
    #   cov2^T = w_eff^T @ gram + b_eff^T
    dh = d * n_heads
    group = jnp.arange(dh) // n_heads
    mavg = (group[:, None] == jnp.arange(d)[None, :]).astype(jnp.float32) / n_heads
    w_eff_t = (mavg.T @ weight) / float(d * d)        # (D, D)  == w_eff^T
    b_col = (mavg.T @ bias)[:, None] / float(d)       # (D, 1)  == b_eff^T

    vmem_cap = _vmem_capacity_bytes()
    vmem_limit = min(48 * 1024 * 1024, vmem_cap // 2)   # 32 MiB on v7x, 48 on v5e/v6e
    x_bytes = bc * d * m * 4

    # ---- Fused single-kernel path: x stays resident across both phases -------
    if (not force_two_pass) and x_bytes <= vmem_cap // 16:
        o3 = pl.pallas_call(
            _fused_kernel,
            out_shape=jax.ShapeDtypeStruct((bc, d, m), jnp.float32),
            compiler_params=pltpu.CompilerParams(vmem_limit_bytes=vmem_limit),
            cost_estimate=pl.CostEstimate(
                flops=4 * bc * m * d * d,
                transcendentals=bc * d * m,
                bytes_accessed=4 * (2 * bc * d * m + 2 * d * d + d)),
        )(x3, w_eff_t, b_col)
        return _restore_module_layout(o3, b0, b1, d, h, w)

    # ---- Streaming two-pass path ---------------------------------------------
    target_bytes = min(6 * 1024 * 1024, vmem_cap // 16)   # ~4 MiB v7x, 6 MiB v5e/v6e
    tbc, nb, nb_p1 = _plan_blocks(bc, d, m, target_bytes)
    steps = nb_p1 // _NUM_PARTIALS
    need_mask = (bc % tbc != 0) or (nb_p1 != nb)

    if nb_p1 == nb:
        x_map = lambda p, j: (p * steps + j, 0, 0)
    else:  # clamp out-of-range block indices; the kernel masks them to zero
        x_map = lambda p, j: (jnp.minimum(p * steps + j, nb - 1), 0, 0)

    # Pass 1: per-core partial grams.  The leading "parallel" axis is sharded
    # across both TensorCores on v7x; on v5e/v6e it is a trivial outer loop.
    partials = pl.pallas_call(
        functools.partial(_gram_kernel, total_bc=bc, need_mask=need_mask),
        out_shape=jax.ShapeDtypeStruct((_NUM_PARTIALS, d, d), jnp.float32),
        grid_spec=pltpu.PrefetchScalarGridSpec(
            num_scalar_prefetch=0,
            grid=(_NUM_PARTIALS, steps),
            in_specs=[pl.BlockSpec((tbc, d, m), x_map)],
            out_specs=pl.BlockSpec((1, d, d), lambda p, j: (p, 0, 0)),
        ),
        compiler_params=pltpu.CompilerParams(
            dimension_semantics=("parallel", "arbitrary"),
            vmem_limit_bytes=vmem_limit),
        cost_estimate=pl.CostEstimate(
            flops=2 * bc * m * d * d, transcendentals=0,
            bytes_accessed=4 * (bc * d * m + _NUM_PARTIALS * d * d)),
    )(x3)

    # Tiny (D, D) epilogue in plain XLA: sum partials + folded Linear.
    gram = jnp.sum(partials, axis=0)
    cov2t = w_eff_t @ gram + b_col                     # (D, D) == cov2^T

    # Pass 2: stream x again, emit sigmoid(cov2^T @ x) lane-dense along H*W.
    o3 = pl.pallas_call(
        _attention_kernel,
        out_shape=jax.ShapeDtypeStruct((bc, d, m), jnp.float32),
        grid_spec=pltpu.PrefetchScalarGridSpec(
            num_scalar_prefetch=0,
            grid=(nb,),
            in_specs=[pl.BlockSpec((d, d), lambda i: (0, 0)),
                      pl.BlockSpec((tbc, d, m), lambda i: (i, 0, 0))],
            out_specs=pl.BlockSpec((tbc, d, m), lambda i: (i, 0, 0)),
        ),
        compiler_params=pltpu.CompilerParams(
            dimension_semantics=("parallel",),
            vmem_limit_bytes=vmem_limit),
        cost_estimate=pl.CostEstimate(
            flops=2 * bc * m * d * d, transcendentals=bc * d * m,
            bytes_accessed=4 * (2 * bc * d * m + d * d)),
    )(cov2t, x3)

    return _restore_module_layout(o3, b0, b1, d, h, w)


# ---------------------------------------------------------------------------
# Pure-JAX reference (faithful transcription of the PyTorch forward)
# ---------------------------------------------------------------------------
def self_attention_ref(x_hat, weight, bias, n_heads):
    b0, b1, b2, b3, b4 = x_hat.shape
    xp = jnp.transpose(x_hat, (0, 1, 3, 4, 2)).reshape(-1, b2)
    cov = (xp.T @ xp) / b2
    cov = cov @ weight.T + bias
    att = (xp @ cov) / b2
    att = att.reshape(att.shape[0], -1, n_heads).mean(axis=-1)
    att = jax.nn.sigmoid(att)
    att = att.reshape(b0, b1, b4, 1, -1)
    att = jnp.swapaxes(att, 4, 3)
    att = jnp.swapaxes(att, 3, 2)
    att = jnp.swapaxes(att, 4, 3)
    return att


if __name__ == "__main__":
    jax.config.update("jax_default_matmul_precision", "highest")

    def make_inputs(key, B, C, D, H, W, n_heads):
        kx, kw, kb = jax.random.split(key, 3)
        x_hat = jax.random.normal(kx, (B, C, D, H, W), jnp.float32)
        bound = 1.0 / (D ** 0.5)   # deterministic nn.Linear-style init
        weight = jax.random.uniform(kw, (D * n_heads, D), jnp.float32, -bound, bound)
        bias = jax.random.uniform(kb, (D * n_heads,), jnp.float32, -bound, bound)
        return x_hat, weight, bias

    key = jax.random.PRNGKey(0)
    cases = [
        # ((B, C, D, H, W), n_heads, force_two_pass)
        ((2, 4, 8, 16, 16), 2, False),   # small x -> fused single-kernel path
        ((2, 4, 8, 16, 16), 2, True),    # same data through the streaming path
        ((1, 5, 16, 8, 16), 3, True),    # uneven B*C -> cdiv grid + tail masking
    ]
    for idx, (shape, n_heads, force_two) in enumerate(cases):
        key, sub = jax.random.split(key)
        x_hat, weight, bias = make_inputs(sub, *shape, n_heads)
        fwd = jax.jit(functools.partial(self_attention_pallas,
                                        n_heads=n_heads,
                                        force_two_pass=force_two))
        out = jax.block_until_ready(fwd(x_hat, weight, bias))
        ref = self_attention_ref(x_hat, weight, bias, n_heads)
        B, C, D, H, W = shape
        assert out.shape == ref.shape == (B, C, H * D, 1, W), (out.shape, ref.shape)
        err = float(jnp.max(jnp.abs(out - ref)))
        assert err < 1e-3, (idx, err)

    print("KERNEL_OK")
</pallas_src>

<mosaic_0001>
module attributes {stable_mosaic.version = 11 : i64} {
  func.func @_fused_kernel(%arg0: memref<8x8x256xf32, #tpu.memory_space<vmem>>, %arg1: memref<8x8xf32, #tpu.memory_space<vmem>>, %arg2: memref<8x1xf32, #tpu.memory_space<vmem>>, %arg3: memref<8x8x256xf32, #tpu.memory_space<vmem>>) attributes {dimension_semantics = [], scalar_prefetch = 0 : i64, scratch_operands = 0 : i64, tpu.core_type = #tpu.core_type<tc>} {
    %c0 = arith.constant 0 : index
    %c0_0 = arith.constant 0 : index
    %c0_1 = arith.constant 0 : index
    %0 = vector.load %arg0[%c0, %c0_0, %c0_1] : memref<8x8x256xf32, #tpu.memory_space<vmem>>, vector<8x8x256xf32>
    %cst = arith.constant dense<0.000000e+00> : vector<8x8x8xf32>
    %1 = tpu.matmul %0, %0, %cst {dimension_numbers = #tpu.dot_dimension_numbers<[2], [2], [1], [1], [0, 0, 0, 1, 1, 1], [0], [0]>, precision = #tpu.contract_precision<fp32>} : vector<8x8x256xf32>, vector<8x8x256xf32>, vector<8x8x8xf32> -> vector<8x8x8xf32>
    %cst_2 = arith.constant dense<0.000000e+00> : vector<8x8xf32>
    %2 = vector.multi_reduction <add>, %1, %cst_2 [0] : vector<8x8x8xf32> to vector<8x8xf32>
    %c0_3 = arith.constant 0 : index
    %c0_4 = arith.constant 0 : index
    %3 = vector.load %arg1[%c0_3, %c0_4] : memref<8x8xf32, #tpu.memory_space<vmem>>, vector<8x8xf32>
    %cst_5 = arith.constant dense<0.000000e+00> : vector<8x8xf32>
    %4 = tpu.matmul %3, %2, %cst_5 {dimension_numbers = #tpu.dot_dimension_numbers<[1], [0], [0], [1], [0, 0, 1, 1], [], []>, precision = #tpu.contract_precision<fp32>} : vector<8x8xf32>, vector<8x8xf32>, vector<8x8xf32> -> vector<8x8xf32>
    %c0_6 = arith.constant 0 : index
    %c0_7 = arith.constant 0 : index
    %5 = vector.load %arg2[%c0_6, %c0_7] : memref<8x1xf32, #tpu.memory_space<vmem>>, vector<8x1xf32>
    %6 = vector.broadcast %5 : vector<8x1xf32> to vector<8x8xf32>
    %7 = arith.addf %4, %6 : vector<8x8xf32>
    %8 = vector.shape_cast %7 : vector<8x8xf32> to vector<1x8x8xf32>
    %9 = vector.broadcast %8 : vector<1x8x8xf32> to vector<8x8x8xf32>
    %cst_8 = arith.constant dense<0.000000e+00> : vector<8x8x256xf32>
    %10 = tpu.matmul %9, %0, %cst_8 {dimension_numbers = #tpu.dot_dimension_numbers<[2], [1], [1], [2], [0, 0, 0, 1, 1, 2], [0], [0]>, precision = #tpu.contract_precision<fp32>} : vector<8x8x8xf32>, vector<8x8x256xf32>, vector<8x8x256xf32> -> vector<8x8x256xf32>
    %cst_9 = arith.constant 0.000000e+00 : f32
    %11 = vector.broadcast %cst_9 : f32 to vector<8x8x256xf32>
    %12 = arith.subf %11, %10 : vector<8x8x256xf32>
    %13 = math.exp %12 : vector<8x8x256xf32>
    %cst_10 = arith.constant 1.000000e+00 : f32
    %14 = vector.broadcast %cst_10 : f32 to vector<8x8x256xf32>
    %15 = arith.addf %14, %13 : vector<8x8x256xf32>
    %16 = tpu.reciprocal %15 : vector<8x8x256xf32> -> vector<8x8x256xf32>
    %c0_11 = arith.constant 0 : index
    %c0_12 = arith.constant 0 : index
    %c0_13 = arith.constant 0 : index
    %17 = vector.load %arg3[%c0_11, %c0_12, %c0_13] : memref<8x8x256xf32, #tpu.memory_space<vmem>>, vector<8x8x256xf32>
    tpu.vector_store %arg3[%c0_11, %c0_12, %c0_13], %16 {strides = array<i32>} : memref<8x8x256xf32, #tpu.memory_space<vmem>>, vector<8x8x256xf32>,
    return
  }
}

</mosaic_0001>

<llo_original>
// kernel: self_attention_pallas.1
$region0: #{self_attention_pallas.1}
  #allocation0 [shape = 'u32[]', space=smem, size = 0x4, offset = 0x4, fixed_abs, tag = 'smem constant byte address 0x4 - core index']
  #allocation1 [shape = 'u32[144,128]{1,0:T(1,128)}', space=vmem, size = 0x12000, scoped, tag = 'internal scratch']
  %s0 = inlined_call_operand.vmem [shape: f32[8,8,256], index: 0, kind: input, shape index: {}]
  %s1 = inlined_call_operand.vmem [shape: f32[8,8], index: 1, kind: input, shape index: {}]
  %s2 = inlined_call_operand.vmem [shape: f32[8,1], index: 2, kind: input, shape index: {}]
  %s3 = inlined_call_operand.vmem [shape: f32[8,8,256], index: 3, kind: output, shape index: {}]
  %s4 = sld [smem:[#allocation0]]
  $region22: #{self_attention_pallas.1} parent=0
    _
  %s6 = ssub.s32 1, %s4
  %s7 = scalar_select 0, %s6, %s4
  // Predicated region
  $region2: #{self_attention_pallas.1} parent=0 // pred_check
    _
  $region3: #{self_attention_pallas.1} parent=0 // pred_check_branch
    %9 = sbr.rel (0) target = $region5
  $region4: #{self_attention_pallas.1} parent=0 // pred_region
    _
  $region5: #{self_attention_pallas.1} parent=0 // pred_fallthru
    _
  // Predicated region
  $region6: #{self_attention_pallas.1} parent=0 // pred_check
    _
  $region7: #{self_attention_pallas.1} parent=0 // pred_check_branch
    %11 = sbr.rel (0) target = $region9
  $region8: #{self_attention_pallas.1} parent=0 // pred_region
    _
  $region9: #{self_attention_pallas.1} parent=0 // pred_fallthru
    _
  // Predicated region
  $region10: #{self_attention_pallas.1} parent=0 // pred_check
    _
  $region11: #{self_attention_pallas.1} parent=0 // pred_check_branch
    %13 = sbr.rel (0) target = $region13
  $region12: #{self_attention_pallas.1} parent=0 // pred_region
    _
  $region13: #{self_attention_pallas.1} parent=0 // pred_fallthru
    _
  %v14 = vld [vmem:[%s0] sm:$0xff]
  %v15 = vld [vmem:[%s0 + $0x8] sm:$0xff]
  %v16 = vld [vmem:[%s0 + $0x10] sm:$0xff]
  %v17 = vld [vmem:[%s0 + $0x18] sm:$0xff]
  %v18 = vld [vmem:[%s0 + $0x20] sm:$0xff]
  %v19 = vld [vmem:[%s0 + $0x28] sm:$0xff]
  %v20 = vld [vmem:[%s0 + $0x30] sm:$0xff]
  %v21 = vld [vmem:[%s0 + $0x38] sm:$0xff]
  %v22 = vld [vmem:[%s0 + $0x40] sm:$0xff]
  %v23 = vld [vmem:[%s0 + $0x48] sm:$0xff]
  %v24 = vld [vmem:[%s0 + $0x50] sm:$0xff]
  %v25 = vld [vmem:[%s0 + $0x58] sm:$0xff]
  %v26 = vld [vmem:[%s0 + $0x60] sm:$0xff]
  %v27 = vld [vmem:[%s0 + $0x68] sm:$0xff]
  %v28 = vld [vmem:[%s0 + $0x70] sm:$0xff]
  %v29 = vld [vmem:[%s0 + $0x78] sm:$0xff]
  %30 = vmatprep.subr.mxu0 0.0
  %31 = vmatpush1.xpose.msra.mxu0 0.0
  %32 = vmatprep.subr.mxu0 0.0
  %33 = vmatpush1.xpose.msra.mxu0 0.0
  %34 = vmatprep.subr.mxu0 0.0
  %35 = vmatpush1.xpose.msra.mxu0 0.0
  %36 = vmatprep.subr.mxu0 0.0
  %37 = vmatpush1.xpose.msra.mxu0 0.0
  %38 = vmatprep.subr.mxu0 0.0
  %39 = vmatpush1.xpose.msra.mxu0 0.0
  %40 = vmatprep.subr.mxu0 0.0
  %41 = vmatpush1.xpose.msra.mxu0 0.0
  %42 = vmatprep.subr.mxu0 0.0
  %43 = vmatpush1.xpose.msra.mxu0 0.0
  %44 = vmatprep.subr.mxu0 0.0
  %45 = vmatpush1.xpose.msra.mxu0 0.0
  %46 = vmatprep.subr.mxu0 0.0
  %47 = vmatpush1.xpose.msra.mxu0 0.0
  %48 = vmatprep.subr.mxu0 0.0
  %49 = vmatpush1.xpose.msra.mxu0 0.0
  %50 = vmatprep.subr.mxu0 0.0
  %51 = vmatpush1.xpose.msra.mxu0 0.0
  %52 = vmatprep.subr.mxu0 0.0
  %53 = vmatpush1.xpose.msra.mxu0 0.0
  %54 = vmatprep.subr.mxu0 0.0
  %55 = vmatpush1.xpose.msra.mxu0 0.0
  %56 = vmatprep.subr.mxu0 0.0
  %57 = vmatpush1.xpose.msra.mxu0 0.0
  %58 = vmatprep.subr.mxu0 0.0
  %59 = vmatpush1.xpose.msra.mxu0 0.0
  %v60 = vand.u32 %v15, 4294901760
  %61 = vmatprep.subr.mxu0 %v60
  %v62 = vand.u32 %v14, 4294901760
  %63 = vmatpush1.xpose.msra.mxu0 %v62
  %64 = vmatprep.subr.mxu0 0.0
  %65 = vmatpush2.xpose.msra.mxu0 0.0
  %66 = vmatprep.subr.mxu0 0.0
  %67 = vmatpush2.xpose.msra.mxu0 0.0
  %68 = vmatprep.subr.mxu0 0.0
  %69 = vmatpush2.xpose.msra.mxu0 0.0
  %70 = vmatprep.subr.mxu0 0.0
  %71 = vmatpush2.xpose.msra.mxu0 0.0
  %72 = vmatprep.subr.mxu0 0.0
  %73 = vmatpush2.xpose.msra.mxu0 0.0
  %74 = vmatprep.subr.mxu0 0.0
  %75 = vmatpush2.xpose.msra.mxu0 0.0
  %76 = vmatprep.subr.mxu0 0.0
  %77 = vmatpush2.xpose.msra.mxu0 0.0
  %78 = vmatprep.subr.mxu0 0.0
  %79 = vmatpush2.xpose.msra.mxu0 0.0
  %80 = vmatprep.subr.mxu0 0.0
  %81 = vmatpush2.xpose.msra.mxu0 0.0
  %82 = vmatprep.subr.mxu0 0.0
  %83 = vmatpush2.xpose.msra.mxu0 0.0
  %84 = vmatprep.subr.mxu0 0.0
  %85 = vmatpush2.xpose.msra.mxu0 0.0
  %86 = vmatprep.subr.mxu0 0.0
  %87 = vmatpush2.xpose.msra.mxu0 0.0
  %88 = vmatprep.subr.mxu0 0.0
  %89 = vmatpush2.xpose.msra.mxu0 0.0
  %90 = vmatprep.subr.mxu0 0.0
  %91 = vmatpush2.xpose.msra.mxu0 0.0
  %92 = vmatprep.subr.mxu0 0.0
  %93 = vmatpush2.xpose.msra.mxu0 0.0
  %94 = vmatprep.subr.mxu0 0.0
  %95 = vmatpush2.xpose.msra.mxu0 0.0
  %v96 = vand.u32 %v15, 4294901760
  %v97 = vsub.f32 %v15, %v96
  %v98 = vand.u32 %v97, 4294901760
  %v99 = vsub.f32 %v97, %v98
  %v100 = vand.u32 %v99, 4294901760
  %101 = vmatprep.mubr.f32.mxu0 %v100
  %v102 = vand.u32 %v14, 4294901760
  %v103 = vsub.f32 %v14, %v102
  %v104 = vand.u32 %v103, 4294901760
  %v105 = vsub.f32 %v103, %v104
  %v106 = vand.u32 %v105, 4294901760
  %107 = vmatmul.mubr.f32.gmra.mxu0 %v106
  %v108 = vpop.f32.mrf.mxu0
  %v109 = vadd.f32 0.0, %v108
  %v110 = vpop.f32.mrf.mxu0
  %111 = vdwg.mxu0
  %112 = vmatprep.subr.mxu0 0.0
  %113 = vmatpush1.xpose.msra.mxu0 0.0
  %114 = vmatprep.subr.mxu0 0.0
  %115 = vmatpush1.xpose.msra.mxu0 0.0
  %116 = vmatprep.subr.mxu0 0.0
  %117 = vmatpush1.xpose.msra.mxu0 0.0
  %118 = vmatprep.subr.mxu0 0.0
  %119 = vmatpush1.xpose.msra.mxu0 0.0
  %120 = vmatprep.subr.mxu0 0.0
  %121 = vmatpush1.xpose.msra.mxu0 0.0
  %122 = vmatprep.subr.mxu0 0.0
  %123 = vmatpush1.xpose.msra.mxu0 0.0
  %124 = vmatprep.subr.mxu0 0.0
  %125 = vmatpush1.xpose.msra.mxu0 0.0
  %126 = vmatprep.subr.mxu0 0.0
  %127 = vmatpush1.xpose.msra.mxu0 0.0
  %128 = vmatprep.subr.mxu0 0.0
  %129 = vmatpush1.xpose.msra.mxu0 0.0
  %130 = vmatprep.subr.mxu0 0.0
  %131 = vmatpush1.xpose.msra.mxu0 0.0
  %132 = vmatprep.subr.mxu0 0.0
  %133 = vmatpush1.xpose.msra.mxu0 0.0
  %134 = vmatprep.subr.mxu0 0.0
  %135 = vmatpush1.xpose.msra.mxu0 0.0
  %136 = vmatprep.subr.mxu0 0.0
  %137 = vmatpush1.xpose.msra.mxu0 0.0
  %138 = vmatprep.subr.mxu0 0.0
  %139 = vmatpush1.xpose.msra.mxu0 0.0
  %140 = vmatprep.subr.mxu0 0.0
  %141 = vmatpush1.xpose.msra.mxu0 0.0
  %v142 = vand.u32 %v15, 4294901760
  %v143 = vsub.f32 %v15, %v142
  %v144 = vand.u32 %v143, 4294901760
  %v145 = vsub.f32 %v143, %v144
  %v146 = vand.u32 %v145, 4294901760
  %147 = vmatprep.subr.mxu0 %v146
  %v148 = vand.u32 %v14, 4294901760
  %v149 = vsub.f32 %v14, %v148
  %v150 = vand.u32 %v149, 4294901760
  %v151 = vsub.f32 %v149, %v150
  %v152 = vand.u32 %v151, 4294901760
  %153 = vmatpush1.xpose.msra.mxu0 %v152
  %154 = vmatprep.subr.mxu0 0.0
  %155 = vmatpush2.xpose.msra.mxu0 0.0
  %156 = vmatprep.subr.mxu0 0.0
  %157 = vmatpush2.xpose.msra.mxu0 0.0
  %158 = vmatprep.subr.mxu0 0.0
  %159 = vmatpush2.xpose.msra.mxu0 0.0
  %160 = vmatprep.subr.mxu0 0.0
  %161 = vmatpush2.xpose.msra.mxu0 0.0
  %162 = vmatprep.subr.mxu0 0.0
  %163 = vmatpush2.xpose.msra.mxu0 0.0
  %164 = vmatprep.subr.mxu0 0.0
  %165 = vmatpush2.xpose.msra.mxu0 0.0
  %166 = vmatprep.subr.mxu0 0.0
  %167 = vmatpush2.xpose.msra.mxu0 0.0
  %168 = vmatprep.subr.mxu0 0.0
  %169 = vmatpush2.xpose.msra.mxu0 0.0
  %170 = vmatprep.subr.mxu0 0.0
  %171 = vmatpush2.xpose.msra.mxu0 0.0
  %172 = vmatprep.subr.mxu0 0.0
  %173 = vmatpush2.xpose.msra.mxu0 0.0
  %174 = vmatprep.subr.mxu0 0.0
  %175 = vmatpush2.xpose.msra.mxu0 0.0
  %176 = vmatprep.subr.mxu0 0.0
  %177 = vmatpush2.xpose.msra.mxu0 0.0
  %178 = vmatprep.subr.mxu0 0.0
  %179 = vmatpush2.xpose.msra.mxu0 0.0
  %180 = vmatprep.subr.mxu0 0.0
  %181 = vmatpush2.xpose.msra.mxu0 0.0
  %182 = vmatprep.subr.mxu0 0.0
  %183 = vmatpush2.xpose.msra.mxu0 0.0
  %184 = vmatprep.subr.mxu0 0.0
  %185 = vmatpush2.xpose.msra.mxu0 0.0
  %v186 = vand.u32 %v15, 4294901760
  %187 = vmatprep.mubr.f32.mxu0 %v186
  %v188 = vand.u32 %v14, 4294901760
  %189 = vmatmul.mubr.f32.gmra.mxu0 %v188
  %v190 = vpop.f32.mrf.mxu0
  %v191 = vadd.f32 %v109, %v190
  %v192 = vpop.f32.mrf.mxu0
  %193 = vdwg.mxu0
  %194 = vmatprep.subr.mxu0 0.0
  %195 = vmatpush1.xpose.msra.mxu0 0.0
  %196 = vmatprep.subr.mxu0 0.0
  %197 = vmatpush1.xpose.msra.mxu0 0.0
  %198 = vmatprep.subr.mxu0 0.0
  %199 = vmatpush1.xpose.msra.mxu0 0.0
  %200 = vmatprep.subr.mxu0 0.0
  %201 = vmatpush1.xpose.msra.mxu0 0.0
  %202 = vmatprep.subr.mxu0 0.0
  %203 = vmatpush1.xpose.msra.mxu0 0.0
  %204 = vmatprep.subr.mxu0 0.0
  %205 = vmatpush1.xpose.msra.mxu0 0.0
  %206 = vmatprep.subr.mxu0 0.0
  %207 = vmatpush1.xpose.msra.mxu0 0.0
  %208 = vmatprep.subr.mxu0 0.0
  %209 = vmatpush1.xpose.msra.mxu0 0.0
  %210 = vmatprep.subr.mxu0 0.0
  %211 = vmatpush1.xpose.msra.mxu0 0.0
  %212 = vmatprep.subr.mxu0 0.0
  %213 = vmatpush1.xpose.msra.mxu0 0.0
  %214 = vmatprep.subr.mxu0 0.0
  %215 = vmatpush1.xpose.msra.mxu0 0.0
  %216 = vmatprep.subr.mxu0 0.0
  %217 = vmatpush1.xpose.msra.mxu0 0.0
  %218 = vmatprep.subr.mxu0 0.0
  %219 = vmatpush1.xpose.msra.mxu0 0.0
  %220 = vmatprep.subr.mxu0 0.0
  %221 = vmatpush1.xpose.msra.mxu0 0.0
  %222 = vmatprep.subr.mxu0 0.0
  %223 = vmatpush1.xpose.msra.mxu0 0.0
  %v224 = vand.u32 %v15, 4294901760
  %v225 = vsub.f32 %v15, %v224
  %226 = vmatprep.subr.mxu0 %v225
  %v227 = vand.u32 %v14, 4294901760
  %v228 = vsub.f32 %v14, %v227
  %229 = vmatpush1.xpose.msra.mxu0 %v228
  %230 = vmatprep.subr.mxu0 0.0
  %231 = vmatpush2.xpose.msra.mxu0 0.0
  %232 = vmatprep.subr.mxu0 0.0
  %233 = vmatpush2.xpose.msra.mxu0 0.0
  %234 = vmatprep.subr.mxu0 0.0
  %235 = vmatpush2.xpose.msra.mxu0 0.0
  %236 = vmatprep.subr.mxu0 0.0
  %237 = vmatpush2.xpose.msra.mxu0 0.0
  %238 = vmatprep.subr.mxu0 0.0
  %239 = vmatpush2.xpose.msra.mxu0 0.0
  %240 = vmatprep.subr.mxu0 0.0
  %241 = vmatpush2.xpose.msra.mxu0 0.0
  %242 = vmatprep.subr.mxu0 0.0
  %243 = vmatpush2.xpose.msra.mxu0 0.0
  %244 = vmatprep.subr.mxu0 0.0
  %245 = vmatpush2.xpose.msra.mxu0 0.0
  %246 = vmatprep.subr.mxu0 0.0
  %247 = vmatpush2.xpose.msra.mxu0 0.0
  %248 = vmatprep.subr.mxu0 0.0
  %249 = vmatpush2.xpose.msra.mxu0 0.0
  %250 = vmatprep.subr.mxu0 0.0
  %251 = vmatpush2.xpose.msra.mxu0 0.0
  %252 = vmatprep.subr.mxu0 0.0
  %253 = vmatpush2.xpose.msra.mxu0 0.0
  %254 = vmatprep.subr.mxu0 0.0
  %255 = vmatpush2.xpose.msra.mxu0 0.0
  %256 = vmatprep.subr.mxu0 0.0
  %257 = vmatpush2.xpose.msra.mxu0 0.0
  %258 = vmatprep.subr.mxu0 0.0
  %259 = vmatpush2.xpose.msra.mxu0 0.0
  %260 = vmatprep.subr.mxu0 0.0
  %261 = vmatpush2.xpose.msra.mxu0 0.0
  %v262 = vand.u32 %v15, 4294901760
  %v263 = vsub.f32 %v15, %v262
  %264 = vmatprep.mubr.f32.mxu0 %v263
  %v265 = vand.u32 %v14, 4294901760
  %v266 = vsub.f32 %v14, %v265
  %267 = vmatmul.mubr.f32.gmra.mxu0 %v266
  %v268 = vpop.f32.mrf.mxu0
  %v269 = vadd.f32 %v191, %v268
  %v270 = vpop.f32.mrf.mxu0
  %271 = vdwg.mxu0
  %272 = vmatprep.subr.mxu0 0.0
  %273 = vmatpush1.xpose.msra.mxu0 0.0
  %274 = vmatprep.subr.mxu0 0.0
  %275 = vmatpush1.xpose.msra.mxu0 0.0
  %276 = vmatprep.subr.mxu0 0.0
  %277 = vmatpush1.xpose.msra.mxu0 0.0
  %278 = vmatprep.subr.mxu0 0.0
  %279 = vmatpush1.xpose.msra.mxu0 0.0
  %280 = vmatprep.subr.mxu0 0.0
  %281 = vmatpush1.xpose.msra.mxu0 0.0
  %282 = vmatprep.subr.mxu0 0.0
  %283 = vmatpush1.xpose.msra.mxu0 0.0
  %284 = vmatprep.subr.mxu0 0.0
  %285 = vmatpush1.xpose.msra.mxu0 0.0
  %286 = vmatprep.subr.mxu0 0.0
  %287 = vmatpush1.xpose.msra.mxu0 0.0
  %288 = vmatprep.subr.mxu0 0.0
  %289 = vmatpush1.xpose.msra.mxu0 0.0
  %290 = vmatprep.subr.mxu0 0.0
  %291 = vmatpush1.xpose.msra.mxu0 0.0
  %292 = vmatprep.subr.mxu0 0.0
  %293 = vmatpush1.xpose.msra.mxu0 0.0
  %294 = vmatprep.subr.mxu0 0.0
  %295 = vmatpush1.xpose.msra.mxu0 0.0
  %296 = vmatprep.subr.mxu0 0.0
  %297 = vmatpush1.xpose.msra.mxu0 0.0
  %298 = vmatprep.subr.mxu0 0.0
  %299 = vmatpush1.xpose.msra.mxu0 0.0
  %300 = vmatprep.subr.mxu0 0.0
  %301 = vmatpush1.xpose.msra.mxu0 0.0
  %v302 = vand.u32 %v15, 4294901760
  %303 = vmatprep.subr.mxu0 %v302
  %v304 = vand.u32 %v14, 4294901760
  %305 = vmatpush1.xpose.msra.mxu0 %v304
  %306 = vmatprep.subr.mxu0 0.0
  %307 = vmatpush2.xpose.msra.mxu0 0.0
  %308 = vmatprep.subr.mxu0 0.0
  %309 = vmatpush2.xpose.msra.mxu0 0.0
  %310 = vmatprep.subr.mxu0 0.0
  %311 = vmatpush2.xpose.msra.mxu0 0.0
  %312 = vmatprep.subr.mxu0 0.0
  %313 = vmatpush2.xpose.msra.mxu0 0.0
  %314 = vmatprep.subr.mxu0 0.0
  %315 = vmatpush2.xpose.msra.mxu0 0.0
  %316 = vmatprep.subr.mxu0 0.0
  %317 = vmatpush2.xpose.msra.mxu0 0.0
  %318 = vmatprep.subr.mxu0 0.0
  %319 = vmatpush2.xpose.msra.mxu0 0.0
  %320 = vmatprep.subr.mxu0 0.0
  %321 = vmatpush2.xpose.msra.mxu0 0.0
  %322 = vmatprep.subr.mxu0 0.0
  %323 = vmatpush2.xpose.msra.mxu0 0.0
  %324 = vmatprep.subr.mxu0 0.0
  %325 = vmatpush2.xpose.msra.mxu0 0.0
  %326 = vmatprep.subr.mxu0 0.0
  %327 = vmatpush2.xpose.msra.mxu0 0.0
  %328 = vmatprep.subr.mxu0 0.0
  %329 = vmatpush2.xpose.msra.mxu0 0.0
  %330 = vmatprep.subr.mxu0 0.0
  %331 = vmatpush2.xpose.msra.mxu0 0.0
  %332 = vmatprep.subr.mxu0 0.0
  %333 = vmatpush2.xpose.msra.mxu0 0.0
  %334 = vmatprep.subr.mxu0 0.0
  %335 = vmatpush2.xpose.msra.mxu0 0.0
  %336 = vmatprep.subr.mxu0 0.0
  %337 = vmatpush2.xpose.msra.mxu0 0.0
  %v338 = vand.u32 %v15, 4294901760
  %v339 = vsub.f32 %v15, %v338
  %v340 = vand.u32 %v339, 4294901760
  %341 = vmatprep.mubr.f32.mxu0 %v340
  %v342 = vand.u32 %v14, 4294901760
  %v343 = vsub.f32 %v14, %v342
  %v344 = vand.u32 %v343, 4294901760
  %345 = vmatmul.mubr.f32.gmra.mxu0 %v344
  %v346 = vpop.f32.mrf.mxu0
  %v347 = vadd.f32 %v269, %v346
  %v348 = vpop.f32.mrf.mxu0
  %349 = vdwg.mxu0
  %350 = vmatprep.subr.mxu0 0.0
  %351 = vmatpush1.xpose.msra.mxu0 0.0
  %352 = vmatprep.subr.mxu0 0.0
  %353 = vmatpush1.xpose.msra.mxu0 0.0
  %354 = vmatprep.subr.mxu0 0.0
  %355 = vmatpush1.xpose.msra.mxu0 0.0
  %356 = vmatprep.subr.mxu0 0.0
  %357 = vmatpush1.xpose.msra.mxu0 0.0
  %358 = vmatprep.subr.mxu0 0.0
  %359 = vmatpush1.xpose.msra.mxu0 0.0
  %360 = vmatprep.subr.mxu0 0.0
  %361 = vmatpush1.xpose.msra.mxu0 0.0
  %362 = vmatprep.subr.mxu0 0.0
  %363 = vmatpush1.xpose.msra.mxu0 0.0
  %364 = vmatprep.subr.mxu0 0.0
  %365 = vmatpush1.xpose.msra.mxu0 0.0
  %366 = vmatprep.subr.mxu0 0.0
  %367 = vmatpush1.xpose.msra.mxu0 0.0
  %368 = vmatprep.subr.mxu0 0.0
  %369 = vmatpush1.xpose.msra.mxu0 0.0
  %370 = vmatprep.subr.mxu0 0.0
  %371 = vmatpush1.xpose.msra.mxu0 0.0
  %372 = vmatprep.subr.mxu0 0.0
  %373 = vmatpush1.xpose.msra.mxu0 0.0
  %374 = vmatprep.subr.mxu0 0.0
  %375 = vmatpush1.xpose.msra.mxu0 0.0
  %376 = vmatprep.subr.mxu0 0.0
  %377 = vmatpush1.xpose.msra.mxu0 0.0
  %378 = vmatprep.subr.mxu0 0.0
  %379 = vmatpush1.xpose.msra.mxu0 0.0
  %v380 = vand.u32 %v15, 4294901760
  %v381 = vsub.f32 %v15, %v380
  %v382 = vand.u32 %v381, 4294901760
  %383 = vmatprep.subr.mxu0 %v382
  %v384 = vand.u32 %v14, 4294901760
  %v385 = vsub.f32 %v14, %v384
  %v386 = vand.u32 %v385, 4294901760
  %387 = vmatpush1.xpose.msra.mxu0 %v386
  %388 = vmatprep.subr.mxu0 0.0
  %389 = vmatpush2.xpose.msra.mxu0 0.0
  %390 = vmatprep.subr.mxu0 0.0
  %391 = vmatpush2.xpose.msra.mxu0 0.0
  %392 = vmatprep.subr.mxu0 0.0
  %393 = vmatpush2.xpose.msra.mxu0 0.0
  %394 = vmatprep.subr.mxu0 0.0
  %395 = vmatpush2.xpose.msra.mxu0 0.0
  %396 = vmatprep.subr.mxu0 0.0
  %397 = vmatpush2.xpose.msra.mxu0 0.0
  %398 = vmatprep.subr.mxu0 0.0
  %399 = vmatpush2.xpose.msra.mxu0 0.0
  %400 = vmatprep.subr.mxu0 0.0
  %401 = vmatpush2.xpose.msra.mxu0 0.0
  %402 = vmatprep.subr.mxu0 0.0
  %403 = vmatpush2.xpose.msra.mxu0 0.0
  %404 = vmatprep.subr.mxu0 0.0
  %405 = vmatpush2.xpose.msra.mxu0 0.0
  %406 = vmatprep.subr.mxu0 0.0
  %407 = vmatpush2.xpose.msra.mxu0 0.0
  %408 = vmatprep.subr.mxu0 0.0
  %409 = vmatpush2.xpose.msra.mxu0 0.0
  %410 = vmatprep.subr.mxu0 0.0
  %411 = vmatpush2.xpose.msra.mxu0 0.0
  %412 = vmatprep.subr.mxu0 0.0
  %413 = vmatpush2.xpose.msra.mxu0 0.0
  %414 = vmatprep.subr.mxu0 0.0
  %415 = vmatpush2.xpose.msra.mxu0 0.0
  %416 = vmatprep.subr.mxu0 0.0
  %417 = vmatpush2.xpose.msra.mxu0 0.0
  %418 = vmatprep.subr.mxu0 0.0
  %419 = vmatpush2.xpose.msra.mxu0 0.0
  %v420 = vand.u32 %v15, 4294901760
  %421 = vmatprep.mubr.f32.mxu0 %v420
  %v422 = vand.u32 %v14, 4294901760
  %423 = vmatmul.mubr.f32.gmra.mxu0 %v422
  %v424 = vpop.f32.mrf.mxu0
  %v425 = vadd.f32 %v347, %v424
  %v426 = vpop.f32.mrf.mxu0
  %427 = vdwg.mxu0
  %428 = vmatprep.subr.mxu0 0.0
  %429 = vmatpush1.xpose.msra.mxu0 0.0
  %430 = vmatprep.subr.mxu0 0.0
  %431 = vmatpush1.xpose.msra.mxu0 0.0
  %432 = vmatprep.subr.mxu0 0.0
  %433 = vmatpush1.xpose.msra.mxu0 0.0
  %434 = vmatprep.subr.mxu0 0.0
  %435 = vmatpush1.xpose.msra.mxu0 0.0
  %436 = vmatprep.subr.mxu0 0.0
  %437 = vmatpush1.xpose.msra.mxu0 0.0
  %438 = vmatprep.subr.mxu0 0.0
  %439 = vmatpush1.xpose.msra.mxu0 0.0
  %440 = vmatprep.subr.mxu0 0.0
  %441 = vmatpush1.xpose.msra.mxu0 0.0
  %442 = vmatprep.subr.mxu0 0.0
  %443 = vmatpush1.xpose.msra.mxu0 0.0
  %444 = vmatprep.subr.mxu0 0.0
  %445 = vmatpush1.xpose.msra.mxu0 0.0
  %446 = vmatprep.subr.mxu0 0.0
  %447 = vmatpush1.xpose.msra.mxu0 0.0
  %448 = vmatprep.subr.mxu0 0.0
  %449 = vmatpush1.xpose.msra.mxu0 0.0
  %450 = vmatprep.subr.mxu0 0.0
  %451 = vmatpush1.xpose.msra.mxu0 0.0
  %452 = vmatprep.subr.mxu0 0.0
  %453 = vmatpush1.xpose.msra.mxu0 0.0
  %454 = vmatprep.subr.mxu0 0.0
  %455 = vmatpush1.xpose.msra.mxu0 0.0
  %456 = vmatprep.subr.mxu0 0.0
  %457 = vmatpush1.xpose.msra.mxu0 0.0
  %v458 = vand.u32 %v15, 4294901760
  %459 = vmatprep.subr.mxu0 %v458
  %v460 = vand.u32 %v14, 4294901760
  %461 = vmatpush1.xpose.msra.mxu0 %v460
  %462 = vmatprep.subr.mxu0 0.0
  %463 = vmatpush2.xpose.msra.mxu0 0.0
  %464 = vmatprep.subr.mxu0 0.0
  %465 = vmatpush2.xpose.msra.mxu0 0.0
  %466 = vmatprep.subr.mxu0 0.0
  %467 = vmatpush2.xpose.msra.mxu0 0.0
  %468 = vmatprep.subr.mxu0 0.0
  %469 = vmatpush2.xpose.msra.mxu0 0.0
  %470 = vmatprep.subr.mxu0 0.0
  %471 = vmatpush2.xpose.msra.mxu0 0.0
  %472 = vmatprep.subr.mxu0 0.0
  %473 = vmatpush2.xpose.msra.mxu0 0.0
  %474 = vmatprep.subr.mxu0 0.0
  %475 = vmatpush2.xpose.msra.mxu0 0.0
  %476 = vmatprep.subr.mxu0 0.0
  %477 = vmatpush2.xpose.msra.mxu0 0.0
  %478 = vmatprep.subr.mxu0 0.0
  %479 = vmatpush2.xpose.msra.mxu0 0.0
  %480 = vmatprep.subr.mxu0 0.0
  %481 = vmatpush2.xpose.msra.mxu0 0.0
  %482 = vmatprep.subr.mxu0 0.0
  %483 = vmatpush2.xpose.msra.mxu0 0.0
  %484 = vmatprep.subr.mxu0 0.0
  %485 = vmatpush2.xpose.msra.mxu0 0.0
  %486 = vmatprep.subr.mxu0 0.0
  %487 = vmatpush2.xpose.msra.mxu0 0.0
  %488 = vmatprep.subr.mxu0 0.0
  %489 = vmatpush2.xpose.msra.mxu0 0.0
  %490 = vmatprep.subr.mxu0 0.0
  %491 = vmatpush2.xpose.msra.mxu0 0.0
  %492 = vmatprep.subr.mxu0 0.0
  %493 = vmatpush2.xpose.msra.mxu0 0.0
  %v494 = vand.u32 %v15, 4294901760
  %495 = vmatprep.mubr.f32.mxu0 %v494
  %v496 = vand.u32 %v14, 4294901760
  %497 = vmatmul.mubr.f32.gmra.mxu0 %v496
  %v498 = vpop.f32.mrf.mxu0
  %v499 = vadd.f32 %v425, %v498
  %v500 = vpop.f32.mrf.mxu0
  %501 = vdwg.mxu0
  %502 = vmatprep.subr.mxu0 0.0
  %503 = vmatpush1.xpose.msra.mxu0 0.0
  %504 = vmatprep.subr.mxu0 0.0
  %505 = vmatpush1.xpose.msra.mxu0 0.0
  %506 = vmatprep.subr.mxu0 0.0
  %507 = vmatpush1.xpose.msra.mxu0 0.0
  %508 = vmatprep.subr.mxu0 0.0
  %509 = vmatpush1.xpose.msra.mxu0 0.0
  %510 = vmatprep.subr.mxu0 0.0
  %511 = vmatpush1.xpose.msra.mxu0 0.0
  %512 = vmatprep.subr.mxu0 0.0
  %513 = vmatpush1.xpose.msra.mxu0 0.0
  %514 = vmatprep.subr.mxu0 0.0
  %515 = vmatpush1.xpose.msra.mxu0 0.0
  %516 = vmatprep.subr.mxu0 0.0
  %517 = vmatpush1.xpose.msra.mxu0 0.0
  %518 = vmatprep.subr.mxu0 0.0
  %519 = vmatpush1.xpose.msra.mxu0 0.0
  %520 = vmatprep.subr.mxu0 0.0
  %521 = vmatpush1.xpose.msra.mxu0 0.0
  %522 = vmatprep.subr.mxu0 0.0
  %523 = vmatpush1.xpose.msra.mxu0 0.0
  %524 = vmatprep.subr.mxu0 0.0
  %525 = vmatpush1.xpose.msra.mxu0 0.0
  %526 = vmatprep.subr.mxu0 0.0
  %527 = vmatpush1.xpose.msra.mxu0 0.0
  %528 = vmatprep.subr.mxu0 0.0
  %529 = vmatpush1.xpose.msra.mxu0 0.0
  %530 = vmatprep.subr.mxu0 0.0
  %531 = vmatpush1.xpose.msra.mxu0 0.0
  %v532 = vand.u32 %v17, 4294901760
  %533 = vmatprep.subr.mxu0 %v532
  %v534 = vand.u32 %v16, 4294901760
  %535 = vmatpush1.xpose.msra.mxu0 %v534
  %536 = vmatprep.subr.mxu0 0.0
  %537 = vmatpush2.xpose.msra.mxu0 0.0
  %538 = vmatprep.subr.mxu0 0.0
  %539 = vmatpush2.xpose.msra.mxu0 0.0
  %540 = vmatprep.subr.mxu0 0.0
  %541 = vmatpush2.xpose.msra.mxu0 0.0
  %542 = vmatprep.subr.mxu0 0.0
  %543 = vmatpush2.xpose.msra.mxu0 0.0
  %544 = vmatprep.subr.mxu0 0.0
  %545 = vmatpush2.xpose.msra.mxu0 0.0
  %546 = vmatprep.subr.mxu0 0.0
  %547 = vmatpush2.xpose.msra.mxu0 0.0
  %548 = vmatprep.subr.mxu0 0.0
  %549 = vmatpush2.xpose.msra.mxu0 0.0
  %550 = vmatprep.subr.mxu0 0.0
  %551 = vmatpush2.xpose.msra.mxu0 0.0
  %552 = vmatprep.subr.mxu0 0.0
  %553 = vmatpush2.xpose.msra.mxu0 0.0
  %554 = vmatprep.subr.mxu0 0.0
  %555 = vmatpush2.xpose.msra.mxu0 0.0
  %556 = vmatprep.subr.mxu0 0.0
  %557 = vmatpush2.xpose.msra.mxu0 0.0
  %558 = vmatprep.subr.mxu0 0.0
  %559 = vmatpush2.xpose.msra.mxu0 0.0
  %560 = vmatprep.subr.mxu0 0.0
  %561 = vmatpush2.xpose.msra.mxu0 0.0
  %562 = vmatprep.subr.mxu0 0.0
  %563 = vmatpush2.xpose.msra.mxu0 0.0
  %564 = vmatprep.subr.mxu0 0.0
  %565 = vmatpush2.xpose.msra.mxu0 0.0
  %566 = vmatprep.subr.mxu0 0.0
  %567 = vmatpush2.xpose.msra.mxu0 0.0
  %v568 = vand.u32 %v17, 4294901760
  %v569 = vsub.f32 %v17, %v568
  %v570 = vand.u32 %v569, 4294901760
  %v571 = vsub.f32 %v569, %v570
  %v572 = vand.u32 %v571, 4294901760
  %573 = vmatprep.mubr.f32.mxu0 %v572
  %v574 = vand.u32 %v16, 4294901760
  %v575 = vsub.f32 %v16, %v574
  %v576 = vand.u32 %v575, 4294901760
  %v577 = vsub.f32 %v575, %v576
  %v578 = vand.u32 %v577, 4294901760
  %579 = vmatmul.mubr.f32.gmra.mxu0 %v578
  %v580 = vpop.f32.mrf.mxu0
  %v581 = vadd.f32 0.0, %v580
  %v582 = vpop.f32.mrf.mxu0
  %583 = vdwg.mxu0
  %584 = vmatprep.subr.mxu0 0.0
  %585 = vmatpush1.xpose.msra.mxu0 0.0
  %586 = vmatprep.subr.mxu0 0.0
  %587 = vmatpush1.xpose.msra.mxu0 0.0
  %588 = vmatprep.subr.mxu0 0.0
  %589 = vmatpush1.xpose.msra.mxu0 0.0
  %590 = vmatprep.subr.mxu0 0.0
  %591 = vmatpush1.xpose.msra.mxu0 0.0
  %592 = vmatprep.subr.mxu0 0.0
  %593 = vmatpush1.xpose.msra.mxu0 0.0
  %594 = vmatprep.subr.mxu0 0.0
  %595 = vmatpush1.xpose.msra.mxu0 0.0
  %596 = vmatprep.subr.mxu0 0.0
  %597 = vmatpush1.xpose.msra.mxu0 0.0
  %598 = vmatprep.subr.mxu0 0.0
  %599 = vmatpush1.xpose.msra.mxu0 0.0
  %600 = vmatprep.subr.mxu0 0.0
  %601 = vmatpush1.xpose.msra.mxu0 0.0
  %602 = vmatprep.subr.mxu0 0.0
  %603 = vmatpush1.xpose.msra.mxu0 0.0
  %604 = vmatprep.subr.mxu0 0.0
  %605 = vmatpush1.xpose.msra.mxu0 0.0
  %606 = vmatprep.subr.mxu0 0.0
  %607 = vmatpush1.xpose.msra.mxu0 0.0
  %608 = vmatprep.subr.mxu0 0.0
  %609 = vmatpush1.xpose.msra.mxu0 0.0
  %610 = vmatprep.subr.mxu0 0.0
  %611 = vmatpush1.xpose.msra.mxu0 0.0
  %612 = vmatprep.subr.mxu0 0.0
  %613 = vmatpush1.xpose.msra.mxu0 0.0
  %v614 = vand.u32 %v17, 4294901760
  %v615 = vsub.f32 %v17, %v614
  %v616 = vand.u32 %v615, 4294901760
  %v617 = vsub.f32 %v615, %v616
  %v618 = vand.u32 %v617, 4294901760
  %619 = vmatprep.subr.mxu0 %v618
  %v620 = vand.u32 %v16, 4294901760
  %v621 = vsub.f32 %v16, %v620
  %v622 = vand.u32 %v621, 4294901760
  %v623 = vsub.f32 %v621, %v622
  %v624 = vand.u32 %v623, 4294901760
  %625 = vmatpush1.xpose.msra.mxu0 %v624
  %626 = vmatprep.subr.mxu0 0.0
  %627 = vmatpush2.xpose.msra.mxu0 0.0
  %628 = vmatprep.subr.mxu0 0.0
  %629 = vmatpush2.xpose.msra.mxu0 0.0
  %630 = vmatprep.subr.mxu0 0.0
  %631 = vmatpush2.xpose.msra.mxu0 0.0
  %632 = vmatprep.subr.mxu0 0.0
  %633 = vmatpush2.xpose.msra.mxu0 0.0
  %634 = vmatprep.subr.mxu0 0.0
  %635 = vmatpush2.xpose.msra.mxu0 0.0
  %636 = vmatprep.subr.mxu0 0.0
  %637 = vmatpush2.xpose.msra.mxu0 0.0
  %638 = vmatprep.subr.mxu0 0.0
  %639 = vmatpush2.xpose.msra.mxu0 0.0
  %640 = vmatprep.subr.mxu0 0.0
  %641 = vmatpush2.xpose.msra.mxu0 0.0
  %642 = vmatprep.subr.mxu0 0.0
  %643 = vmatpush2.xpose.msra.mxu0 0.0
  %644 = vmatprep.subr.mxu0 0.0
  %645 = vmatpush2.xpose.msra.mxu0 0.0
  %646 = vmatprep.subr.mxu0 0.0
  %647 = vmatpush2.xpose.msra.mxu0 0.0
  %648 = vmatprep.subr.mxu0 0.0
  %649 = vmatpush2.xpose.msra.mxu0 0.0
  %650 = vmatprep.subr.mxu0 0.0
  %651 = vmatpush2.xpose.msra.mxu0 0.0
  %652 = vmatprep.subr.mxu0 0.0
  %653 = vmatpush2.xpose.msra.mxu0 0.0
  %654 = vmatprep.subr.mxu0 0.0
  %655 = vmatpush2.xpose.msra.mxu0 0.0
  %656 = vmatprep.subr.mxu0 0.0
  %657 = vmatpush2.xpose.msra.mxu0 0.0
  %v658 = vand.u32 %v17, 4294901760
  %659 = vmatprep.mubr.f32.mxu0 %v658
  %v660 = vand.u32 %v16, 4294901760
  %661 = vmatmul.mubr.f32.gmra.mxu0 %v660
  %v662 = vpop.f32.mrf.mxu0
  %v663 = vadd.f32 %v581, %v662
  %v664 = vpop.f32.mrf.mxu0
  %665 = vdwg.mxu0
  %666 = vmatprep.subr.mxu0 0.0
  %667 = vmatpush1.xpose.msra.mxu0 0.0
  %668 = vmatprep.subr.mxu0 0.0
  %669 = vmatpush1.xpose.msra.mxu0 0.0
  %670 = vmatprep.subr.mxu0 0.0
  %671 = vmatpush1.xpose.msra.mxu0 0.0
  %672 = vmatprep.subr.mxu0 0.0
  %673 = vmatpush1.xpose.msra.mxu0 0.0
  %674 = vmatprep.subr.mxu0 0.0
  %675 = vmatpush1.xpose.msra.mxu0 0.0
  %676 = vmatprep.subr.mxu0 0.0
  %677 = vmatpush1.xpose.msra.mxu0 0.0
  %678 = vmatprep.subr.mxu0 0.0
  %679 = vmatpush1.xpose.msra.mxu0 0.0
  %680 = vmatprep.subr.mxu0 0.0
  %681 = vmatpush1.xpose.msra.mxu0 0.0
  %682 = vmatprep.subr.mxu0 0.0
  %683 = vmatpush1.xpose.msra.mxu0 0.0
  %684 = vmatprep.subr.mxu0 0.0
  %685 = vmatpush1.xpose.msra.mxu0 0.0
  %686 = vmatprep.subr.mxu0 0.0
  %687 = vmatpush1.xpose.msra.mxu0 0.0
  %688 = vmatprep.subr.mxu0 0.0
  %689 = vmatpush1.xpose.msra.mxu0 0.0
  %690 = vmatprep.subr.mxu0 0.0
  %691 = vmatpush1.xpose.msra.mxu0 0.0
  %692 = vmatprep.subr.mxu0 0.0
  %693 = vmatpush1.xpose.msra.mxu0 0.0
  %694 = vmatprep.subr.mxu0 0.0
  %695 = vmatpush1.xpose.msra.mxu0 0.0
  %v696 = vand.u32 %v17, 4294901760
  %v697 = vsub.f32 %v17, %v696
  %698 = vmatprep.subr.mxu0 %v697
  %v699 = vand.u32 %v16, 4294901760
  %v700 = vsub.f32 %v16, %v699
  %701 = vmatpush1.xpose.msra.mxu0 %v700
  %702 = vmatprep.subr.mxu0 0.0
  %703 = vmatpush2.xpose.msra.mxu0 0.0
  %704 = vmatprep.subr.mxu0 0.0
  %705 = vmatpush2.xpose.msra.mxu0 0.0
  %706 = vmatprep.subr.mxu0 0.0
  %707 = vmatpush2.xpose.msra.mxu0 0.0
  %708 = vmatprep.subr.mxu0 0.0
  %709 = vmatpush2.xpose.msra.mxu0 0.0
  %710 = vmatprep.subr.mxu0 0.0
  %711 = vmatpush2.xpose.msra.mxu0 0.0
  %712 = vmatprep.subr.mxu0 0.0
  %713 = vmatpush2.xpose.msra.mxu0 0.0
  %714 = vmatprep.subr.mxu0 0.0
  %715 = vmatpush2.xpose.msra.mxu0 0.0
  %716 = vmatprep.subr.mxu0 0.0
  %717 = vmatpush2.xpose.msra.mxu0 0.0
  %718 = vmatprep.subr.mxu0 0.0
  %719 = vmatpush2.xpose.msra.mxu0 0.0
  %720 = vmatprep.subr.mxu0 0.0
  %721 = vmatpush2.xpose.msra.mxu0 0.0
  %722 = vmatprep.subr.mxu0 0.0
  %723 = vmatpush2.xpose.msra.mxu0 0.0
  %724 = vmatprep.subr.mxu0 0.0
  %725 = vmatpush2.xpose.msra.mxu0 0.0
  %726 = vmatprep.subr.mxu0 0.0
  %727 = vmatpush2.xpose.msra.mxu0 0.0
  %728 = vmatprep.subr.mxu0 0.0
  %729 = vmatpush2.xpose.msra.mxu0 0.0
  %730 = vmatprep.subr.mxu0 0.0
  %731 = vmatpush2.xpose.msra.mxu0 0.0
  %732 = vmatprep.subr.mxu0 0.0
  %733 = vmatpush2.xpose.msra.mxu0 0.0
  %v734 = vand.u32 %v17, 4294901760
  %v735 = vsub.f32 %v17, %v734
  %736 = vmatprep.mubr.f32.mxu0 %v735
  %v737 = vand.u32 %v16, 4294901760
  %v738 = vsub.f32 %v16, %v737
  %739 = vmatmul.mubr.f32.gmra.mxu0 %v738
  %v740 = vpop.f32.mrf.mxu0
  %v741 = vadd.f32 %v663, %v740
  %v742 = vpop.f32.mrf.mxu0
  %743 = vdwg.mxu0
  %744 = vmatprep.subr.mxu0 0.0
  %745 = vmatpush1.xpose.msra.mxu0 0.0
  %746 = vmatprep.subr.mxu0 0.0
  %747 = vmatpush1.xpose.msra.mxu0 0.0
  %748 = vmatprep.subr.mxu0 0.0
  %749 = vmatpush1.xpose.msra.mxu0 0.0
  %750 = vmatprep.subr.mxu0 0.0
  %751 = vmatpush1.xpose.msra.mxu0 0.0
  %752 = vmatprep.subr.mxu0 0.0
  %753 = vmatpush1.xpose.msra.mxu0 0.0
  %754 = vmatprep.subr.mxu0 0.0
  %755 = vmatpush1.xpose.msra.mxu0 0.0
  %756 = vmatprep.subr.mxu0 0.0
  %757 = vmatpush1.xpose.msra.mxu0 0.0
  %758 = vmatprep.subr.mxu0 0.0
  %759 = vmatpush1.xpose.msra.mxu0 0.0
  %760 = vmatprep.subr.mxu0 0.0
  %761 = vmatpush1.xpose.msra.mxu0 0.0
  %762 = vmatprep.subr.mxu0 0.0
  %763 = vmatpush1.xpose.msra.mxu0 0.0
  %764 = vmatprep.subr.mxu0 0.0
  %765 = vmatpush1.xpose.msra.mxu0 0.0
  %766 = vmatprep.subr.mxu0 0.0
  %767 = vmatpush1.xpose.msra.mxu0 0.0
  %768 = vmatprep.subr.mxu0 0.0
  %769 = vmatpush1.xpose.msra.mxu0 0.0
  %770 = vmatprep.subr.mxu0 0.0
  %771 = vmatpush1.xpose.msra.mxu0 0.0
  %772 = vmatprep.subr.mxu0 0.0
  %773 = vmatpush1.xpose.msra.mxu0 0.0
  %v774 = vand.u32 %v17, 4294901760
  %775 = vmatprep.subr.mxu0 %v774
  %v776 = vand.u32 %v16, 4294901760
  %777 = vmatpush1.xpose.msra.mxu0 %v776
  %778 = vmatprep.subr.mxu0 0.0
  %779 = vmatpush2.xpose.msra.mxu0 0.0
  %780 = vmatprep.subr.mxu0 0.0
  %781 = vmatpush2.xpose.msra.mxu0 0.0
  %782 = vmatprep.subr.mxu0 0.0
  %783 = vmatpush2.xpose.msra.mxu0 0.0
  %784 = vmatprep.subr.mxu0 0.0
  %785 = vmatpush2.xpose.msra.mxu0 0.0
  %786 = vmatprep.subr.mxu0 0.0
  %787 = vmatpush2.xpose.msra.mxu0 0.0
  %788 = vmatprep.subr.mxu0 0.0
  %789 = vmatpush2.xpose.msra.mxu0 0.0
  %790 = vmatprep.subr.mxu0 0.0
  %791 = vmatpush2.xpose.msra.mxu0 0.0
  %792 = vmatprep.subr.mxu0 0.0
  %793 = vmatpush2.xpose.msra.mxu0 0.0
  %794 = vmatprep.subr.mxu0 0.0
  %795 = vmatpush2.xpose.msra.mxu0 0.0
  %796 = vmatprep.subr.mxu0 0.0
  %797 = vmatpush2.xpose.msra.mxu0 0.0
  %798 = vmatprep.subr.mxu0 0.0
  %799 = vmatpush2.xpose.msra.mxu0 0.0
  %800 = vmatprep.subr.mxu0 0.0
  %801 = vmatpush2.xpose.msra.mxu0 0.0
  %802 = vmatprep.subr.mxu0 0.0
  %803 = vmatpush2.xpose.msra.mxu0 0.0
  %804 = vmatprep.subr.mxu0 0.0
  %805 = vmatpush2.xpose.msra.mxu0 0.0
  %806 = vmatprep.subr.mxu0 0.0
  %807 = vmatpush2.xpose.msra.mxu0 0.0
  %808 = vmatprep.subr.mxu0 0.0
  %809 = vmatpush2.xpose.msra.mxu0 0.0
  %v810 = vand.u32 %v17, 4294901760
  %v811 = vsub.f32 %v17, %v810
  %v812 = vand.u32 %v811, 4294901760
  %813 = vmatprep.mubr.f32.mxu0 %v812
  %v814 = vand.u32 %v16, 4294901760
  %v815 = vsub.f32 %v16, %v814
  %v816 = vand.u32 %v815, 4294901760
  %817 = vmatmul.mubr.f32.gmra.mxu0 %v816
  %v818 = vpop.f32.mrf.mxu0
  %v819 = vadd.f32 %v741, %v818
  %v820 = vpop.f32.mrf.mxu0
  %821 = vdwg.mxu0
  %822 = vmatprep.subr.mxu0 0.0
  %823 = vmatpush1.xpose.msra.mxu0 0.0
  %824 = vmatprep.subr.mxu0 0.0
  %825 = vmatpush1.xpose.msra.mxu0 0.0
  %826 = vmatprep.subr.mxu0 0.0
  %827 = vmatpush1.xpose.msra.mxu0 0.0
  %828 = vmatprep.subr.mxu0 0.0
  %829 = vmatpush1.xpose.msra.mxu0 0.0
  %830 = vmatprep.subr.mxu0 0.0
  %831 = vmatpush1.xpose.msra.mxu0 0.0
  %832 = vmatprep.subr.mxu0 0.0
  %833 = vmatpush1.xpose.msra.mxu0 0.0
  %834 = vmatprep.subr.mxu0 0.0
  %835 = vmatpush1.xpose.msra.mxu0 0.0
  %836 = vmatprep.subr.mxu0 0.0
  %837 = vmatpush1.xpose.msra.mxu0 0.0
  %838 = vmatprep.subr.mxu0 0.0
  %839 = vmatpush1.xpose.msra.mxu0 0.0
  %840 = vmatprep.subr.mxu0 0.0
  %841 = vmatpush1.xpose.msra.mxu0 0.0
  %842 = vmatprep.subr.mxu0 0.0
  %843 = vmatpush1.xpose.msra.mxu0 0.0
  %844 = vmatprep.subr.mxu0 0.0
  %845 = vmatpush1.xpose.msra.mxu0 0.0
  %846 = vmatprep.subr.mxu0 0.0
  %847 = vmatpush1.xpose.msra.mxu0 0.0
  %848 = vmatprep.subr.mxu0 0.0
  %849 = vmatpush1.xpose.msra.mxu0 0.0
  %850 = vmatprep.subr.mxu0 0.0
  %851 = vmatpush1.xpose.msra.mxu0 0.0
  %v852 = vand.u32 %v17, 4294901760
  %v853 = vsub.f32 %v17, %v852
  %v854 = vand.u32 %v853, 4294901760
  %855 = vmatprep.subr.mxu0 %v854
  %v856 = vand.u32 %v16, 4294901760
  %v857 = vsub.f32 %v16, %v856
  %v858 = vand.u32 %v857, 4294901760
  %859 = vmatpush1.xpose.msra.mxu0 %v858
  %860 = vmatprep.subr.mxu0 0.0
  %861 = vmatpush2.xpose.msra.mxu0 0.0
  %862 = vmatprep.subr.mxu0 0.0
  %863 = vmatpush2.xpose.msra.mxu0 0.0
  %864 = vmatprep.subr.mxu0 0.0
  %865 = vmatpush2.xpose.msra.mxu0 0.0
  %866 = vmatprep.subr.mxu0 0.0
  %867 = vmatpush2.xpose.msra.mxu0 0.0
  %868 = vmatprep.subr.mxu0 0.0
  %869 = vmatpush2.xpose.msra.mxu0 0.0
  %870 = vmatprep.subr.mxu0 0.0
  %871 = vmatpush2.xpose.msra.mxu0 0.0
  %872 = vmatprep.subr.mxu0 0.0
  %873 = vmatpush2.xpose.msra.mxu0 0.0
  %874 = vmatprep.subr.mxu0 0.0
  %875 = vmatpush2.xpose.msra.mxu0 0.0
  %876 = vmatprep.subr.mxu0 0.0
  %877 = vmatpush2.xpose.msra.mxu0 0.0
  %878 = vmatprep.subr.mxu0 0.0
  %879 = vmatpush2.xpose.msra.mxu0 0.0
  %880 = vmatprep.subr.mxu0 0.0
  %881 = vmatpush2.xpose.msra.mxu0 0.0
  %882 = vmatprep.subr.mxu0 0.0
  %883 = vmatpush2.xpose.msra.mxu0 0.0
  %884 = vmatprep.subr.mxu0 0.0
  %885 = vmatpush2.xpose.msra.mxu0 0.0
  %886 = vmatprep.subr.mxu0 0.0
  %887 = vmatpush2.xpose.msra.mxu0 0.0
  %888 = vmatprep.subr.mxu0 0.0
  %889 = vmatpush2.xpose.msra.mxu0 0.0
  %890 = vmatprep.subr.mxu0 0.0
  %891 = vmatpush2.xpose.msra.mxu0 0.0
  %v892 = vand.u32 %v17, 4294901760
  %893 = vmatprep.mubr.f32.mxu0 %v892
  %v894 = vand.u32 %v16, 4294901760
  %895 = vmatmul.mubr.f32.gmra.mxu0 %v894
  %v896 = vpop.f32.mrf.mxu0
  %v897 = vadd.f32 %v819, %v896
  %v898 = vpop.f32.mrf.mxu0
  %899 = vdwg.mxu0
  %900 = vmatprep.subr.mxu0 0.0
  %901 = vmatpush1.xpose.msra.mxu0 0.0
  %902 = vmatprep.subr.mxu0 0.0
  %903 = vmatpush1.xpose.msra.mxu0 0.0
  %904 = vmatprep.subr.mxu0 0.0
  %905 = vmatpush1.xpose.msra.mxu0 0.0
  %906 = vmatprep.subr.mxu0 0.0
  %907 = vmatpush1.xpose.msra.mxu0 0.0
  %908 = vmatprep.subr.mxu0 0.0
  %909 = vmatpush1.xpose.msra.mxu0 0.0
  %910 = vmatprep.subr.mxu0 0.0
  %911 = vmatpush1.xpose.msra.mxu0 0.0
  %912 = vmatprep.subr.mxu0 0.0
  %913 = vmatpush1.xpose.msra.mxu0 0.0
  %914 = vmatprep.subr.mxu0 0.0
  %915 = vmatpush1.xpose.msra.mxu0 0.0
  %916 = vmatprep.subr.mxu0 0.0
  %917 = vmatpush1.xpose.msra.mxu0 0.0
  %918 = vmatprep.subr.mxu0 0.0
  %919 = vmatpush1.xpose.msra.mxu0 0.0
  %920 = vmatprep.subr.mxu0 0.0
  %921 = vmatpush1.xpose.msra.mxu0 0.0
  %922 = vmatprep.subr.mxu0 0.0
  %923 = vmatpush1.xpose.msra.mxu0 0.0
  %924 = vmatprep.subr.mxu0 0.0
  %925 = vmatpush1.xpose.msra.mxu0 0.0
  %926 = vmatprep.subr.mxu0 0.0
  %927 = vmatpush1.xpose.msra.mxu0 0.0
  %928 = vmatprep.subr.mxu0 0.0
  %929 = vmatpush1.xpose.msra.mxu0 0.0
  %v930 = vand.u32 %v17, 4294901760
  %931 = vmatprep.subr.mxu0 %v930
  %v932 = vand.u32 %v16, 4294901760
  %933 = vmatpush1.xpose.msra.mxu0 %v932
  %934 = vmatprep.subr.mxu0 0.0
  %935 = vmatpush2.xpose.msra.mxu0 0.0
  %936 = vmatprep.subr.mxu0 0.0
  %937 = vmatpush2.xpose.msra.mxu0 0.0
  %938 = vmatprep.subr.mxu0 0.0
  %939 = vmatpush2.xpose.msra.mxu0 0.0
  %940 = vmatprep.subr.mxu0 0.0
  %941 = vmatpush2.xpose.msra.mxu0 0.0
  %942 = vmatprep.subr.mxu0 0.0
  %943 = vmatpush2.xpose.msra.mxu0 0.0
  %944 = vmatprep.subr.mxu0 0.0
  %945 = vmatpush2.xpose.msra.mxu0 0.0
  %946 = vmatprep.subr.mxu0 0.0
  %947 = vmatpush2.xpose.msra.mxu0 0.0
  %948 = vmatprep.subr.mxu0 0.0
  %949 = vmatpush2.xpose.msra.mxu0 0.0
  %950 = vmatprep.subr.mxu0 0.0
  %951 = vmatpush2.xpose.msra.mxu0 0.0
  %952 = vmatprep.subr.mxu0 0.0
  %953 = vmatpush2.xpose.msra.mxu0 0.0
  %954 = vmatprep.subr.mxu0 0.0
  %955 = vmatpush2.xpose.msra.mxu0 0.0
  %956 = vmatprep.subr.mxu0 0.0
  %957 = vmatpush2.xpose.msra.mxu0 0.0
  %958 = vmatprep.subr.mxu0 0.0
  %959 = vmatpush2.xpose.msra.mxu0 0.0
  %960 = vmatprep.subr.mxu0 0.0
  %961 = vmatpush2.xpose.msra.mxu0 0.0
  %962 = vmatprep.subr.mxu0 0.0
  %963 = vmatpush2.xpose.msra.mxu0 0.0
  %964 = vmatprep.subr.mxu0 0.0
  %965 = vmatpush2.xpose.msra.mxu0 0.0
  %v966 = vand.u32 %v17, 4294901760
  %967 = vmatprep.mubr.f32.mxu0 %v966
  %v968 = vand.u32 %v16, 4294901760
  %969 = vmatmul.mubr.f32.gmra.mxu0 %v968
  %v970 = vpop.f32.mrf.mxu0
  %v971 = vadd.f32 %v897, %v970
  %v972 = vpop.f32.mrf.mxu0
  %973 = vdwg.mxu0
  %974 = vmatprep.subr.mxu0 0.0
  %975 = vmatpush1.xpose.msra.mxu0 0.0
  %976 = vmatprep.subr.mxu0 0.0
  %977 = vmatpush1.xpose.msra.mxu0 0.0
  %978 = vmatprep.subr.mxu0 0.0
  %979 = vmatpush1.xpose.msra.mxu0 0.0
  %980 = vmatprep.subr.mxu0 0.0
  %981 = vmatpush1.xpose.msra.mxu0 0.0
  %982 = vmatprep.subr.mxu0 0.0
  %983 = vmatpush1.xpose.msra.mxu0 0.0
  %984 = vmatprep.subr.mxu0 0.0
  %985 = vmatpush1.xpose.msra.mxu0 0.0
  %986 = vmatprep.subr.mxu0 0.0
  %987 = vmatpush1.xpose.msra.mxu0 0.0
  %988 = vmatprep.subr.mxu0 0.0
  %989 = vmatpush1.xpose.msra.mxu0 0.0
  %990 = vmatprep.subr.mxu0 0.0
  %991 = vmatpush1.xpose.msra.mxu0 0.0
  %992 = vmatprep.subr.mxu0 0.0
  %993 = vmatpush1.xpose.msra.mxu0 0.0
  %994 = vmatprep.subr.mxu0 0.0
  %995 = vmatpush1.xpose.msra.mxu0 0.0
  %996 = vmatprep.subr.mxu0 0.0
  %997 = vmatpush1.xpose.msra.mxu0 0.0
  %998 = vmatprep.subr.mxu0 0.0
  %999 = vmatpush1.xpose.msra.mxu0 0.0
  %1000 = vmatprep.subr.mxu0 0.0
  %1001 = vmatpush1.xpose.msra.mxu0 0.0
  %1002 = vmatprep.subr.mxu0 0.0
  %1003 = vmatpush1.xpose.msra.mxu0 0.0
  %v1004 = vand.u32 %v19, 4294901760
  %1005 = vmatprep.subr.mxu0 %v1004
  %v1006 = vand.u32 %v18, 4294901760
  %1007 = vmatpush1.xpose.msra.mxu0 %v1006
  %1008 = vmatprep.subr.mxu0 0.0
  %1009 = vmatpush2.xpose.msra.mxu0 0.0
  %1010 = vmatprep.subr.mxu0 0.0
  %1011 = vmatpush2.xpose.msra.mxu0 0.0
  %1012 = vmatprep.subr.mxu0 0.0
  %1013 = vmatpush2.xpose.msra.mxu0 0.0
  %1014 = vmatprep.subr.mxu0 0.0
  %1015 = vmatpush2.xpose.msra.mxu0 0.0
  %1016 = vmatprep.subr.mxu0 0.0
  %1017 = vmatpush2.xpose.msra.mxu0 0.0
  %1018 = vmatprep.subr.mxu0 0.0
  %1019 = vmatpush2.xpose.msra.mxu0 0.0
  %1020 = vmatprep.subr.mxu0 0.0
  %1021 = vmatpush2.xpose.msra.mxu0 0.0
  %1022 = vmatprep.subr.mxu0 0.0
  %1023 = vmatpush2.xpose.msra.mxu0 0.0
  %1024 = vmatprep.subr.mxu0 0.0
  %1025 = vmatpush2.xpose.msra.mxu0 0.0
  %1026 = vmatprep.subr.mxu0 0.0
  %1027 = vmatpush2.xpose.msra.mxu0 0.0
  %1028 = vmatprep.subr.mxu0 0.0
  %1029 = vmatpush2.xpose.msra.mxu0 0.0
  %1030 = vmatprep.subr.mxu0 0.0
  %1031 = vmatpush2.xpose.msra.mxu0 0.0
  %1032 = vmatprep.subr.mxu0 0.0
  %1033 = vmatpush2.xpose.msra.mxu0 0.0
  %1034 = vmatprep.subr.mxu0 0.0
  %1035 = vmatpush2.xpose.msra.mxu0 0.0
  %1036 = vmatprep.subr.mxu0 0.0
  %1037 = vmatpush2.xpose.msra.mxu0 0.0
  %1038 = vmatprep.subr.mxu0 0.0
  %1039 = vmatpush2.xpose.msra.mxu0 0.0
  %v1040 = vand.u32 %v19, 4294901760
  %v1041 = vsub.f32 %v19, %v1040
  %v1042 = vand.u32 %v1041, 4294901760
  %v1043 = vsub.f32 %v1041, %v1042
  %v1044 = vand.u32 %v1043, 4294901760
  %1045 = vmatprep.mubr.f32.mxu0 %v1044
  %v1046 = vand.u32 %v18, 4294901760
  %v1047 = vsub.f32 %v18, %v1046
  %v1048 = vand.u32 %v1047, 4294901760
  %v1049 = vsub.f32 %v1047, %v1048
  %v1050 = vand.u32 %v1049, 4294901760
  %1051 = vmatmul.mubr.f32.gmra.mxu0 %v1050
  %v1052 = vpop.f32.mrf.mxu0
  %v1053 = vadd.f32 0.0, %v1052
  %v1054 = vpop.f32.mrf.mxu0
  %1055 = vdwg.mxu0
  %1056 = vmatprep.subr.mxu0 0.0
  %1057 = vmatpush1.xpose.msra.mxu0 0.0
  %1058 = vmatprep.subr.mxu0 0.0
  %1059 = vmatpush1.xpose.msra.mxu0 0.0
  %1060 = vmatprep.subr.mxu0 0.0
  %1061 = vmatpush1.xpose.msra.mxu0 0.0
  %1062 = vmatprep.subr.mxu0 0.0
  %1063 = vmatpush1.xpose.msra.mxu0 0.0
  %1064 = vmatprep.subr.mxu0 0.0
  %1065 = vmatpush1.xpose.msra.mxu0 0.0
  %1066 = vmatprep.subr.mxu0 0.0
  %1067 = vmatpush1.xpose.msra.mxu0 0.0
  %1068 = vmatprep.subr.mxu0 0.0
  %1069 = vmatpush1.xpose.msra.mxu0 0.0
  %1070 = vmatprep.subr.mxu0 0.0
  %1071 = vmatpush1.xpose.msra.mxu0 0.0
  %1072 = vmatprep.subr.mxu0 0.0
  %1073 = vmatpush1.xpose.msra.mxu0 0.0
  %1074 = vmatprep.subr.mxu0 0.0
  %1075 = vmatpush1.xpose.msra.mxu0 0.0
  %1076 = vmatprep.subr.mxu0 0.0
  %1077 = vmatpush1.xpose.msra.mxu0 0.0
  %1078 = vmatprep.subr.mxu0 0.0
  %1079 = vmatpush1.xpose.msra.mxu0 0.0
  %1080 = vmatprep.subr.mxu0 0.0
  %1081 = vmatpush1.xpose.msra.mxu0 0.0
  %1082 = vmatprep.subr.mxu0 0.0
  %1083 = vmatpush1.xpose.msra.mxu0 0.0
  %1084 = vmatprep.subr.mxu0 0.0
  %1085 = vmatpush1.xpose.msra.mxu0 0.0
  %v1086 = vand.u32 %v19, 4294901760
  %v1087 = vsub.f32 %v19, %v1086
  %v1088 = vand.u32 %v1087, 4294901760
  %v1089 = vsub.f32 %v1087, %v1088
  %v1090 = vand.u32 %v1089, 4294901760
  %1091 = vmatprep.subr.mxu0 %v1090
  %v1092 = vand.u32 %v18, 4294901760
  %v1093 = vsub.f32 %v18, %v1092
  %v1094 = vand.u32 %v1093, 4294901760
  %v1095 = vsub.f32 %v1093, %v1094
  %v1096 = vand.u32 %v1095, 4294901760
  %1097 = vmatpush1.xpose.msra.mxu0 %v1096
  %1098 = vmatprep.subr.mxu0 0.0
  %1099 = vmatpush2.xpose.msra.mxu0 0.0
  %1100 = vmatprep.subr.mxu0 0.0
  %1101 = vmatpush2.xpose.msra.mxu0 0.0
  %1102 = vmatprep.subr.mxu0 0.0
  %1103 = vmatpush2.xpose.msra.mxu0 0.0
  %1104 = vmatprep.subr.mxu0 0.0
  %1105 = vmatpush2.xpose.msra.mxu0 0.0
  %1106 = vmatprep.subr.mxu0 0.0
  %1107 = vmatpush2.xpose.msra.mxu0 0.0
  %1108 = vmatprep.subr.mxu0 0.0
  %1109 = vmatpush2.xpose.msra.mxu0 0.0
  %1110 = vmatprep.subr.mxu0 0.0
  %1111 = vmatpush2.xpose.msra.mxu0 0.0
  %1112 = vmatprep.subr.mxu0 0.0
  %1113 = vmatpush2.xpose.msra.mxu0 0.0
  %1114 = vmatprep.subr.mxu0 0.0
  %1115 = vmatpush2.xpose.msra.mxu0 0.0
  %1116 = vmatprep.subr.mxu0 0.0
  %1117 = vmatpush2.xpose.msra.mxu0 0.0
  %1118 = vmatprep.subr.mxu0 0.0
  %1119 = vmatpush2.xpose.msra.mxu0 0.0
  %1120 = vmatprep.subr.mxu0 0.0
  %1121 = vmatpush2.xpose.msra.mxu0 0.0
  %1122 = vmatprep.subr.mxu0 0.0
  %1123 = vmatpush2.xpose.msra.mxu0 0.0
  %1124 = vmatprep.subr.mxu0 0.0
  %1125 = vmatpush2.xpose.msra.mxu0 0.0
  %1126 = vmatprep.subr.mxu0 0.0
  %1127 = vmatpush2.xpose.msra.mxu0 0.0
  %1128 = vmatprep.subr.mxu0 0.0
  %1129 = vmatpush2.xpose.msra.mxu0 0.0
  %v1130 = vand.u32 %v19, 4294901760
  %1131 = vmatprep.mubr.f32.mxu0 %v1130
  %v1132 = vand.u32 %v18, 4294901760
  %1133 = vmatmul.mubr.f32.gmra.mxu0 %v1132
  %v1134 = vpop.f32.mrf.mxu0
  %v1135 = vadd.f32 %v1053, %v1134
  %v1136 = vpop.f32.mrf.mxu0
  %1137 = vdwg.mxu0
  %1138 = vmatprep.subr.mxu0 0.0
  %1139 = vmatpush1.xpose.msra.mxu0 0.0
  %1140 = vmatprep.subr.mxu0 0.0
  %1141 = vmatpush1.xpose.msra.mxu0 0.0
  %1142 = vmatprep.subr.mxu0 0.0
  %1143 = vmatpush1.xpose.msra.mxu0 0.0
  %1144 = vmatprep.subr.mxu0 0.0
  %1145 = vmatpush1.xpose.msra.mxu0 0.0
  %1146 = vmatprep.subr.mxu0 0.0
  %1147 = vmatpush1.xpose.msra.mxu0 0.0
  %1148 = vmatprep.subr.mxu0 0.0
  %1149 = vmatpush1.xpose.msra.mxu0 0.0
  %1150 = vmatprep.subr.mxu0 0.0
  %1151 = vmatpush1.xpose.msra.mxu0 0.0
  %1152 = vmatprep.subr.mxu0 0.0
  %1153 = vmatpush1.xpose.msra.mxu0 0.0
  %1154 = vmatprep.subr.mxu0 0.0
  %1155 = vmatpush1.xpose.msra.mxu0 0.0
  %1156 = vmatprep.subr.mxu0 0.0
  %1157 = vmatpush1.xpose.msra.mxu0 0.0
  %1158 = vmatprep.subr.mxu0 0.0
  %1159 = vmatpush1.xpose.msra.mxu0 0.0
  %1160 = vmatprep.subr.mxu0 0.0
  %1161 = vmatpush1.xpose.msra.mxu0 0.0
  %1162 = vmatprep.subr.mxu0 0.0
  %1163 = vmatpush1.xpose.msra.mxu0 0.0
  %1164 = vmatprep.subr.mxu0 0.0
  %1165 = vmatpush1.xpose.msra.mxu0 0.0
  %1166 = vmatprep.subr.mxu0 0.0
  %1167 = vmatpush1.xpose.msra.mxu0 0.0
  %v1168 = vand.u32 %v19, 4294901760
  %v1169 = vsub.f32 %v19, %v1168
  %1170 = vmatprep.subr.mxu0 %v1169
  %v1171 = vand.u32 %v18, 4294901760
  %v1172 = vsub.f32 %v18, %v1171
  %1173 = vmatpush1.xpose.msra.mxu0 %v1172
  %1174 = vmatprep.subr.mxu0 0.0
  %1175 = vmatpush2.xpose.msra.mxu0 0.0
  %1176 = vmatprep.subr.mxu0 0.0
  %1177 = vmatpush2.xpose.msra.mxu0 0.0
  %1178 = vmatprep.subr.mxu0 0.0
  %1179 = vmatpush2.xpose.msra.mxu0 0.0
  %1180 = vmatprep.subr.mxu0 0.0
  %1181 = vmatpush2.xpose.msra.mxu0 0.0
  %1182 = vmatprep.subr.mxu0 0.0
  %1183 = vmatpush2.xpose.msra.mxu0 0.0
  %1184 = vmatprep.subr.mxu0 0.0
  %1185 = vmatpush2.xpose.msra.mxu0 0.0
  %1186 = vmatprep.subr.mxu0 0.0
  %1187 = vmatpush2.xpose.msra.mxu0 0.0
  %1188 = vmatprep.subr.mxu0 0.0
  %1189 = vmatpush2.xpose.msra.mxu0 0.0
  %1190 = vmatprep.subr.mxu0 0.0
  %1191 = vmatpush2.xpose.msra.mxu0 0.0
  %1192 = vmatprep.subr.mxu0 0.0
  %1193 = vmatpush2.xpose.msra.mxu0 0.0
  %1194 = vmatprep.subr.mxu0 0.0
  %1195 = vmatpush2.xpose.msra.mxu0 0.0
  %1196 = vmatprep.subr.mxu0 0.0
  %1197 = vmatpush2.xpose.msra.mxu0 0.0
  %1198 = vmatprep.subr.mxu0 0.0
  %1199 = vmatpush2.xpose.msra.mxu0 0.0
  %1200 = vmatprep.subr.mxu0 0.0
  %1201 = vmatpush2.xpose.msra.mxu0 0.0
  %1202 = vmatprep.subr.mxu0 0.0
  %1203 = vmatpush2.xpose.msra.mxu0 0.0
  %1204 = vmatprep.subr.mxu0 0.0
  %1205 = vmatpush2.xpose.msra.mxu0 0.0
  %v1206 = vand.u32 %v19, 4294901760
  %v1207 = vsub.f32 %v19, %v1206
  %1208 = vmatprep.mubr.f32.mxu0 %v1207
  %v1209 = vand.u32 %v18, 4294901760
  %v1210 = vsub.f32 %v18, %v1209
  %1211 = vmatmul.mubr.f32.gmra.mxu0 %v1210
  %v1212 = vpop.f32.mrf.mxu0
  %v1213 = vadd.f32 %v1135, %v1212
  %v1214 = vpop.f32.mrf.mxu0
  %1215 = vdwg.mxu0
  %1216 = vmatprep.subr.mxu0 0.0
  %1217 = vmatpush1.xpose.msra.mxu0 0.0
  %1218 = vmatprep.subr.mxu0 0.0
  %1219 = vmatpush1.xpose.msra.mxu0 0.0
  %1220 = vmatprep.subr.mxu0 0.0
  %1221 = vmatpush1.xpose.msra.mxu0 0.0
  %1222 = vmatprep.subr.mxu0 0.0
  %1223 = vmatpush1.xpose.msra.mxu0 0.0
  %1224 = vmatprep.subr.mxu0 0.0
  %1225 = vmatpush1.xpose.msra.mxu0 0.0
  %1226 = vmatprep.subr.mxu0 0.0
  %1227 = vmatpush1.xpose.msra.mxu0 0.0
  %1228 = vmatprep.subr.mxu0 0.0
  %1229 = vmatpush1.xpose.msra.mxu0 0.0
  %1230 = vmatprep.subr.mxu0 0.0
  %1231 = vmatpush1.xpose.msra.mxu0 0.0
  %1232 = vmatprep.subr.mxu0 0.0
  %1233 = vmatpush1.xpose.msra.mxu0 0.0
  %1234 = vmatprep.subr.mxu0 0.0
  %1235 = vmatpush1.xpose.msra.mxu0 0.0
  %1236 = vmatprep.subr.mxu0 0.0
  %1237 = vmatpush1.xpose.msra.mxu0 0.0
  %1238 = vmatprep.subr.mxu0 0.0
  %1239 = vmatpush1.xpose.msra.mxu0 0.0
  %1240 = vmatprep.subr.mxu0 0.0
  %1241 = vmatpush1.xpose.msra.mxu0 0.0
  %1242 = vmatprep.subr.mxu0 0.0
  %1243 = vmatpush1.xpose.msra.mxu0 0.0
  %1244 = vmatprep.subr.mxu0 0.0
  %1245 = vmatpush1.xpose.msra.mxu0 0.0
  %v1246 = vand.u32 %v19, 4294901760
  %1247 = vmatprep.subr.mxu0 %v1246
  %v1248 = vand.u32 %v18, 4294901760
  %1249 = vmatpush1.xpose.msra.mxu0 %v1248
  %1250 = vmatprep.subr.mxu0 0.0
  %1251 = vmatpush2.xpose.msra.mxu0 0.0
  %1252 = vmatprep.subr.mxu0 0.0
  %1253 = vmatpush2.xpose.msra.mxu0 0.0
  %1254 = vmatprep.subr.mxu0 0.0
  %1255 = vmatpush2.xpose.msra.mxu0 0.0
  %1256 = vmatprep.subr.mxu0 0.0
  %1257 = vmatpush2.xpose.msra.mxu0 0.0
  %1258 = vmatprep.subr.mxu0 0.0
  %1259 = vmatpush2.xpose.msra.mxu0 0.0
  %1260 = vmatprep.subr.mxu0 0.0
  %1261 = vmatpush2.xpose.msra.mxu0 0.0
  %1262 = vmatprep.subr.mxu0 0.0
  %1263 = vmatpush2.xpose.msra.mxu0 0.0
  %1264 = vmatprep.subr.mxu0 0.0
  %1265 = vmatpush2.xpose.msra.mxu0 0.0
  %1266 = vmatprep.subr.mxu0 0.0
  %1267 = vmatpush2.xpose.msra.mxu0 0.0
  %1268 = vmatprep.subr.mxu0 0.0
  %1269 = vmatpush2.xpose.msra.mxu0 0.0
  %1270 = vmatprep.subr.mxu0 0.0
  %1271 = vmatpush2.xpose.msra.mxu0 0.0
  %1272 = vmatprep.subr.mxu0 0.0
  %1273 = vmatpush2.xpose.msra.mxu0 0.0
  %1274 = vmatprep.subr.mxu0 0.0
  %1275 = vmatpush2.xpose.msra.mxu0 0.0
  %1276 = vmatprep.subr.mxu0 0.0
  %1277 = vmatpush2.xpose.msra.mxu0 0.0
  %1278 = vmatprep.subr.mxu0 0.0
  %1279 = vmatpush2.xpose.msra.mxu0 0.0
  %1280 = vmatprep.subr.mxu0 0.0
  %1281 = vmatpush2.xpose.msra.mxu0 0.0
  %v1282 = vand.u32 %v19, 4294901760
  %v1283 = vsub.f32 %v19, %v1282
  %v1284 = vand.u32 %v1283, 4294901760
  %1285 = vmatprep.mubr.f32.mxu0 %v1284
  %v1286 = vand.u32 %v18, 4294901760
  %v1287 = vsub.f32 %v18, %v1286
  %v1288 = vand.u32 %v1287, 4294901760
  %1289 = vmatmul.mubr.f32.gmra.mxu0 %v1288
  %v1290 = vpop.f32.mrf.mxu0
  %v1291 = vadd.f32 %v1213, %v1290
  %v1292 = vpop.f32.mrf.mxu0
  %1293 = vdwg.mxu0
  %1294 = vmatprep.subr.mxu0 0.0
  %1295 = vmatpush1.xpose.msra.mxu0 0.0
  %1296 = vmatprep.subr.mxu0 0.0
  %1297 = vmatpush1.xpose.msra.mxu0 0.0
  %1298 = vmatprep.subr.mxu0 0.0
  %1299 = vmatpush1.xpose.msra.mxu0 0.0
  %1300 = vmatprep.subr.mxu0 0.0
  %1301 = vmatpush1.xpose.msra.mxu0 0.0
  %1302 = vmatprep.subr.mxu0 0.0
  %1303 = vmatpush1.xpose.msra.mxu0 0.0
  %1304 = vmatprep.subr.mxu0 0.0
  %1305 = vmatpush1.xpose.msra.mxu0 0.0
  %1306 = vmatprep.subr.mxu0 0.0
  %1307 = vmatpush1.xpose.msra.mxu0 0.0
  %1308 = vmatprep.subr.mxu0 0.0
  %1309 = vmatpush1.xpose.msra.mxu0 0.0
  %1310 = vmatprep.subr.mxu0 0.0
  %1311 = vmatpush1.xpose.msra.mxu0 0.0
  %1312 = vmatprep.subr.mxu0 0.0
  %1313 = vmatpush1.xpose.msra.mxu0 0.0
  %1314 = vmatprep.subr.mxu0 0.0
  %1315 = vmatpush1.xpose.msra.mxu0 0.0
  %1316 = vmatprep.subr.mxu0 0.0
  %1317 = vmatpush1.xpose.msra.mxu0 0.0
  %1318 = vmatprep.subr.mxu0 0.0
  %1319 = vmatpush1.xpose.msra.mxu0 0.0
  %1320 = vmatprep.subr.mxu0 0.0
  %1321 = vmatpush1.xpose.msra.mxu0 0.0
  %1322 = vmatprep.subr.mxu0 0.0
  %1323 = vmatpush1.xpose.msra.mxu0 0.0
  %v1324 = vand.u32 %v19, 4294901760
  %v1325 = vsub.f32 %v19, %v1324
  %v1326 = vand.u32 %v1325, 4294901760
  %1327 = vmatprep.subr.mxu0 %v1326
  %v1328 = vand.u32 %v18, 4294901760
  %v1329 = vsub.f32 %v18, %v1328
  %v1330 = vand.u32 %v1329, 4294901760
  %1331 = vmatpush1.xpose.msra.mxu0 %v1330
  %1332 = vmatprep.subr.mxu0 0.0
  %1333 = vmatpush2.xpose.msra.mxu0 0.0
  %1334 = vmatprep.subr.mxu0 0.0
  %1335 = vmatpush2.xpose.msra.mxu0 0.0
  %1336 = vmatprep.subr.mxu0 0.0
  %1337 = vmatpush2.xpose.msra.mxu0 0.0
  %1338 = vmatprep.subr.mxu0 0.0
  %1339 = vmatpush2.xpose.msra.mxu0 0.0
  %1340 = vmatprep.subr.mxu0 0.0
  %1341 = vmatpush2.xpose.msra.mxu0 0.0
  %1342 = vmatprep.subr.mxu0 0.0
  %1343 = vmatpush2.xpose.msra.mxu0 0.0
  %1344 = vmatprep.subr.mxu0 0.0
  %1345 = vmatpush2.xpose.msra.mxu0 0.0
  %1346 = vmatprep.subr.mxu0 0.0
  %1347 = vmatpush2.xpose.msra.mxu0 0.0
  %1348 = vmatprep.subr.mxu0 0.0
  %1349 = vmatpush2.xpose.msra.mxu0 0.0
  %1350 = vmatprep.subr.mxu0 0.0
  %1351 = vmatpush2.xpose.msra.mxu0 0.0
  %1352 = vmatprep.subr.mxu0 0.0
  %1353 = vmatpush2.xpose.msra.mxu0 0.0
  %1354 = vmatprep.subr.mxu0 0.0
  %1355 = vmatpush2.xpose.msra.mxu0 0.0
  %1356 = vmatprep.subr.mxu0 0.0
  %1357 = vmatpush2.xpose.msra.mxu0 0.0
  %1358 = vmatprep.subr.mxu0 0.0
  %1359 = vmatpush2.xpose.msra.mxu0 0.0
  %1360 = vmatprep.subr.mxu0 0.0
  %1361 = vmatpush2.xpose.msra.mxu0 0.0
  %1362 = vmatprep.subr.mxu0 0.0
  %1363 = vmatpush2.xpose.msra.mxu0 0.0
  %v1364 = vand.u32 %v19, 4294901760
  %1365 = vmatprep.mubr.f32.mxu0 %v1364
  %v1366 = vand.u32 %v18, 4294901760
  %1367 = vmatmul.mubr.f32.gmra.mxu0 %v1366
  %v1368 = vpop.f32.mrf.mxu0
  %v1369 = vadd.f32 %v1291, %v1368
  %v1370 = vpop.f32.mrf.mxu0
  %1371 = vdwg.mxu0
  %1372 = vmatprep.subr.mxu0 0.0
  %1373 = vmatpush1.xpose.msra.mxu0 0.0
  %1374 = vmatprep.subr.mxu0 0.0
  %1375 = vmatpush1.xpose.msra.mxu0 0.0
  %1376 = vmatprep.subr.mxu0 0.0
  %1377 = vmatpush1.xpose.msra.mxu0 0.0
  %1378 = vmatprep.subr.mxu0 0.0
  %1379 = vmatpush1.xpose.msra.mxu0 0.0
  %1380 = vmatprep.subr.mxu0 0.0
  %1381 = vmatpush1.xpose.msra.mxu0 0.0
  %1382 = vmatprep.subr.mxu0 0.0
  %1383 = vmatpush1.xpose.msra.mxu0 0.0
  %1384 = vmatprep.subr.mxu0 0.0
  %1385 = vmatpush1.xpose.msra.mxu0 0.0
  %1386 = vmatprep.subr.mxu0 0.0
  %1387 = vmatpush1.xpose.msra.mxu0 0.0
  %1388 = vmatprep.subr.mxu0 0.0
  %1389 = vmatpush1.xpose.msra.mxu0 0.0
  %1390 = vmatprep.subr.mxu0 0.0
  %1391 = vmatpush1.xpose.msra.mxu0 0.0
  %1392 = vmatprep.subr.mxu0 0.0
  %1393 = vmatpush1.xpose.msra.mxu0 0.0
  %1394 = vmatprep.subr.mxu0 0.0
  %1395 = vmatpush1.xpose.msra.mxu0 0.0
  %1396 = vmatprep.subr.mxu0 0.0
  %1397 = vmatpush1.xpose.msra.mxu0 0.0
  %1398 = vmatprep.subr.mxu0 0.0
  %1399 = vmatpush1.xpose.msra.mxu0 0.0
  %1400 = vmatprep.subr.mxu0 0.0
  %1401 = vmatpush1.xpose.msra.mxu0 0.0
  %v1402 = vand.u32 %v19, 4294901760
  %1403 = vmatprep.subr.mxu0 %v1402
  %v1404 = vand.u32 %v18, 4294901760
  %1405 = vmatpush1.xpose.msra.mxu0 %v1404
  %1406 = vmatprep.subr.mxu0 0.0
  %1407 = vmatpush2.xpose.msra.mxu0 0.0
  %1408 = vmatprep.subr.mxu0 0.0
  %1409 = vmatpush2.xpose.msra.mxu0 0.0
  %1410 = vmatprep.subr.mxu0 0.0
  %1411 = vmatpush2.xpose.msra.mxu0 0.0
  %1412 = vmatprep.subr.mxu0 0.0
  %1413 = vmatpush2.xpose.msra.mxu0 0.0
  %1414 = vmatprep.subr.mxu0 0.0
  %1415 = vmatpush2.xpose.msra.mxu0 0.0
  %1416 = vmatprep.subr.mxu0 0.0
  %1417 = vmatpush2.xpose.msra.mxu0 0.0
  %1418 = vmatprep.subr.mxu0 0.0
  %1419 = vmatpush2.xpose.msra.mxu0 0.0
  %1420 = vmatprep.subr.mxu0 0.0
  %1421 = vmatpush2.xpose.msra.mxu0 0.0
  %1422 = vmatprep.subr.mxu0 0.0
  %1423 = vmatpush2.xpose.msra.mxu0 0.0
  %1424 = vmatprep.subr.mxu0 0.0
  %1425 = vmatpush2.xpose.msra.mxu0 0.0
  %1426 = vmatprep.subr.mxu0 0.0
  %1427 = vmatpush2.xpose.msra.mxu0 0.0
  %1428 = vmatprep.subr.mxu0 0.0
  %1429 = vmatpush2.xpose.msra.mxu0 0.0
  %1430 = vmatprep.subr.mxu0 0.0
  %1431 = vmatpush2.xpose.msra.mxu0 0.0
  %1432 = vmatprep.subr.mxu0 0.0
  %1433 = vmatpush2.xpose.msra.mxu0 0.0
  %1434 = vmatprep.subr.mxu0 0.0
  %1435 = vmatpush2.xpose.msra.mxu0 0.0
  %1436 = vmatprep.subr.mxu0 0.0
  %1437 = vmatpush2.xpose.msra.mxu0 0.0
  %v1438 = vand.u32 %v19, 4294901760
  %1439 = vmatprep.mubr.f32.mxu0 %v1438
  %v1440 = vand.u32 %v18, 4294901760
  %1441 = vmatmul.mubr.f32.gmra.mxu0 %v1440
  %v1442 = vpop.f32.mrf.mxu0
  %v1443 = vadd.f32 %v1369, %v1442
  %v1444 = vpop.f32.mrf.mxu0
  %1445 = vdwg.mxu0
  %1446 = vmatprep.subr.mxu0 0.0
  %1447 = vmatpush1.xpose.msra.mxu0 0.0
  %1448 = vmatprep.subr.mxu0 0.0
  %1449 = vmatpush1.xpose.msra.mxu0 0.0
  %1450 = vmatprep.subr.mxu0 0.0
  %1451 = vmatpush1.xpose.msra.mxu0 0.0
  %1452 = vmatprep.subr.mxu0 0.0
  %1453 = vmatpush1.xpose.msra.mxu0 0.0
  %1454 = vmatprep.subr.mxu0 0.0
  %1455 = vmatpush1.xpose.msra.mxu0 0.0
  %1456 = vmatprep.subr.mxu0 0.0
  %1457 = vmatpush1.xpose.msra.mxu0 0.0
  %1458 = vmatprep.subr.mxu0 0.0
  %1459 = vmatpush1.xpose.msra.mxu0 0.0
  %1460 = vmatprep.subr.mxu0 0.0
  %1461 = vmatpush1.xpose.msra.mxu0 0.0
  %1462 = vmatprep.subr.mxu0 0.0
  %1463 = vmatpush1.xpose.msra.mxu0 0.0
  %1464 = vmatprep.subr.mxu0 0.0
  %1465 = vmatpush1.xpose.msra.mxu0 0.0
  %1466 = vmatprep.subr.mxu0 0.0
  %1467 = vmatpush1.xpose.msra.mxu0 0.0
  %1468 = vmatprep.subr.mxu0 0.0
  %1469 = vmatpush1.xpose.msra.mxu0 0.0
  %1470 = vmatprep.subr.mxu0 0.0
  %1471 = vmatpush1.xpose.msra.mxu0 0.0
  %1472 = vmatprep.subr.mxu0 0.0
  %1473 = vmatpush1.xpose.msra.mxu0 0.0
  %1474 = vmatprep.subr.mxu0 0.0
  %1475 = vmatpush1.xpose.msra.mxu0 0.0
  %v1476 = vand.u32 %v21, 4294901760
  %1477 = vmatprep.subr.mxu0 %v1476
  %v1478 = vand.u32 %v20, 4294901760
  %1479 = vmatpush1.xpose.msra.mxu0 %v1478
  %1480 = vmatprep.subr.mxu0 0.0
  %1481 = vmatpush2.xpose.msra.mxu0 0.0
  %1482 = vmatprep.subr.mxu0 0.0
  %1483 = vmatpush2.xpose.msra.mxu0 0.0
  %1484 = vmatprep.subr.mxu0 0.0
  %1485 = vmatpush2.xpose.msra.mxu0 0.0
  %1486 = vmatprep.subr.mxu0 0.0
  %1487 = vmatpush2.xpose.msra.mxu0 0.0
  %1488 = vmatprep.subr.mxu0 0.0
  %1489 = vmatpush2.xpose.msra.mxu0 0.0
  %1490 = vmatprep.subr.mxu0 0.0
  %1491 = vmatpush2.xpose.msra.mxu0 0.0
  %1492 = vmatprep.subr.mxu0 0.0
  %1493 = vmatpush2.xpose.msra.mxu0 0.0
  %1494 = vmatprep.subr.mxu0 0.0
  %1495 = vmatpush2.xpose.msra.mxu0 0.0
  %1496 = vmatprep.subr.mxu0 0.0
  %1497 = vmatpush2.xpose.msra.mxu0 0.0
  %1498 = vmatprep.subr.mxu0 0.0
  %1499 = vmatpush2.xpose.msra.mxu0 0.0
  %1500 = vmatprep.subr.mxu0 0.0
  %1501 = vmatpush2.xpose.msra.mxu0 0.0
  %1502 = vmatprep.subr.mxu0 0.0
  %1503 = vmatpush2.xpose.msra.mxu0 0.0
  %1504 = vmatprep.subr.mxu0 0.0
  %1505 = vmatpush2.xpose.msra.mxu0 0.0
  %1506 = vmatprep.subr.mxu0 0.0
  %1507 = vmatpush2.xpose.msra.mxu0 0.0
  %1508 = vmatprep.subr.mxu0 0.0
  %1509 = vmatpush2.xpose.msra.mxu0 0.0
  %1510 = vmatprep.subr.mxu0 0.0
  %1511 = vmatpush2.xpose.msra.mxu0 0.0
  %v1512 = vand.u32 %v21, 4294901760
  %v1513 = vsub.f32 %v21, %v1512
  %v1514 = vand.u32 %v1513, 4294901760
  %v1515 = vsub.f32 %v1513, %v1514
  %v1516 = vand.u32 %v1515, 4294901760
  %1517 = vmatprep.mubr.f32.mxu0 %v1516
  %v1518 = vand.u32 %v20, 4294901760
  %v1519 = vsub.f32 %v20, %v1518
  %v1520 = vand.u32 %v1519, 4294901760
  %v1521 = vsub.f32 %v1519, %v1520
  %v1522 = vand.u32 %v1521, 4294901760
  %1523 = vmatmul.mubr.f32.gmra.mxu0 %v1522
  %v1524 = vpop.f32.mrf.mxu0
  %v1525 = vadd.f32 0.0, %v1524
  %v1526 = vpop.f32.mrf.mxu0
  %1527 = vdwg.mxu0
  %1528 = vmatprep.subr.mxu0 0.0
  %1529 = vmatpush1.xpose.msra.mxu0 0.0
  %1530 = vmatprep.subr.mxu0 0.0
  %1531 = vmatpush1.xpose.msra.mxu0 0.0
  %1532 = vmatprep.subr.mxu0 0.0
  %1533 = vmatpush1.xpose.msra.mxu0 0.0
  %1534 = vmatprep.subr.mxu0 0.0
  %1535 = vmatpush1.xpose.msra.mxu0 0.0
  %1536 = vmatprep.subr.mxu0 0.0
  %1537 = vmatpush1.xpose.msra.mxu0 0.0
  %1538 = vmatprep.subr.mxu0 0.0
  %1539 = vmatpush1.xpose.msra.mxu0 0.0
  %1540 = vmatprep.subr.mxu0 0.0
  %1541 = vmatpush1.xpose.msra.mxu0 0.0
  %1542 = vmatprep.subr.mxu0 0.0
  %1543 = vmatpush1.xpose.msra.mxu0 0.0
  %1544 = vmatprep.subr.mxu0 0.0
  %1545 = vmatpush1.xpose.msra.mxu0 0.0
  %1546 = vmatprep.subr.mxu0 0.0
  %1547 = vmatpush1.xpose.msra.mxu0 0.0
  %1548 = vmatprep.subr.mxu0 0.0
  %1549 = vmatpush1.xpose.msra.mxu0 0.0
  %1550 = vmatprep.subr.mxu0 0.0
  %1551 = vmatpush1.xpose.msra.mxu0 0.0
  %1552 = vmatprep.subr.mxu0 0.0
  %1553 = vmatpush1.xpose.msra.mxu0 0.0
  %1554 = vmatprep.subr.mxu0 0.0
  %1555 = vmatpush1.xpose.msra.mxu0 0.0
  %1556 = vmatprep.subr.mxu0 0.0
  %1557 = vmatpush1.xpose.msra.mxu0 0.0
  %v1558 = vand.u32 %v21, 4294901760
  %v1559 = vsub.f32 %v21, %v1558
  %v1560 = vand.u32 %v1559, 4294901760
  %v1561 = vsub.f32 %v1559, %v1560
  %v1562 = vand.u32 %v1561, 4294901760
  %1563 = vmatprep.subr.mxu0 %v1562
  %v1564 = vand.u32 %v20, 4294901760
  %v1565 = vsub.f32 %v20, %v1564
  %v1566 = vand.u32 %v1565, 4294901760
  %v1567 = vsub.f32 %v1565, %v1566
  %v1568 = vand.u32 %v1567, 4294901760
  %1569 = vmatpush1.xpose.msra.mxu0 %v1568
  %1570 = vmatprep.subr.mxu0 0.0
  %1571 = vmatpush2.xpose.msra.mxu0 0.0
  %1572 = vmatprep.subr.mxu0 0.0
  %1573 = vmatpush2.xpose.msra.mxu0 0.0
  %1574 = vmatprep.subr.mxu0 0.0
  %1575 = vmatpush2.xpose.msra.mxu0 0.0
  %1576 = vmatprep.subr.mxu0 0.0
  %1577 = vmatpush2.xpose.msra.mxu0 0.0
  %1578 = vmatprep.subr.mxu0 0.0
  %1579 = vmatpush2.xpose.msra.mxu0 0.0
  %1580 = vmatprep.subr.mxu0 0.0
  %1581 = vmatpush2.xpose.msra.mxu0 0.0
  %1582 = vmatprep.subr.mxu0 0.0
  %1583 = vmatpush2.xpose.msra.mxu0 0.0
  %1584 = vmatprep.subr.mxu0 0.0
  %1585 = vmatpush2.xpose.msra.mxu0 0.0
  %1586 = vmatprep.subr.mxu0 0.0
  %1587 = vmatpush2.xpose.msra.mxu0 0.0
  %1588 = vmatprep.subr.mxu0 0.0
  %1589 = vmatpush2.xpose.msra.mxu0 0.0
  %1590 = vmatprep.subr.mxu0 0.0
  %1591 = vmatpush2.xpose.msra.mxu0 0.0
  %1592 = vmatprep.subr.mxu0 0.0
  %1593 = vmatpush2.xpose.msra.mxu0 0.0
  %1594 = vmatprep.subr.mxu0 0.0
  %1595 = vmatpush2.xpose.msra.mxu0 0.0
  %1596 = vmatprep.subr.mxu0 0.0
  %1597 = vmatpush2.xpose.msra.mxu0 0.0
  %1598 = vmatprep.subr.mxu0 0.0
  %1599 = vmatpush2.xpose.msra.mxu0 0.0
  %1600 = vmatprep.subr.mxu0 0.0
  %1601 = vmatpush2.xpose.msra.mxu0 0.0
  %v1602 = vand.u32 %v21, 4294901760
  %1603 = vmatprep.mubr.f32.mxu0 %v1602
  %v1604 = vand.u32 %v20, 4294901760
  %1605 = vmatmul.mubr.f32.gmra.mxu0 %v1604
  %v1606 = vpop.f32.mrf.mxu0
  %v1607 = vadd.f32 %v1525, %v1606
  %v1608 = vpop.f32.mrf.mxu0
  %1609 = vdwg.mxu0
  %1610 = vmatprep.subr.mxu0 0.0
  %1611 = vmatpush1.xpose.msra.mxu0 0.0
  %1612 = vmatprep.subr.mxu0 0.0
  %1613 = vmatpush1.xpose.msra.mxu0 0.0
  %1614 = vmatprep.subr.mxu0 0.0
  %1615 = vmatpush1.xpose.msra.mxu0 0.0
  %1616 = vmatprep.subr.mxu0 0.0
  %1617 = vmatpush1.xpose.msra.mxu0 0.0
  %1618 = vmatprep.subr.mxu0 0.0
  %1619 = vmatpush1.xpose.msra.mxu0 0.0
  %1620 = vmatprep.subr.mxu0 0.0
  %1621 = vmatpush1.xpose.msra.mxu0 0.0
  %1622 = vmatprep.subr.mxu0 0.0
  %1623 = vmatpush1.xpose.msra.mxu0 0.0
  %1624 = vmatprep.subr.mxu0 0.0
  %1625 = vmatpush1.xpose.msra.mxu0 0.0
  %1626 = vmatprep.subr.mxu0 0.0
  %1627 = vmatpush1.xpose.msra.mxu0 0.0
  %1628 = vmatprep.subr.mxu0 0.0
  %1629 = vmatpush1.xpose.msra.mxu0 0.0
  %1630 = vmatprep.subr.mxu0 0.0
  %1631 = vmatpush1.xpose.msra.mxu0 0.0
  %1632 = vmatprep.subr.mxu0 0.0
  %1633 = vmatpush1.xpose.msra.mxu0 0.0
  %1634 = vmatprep.subr.mxu0 0.0
  %1635 = vmatpush1.xpose.msra.mxu0 0.0
  %1636 = vmatprep.subr.mxu0 0.0
  %1637 = vmatpush1.xpose.msra.mxu0 0.0
  %1638 = vmatprep.subr.mxu0 0.0
  %1639 = vmatpush1.xpose.msra.mxu0 0.0
  %v1640 = vand.u32 %v21, 4294901760
  %v1641 = vsub.f32 %v21, %v1640
  %1642 = vmatprep.subr.mxu0 %v1641
  %v1643 = vand.u32 %v20, 4294901760
  %v1644 = vsub.f32 %v20, %v1643
  %1645 = vmatpush1.xpose.msra.mxu0 %v1644
  %1646 = vmatprep.subr.mxu0 0.0
  %1647 = vmatpush2.xpose.msra.mxu0 0.0
  %1648 = vmatprep.subr.mxu0 0.0
  %1649 = vmatpush2.xpose.msra.mxu0 0.0
  %1650 = vmatprep.subr.mxu0 0.0
  %1651 = vmatpush2.xpose.msra.mxu0 0.0
  %1652 = vmatprep.subr.mxu0 0.0
  %1653 = vmatpush2.xpose.msra.mxu0 0.0
  %1654 = vmatprep.subr.mxu0 0.0
  %1655 = vmatpush2.xpose.msra.mxu0 0.0
  %1656 = vmatprep.subr.mxu0 0.0
  %1657 = vmatpush2.xpose.msra.mxu0 0.0
  %1658 = vmatprep.subr.mxu0 0.0
  %1659 = vmatpush2.xpose.msra.mxu0 0.0
  %1660 = vmatprep.subr.mxu0 0.0
  %1661 = vmatpush2.xpose.msra.mxu0 0.0
  %1662 = vmatprep.subr.mxu0 0.0
  %1663 = vmatpush2.xpose.msra.mxu0 0.0
  %1664 = vmatprep.subr.mxu0 0.0
  %1665 = vmatpush2.xpose.msra.mxu0 0.0
  %1666 = vmatprep.subr.mxu0 0.0
  %1667 = vmatpush2.xpose.msra.mxu0 0.0
  %1668 = vmatprep.subr.mxu0 0.0
  %1669 = vmatpush2.xpose.msra.mxu0 0.0
  %1670 = vmatprep.subr.mxu0 0.0
  %1671 = vmatpush2.xpose.msra.mxu0 0.0
  %1672 = vmatprep.subr.mxu0 0.0
  %1673 = vmatpush2.xpose.msra.mxu0 0.0
  %1674 = vmatprep.subr.mxu0 0.0
  %1675 = vmatpush2.xpose.msra.mxu0 0.0
  %1676 = vmatprep.subr.mxu0 0.0
  %1677 = vmatpush2.xpose.msra.mxu0 0.0
  %v1678 = vand.u32 %v21, 4294901760
  %v1679 = vsub.f32 %v21, %v1678
  %1680 = vmatprep.mubr.f32.mxu0 %v1679
  %v1681 = vand.u32 %v20, 4294901760
  %v1682 = vsub.f32 %v20, %v1681
  %1683 = vmatmul.mubr.f32.gmra.mxu0 %v1682
  %v1684 = vpop.f32.mrf.mxu0
  %v1685 = vadd.f32 %v1607, %v1684
  %v1686 = vpop.f32.mrf.mxu0
  %1687 = vdwg.mxu0
  %1688 = vmatprep.subr.mxu0 0.0
  %1689 = vmatpush1.xpose.msra.mxu0 0.0
  %1690 = vmatprep.subr.mxu0 0.0
  %1691 = vmatpush1.xpose.msra.mxu0 0.0
  %1692 = vmatprep.subr.mxu0 0.0
  %1693 = vmatpush1.xpose.msra.mxu0 0.0
  %1694 = vmatprep.subr.mxu0 0.0
  %1695 = vmatpush1.xpose.msra.mxu0 0.0
  %1696 = vmatprep.subr.mxu0 0.0
  %1697 = vmatpush1.xpose.msra.mxu0 0.0
  %1698 = vmatprep.subr.mxu0 0.0
  %1699 = vmatpush1.xpose.msra.mxu0 0.0
  %1700 = vmatprep.subr.mxu0 0.0
  %1701 = vmatpush1.xpose.msra.mxu0 0.0
  %1702 = vmatprep.subr.mxu0 0.0
  %1703 = vmatpush1.xpose.msra.mxu0 0.0
  %1704 = vmatprep.subr.mxu0 0.0
  %1705 = vmatpush1.xpose.msra.mxu0 0.0
  %1706 = vmatprep.subr.mxu0 0.0
  %1707 = vmatpush1.xpose.msra.mxu0 0.0
  %1708 = vmatprep.subr.mxu0 0.0
  %1709 = vmatpush1.xpose.msra.mxu0 0.0
  %1710 = vmatprep.subr.mxu0 0.0
  %1711 = vmatpush1.xpose.msra.mxu0 0.0
  %1712 = vmatprep.subr.mxu0 0.0
  %1713 = vmatpush1.xpose.msra.mxu0 0.0
  %1714 = vmatprep.subr.mxu0 0.0
  %1715 = vmatpush1.xpose.msra.mxu0 0.0
  %1716 = vmatprep.subr.mxu0 0.0
  %1717 = vmatpush1.xpose.msra.mxu0 0.0
  %v1718 = vand.u32 %v21, 4294901760
  %1719 = vmatprep.subr.mxu0 %v1718
  %v1720 = vand.u32 %v20, 4294901760
  %1721 = vmatpush1.xpose.msra.mxu0 %v1720
  %1722 = vmatprep.subr.mxu0 0.0
  %1723 = vmatpush2.xpose.msra.mxu0 0.0
  %1724 = vmatprep.subr.mxu0 0.0
  %1725 = vmatpush2.xpose.msra.mxu0 0.0
  %1726 = vmatprep.subr.mxu0 0.0
  %1727 = vmatpush2.xpose.msra.mxu0 0.0
  %1728 = vmatprep.subr.mxu0 0.0
  %1729 = vmatpush2.xpose.msra.mxu0 0.0
  %1730 = vmatprep.subr.mxu0 0.0
  %1731 = vmatpush2.xpose.msra.mxu0 0.0
  %1732 = vmatprep.subr.mxu0 0.0
  %1733 = vmatpush2.xpose.msra.mxu0 0.0
  %1734 = vmatprep.subr.mxu0 0.0
  %1735 = vmatpush2.xpose.msra.mxu0 0.0
  %1736 = vmatprep.subr.mxu0 0.0
  %1737 = vmatpush2.xpose.msra.mxu0 0.0
  %1738 = vmatprep.subr.mxu0 0.0
  %1739 = vmatpush2.xpose.msra.mxu0 0.0
  %1740 = vmatprep.subr.mxu0 0.0
  %1741 = vmatpush2.xpose.msra.mxu0 0.0
  %1742 = vmatprep.subr.mxu0 0.0
  %1743 = vmatpush2.xpose.msra.mxu0 0.0
  %1744 = vmatprep.subr.mxu0 0.0
  %1745 = vmatpush2.xpose.msra.mxu0 0.0
  %1746 = vmatprep.subr.mxu0 0.0
  %1747 = vmatpush2.xpose.msra.mxu0 0.0
  %1748 = vmatprep.subr.mxu0 0.0
  %1749 = vmatpush2.xpose.msra.mxu0 0.0
  %1750 = vmatprep.subr.mxu0 0.0
  %1751 = vmatpush2.xpose.msra.mxu0 0.0
  %1752 = vmatprep.subr.mxu0 0.0
  %1753 = vmatpush2.xpose.msra.mxu0 0.0
  %v1754 = vand.u32 %v21, 4294901760
  %v1755 = vsub.f32 %v21, %v1754
  %v1756 = vand.u32 %v1755, 4294901760
  %1757 = vmatprep.mubr.f32.mxu0 %v1756
  %v1758 = vand.u32 %v20, 4294901760
  %v1759 = vsub.f32 %v20, %v1758
  %v1760 = vand.u32 %v1759, 4294901760
  %1761 = vmatmul.mubr.f32.gmra.mxu0 %v1760
  %v1762 = vpop.f32.mrf.mxu0
  %v1763 = vadd.f32 %v1685, %v1762
  %v1764 = vpop.f32.mrf.mxu0
  %1765 = vdwg.mxu0
  %1766 = vmatprep.subr.mxu0 0.0
  %1767 = vmatpush1.xpose.msra.mxu0 0.0
  %1768 = vmatprep.subr.mxu0 0.0
  %1769 = vmatpush1.xpose.msra.mxu0 0.0
  %1770 = vmatprep.subr.mxu0 0.0
  %1771 = vmatpush1.xpose.msra.mxu0 0.0
  %1772 = vmatprep.subr.mxu0 0.0
  %1773 = vmatpush1.xpose.msra.mxu0 0.0
  %1774 = vmatprep.subr.mxu0 0.0
  %1775 = vmatpush1.xpose.msra.mxu0 0.0
  %1776 = vmatprep.subr.mxu0 0.0
  %1777 = vmatpush1.xpose.msra.mxu0 0.0
  %1778 = vmatprep.subr.mxu0 0.0
  %1779 = vmatpush1.xpose.msra.mxu0 0.0
  %1780 = vmatprep.subr.mxu0 0.0
  %1781 = vmatpush1.xpose.msra.mxu0 0.0
  %1782 = vmatprep.subr.mxu0 0.0
  %1783 = vmatpush1.xpose.msra.mxu0 0.0
  %1784 = vmatprep.subr.mxu0 0.0
  %1785 = vmatpush1.xpose.msra.mxu0 0.0
  %1786 = vmatprep.subr.mxu0 0.0
  %1787 = vmatpush1.xpose.msra.mxu0 0.0
  %1788 = vmatprep.subr.mxu0 0.0
  %1789 = vmatpush1.xpose.msra.mxu0 0.0
  %1790 = vmatprep.subr.mxu0 0.0
  %1791 = vmatpush1.xpose.msra.mxu0 0.0
  %1792 = vmatprep.subr.mxu0 0.0
  %1793 = vmatpush1.xpose.msra.mxu0 0.0
  %1794 = vmatprep.subr.mxu0 0.0
  %1795 = vmatpush1.xpose.msra.mxu0 0.0
  %v1796 = vand.u32 %v21, 4294901760
  %v1797 = vsub.f32 %v21, %v1796
  %v1798 = vand.u32 %v1797, 4294901760
  %1799 = vmatprep.subr.mxu0 %v1798
  %v1800 = vand.u32 %v20, 4294901760
  %v1801 = vsub.f32 %v20, %v1800
  %v1802 = vand.u32 %v1801, 4294901760
  %1803 = vmatpush1.xpose.msra.mxu0 %v1802
  %1804 = vmatprep.subr.mxu0 0.0
  %1805 = vmatpush2.xpose.msra.mxu0 0.0
  %1806 = vmatprep.subr.mxu0 0.0
  %1807 = vmatpush2.xpose.msra.mxu0 0.0
  %1808 = vmatprep.subr.mxu0 0.0
  %1809 = vmatpush2.xpose.msra.mxu0 0.0
  %1810 = vmatprep.subr.mxu0 0.0
  %1811 = vmatpush2.xpose.msra.mxu0 0.0
  %1812 = vmatprep.subr.mxu0 0.0
  %1813 = vmatpush2.xpose.msra.mxu0 0.0
  %1814 = vmatprep.subr.mxu0 0.0
  %1815 = vmatpush2.xpose.msra.mxu0 0.0
  %1816 = vmatprep.subr.mxu0 0.0
  %1817 = vmatpush2.xpose.msra.mxu0 0.0
  %1818 = vmatprep.subr.mxu0 0.0
  %1819 = vmatpush2.xpose.msra.mxu0 0.0
  %1820 = vmatprep.subr.mxu0 0.0
  %1821 = vmatpush2.xpose.msra.mxu0 0.0
  %1822 = vmatprep.subr.mxu0 0.0
  %1823 = vmatpush2.xpose.msra.mxu0 0.0
  %1824 = vmatprep.subr.mxu0 0.0
  %1825 = vmatpush2.xpose.msra.mxu0 0.0
  %1826 = vmatprep.subr.mxu0 0.0
  %1827 = vmatpush2.xpose.msra.mxu0 0.0
  %1828 = vmatprep.subr.mxu0 0.0
  %1829 = vmatpush2.xpose.msra.mxu0 0.0
  %1830 = vmatprep.subr.mxu0 0.0
  %1831 = vmatpush2.xpose.msra.mxu0 0.0
  %1832 = vmatprep.subr.mxu0 0.0
  %1833 = vmatpush2.xpose.msra.mxu0 0.0
  %1834 = vmatprep.subr.mxu0 0.0
  %1835 = vmatpush2.xpose.msra.mxu0 0.0
  %v1836 = vand.u32 %v21, 4294901760
  %1837 = vmatprep.mubr.f32.mxu0 %v1836
  %v1838 = vand.u32 %v20, 4294901760
  %1839 = vmatmul.mubr.f32.gmra.mxu0 %v1838
  %v1840 = vpop.f32.mrf.mxu0
  %v1841 = vadd.f32 %v1763, %v1840
  %v1842 = vpop.f32.mrf.mxu0
  %1843 = vdwg.mxu0
  %1844 = vmatprep.subr.mxu0 0.0
  %1845 = vmatpush1.xpose.msra.mxu0 0.0
  %1846 = vmatprep.subr.mxu0 0.0
  %1847 = vmatpush1.xpose.msra.mxu0 0.0
  %1848 = vmatprep.subr.mxu0 0.0
  %1849 = vmatpush1.xpose.msra.mxu0 0.0
  %1850 = vmatprep.subr.mxu0 0.0
  %1851 = vmatpush1.xpose.msra.mxu0 0.0
  %1852 = vmatprep.subr.mxu0 0.0
  %1853 = vmatpush1.xpose.msra.mxu0 0.0
  %1854 = vmatprep.subr.mxu0 0.0
  %1855 = vmatpush1.xpose.msra.mxu0 0.0
  %1856 = vmatprep.subr.mxu0 0.0
  %1857 = vmatpush1.xpose.msra.mxu0 0.0
  %1858 = vmatprep.subr.mxu0 0.0
  %1859 = vmatpush1.xpose.msra.mxu0 0.0
  %1860 = vmatprep.subr.mxu0 0.0
  %1861 = vmatpush1.xpose.msra.mxu0 0.0
  %1862 = vmatprep.subr.mxu0 0.0
  %1863 = vmatpush1.xpose.msra.mxu0 0.0
  %1864 = vmatprep.subr.mxu0 0.0
  %1865 = vmatpush1.xpose.msra.mxu0 0.0
  %1866 = vmatprep.subr.mxu0 0.0
  %1867 = vmatpush1.xpose.msra.mxu0 0.0
  %1868 = vmatprep.subr.mxu0 0.0
  %1869 = vmatpush1.xpose.msra.mxu0 0.0
  %1870 = vmatprep.subr.mxu0 0.0
  %1871 = vmatpush1.xpose.msra.mxu0 0.0
  %1872 = vmatprep.subr.mxu0 0.0
  %1873 = vmatpush1.xpose.msra.mxu0 0.0
  %v1874 = vand.u32 %v21, 4294901760
  %1875 = vmatprep.subr.mxu0 %v1874
  %v1876 = vand.u32 %v20, 4294901760
  %1877 = vmatpush1.xpose.msra.mxu0 %v1876
  %1878 = vmatprep.subr.mxu0 0.0
  %1879 = vmatpush2.xpose.msra.mxu0 0.0
  %1880 = vmatprep.subr.mxu0 0.0
  %1881 = vmatpush2.xpose.msra.mxu0 0.0
  %1882 = vmatprep.subr.mxu0 0.0
  %1883 = vmatpush2.xpose.msra.mxu0 0.0
  %1884 = vmatprep.subr.mxu0 0.0
  %1885 = vmatpush2.xpose.msra.mxu0 0.0
  %1886 = vmatprep.subr.mxu0 0.0
  %1887 = vmatpush2.xpose.msra.mxu0 0.0
  %1888 = vmatprep.subr.mxu0 0.0
  %1889 = vmatpush2.xpose.msra.mxu0 0.0
  %1890 = vmatprep.subr.mxu0 0.0
  %1891 = vmatpush2.xpose.msra.mxu0 0.0
  %1892 = vmatprep.subr.mxu0 0.0
  %1893 = vmatpush2.xpose.msra.mxu0 0.0
  %1894 = vmatprep.subr.mxu0 0.0
  %1895 = vmatpush2.xpose.msra.mxu0 0.0
  %1896 = vmatprep.subr.mxu0 0.0
  %1897 = vmatpush2.xpose.msra.mxu0 0.0
  %1898 = vmatprep.subr.mxu0 0.0
  %1899 = vmatpush2.xpose.msra.mxu0 0.0
  %1900 = vmatprep.subr.mxu0 0.0
  %1901 = vmatpush2.xpose.msra.mxu0 0.0
  %1902 = vmatprep.subr.mxu0 0.0
  %1903 = vmatpush2.xpose.msra.mxu0 0.0
  %1904 = vmatprep.subr.mxu0 0.0
  %1905 = vmatpush2.xpose.msra.mxu0 0.0
  %1906 = vmatprep.subr.mxu0 0.0
  %1907 = vmatpush2.xpose.msra.mxu0 0.0
  %1908 = vmatprep.subr.mxu0 0.0
  %1909 = vmatpush2.xpose.msra.mxu0 0.0
  %v1910 = vand.u32 %v21, 4294901760
  %1911 = vmatprep.mubr.f32.mxu0 %v1910
  %v1912 = vand.u32 %v20, 4294901760
  %1913 = vmatmul.mubr.f32.gmra.mxu0 %v1912
  %v1914 = vpop.f32.mrf.mxu0
  %v1915 = vadd.f32 %v1841, %v1914
  %v1916 = vpop.f32.mrf.mxu0
  %1917 = vdwg.mxu0
  %1918 = vmatprep.subr.mxu0 0.0
  %1919 = vmatpush1.xpose.msra.mxu0 0.0
  %1920 = vmatprep.subr.mxu0 0.0
  %1921 = vmatpush1.xpose.msra.mxu0 0.0
  %1922 = vmatprep.subr.mxu0 0.0
  %1923 = vmatpush1.xpose.msra.mxu0 0.0
  %1924 = vmatprep.subr.mxu0 0.0
  %1925 = vmatpush1.xpose.msra.mxu0 0.0
  %1926 = vmatprep.subr.mxu0 0.0
  %1927 = vmatpush1.xpose.msra.mxu0 0.0
  %1928 = vmatprep.subr.mxu0 0.0
  %1929 = vmatpush1.xpose.msra.mxu0 0.0
  %1930 = vmatprep.subr.mxu0 0.0
  %1931 = vmatpush1.xpose.msra.mxu0 0.0
  %1932 = vmatprep.subr.mxu0 0.0
  %1933 = vmatpush1.xpose.msra.mxu0 0.0
  %1934 = vmatprep.subr.mxu0 0.0
  %1935 = vmatpush1.xpose.msra.mxu0 0.0
  %1936 = vmatprep.subr.mxu0 0.0
  %1937 = vmatpush1.xpose.msra.mxu0 0.0
  %1938 = vmatprep.subr.mxu0 0.0
  %1939 = vmatpush1.xpose.msra.mxu0 0.0
  %1940 = vmatprep.subr.mxu0 0.0
  %1941 = vmatpush1.xpose.msra.mxu0 0.0
  %1942 = vmatprep.subr.mxu0 0.0
  %1943 = vmatpush1.xpose.msra.mxu0 0.0
  %1944 = vmatprep.subr.mxu0 0.0
  %1945 = vmatpush1.xpose.msra.mxu0 0.0
  %1946 = vmatprep.subr.mxu0 0.0
  %1947 = vmatpush1.xpose.msra.mxu0 0.0
  %v1948 = vand.u32 %v23, 4294901760
  %1949 = vmatprep.subr.mxu0 %v1948
  %v1950 = vand.u32 %v22, 4294901760
  %1951 = vmatpush1.xpose.msra.mxu0 %v1950
  %1952 = vmatprep.subr.mxu0 0.0
  %1953 = vmatpush2.xpose.msra.mxu0 0.0
  %1954 = vmatprep.subr.mxu0 0.0
  %1955 = vmatpush2.xpose.msra.mxu0 0.0
  %1956 = vmatprep.subr.mxu0 0.0
  %1957 = vmatpush2.xpose.msra.mxu0 0.0
  %1958 = vmatprep.subr.mxu0 0.0
  %1959 = vmatpush2.xpose.msra.mxu0 0.0
  %1960 = vmatprep.subr.mxu0 0.0
  %1961 = vmatpush2.xpose.msra.mxu0 0.0
  %1962 = vmatprep.subr.mxu0 0.0
  %1963 = vmatpush2.xpose.msra.mxu0 0.0
  %1964 = vmatprep.subr.mxu0 0.0
  %1965 = vmatpush2.xpose.msra.mxu0 0.0
  %1966 = vmatprep.subr.mxu0 0.0
  %1967 = vmatpush2.xpose.msra.mxu0 0.0
  %1968 = vmatprep.subr.mxu0 0.0
  %1969 = vmatpush2.xpose.msra.mxu0 0.0
  %1970 = vmatprep.subr.mxu0 0.0
  %1971 = vmatpush2.xpose.msra.mxu0 0.0
  %1972 = vmatprep.subr.mxu0 0.0
  %1973 = vmatpush2.xpose.msra.mxu0 0.0
  %1974 = vmatprep.subr.mxu0 0.0
  %1975 = vmatpush2.xpose.msra.mxu0 0.0
  %1976 = vmatprep.subr.mxu0 0.0
  %1977 = vmatpush2.xpose.msra.mxu0 0.0
  %1978 = vmatprep.subr.mxu0 0.0
  %1979 = vmatpush2.xpose.msra.mxu0 0.0
  %1980 = vmatprep.subr.mxu0 0.0
  %1981 = vmatpush2.xpose.msra.mxu0 0.0
  %1982 = vmatprep.subr.mxu0 0.0
  %1983 = vmatpush2.xpose.msra.mxu0 0.0
  %v1984 = vand.u32 %v23, 4294901760
  %v1985 = vsub.f32 %v23, %v1984
  %v1986 = vand.u32 %v1985, 4294901760
  %v1987 = vsub.f32 %v1985, %v1986
  %v1988 = vand.u32 %v1987, 4294901760
  %1989 = vmatprep.mubr.f32.mxu0 %v1988
  %v1990 = vand.u32 %v22, 4294901760
  %v1991 = vsub.f32 %v22, %v1990
  %v1992 = vand.u32 %v1991, 4294901760
  %v1993 = vsub.f32 %v1991, %v1992
  %v1994 = vand.u32 %v1993, 4294901760
  %1995 = vmatmul.mubr.f32.gmra.mxu0 %v1994
  %v1996 = vpop.f32.mrf.mxu0
  %v1997 = vadd.f32 0.0, %v1996
  %v1998 = vpop.f32.mrf.mxu0
  %1999 = vdwg.mxu0
  %2000 = vmatprep.subr.mxu0 0.0
  %2001 = vmatpush1.xpose.msra.mxu0 0.0
  %2002 = vmatprep.subr.mxu0 0.0
  %2003 = vmatpush1.xpose.msra.mxu0 0.0
  %2004 = vmatprep.subr.mxu0 0.0
  %2005 = vmatpush1.xpose.msra.mxu0 0.0
  %2006 = vmatprep.subr.mxu0 0.0
  %2007 = vmatpush1.xpose.msra.mxu0 0.0
  %2008 = vmatprep.subr.mxu0 0.0
  %2009 = vmatpush1.xpose.msra.mxu0 0.0
  %2010 = vmatprep.subr.mxu0 0.0
  %2011 = vmatpush1.xpose.msra.mxu0 0.0
  %2012 = vmatprep.subr.mxu0 0.0
  %2013 = vmatpush1.xpose.msra.mxu0 0.0
  %2014 = vmatprep.subr.mxu0 0.0
  %2015 = vmatpush1.xpose.msra.mxu0 0.0
  %2016 = vmatprep.subr.mxu0 0.0
  %2017 = vmatpush1.xpose.msra.mxu0 0.0
  %2018 = vmatprep.subr.mxu0 0.0
  %2019 = vmatpush1.xpose.msra.mxu0 0.0
  %2020 = vmatprep.subr.mxu0 0.0
  %2021 = vmatpush1.xpose.msra.mxu0 0.0
  %2022 = vmatprep.subr.mxu0 0.0
  %2023 = vmatpush1.xpose.msra.mxu0 0.0
  %2024 = vmatprep.subr.mxu0 0.0
  %2025 = vmatpush1.xpose.msra.mxu0 0.0
  %2026 = vmatprep.subr.mxu0 0.0
  %2027 = vmatpush1.xpose.msra.mxu0 0.0
  %2028 = vmatprep.subr.mxu0 0.0
  %2029 = vmatpush1.xpose.msra.mxu0 0.0
  %v2030 = vand.u32 %v23, 4294901760
  %v2031 = vsub.f32 %v23, %v2030
  %v2032 = vand.u32 %v2031, 4294901760
  %v2033 = vsub.f32 %v2031, %v2032
  %v2034 = vand.u32 %v2033, 4294901760
  %2035 = vmatprep.subr.mxu0 %v2034
  %v2036 = vand.u32 %v22, 4294901760
  %v2037 = vsub.f32 %v22, %v2036
  %v2038 = vand.u32 %v2037, 4294901760
  %v2039 = vsub.f32 %v2037, %v2038
  %v2040 = vand.u32 %v2039, 4294901760
  %2041 = vmatpush1.xpose.msra.mxu0 %v2040
  %2042 = vmatprep.subr.mxu0 0.0
  %2043 = vmatpush2.xpose.msra.mxu0 0.0
  %2044 = vmatprep.subr.mxu0 0.0
  %2045 = vmatpush2.xpose.msra.mxu0 0.0
  %2046 = vmatprep.subr.mxu0 0.0
  %2047 = vmatpush2.xpose.msra.mxu0 0.0
  %2048 = vmatprep.subr.mxu0 0.0
  %2049 = vmatpush2.xpose.msra.mxu0 0.0
  %2050 = vmatprep.subr.mxu0 0.0
  %2051 = vmatpush2.xpose.msra.mxu0 0.0
  %2052 = vmatprep.subr.mxu0 0.0
  %2053 = vmatpush2.xpose.msra.mxu0 0.0
  %2054 = vmatprep.subr.mxu0 0.0
  %2055 = vmatpush2.xpose.msra.mxu0 0.0
  %2056 = vmatprep.subr.mxu0 0.0
  %2057 = vmatpush2.xpose.msra.mxu0 0.0
  %2058 = vmatprep.subr.mxu0 0.0
  %2059 = vmatpush2.xpose.msra.mxu0 0.0
  %2060 = vmatprep.subr.mxu0 0.0
  %2061 = vmatpush2.xpose.msra.mxu0 0.0
  %2062 = vmatprep.subr.mxu0 0.0
  %2063 = vmatpush2.xpose.msra.mxu0 0.0
  %2064 = vmatprep.subr.mxu0 0.0
  %2065 = vmatpush2.xpose.msra.mxu0 0.0
  %2066 = vmatprep.subr.mxu0 0.0
  %2067 = vmatpush2.xpose.msra.mxu0 0.0
  %2068 = vmatprep.subr.mxu0 0.0
  %2069 = vmatpush2.xpose.msra.mxu0 0.0
  %2070 = vmatprep.subr.mxu0 0.0
  %2071 = vmatpush2.xpose.msra.mxu0 0.0
  %2072 = vmatprep.subr.mxu0 0.0
  %2073 = vmatpush2.xpose.msra.mxu0 0.0
  %v2074 = vand.u32 %v23, 4294901760
  %2075 = vmatprep.mubr.f32.mxu0 %v2074
  %v2076 = vand.u32 %v22, 4294901760
  %2077 = vmatmul.mubr.f32.gmra.mxu0 %v2076
  %v2078 = vpop.f32.mrf.mxu0
  %v2079 = vadd.f32 %v1997, %v2078
  %v2080 = vpop.f32.mrf.mxu0
  %2081 = vdwg.mxu0
  %2082 = vmatprep.subr.mxu0 0.0
  %2083 = vmatpush1.xpose.msra.mxu0 0.0
  %2084 = vmatprep.subr.mxu0 0.0
  %2085 = vmatpush1.xpose.msra.mxu0 0.0
  %2086 = vmatprep.subr.mxu0 0.0
  %2087 = vmatpush1.xpose.msra.mxu0 0.0
  %2088 = vmatprep.subr.mxu0 0.0
  %2089 = vmatpush1.xpose.msra.mxu0 0.0
  %2090 = vmatprep.subr.mxu0 0.0
  %2091 = vmatpush1.xpose.msra.mxu0 0.0
  %2092 = vmatprep.subr.mxu0 0.0
  %2093 = vmatpush1.xpose.msra.mxu0 0.0
  %2094 = vmatprep.subr.mxu0 0.0
  %2095 = vmatpush1.xpose.msra.mxu0 0.0
  %2096 = vmatprep.subr.mxu0 0.0
  %2097 = vmatpush1.xpose.msra.mxu0 0.0
  %2098 = vmatprep.subr.mxu0 0.0
  %2099 = vmatpush1.xpose.msra.mxu0 0.0
  %2100 = vmatprep.subr.mxu0 0.0
  %2101 = vmatpush1.xpose.msra.mxu0 0.0
  %2102 = vmatprep.subr.mxu0 0.0
  %2103 = vmatpush1.xpose.msra.mxu0 0.0
  %2104 = vmatprep.subr.mxu0 0.0
  %2105 = vmatpush1.xpose.msra.mxu0 0.0
  %2106 = vmatprep.subr.mxu0 0.0
  %2107 = vmatpush1.xpose.msra.mxu0 0.0
  %2108 = vmatprep.subr.mxu0 0.0
  %2109 = vmatpush1.xpose.msra.mxu0 0.0
  %2110 = vmatprep.subr.mxu0 0.0
  %2111 = vmatpush1.xpose.msra.mxu0 0.0
  %v2112 = vand.u32 %v23, 4294901760
  %v2113 = vsub.f32 %v23, %v2112
  %2114 = vmatprep.subr.mxu0 %v2113
  %v2115 = vand.u32 %v22, 4294901760
  %v2116 = vsub.f32 %v22, %v2115
  %2117 = vmatpush1.xpose.msra.mxu0 %v2116
  %2118 = vmatprep.subr.mxu0 0.0
  %2119 = vmatpush2.xpose.msra.mxu0 0.0
  %2120 = vmatprep.subr.mxu0 0.0
  %2121 = vmatpush2.xpose.msra.mxu0 0.0
  %2122 = vmatprep.subr.mxu0 0.0
  %2123 = vmatpush2.xpose.msra.mxu0 0.0
  %2124 = vmatprep.subr.mxu0 0.0
  %2125 = vmatpush2.xpose.msra.mxu0 0.0
  %2126 = vmatprep.subr.mxu0 0.0
  %2127 = vmatpush2.xpose.msra.mxu0 0.0
  %2128 = vmatprep.subr.mxu0 0.0
  %2129 = vmatpush2.xpose.msra.mxu0 0.0
  %2130 = vmatprep.subr.mxu0 0.0
  %2131 = vmatpush2.xpose.msra.mxu0 0.0
  %2132 = vmatprep.subr.mxu0 0.0
  %2133 = vmatpush2.xpose.msra.mxu0 0.0
  %2134 = vmatprep.subr.mxu0 0.0
  %2135 = vmatpush2.xpose.msra.mxu0 0.0
  %2136 = vmatprep.subr.mxu0 0.0
  %2137 = vmatpush2.xpose.msra.mxu0 0.0
  %2138 = vmatprep.subr.mxu0 0.0
  %2139 = vmatpush2.xpose.msra.mxu0 0.0
  %2140 = vmatprep.subr.mxu0 0.0
  %2141 = vmatpush2.xpose.msra.mxu0 0.0
  %2142 = vmatprep.subr.mxu0 0.0
  %2143 = vmatpush2.xpose.msra.mxu0 0.0
  %2144 = vmatprep.subr.mxu0 0.0
  %2145 = vmatpush2.xpose.msra.mxu0 0.0
  %2146 = vmatprep.subr.mxu0 0.0
  %2147 = vmatpush2.xpose.msra.mxu0 0.0
  %2148 = vmatprep.subr.mxu0 0.0
  %2149 = vmatpush2.xpose.msra.mxu0 0.0
  %v2150 = vand.u32 %v23, 4294901760
  %v2151 = vsub.f32 %v23, %v2150
  %2152 = vmatprep.mubr.f32.mxu0 %v2151
  %v2153 = vand.u32 %v22, 4294901760
  %v2154 = vsub.f32 %v22, %v2153
  %2155 = vmatmul.mubr.f32.gmra.mxu0 %v2154
  %v2156 = vpop.f32.mrf.mxu0
  %v2157 = vadd.f32 %v2079, %v2156
  %v2158 = vpop.f32.mrf.mxu0
  %2159 = vdwg.mxu0
  %2160 = vmatprep.subr.mxu0 0.0
  %2161 = vmatpush1.xpose.msra.mxu0 0.0
  %2162 = vmatprep.subr.mxu0 0.0
  %2163 = vmatpush1.xpose.msra.mxu0 0.0
  %2164 = vmatprep.subr.mxu0 0.0
  %2165 = vmatpush1.xpose.msra.mxu0 0.0
  %2166 = vmatprep.subr.mxu0 0.0
  %2167 = vmatpush1.xpose.msra.mxu0 0.0
  %2168 = vmatprep.subr.mxu0 0.0
  %2169 = vmatpush1.xpose.msra.mxu0 0.0
  %2170 = vmatprep.subr.mxu0 0.0
  %2171 = vmatpush1.xpose.msra.mxu0 0.0
  %2172 = vmatprep.subr.mxu0 0.0
  %2173 = vmatpush1.xpose.msra.mxu0 0.0
  %2174 = vmatprep.subr.mxu0 0.0
  %2175 = vmatpush1.xpose.msra.mxu0 0.0
  %2176 = vmatprep.subr.mxu0 0.0
  %2177 = vmatpush1.xpose.msra.mxu0 0.0
  %2178 = vmatprep.subr.mxu0 0.0
  %2179 = vmatpush1.xpose.msra.mxu0 0.0
  %2180 = vmatprep.subr.mxu0 0.0
  %2181 = vmatpush1.xpose.msra.mxu0 0.0
  %2182 = vmatprep.subr.mxu0 0.0
  %2183 = vmatpush1.xpose.msra.mxu0 0.0
  %2184 = vmatprep.subr.mxu0 0.0
  %2185 = vmatpush1.xpose.msra.mxu0 0.0
  %2186 = vmatprep.subr.mxu0 0.0
  %2187 = vmatpush1.xpose.msra.mxu0 0.0
  %2188 = vmatprep.subr.mxu0 0.0
  %2189 = vmatpush1.xpose.msra.mxu0 0.0
  %v2190 = vand.u32 %v23, 4294901760
  %2191 = vmatprep.subr.mxu0 %v2190
  %v2192 = vand.u32 %v22, 4294901760
  %2193 = vmatpush1.xpose.msra.mxu0 %v2192
  %2194 = vmatprep.subr.mxu0 0.0
  %2195 = vmatpush2.xpose.msra.mxu0 0.0
  %2196 = vmatprep.subr.mxu0 0.0
  %2197 = vmatpush2.xpose.msra.mxu0 0.0
  %2198 = vmatprep.subr.mxu0 0.0
  %2199 = vmatpush2.xpose.msra.mxu0 0.0
  %2200 = vmatprep.subr.mxu0 0.0
  %2201 = vmatpush2.xpose.msra.mxu0 0.0
  %2202 = vmatprep.subr.mxu0 0.0
  %2203 = vmatpush2.xpose.msra.mxu0 0.0
  %2204 = vmatprep.subr.mxu0 0.0
  %2205 = vmatpush2.xpose.msra.mxu0 0.0
  %2206 = vmatprep.subr.mxu0 0.0
  %2207 = vmatpush2.xpose.msra.mxu0 0.0
  %2208 = vmatprep.subr.mxu0 0.0
  %2209 = vmatpush2.xpose.msra.mxu0 0.0
  %2210 = vmatprep.subr.mxu0 0.0
  %2211 = vmatpush2.xpose.msra.mxu0 0.0
  %2212 = vmatprep.subr.mxu0 0.0
  %2213 = vmatpush2.xpose.msra.mxu0 0.0
  %2214 = vmatprep.subr.mxu0 0.0
  %2215 = vmatpush2.xpose.msra.mxu0 0.0
  %2216 = vmatprep.subr.mxu0 0.0
  %2217 = vmatpush2.xpose.msra.mxu0 0.0
  %2218 = vmatprep.subr.mxu0 0.0
  %2219 = vmatpush2.xpose.msra.mxu0 0.0
  %2220 = vmatprep.subr.mxu0 0.0
  %2221 = vmatpush2.xpose.msra.mxu0 0.0
  %2222 = vmatprep.subr.mxu0 0.0
  %2223 = vmatpush2.xpose.msra.mxu0 0.0
  %2224 = vmatprep.subr.mxu0 0.0
  %2225 = vmatpush2.xpose.msra.mxu0 0.0
  %v2226 = vand.u32 %v23, 4294901760
  %v2227 = vsub.f32 %v23, %v2226
  %v2228 = vand.u32 %v2227, 4294901760
  %2229 = vmatprep.mubr.f32.mxu0 %v2228
  %v2230 = vand.u32 %v22, 4294901760
  %v2231 = vsub.f32 %v22, %v2230
  %v2232 = vand.u32 %v2231, 4294901760
  %2233 = vmatmul.mubr.f32.gmra.mxu0 %v2232
  %v2234 = vpop.f32.mrf.mxu0
  %v2235 = vadd.f32 %v2157, %v2234
  %v2236 = vpop.f32.mrf.mxu0
  %2237 = vdwg.mxu0
  %2238 = vmatprep.subr.mxu0 0.0
  %2239 = vmatpush1.xpose.msra.mxu0 0.0
  %2240 = vmatprep.subr.mxu0 0.0
  %2241 = vmatpush1.xpose.msra.mxu0 0.0
  %2242 = vmatprep.subr.mxu0 0.0
  %2243 = vmatpush1.xpose.msra.mxu0 0.0
  %2244 = vmatprep.subr.mxu0 0.0
  %2245 = vmatpush1.xpose.msra.mxu0 0.0
  %2246 = vmatprep.subr.mxu0 0.0
  %2247 = vmatpush1.xpose.msra.mxu0 0.0
  %2248 = vmatprep.subr.mxu0 0.0
  %2249 = vmatpush1.xpose.msra.mxu0 0.0
  %2250 = vmatprep.subr.mxu0 0.0
  %2251 = vmatpush1.xpose.msra.mxu0 0.0
  %2252 = vmatprep.subr.mxu0 0.0
  %2253 = vmatpush1.xpose.msra.mxu0 0.0
  %2254 = vmatprep.subr.mxu0 0.0
  %2255 = vmatpush1.xpose.msra.mxu0 0.0
  %2256 = vmatprep.subr.mxu0 0.0
  %2257 = vmatpush1.xpose.msra.mxu0 0.0
  %2258 = vmatprep.subr.mxu0 0.0
  %2259 = vmatpush1.xpose.msra.mxu0 0.0
  %2260 = vmatprep.subr.mxu0 0.0
  %2261 = vmatpush1.xpose.msra.mxu0 0.0
  %2262 = vmatprep.subr.mxu0 0.0
  %2263 = vmatpush1.xpose.msra.mxu0 0.0
  %2264 = vmatprep.subr.mxu0 0.0
  %2265 = vmatpush1.xpose.msra.mxu0 0.0
  %2266 = vmatprep.subr.mxu0 0.0
  %2267 = vmatpush1.xpose.msra.mxu0 0.0
  %v2268 = vand.u32 %v23, 4294901760
  %v2269 = vsub.f32 %v23, %v2268
  %v2270 = vand.u32 %v2269, 4294901760
  %2271 = vmatprep.subr.mxu0 %v2270
  %v2272 = vand.u32 %v22, 4294901760
  %v2273 = vsub.f32 %v22, %v2272
  %v2274 = vand.u32 %v2273, 4294901760
  %2275 = vmatpush1.xpose.msra.mxu0 %v2274
  %2276 = vmatprep.subr.mxu0 0.0
  %2277 = vmatpush2.xpose.msra.mxu0 0.0
  %2278 = vmatprep.subr.mxu0 0.0
  %2279 = vmatpush2.xpose.msra.mxu0 0.0
  %2280 = vmatprep.subr.mxu0 0.0
  %2281 = vmatpush2.xpose.msra.mxu0 0.0
  %2282 = vmatprep.subr.mxu0 0.0
  %2283 = vmatpush2.xpose.msra.mxu0 0.0
  %2284 = vmatprep.subr.mxu0 0.0
  %2285 = vmatpush2.xpose.msra.mxu0 0.0
  %2286 = vmatprep.subr.mxu0 0.0
  %2287 = vmatpush2.xpose.msra.mxu0 0.0
  %2288 = vmatprep.subr.mxu0 0.0
  %2289 = vmatpush2.xpose.msra.mxu0 0.0
  %2290 = vmatprep.subr.mxu0 0.0
  %2291 = vmatpush2.xpose.msra.mxu0 0.0
  %2292 = vmatprep.subr.mxu0 0.0
  %2293 = vmatpush2.xpose.msra.mxu0 0.0
  %2294 = vmatprep.subr.mxu0 0.0
  %2295 = vmatpush2.xpose.msra.mxu0 0.0
  %2296 = vmatprep.subr.mxu0 0.0
  %2297 = vmatpush2.xpose.msra.mxu0 0.0
  %2298 = vmatprep.subr.mxu0 0.0
  %2299 = vmatpush2.xpose.msra.mxu0 0.0
  %2300 = vmatprep.subr.mxu0 0.0
  %2301 = vmatpush2.xpose.msra.mxu0 0.0
  %2302 = vmatprep.subr.mxu0 0.0
  %2303 = vmatpush2.xpose.msra.mxu0 0.0
  %2304 = vmatprep.subr.mxu0 0.0
  %2305 = vmatpush2.xpose.msra.mxu0 0.0
  %2306 = vmatprep.subr.mxu0 0.0
  %2307 = vmatpush2.xpose.msra.mxu0 0.0
  %v2308 = vand.u32 %v23, 4294901760
  %2309 = vmatprep.mubr.f32.mxu0 %v2308
  %v2310 = vand.u32 %v22, 4294901760
  %2311 = vmatmul.mubr.f32.gmra.mxu0 %v2310
  %v2312 = vpop.f32.mrf.mxu0
  %v2313 = vadd.f32 %v2235, %v2312
  %v2314 = vpop.f32.mrf.mxu0
  %2315 = vdwg.mxu0
  %2316 = vmatprep.subr.mxu0 0.0
  %2317 = vmatpush1.xpose.msra.mxu0 0.0
  %2318 = vmatprep.subr.mxu0 0.0
  %2319 = vmatpush1.xpose.msra.mxu0 0.0
  %2320 = vmatprep.subr.mxu0 0.0
  %2321 = vmatpush1.xpose.msra.mxu0 0.0
  %2322 = vmatprep.subr.mxu0 0.0
  %2323 = vmatpush1.xpose.msra.mxu0 0.0
  %2324 = vmatprep.subr.mxu0 0.0
  %2325 = vmatpush1.xpose.msra.mxu0 0.0
  %2326 = vmatprep.subr.mxu0 0.0
  %2327 = vmatpush1.xpose.msra.mxu0 0.0
  %2328 = vmatprep.subr.mxu0 0.0
  %2329 = vmatpush1.xpose.msra.mxu0 0.0
  %2330 = vmatprep.subr.mxu0 0.0
  %2331 = vmatpush1.xpose.msra.mxu0 0.0
  %2332 = vmatprep.subr.mxu0 0.0
  %2333 = vmatpush1.xpose.msra.mxu0 0.0
  %2334 = vmatprep.subr.mxu0 0.0
  %2335 = vmatpush1.xpose.msra.mxu0 0.0
  %2336 = vmatprep.subr.mxu0 0.0
  %2337 = vmatpush1.xpose.msra.mxu0 0.0
  %2338 = vmatprep.subr.mxu0 0.0
  %2339 = vmatpush1.xpose.msra.mxu0 0.0
  %2340 = vmatprep.subr.mxu0 0.0
  %2341 = vmatpush1.xpose.msra.mxu0 0.0
  %2342 = vmatprep.subr.mxu0 0.0
  %2343 = vmatpush1.xpose.msra.mxu0 0.0
  %2344 = vmatprep.subr.mxu0 0.0
  %2345 = vmatpush1.xpose.msra.mxu0 0.0
  %v2346 = vand.u32 %v23, 4294901760
  %2347 = vmatprep.subr.mxu0 %v2346
  %v2348 = vand.u32 %v22, 4294901760
  %2349 = vmatpush1.xpose.msra.mxu0 %v2348
  %2350 = vmatprep.subr.mxu0 0.0
  %2351 = vmatpush2.xpose.msra.mxu0 0.0
  %2352 = vmatprep.subr.mxu0 0.0
  %2353 = vmatpush2.xpose.msra.mxu0 0.0
  %2354 = vmatprep.subr.mxu0 0.0
  %2355 = vmatpush2.xpose.msra.mxu0 0.0
  %2356 = vmatprep.subr.mxu0 0.0
  %2357 = vmatpush2.xpose.msra.mxu0 0.0
  %2358 = vmatprep.subr.mxu0 0.0
  %2359 = vmatpush2.xpose.msra.mxu0 0.0
  %2360 = vmatprep.subr.mxu0 0.0
  %2361 = vmatpush2.xpose.msra.mxu0 0.0
  %2362 = vmatprep.subr.mxu0 0.0
  %2363 = vmatpush2.xpose.msra.mxu0 0.0
  %2364 = vmatprep.subr.mxu0 0.0
  %2365 = vmatpush2.xpose.msra.mxu0 0.0
  %2366 = vmatprep.subr.mxu0 0.0
  %2367 = vmatpush2.xpose.msra.mxu0 0.0
  %2368 = vmatprep.subr.mxu0 0.0
  %2369 = vmatpush2.xpose.msra.mxu0 0.0
  %2370 = vmatprep.subr.mxu0 0.0
  %2371 = vmatpush2.xpose.msra.mxu0 0.0
  %2372 = vmatprep.subr.mxu0 0.0
  %2373 = vmatpush2.xpose.msra.mxu0 0.0
  %2374 = vmatprep.subr.mxu0 0.0
  %2375 = vmatpush2.xpose.msra.mxu0 0.0
  %2376 = vmatprep.subr.mxu0 0.0
  %2377 = vmatpush2.xpose.msra.mxu0 0.0
  %2378 = vmatprep.subr.mxu0 0.0
  %2379 = vmatpush2.xpose.msra.mxu0 0.0
  %2380 = vmatprep.subr.mxu0 0.0
  %2381 = vmatpush2.xpose.msra.mxu0 0.0
  %v2382 = vand.u32 %v23, 4294901760
  %2383 = vmatprep.mubr.f32.mxu0 %v2382
  %v2384 = vand.u32 %v22, 4294901760
  %2385 = vmatmul.mubr.f32.gmra.mxu0 %v2384
  %v2386 = vpop.f32.mrf.mxu0
  %v2387 = vadd.f32 %v2313, %v2386
  %v2388 = vpop.f32.mrf.mxu0
  %2389 = vdwg.mxu0
  %2390 = vmatprep.subr.mxu0 0.0
  %2391 = vmatpush1.xpose.msra.mxu0 0.0
  %2392 = vmatprep.subr.mxu0 0.0
  %2393 = vmatpush1.xpose.msra.mxu0 0.0
  %2394 = vmatprep.subr.mxu0 0.0
  %2395 = vmatpush1.xpose.msra.mxu0 0.0
  %2396 = vmatprep.subr.mxu0 0.0
  %2397 = vmatpush1.xpose.msra.mxu0 0.0
  %2398 = vmatprep.subr.mxu0 0.0
  %2399 = vmatpush1.xpose.msra.mxu0 0.0
  %2400 = vmatprep.subr.mxu0 0.0
  %2401 = vmatpush1.xpose.msra.mxu0 0.0
  %2402 = vmatprep.subr.mxu0 0.0
  %2403 = vmatpush1.xpose.msra.mxu0 0.0
  %2404 = vmatprep.subr.mxu0 0.0
  %2405 = vmatpush1.xpose.msra.mxu0 0.0
  %2406 = vmatprep.subr.mxu0 0.0
  %2407 = vmatpush1.xpose.msra.mxu0 0.0
  %2408 = vmatprep.subr.mxu0 0.0
  %2409 = vmatpush1.xpose.msra.mxu0 0.0
  %2410 = vmatprep.subr.mxu0 0.0
  %2411 = vmatpush1.xpose.msra.mxu0 0.0
  %2412 = vmatprep.subr.mxu0 0.0
  %2413 = vmatpush1.xpose.msra.mxu0 0.0
  %2414 = vmatprep.subr.mxu0 0.0
  %2415 = vmatpush1.xpose.msra.mxu0 0.0
  %2416 = vmatprep.subr.mxu0 0.0
  %2417 = vmatpush1.xpose.msra.mxu0 0.0
  %2418 = vmatprep.subr.mxu0 0.0
  %2419 = vmatpush1.xpose.msra.mxu0 0.0
  %v2420 = vand.u32 %v25, 4294901760
  %2421 = vmatprep.subr.mxu0 %v2420
  %v2422 = vand.u32 %v24, 4294901760
  %2423 = vmatpush1.xpose.msra.mxu0 %v2422
  %2424 = vmatprep.subr.mxu0 0.0
  %2425 = vmatpush2.xpose.msra.mxu0 0.0
  %2426 = vmatprep.subr.mxu0 0.0
  %2427 = vmatpush2.xpose.msra.mxu0 0.0
  %2428 = vmatprep.subr.mxu0 0.0
  %2429 = vmatpush2.xpose.msra.mxu0 0.0
  %2430 = vmatprep.subr.mxu0 0.0
  %2431 = vmatpush2.xpose.msra.mxu0 0.0
  %2432 = vmatprep.subr.mxu0 0.0
  %2433 = vmatpush2.xpose.msra.mxu0 0.0
  %2434 = vmatprep.subr.mxu0 0.0
  %2435 = vmatpush2.xpose.msra.mxu0 0.0
  %2436 = vmatprep.subr.mxu0 0.0
  %2437 = vmatpush2.xpose.msra.mxu0 0.0
  %2438 = vmatprep.subr.mxu0 0.0
  %2439 = vmatpush2.xpose.msra.mxu0 0.0
  %2440 = vmatprep.subr.mxu0 0.0
  %2441 = vmatpush2.xpose.msra.mxu0 0.0
  %2442 = vmatprep.subr.mxu0 0.0
  %2443 = vmatpush2.xpose.msra.mxu0 0.0
  %2444 = vmatprep.subr.mxu0 0.0
  %2445 = vmatpush2.xpose.msra.mxu0 0.0
  %2446 = vmatprep.subr.mxu0 0.0
  %2447 = vmatpush2.xpose.msra.mxu0 0.0
  %2448 = vmatprep.subr.mxu0 0.0
  %2449 = vmatpush2.xpose.msra.mxu0 0.0
  %2450 = vmatprep.subr.mxu0 0.0
  %2451 = vmatpush2.xpose.msra.mxu0 0.0
  %2452 = vmatprep.subr.mxu0 0.0
  %2453 = vmatpush2.xpose.msra.mxu0 0.0
  %2454 = vmatprep.subr.mxu0 0.0
  %2455 = vmatpush2.xpose.msra.mxu0 0.0
  %v2456 = vand.u32 %v25, 4294901760
  %v2457 = vsub.f32 %v25, %v2456
  %v2458 = vand.u32 %v2457, 4294901760
  %v2459 = vsub.f32 %v2457, %v2458
  %v2460 = vand.u32 %v2459, 4294901760
  %2461 = vmatprep.mubr.f32.mxu0 %v2460
  %v2462 = vand.u32 %v24, 4294901760
  %v2463 = vsub.f32 %v24, %v2462
  %v2464 = vand.u32 %v2463, 4294901760
  %v2465 = vsub.f32 %v2463, %v2464
  %v2466 = vand.u32 %v2465, 4294901760
  %2467 = vmatmul.mubr.f32.gmra.mxu0 %v2466
  %v2468 = vpop.f32.mrf.mxu0
  %v2469 = vadd.f32 0.0, %v2468
  %v2470 = vpop.f32.mrf.mxu0
  %2471 = vdwg.mxu0
  %2472 = vmatprep.subr.mxu0 0.0
  %2473 = vmatpush1.xpose.msra.mxu0 0.0
  %2474 = vmatprep.subr.mxu0 0.0
  %2475 = vmatpush1.xpose.msra.mxu0 0.0
  %2476 = vmatprep.subr.mxu0 0.0
  %2477 = vmatpush1.xpose.msra.mxu0 0.0
  %2478 = vmatprep.subr.mxu0 0.0
  %2479 = vmatpush1.xpose.msra.mxu0 0.0
  %2480 = vmatprep.subr.mxu0 0.0
  %2481 = vmatpush1.xpose.msra.mxu0 0.0
  %2482 = vmatprep.subr.mxu0 0.0
  %2483 = vmatpush1.xpose.msra.mxu0 0.0
  %2484 = vmatprep.subr.mxu0 0.0
  %2485 = vmatpush1.xpose.msra.mxu0 0.0
  %2486 = vmatprep.subr.mxu0 0.0
  %2487 = vmatpush1.xpose.msra.mxu0 0.0
  %2488 = vmatprep.subr.mxu0 0.0
  %2489 = vmatpush1.xpose.msra.mxu0 0.0
  %2490 = vmatprep.subr.mxu0 0.0
  %2491 = vmatpush1.xpose.msra.mxu0 0.0
  %2492 = vmatprep.subr.mxu0 0.0
  %2493 = vmatpush1.xpose.msra.mxu0 0.0
  %2494 = vmatprep.subr.mxu0 0.0
  %2495 = vmatpush1.xpose.msra.mxu0 0.0
  %2496 = vmatprep.subr.mxu0 0.0
  %2497 = vmatpush1.xpose.msra.mxu0 0.0
  %2498 = vmatprep.subr.mxu0 0.0
  %2499 = vmatpush1.xpose.msra.mxu0 0.0
  %2500 = vmatprep.subr.mxu0 0.0
  %2501 = vmatpush1.xpose.msra.mxu0 0.0
  %v2502 = vand.u32 %v25, 4294901760
  %v2503 = vsub.f32 %v25, %v2502
  %v2504 = vand.u32 %v2503, 4294901760
  %v2505 = vsub.f32 %v2503, %v2504
  %v2506 = vand.u32 %v2505, 4294901760
  %2507 = vmatprep.subr.mxu0 %v2506
  %v2508 = vand.u32 %v24, 4294901760
  %v2509 = vsub.f32 %v24, %v2508
  %v2510 = vand.u32 %v2509, 4294901760
  %v2511 = vsub.f32 %v2509, %v2510
  %v2512 = vand.u32 %v2511, 4294901760
  %2513 = vmatpush1.xpose.msra.mxu0 %v2512
  %2514 = vmatprep.subr.mxu0 0.0
  %2515 = vmatpush2.xpose.msra.mxu0 0.0
  %2516 = vmatprep.subr.mxu0 0.0
  %2517 = vmatpush2.xpose.msra.mxu0 0.0
  %2518 = vmatprep.subr.mxu0 0.0
  %2519 = vmatpush2.xpose.msra.mxu0 0.0
  %2520 = vmatprep.subr.mxu0 0.0
  %2521 = vmatpush2.xpose.msra.mxu0 0.0
  %2522 = vmatprep.subr.mxu0 0.0
  %2523 = vmatpush2.xpose.msra.mxu0 0.0
  %2524 = vmatprep.subr.mxu0 0.0
  %2525 = vmatpush2.xpose.msra.mxu0 0.0
  %2526 = vmatprep.subr.mxu0 0.0
  %2527 = vmatpush2.xpose.msra.mxu0 0.0
  %2528 = vmatprep.subr.mxu0 0.0
  %2529 = vmatpush2.xpose.msra.mxu0 0.0
  %2530 = vmatprep.subr.mxu0 0.0
  %2531 = vmatpush2.xpose.msra.mxu0 0.0
  %2532 = vmatprep.subr.mxu0 0.0
  %2533 = vmatpush2.xpose.msra.mxu0 0.0
  %2534 = vmatprep.subr.mxu0 0.0
  %2535 = vmatpush2.xpose.msra.mxu0 0.0
  %2536 = vmatprep.subr.mxu0 0.0
  %2537 = vmatpush2.xpose.msra.mxu0 0.0
  %2538 = vmatprep.subr.mxu0 0.0
  %2539 = vmatpush2.xpose.msra.mxu0 0.0
  %2540 = vmatprep.subr.mxu0 0.0
  %2541 = vmatpush2.xpose.msra.mxu0 0.0
  %2542 = vmatprep.subr.mxu0 0.0
  %2543 = vmatpush2.xpose.msra.mxu0 0.0
  %2544 = vmatprep.subr.mxu0 0.0
  %2545 = vmatpush2.xpose.msra.mxu0 0.0
  %v2546 = vand.u32 %v25, 4294901760
  %2547 = vmatprep.mubr.f32.mxu0 %v2546
  %v2548 = vand.u32 %v24, 4294901760
  %2549 = vmatmul.mubr.f32.gmra.mxu0 %v2548
  %v2550 = vpop.f32.mrf.mxu0
  %v2551 = vadd.f32 %v2469, %v2550
  %v2552 = vpop.f32.mrf.mxu0
  %2553 = vdwg.mxu0
  %2554 = vmatprep.subr.mxu0 0.0
  %2555 = vmatpush1.xpose.msra.mxu0 0.0
  %2556 = vmatprep.subr.mxu0 0.0
  %2557 = vmatpush1.xpose.msra.mxu0 0.0
  %2558 = vmatprep.subr.mxu0 0.0
  %2559 = vmatpush1.xpose.msra.mxu0 0.0
  %2560 = vmatprep.subr.mxu0 0.0
  %2561 = vmatpush1.xpose.msra.mxu0 0.0
  %2562 = vmatprep.subr.mxu0 0.0
  %2563 = vmatpush1.xpose.msra.mxu0 0.0
  %2564 = vmatprep.subr.mxu0 0.0
  %2565 = vmatpush1.xpose.msra.mxu0 0.0
  %2566 = vmatprep.subr.mxu0 0.0
  %2567 = vmatpush1.xpose.msra.mxu0 0.0
  %2568 = vmatprep.subr.mxu0 0.0
  %2569 = vmatpush1.xpose.msra.mxu0 0.0
  %2570 = vmatprep.subr.mxu0 0.0
  %2571 = vmatpush1.xpose.msra.mxu0 0.0
  %2572 = vmatprep.subr.mxu0 0.0
  %2573 = vmatpush1.xpose.msra.mxu0 0.0
  %2574 = vmatprep.subr.mxu0 0.0
  %2575 = vmatpush1.xpose.msra.mxu0 0.0
  %2576 = vmatprep.subr.mxu0 0.0
  %2577 = vmatpush1.xpose.msra.mxu0 0.0
  %2578 = vmatprep.subr.mxu0 0.0
  %2579 = vmatpush1.xpose.msra.mxu0 0.0
  %2580 = vmatprep.subr.mxu0 0.0
  %2581 = vmatpush1.xpose.msra.mxu0 0.0
  %2582 = vmatprep.subr.mxu0 0.0
  %2583 = vmatpush1.xpose.msra.mxu0 0.0
  %v2584 = vand.u32 %v25, 4294901760
  %v2585 = vsub.f32 %v25, %v2584
  %2586 = vmatprep.subr.mxu0 %v2585
  %v2587 = vand.u32 %v24, 4294901760
  %v2588 = vsub.f32 %v24, %v2587
  %2589 = vmatpush1.xpose.msra.mxu0 %v2588
  %2590 = vmatprep.subr.mxu0 0.0
  %2591 = vmatpush2.xpose.msra.mxu0 0.0
  %2592 = vmatprep.subr.mxu0 0.0
  %2593 = vmatpush2.xpose.msra.mxu0 0.0
  %2594 = vmatprep.subr.mxu0 0.0
  %2595 = vmatpush2.xpose.msra.mxu0 0.0
  %2596 = vmatprep.subr.mxu0 0.0
  %2597 = vmatpush2.xpose.msra.mxu0 0.0
  %2598 = vmatprep.subr.mxu0 0.0
  %2599 = vmatpush2.xpose.msra.mxu0 0.0
  %2600 = vmatprep.subr.mxu0 0.0
  %2601 = vmatpush2.xpose.msra.mxu0 0.0
  %2602 = vmatprep.subr.mxu0 0.0
  %2603 = vmatpush2.xpose.msra.mxu0 0.0
  %2604 = vmatprep.subr.mxu0 0.0
  %2605 = vmatpush2.xpose.msra.mxu0 0.0
  %2606 = vmatprep.subr.mxu0 0.0
  %2607 = vmatpush2.xpose.msra.mxu0 0.0
  %2608 = vmatprep.subr.mxu0 0.0
  %2609 = vmatpush2.xpose.msra.mxu0 0.0
  %2610 = vmatprep.subr.mxu0 0.0
  %2611 = vmatpush2.xpose.msra.mxu0 0.0
  %2612 = vmatprep.subr.mxu0 0.0
  %2613 = vmatpush2.xpose.msra.mxu0 0.0
  %2614 = vmatprep.subr.mxu0 0.0
  %2615 = vmatpush2.xpose.msra.mxu0 0.0
  %2616 = vmatprep.subr.mxu0 0.0
  %2617 = vmatpush2.xpose.msra.mxu0 0.0
  %2618 = vmatprep.subr.mxu0 0.0
  %2619 = vmatpush2.xpose.msra.mxu0 0.0
  %2620 = vmatprep.subr.mxu0 0.0
  %2621 = vmatpush2.xpose.msra.mxu0 0.0
  %v2622 = vand.u32 %v25, 4294901760
  %v2623 = vsub.f32 %v25, %v2622
  %2624 = vmatprep.mubr.f32.mxu0 %v2623
  %v2625 = vand.u32 %v24, 4294901760
  %v2626 = vsub.f32 %v24, %v2625
  %2627 = vmatmul.mubr.f32.gmra.mxu0 %v2626
  %v2628 = vpop.f32.mrf.mxu0
  %v2629 = vadd.f32 %v2551, %v2628
  %v2630 = vpop.f32.mrf.mxu0
  %2631 = vdwg.mxu0
  %2632 = vmatprep.subr.mxu0 0.0
  %2633 = vmatpush1.xpose.msra.mxu0 0.0
  %2634 = vmatprep.subr.mxu0 0.0
  %2635 = vmatpush1.xpose.msra.mxu0 0.0
  %2636 = vmatprep.subr.mxu0 0.0
  %2637 = vmatpush1.xpose.msra.mxu0 0.0
  %2638 = vmatprep.subr.mxu0 0.0
  %2639 = vmatpush1.xpose.msra.mxu0 0.0
  %2640 = vmatprep.subr.mxu0 0.0
  %2641 = vmatpush1.xpose.msra.mxu0 0.0
  %2642 = vmatprep.subr.mxu0 0.0
  %2643 = vmatpush1.xpose.msra.mxu0 0.0
  %2644 = vmatprep.subr.mxu0 0.0
  %2645 = vmatpush1.xpose.msra.mxu0 0.0
  %2646 = vmatprep.subr.mxu0 0.0
  %2647 = vmatpush1.xpose.msra.mxu0 0.0
  %2648 = vmatprep.subr.mxu0 0.0
  %2649 = vmatpush1.xpose.msra.mxu0 0.0
  %2650 = vmatprep.subr.mxu0 0.0
  %2651 = vmatpush1.xpose.msra.mxu0 0.0
  %2652 = vmatprep.subr.mxu0 0.0
  %2653 = vmatpush1.xpose.msra.mxu0 0.0
  %2654 = vmatprep.subr.mxu0 0.0
  %2655 = vmatpush1.xpose.msra.mxu0 0.0
  %2656 = vmatprep.subr.mxu0 0.0
  %2657 = vmatpush1.xpose.msra.mxu0 0.0
  %2658 = vmatprep.subr.mxu0 0.0
  %2659 = vmatpush1.xpose.msra.mxu0 0.0
  %2660 = vmatprep.subr.mxu0 0.0
  %2661 = vmatpush1.xpose.msra.mxu0 0.0
  %v2662 = vand.u32 %v25, 4294901760
  %2663 = vmatprep.subr.mxu0 %v2662
  %v2664 = vand.u32 %v24, 4294901760
  %2665 = vmatpush1.xpose.msra.mxu0 %v2664
  %2666 = vmatprep.subr.mxu0 0.0
  %2667 = vmatpush2.xpose.msra.mxu0 0.0
  %2668 = vmatprep.subr.mxu0 0.0
  %2669 = vmatpush2.xpose.msra.mxu0 0.0
  %2670 = vmatprep.subr.mxu0 0.0
  %2671 = vmatpush2.xpose.msra.mxu0 0.0
  %2672 = vmatprep.subr.mxu0 0.0
  %2673 = vmatpush2.xpose.msra.mxu0 0.0
  %2674 = vmatprep.subr.mxu0 0.0
  %2675 = vmatpush2.xpose.msra.mxu0 0.0
  %2676 = vmatprep.subr.mxu0 0.0
  %2677 = vmatpush2.xpose.msra.mxu0 0.0
  %2678 = vmatprep.subr.mxu0 0.0
  %2679 = vmatpush2.xpose.msra.mxu0 0.0
  %2680 = vmatprep.subr.mxu0 0.0
  %2681 = vmatpush2.xpose.msra.mxu0 0.0
  %2682 = vmatprep.subr.mxu0 0.0
  %2683 = vmatpush2.xpose.msra.mxu0 0.0
  %2684 = vmatprep.subr.mxu0 0.0
  %2685 = vmatpush2.xpose.msra.mxu0 0.0
  %2686 = vmatprep.subr.mxu0 0.0
  %2687 = vmatpush2.xpose.msra.mxu0 0.0
  %2688 = vmatprep.subr.mxu0 0.0
  %2689 = vmatpush2.xpose.msra.mxu0 0.0
  %2690 = vmatprep.subr.mxu0 0.0
  %2691 = vmatpush2.xpose.msra.mxu0 0.0
  %2692 = vmatprep.subr.mxu0 0.0
  %2693 = vmatpush2.xpose.msra.mxu0 0.0
  %2694 = vmatprep.subr.mxu0 0.0
  %2695 = vmatpush2.xpose.msra.mxu0 0.0
  %2696 = vmatprep.subr.mxu0 0.0
  %2697 = vmatpush2.xpose.msra.mxu0 0.0
  %v2698 = vand.u32 %v25, 4294901760
  %v2699 = vsub.f32 %v25, %v2698
  %v2700 = vand.u32 %v2699, 4294901760
  %2701 = vmatprep.mubr.f32.mxu0 %v2700
  %v2702 = vand.u32 %v24, 4294901760
  %v2703 = vsub.f32 %v24, %v2702
  %v2704 = vand.u32 %v2703, 4294901760
  %2705 = vmatmul.mubr.f32.gmra.mxu0 %v2704
  %v2706 = vpop.f32.mrf.mxu0
  %v2707 = vadd.f32 %v2629, %v2706
  %v2708 = vpop.f32.mrf.mxu0
  %2709 = vdwg.mxu0
  %2710 = vmatprep.subr.mxu0 0.0
  %2711 = vmatpush1.xpose.msra.mxu0 0.0
  %2712 = vmatprep.subr.mxu0 0.0
  %2713 = vmatpush1.xpose.msra.mxu0 0.0
  %2714 = vmatprep.subr.mxu0 0.0
  %2715 = vmatpush1.xpose.msra.mxu0 0.0
  %2716 = vmatprep.subr.mxu0 0.0
  %2717 = vmatpush1.xpose.msra.mxu0 0.0
  %2718 = vmatprep.subr.mxu0 0.0
  %2719 = vmatpush1.xpose.msra.mxu0 0.0
  %2720 = vmatprep.subr.mxu0 0.0
  %2721 = vmatpush1.xpose.msra.mxu0 0.0
  %2722 = vmatprep.subr.mxu0 0.0
  %2723 = vmatpush1.xpose.msra.mxu0 0.0
  %2724 = vmatprep.subr.mxu0 0.0
  %2725 = vmatpush1.xpose.msra.mxu0 0.0
  %2726 = vmatprep.subr.mxu0 0.0
  %2727 = vmatpush1.xpose.msra.mxu0 0.0
  %2728 = vmatprep.subr.mxu0 0.0
  %2729 = vmatpush1.xpose.msra.mxu0 0.0
  %2730 = vmatprep.subr.mxu0 0.0
  %2731 = vmatpush1.xpose.msra.mxu0 0.0
  %2732 = vmatprep.subr.mxu0 0.0
  %2733 = vmatpush1.xpose.msra.mxu0 0.0
  %2734 = vmatprep.subr.mxu0 0.0
  %2735 = vmatpush1.xpose.msra.mxu0 0.0
  %2736 = vmatprep.subr.mxu0 0.0
  %2737 = vmatpush1.xpose.msra.mxu0 0.0
  %2738 = vmatprep.subr.mxu0 0.0
  %2739 = vmatpush1.xpose.msra.mxu0 0.0
  %v2740 = vand.u32 %v25, 4294901760
  %v2741 = vsub.f32 %v25, %v2740
  %v2742 = vand.u32 %v2741, 4294901760
  %2743 = vmatprep.subr.mxu0 %v2742
  %v2744 = vand.u32 %v24, 4294901760
  %v2745 = vsub.f32 %v24, %v2744
  %v2746 = vand.u32 %v2745, 4294901760
  %2747 = vmatpush1.xpose.msra.mxu0 %v2746
  %2748 = vmatprep.subr.mxu0 0.0
  %2749 = vmatpush2.xpose.msra.mxu0 0.0
  %2750 = vmatprep.subr.mxu0 0.0
  %2751 = vmatpush2.xpose.msra.mxu0 0.0
  %2752 = vmatprep.subr.mxu0 0.0
  %2753 = vmatpush2.xpose.msra.mxu0 0.0
  %2754 = vmatprep.subr.mxu0 0.0
  %2755 = vmatpush2.xpose.msra.mxu0 0.0
  %2756 = vmatprep.subr.mxu0 0.0
  %2757 = vmatpush2.xpose.msra.mxu0 0.0
  %2758 = vmatprep.subr.mxu0 0.0
  %2759 = vmatpush2.xpose.msra.mxu0 0.0
  %2760 = vmatprep.subr.mxu0 0.0
  %2761 = vmatpush2.xpose.msra.mxu0 0.0
  %2762 = vmatprep.subr.mxu0 0.0
  %2763 = vmatpush2.xpose.msra.mxu0 0.0
  %2764 = vmatprep.subr.mxu0 0.0
  %2765 = vmatpush2.xpose.msra.mxu0 0.0
  %2766 = vmatprep.subr.mxu0 0.0
  %2767 = vmatpush2.xpose.msra.mxu0 0.0
  %2768 = vmatprep.subr.mxu0 0.0
  %2769 = vmatpush2.xpose.msra.mxu0 0.0
  %2770 = vmatprep.subr.mxu0 0.0
  %2771 = vmatpush2.xpose.msra.mxu0 0.0
  %2772 = vmatprep.subr.mxu0 0.0
  %2773 = vmatpush2.xpose.msra.mxu0 0.0
  %2774 = vmatprep.subr.mxu0 0.0
  %2775 = vmatpush2.xpose.msra.mxu0 0.0
  %2776 = vmatprep.subr.mxu0 0.0
  %2777 = vmatpush2.xpose.msra.mxu0 0.0
  %2778 = vmatprep.subr.mxu0 0.0
  %2779 = vmatpush2.xpose.msra.mxu0 0.0
  %v2780 = vand.u32 %v25, 4294901760
  %2781 = vmatprep.mubr.f32.mxu0 %v2780
  %v2782 = vand.u32 %v24, 4294901760
  %2783 = vmatmul.mubr.f32.gmra.mxu0 %v2782
  %v2784 = vpop.f32.mrf.mxu0
  %v2785 = vadd.f32 %v2707, %v2784
  %v2786 = vpop.f32.mrf.mxu0
  %2787 = vdwg.mxu0
  %2788 = vmatprep.subr.mxu0 0.0
  %2789 = vmatpush1.xpose.msra.mxu0 0.0
  %2790 = vmatprep.subr.mxu0 0.0
  %2791 = vmatpush1.xpose.msra.mxu0 0.0
  %2792 = vmatprep.subr.mxu0 0.0
  %2793 = vmatpush1.xpose.msra.mxu0 0.0
  %2794 = vmatprep.subr.mxu0 0.0
  %2795 = vmatpush1.xpose.msra.mxu0 0.0
  %2796 = vmatprep.subr.mxu0 0.0
  %2797 = vmatpush1.xpose.msra.mxu0 0.0
  %2798 = vmatprep.subr.mxu0 0.0
  %2799 = vmatpush1.xpose.msra.mxu0 0.0
  %2800 = vmatprep.subr.mxu0 0.0
  %2801 = vmatpush1.xpose.msra.mxu0 0.0
  %2802 = vmatprep.subr.mxu0 0.0
  %2803 = vmatpush1.xpose.msra.mxu0 0.0
  %2804 = vmatprep.subr.mxu0 0.0
  %2805 = vmatpush1.xpose.msra.mxu0 0.0
  %2806 = vmatprep.subr.mxu0 0.0
  %2807 = vmatpush1.xpose.msra.mxu0 0.0
  %2808 = vmatprep.subr.mxu0 0.0
  %2809 = vmatpush1.xpose.msra.mxu0 0.0
  %2810 = vmatprep.subr.mxu0 0.0
  %2811 = vmatpush1.xpose.msra.mxu0 0.0
  %2812 = vmatprep.subr.mxu0 0.0
  %2813 = vmatpush1.xpose.msra.mxu0 0.0
  %2814 = vmatprep.subr.mxu0 0.0
  %2815 = vmatpush1.xpose.msra.mxu0 0.0
  %2816 = vmatprep.subr.mxu0 0.0
  %2817 = vmatpush1.xpose.msra.mxu0 0.0
  %v2818 = vand.u32 %v25, 4294901760
  %2819 = vmatprep.subr.mxu0 %v2818
  %v2820 = vand.u32 %v24, 4294901760
  %2821 = vmatpush1.xpose.msra.mxu0 %v2820
  %2822 = vmatprep.subr.mxu0 0.0
  %2823 = vmatpush2.xpose.msra.mxu0 0.0
  %2824 = vmatprep.subr.mxu0 0.0
  %2825 = vmatpush2.xpose.msra.mxu0 0.0
  %2826 = vmatprep.subr.mxu0 0.0
  %2827 = vmatpush2.xpose.msra.mxu0 0.0
  %2828 = vmatprep.subr.mxu0 0.0
  %2829 = vmatpush2.xpose.msra.mxu0 0.0
  %2830 = vmatprep.subr.mxu0 0.0
  %2831 = vmatpush2.xpose.msra.mxu0 0.0
  %2832 = vmatprep.subr.mxu0 0.0
  %2833 = vmatpush2.xpose.msra.mxu0 0.0
  %2834 = vmatprep.subr.mxu0 0.0
  %2835 = vmatpush2.xpose.msra.mxu0 0.0
  %2836 = vmatprep.subr.mxu0 0.0
  %2837 = vmatpush2.xpose.msra.mxu0 0.0
  %2838 = vmatprep.subr.mxu0 0.0
  %2839 = vmatpush2.xpose.msra.mxu0 0.0
  %2840 = vmatprep.subr.mxu0 0.0
  %2841 = vmatpush2.xpose.msra.mxu0 0.0
  %2842 = vmatprep.subr.mxu0 0.0
  %2843 = vmatpush2.xpose.msra.mxu0 0.0
  %2844 = vmatprep.subr.mxu0 0.0
  %2845 = vmatpush2.xpose.msra.mxu0 0.0
  %2846 = vmatprep.subr.mxu0 0.0
  %2847 = vmatpush2.xpose.msra.mxu0 0.0
  %2848 = vmatprep.subr.mxu0 0.0
  %2849 = vmatpush2.xpose.msra.mxu0 0.0
  %2850 = vmatprep.subr.mxu0 0.0
  %2851 = vmatpush2.xpose.msra.mxu0 0.0
  %2852 = vmatprep.subr.mxu0 0.0
  %2853 = vmatpush2.xpose.msra.mxu0 0.0
  %v2854 = vand.u32 %v25, 4294901760
  %2855 = vmatprep.mubr.f32.mxu0 %v2854
  %v2856 = vand.u32 %v24, 4294901760
  %2857 = vmatmul.mubr.f32.gmra.mxu0 %v2856
  %v2858 = vpop.f32.mrf.mxu0
  %v2859 = vadd.f32 %v2785, %v2858
  %v2860 = vpop.f32.mrf.mxu0
  %2861 = vdwg.mxu0
  %2862 = vmatprep.subr.mxu0 0.0
  %2863 = vmatpush1.xpose.msra.mxu0 0.0
  %2864 = vmatprep.subr.mxu0 0.0
  %2865 = vmatpush1.xpose.msra.mxu0 0.0
  %2866 = vmatprep.subr.mxu0 0.0
  %2867 = vmatpush1.xpose.msra.mxu0 0.0
  %2868 = vmatprep.subr.mxu0 0.0
  %2869 = vmatpush1.xpose.msra.mxu0 0.0
  %2870 = vmatprep.subr.mxu0 0.0
  %2871 = vmatpush1.xpose.msra.mxu0 0.0
  %2872 = vmatprep.subr.mxu0 0.0
  %2873 = vmatpush1.xpose.msra.mxu0 0.0
  %2874 = vmatprep.subr.mxu0 0.0
  %2875 = vmatpush1.xpose.msra.mxu0 0.0
  %2876 = vmatprep.subr.mxu0 0.0
  %2877 = vmatpush1.xpose.msra.mxu0 0.0
  %2878 = vmatprep.subr.mxu0 0.0
  %2879 = vmatpush1.xpose.msra.mxu0 0.0
  %2880 = vmatprep.subr.mxu0 0.0
  %2881 = vmatpush1.xpose.msra.mxu0 0.0
  %2882 = vmatprep.subr.mxu0 0.0
  %2883 = vmatpush1.xpose.msra.mxu0 0.0
  %2884 = vmatprep.subr.mxu0 0.0
  %2885 = vmatpush1.xpose.msra.mxu0 0.0
  %2886 = vmatprep.subr.mxu0 0.0
  %2887 = vmatpush1.xpose.msra.mxu0 0.0
  %2888 = vmatprep.subr.mxu0 0.0
  %2889 = vmatpush1.xpose.msra.mxu0 0.0
  %2890 = vmatprep.subr.mxu0 0.0
  %2891 = vmatpush1.xpose.msra.mxu0 0.0
  %v2892 = vand.u32 %v27, 4294901760
  %2893 = vmatprep.subr.mxu0 %v2892
  %v2894 = vand.u32 %v26, 4294901760
  %2895 = vmatpush1.xpose.msra.mxu0 %v2894
  %2896 = vmatprep.subr.mxu0 0.0
  %2897 = vmatpush2.xpose.msra.mxu0 0.0
  %2898 = vmatprep.subr.mxu0 0.0
  %2899 = vmatpush2.xpose.msra.mxu0 0.0
  %2900 = vmatprep.subr.mxu0 0.0
  %2901 = vmatpush2.xpose.msra.mxu0 0.0
  %2902 = vmatprep.subr.mxu0 0.0
  %2903 = vmatpush2.xpose.msra.mxu0 0.0
  %2904 = vmatprep.subr.mxu0 0.0
  %2905 = vmatpush2.xpose.msra.mxu0 0.0
  %2906 = vmatprep.subr.mxu0 0.0
  %2907 = vmatpush2.xpose.msra.mxu0 0.0
  %2908 = vmatprep.subr.mxu0 0.0
  %2909 = vmatpush2.xpose.msra.mxu0 0.0
  %2910 = vmatprep.subr.mxu0 0.0
  %2911 = vmatpush2.xpose.msra.mxu0 0.0
  %2912 = vmatprep.subr.mxu0 0.0
  %2913 = vmatpush2.xpose.msra.mxu0 0.0
  %2914 = vmatprep.subr.mxu0 0.0
  %2915 = vmatpush2.xpose.msra.mxu0 0.0
  %2916 = vmatprep.subr.mxu0 0.0
  %2917 = vmatpush2.xpose.msra.mxu0 0.0
  %2918 = vmatprep.subr.mxu0 0.0
  %2919 = vmatpush2.xpose.msra.mxu0 0.0
  %2920 = vmatprep.subr.mxu0 0.0
  %2921 = vmatpush2.xpose.msra.mxu0 0.0
  %2922 = vmatprep.subr.mxu0 0.0
  %2923 = vmatpush2.xpose.msra.mxu0 0.0
  %2924 = vmatprep.subr.mxu0 0.0
  %2925 = vmatpush2.xpose.msra.mxu0 0.0
  %2926 = vmatprep.subr.mxu0 0.0
  %2927 = vmatpush2.xpose.msra.mxu0 0.0
  %v2928 = vand.u32 %v27, 4294901760
  %v2929 = vsub.f32 %v27, %v2928
  %v2930 = vand.u32 %v2929, 4294901760
  %v2931 = vsub.f32 %v2929, %v2930
  %v2932 = vand.u32 %v2931, 4294901760
  %2933 = vmatprep.mubr.f32.mxu0 %v2932
  %v2934 = vand.u32 %v26, 4294901760
  %v2935 = vsub.f32 %v26, %v2934
  %v2936 = vand.u32 %v2935, 4294901760
  %v2937 = vsub.f32 %v2935, %v2936
  %v2938 = vand.u32 %v2937, 4294901760
  %2939 = vmatmul.mubr.f32.gmra.mxu0 %v2938
  %v2940 = vpop.f32.mrf.mxu0
  %v2941 = vadd.f32 0.0, %v2940
  %v2942 = vpop.f32.mrf.mxu0
  %2943 = vdwg.mxu0
  %2944 = vmatprep.subr.mxu0 0.0
  %2945 = vmatpush1.xpose.msra.mxu0 0.0
  %2946 = vmatprep.subr.mxu0 0.0
  %2947 = vmatpush1.xpose.msra.mxu0 0.0
  %2948 = vmatprep.subr.mxu0 0.0
  %2949 = vmatpush1.xpose.msra.mxu0 0.0
  %2950 = vmatprep.subr.mxu0 0.0
  %2951 = vmatpush1.xpose.msra.mxu0 0.0
  %2952 = vmatprep.subr.mxu0 0.0
  %2953 = vmatpush1.xpose.msra.mxu0 0.0
  %2954 = vmatprep.subr.mxu0 0.0
  %2955 = vmatpush1.xpose.msra.mxu0 0.0
  %2956 = vmatprep.subr.mxu0 0.0
  %2957 = vmatpush1.xpose.msra.mxu0 0.0
  %2958 = vmatprep.subr.mxu0 0.0
  %2959 = vmatpush1.xpose.msra.mxu0 0.0
  %2960 = vmatprep.subr.mxu0 0.0
  %2961 = vmatpush1.xpose.msra.mxu0 0.0
  %2962 = vmatprep.subr.mxu0 0.0
  %2963 = vmatpush1.xpose.msra.mxu0 0.0
  %2964 = vmatprep.subr.mxu0 0.0
  %2965 = vmatpush1.xpose.msra.mxu0 0.0
  %2966 = vmatprep.subr.mxu0 0.0
  %2967 = vmatpush1.xpose.msra.mxu0 0.0
  %2968 = vmatprep.subr.mxu0 0.0
  %2969 = vmatpush1.xpose.msra.mxu0 0.0
  %2970 = vmatprep.subr.mxu0 0.0
  %2971 = vmatpush1.xpose.msra.mxu0 0.0
  %2972 = vmatprep.subr.mxu0 0.0
  %2973 = vmatpush1.xpose.msra.mxu0 0.0
  %v2974 = vand.u32 %v27, 4294901760
  %v2975 = vsub.f32 %v27, %v2974
  %v2976 = vand.u32 %v2975, 4294901760
  %v2977 = vsub.f32 %v2975, %v2976
  %v2978 = vand.u32 %v2977, 4294901760
  %2979 = vmatprep.subr.mxu0 %v2978
  %v2980 = vand.u32 %v26, 4294901760
  %v2981 = vsub.f32 %v26, %v2980
  %v2982 = vand.u32 %v2981, 4294901760
  %v2983 = vsub.f32 %v2981, %v2982
  %v2984 = vand.u32 %v2983, 4294901760
  %2985 = vmatpush1.xpose.msra.mxu0 %v2984
  %2986 = vmatprep.subr.mxu0 0.0
  %2987 = vmatpush2.xpose.msra.mxu0 0.0
  %2988 = vmatprep.subr.mxu0 0.0
  %2989 = vmatpush2.xpose.msra.mxu0 0.0
  %2990 = vmatprep.subr.mxu0 0.0
  %2991 = vmatpush2.xpose.msra.mxu0 0.0
  %2992 = vmatprep.subr.mxu0 0.0
  %2993 = vmatpush2.xpose.msra.mxu0 0.0
  %2994 = vmatprep.subr.mxu0 0.0
  %2995 = vmatpush2.xpose.msra.mxu0 0.0
  %2996 = vmatprep.subr.mxu0 0.0
  %2997 = vmatpush2.xpose.msra.mxu0 0.0
  %2998 = vmatprep.subr.mxu0 0.0
  %2999 = vmatpush2.xpose.msra.mxu0 0.0
  %3000 = vmatprep.subr.mxu0 0.0
  %3001 = vmatpush2.xpose.msra.mxu0 0.0
  %3002 = vmatprep.subr.mxu0 0.0
  %3003 = vmatpush2.xpose.msra.mxu0 0.0
  %3004 = vmatprep.subr.mxu0 0.0
  %3005 = vmatpush2.xpose.msra.mxu0 0.0
  %3006 = vmatprep.subr.mxu0 0.0
  %3007 = vmatpush2.xpose.msra.mxu0 0.0
  %3008 = vmatprep.subr.mxu0 0.0
  %3009 = vmatpush2.xpose.msra.mxu0 0.0
  %3010 = vmatprep.subr.mxu0 0.0
  %3011 = vmatpush2.xpose.msra.mxu0 0.0
  %3012 = vmatprep.subr.mxu0 0.0
  %3013 = vmatpush2.xpose.msra.mxu0 0.0
  %3014 = vmatprep.subr.mxu0 0.0
  %3015 = vmatpush2.xpose.msra.mxu0 0.0
  %3016 = vmatprep.subr.mxu0 0.0
  %3017 = vmatpush2.xpose.msra.mxu0 0.0
  %v3018 = vand.u32 %v27, 4294901760
  %3019 = vmatprep.mubr.f32.mxu0 %v3018
  %v3020 = vand.u32 %v26, 4294901760
  %3021 = vmatmul.mubr.f32.gmra.mxu0 %v3020
  %v3022 = vpop.f32.mrf.mxu0
  %v3023 = vadd.f32 %v2941, %v3022
  %v3024 = vpop.f32.mrf.mxu0
  %3025 = vdwg.mxu0
  %3026 = vmatprep.subr.mxu0 0.0
  %3027 = vmatpush1.xpose.msra.mxu0 0.0
  %3028 = vmatprep.subr.mxu0 0.0
  %3029 = vmatpush1.xpose.msra.mxu0 0.0
  %3030 = vmatprep.subr.mxu0 0.0
  %3031 = vmatpush1.xpose.msra.mxu0 0.0
  %3032 = vmatprep.subr.mxu0 0.0
  %3033 = vmatpush1.xpose.msra.mxu0 0.0
  %3034 = vmatprep.subr.mxu0 0.0
  %3035 = vmatpush1.xpose.msra.mxu0 0.0
  %3036 = vmatprep.subr.mxu0 0.0
  %3037 = vmatpush1.xpose.msra.mxu0 0.0
  %3038 = vmatprep.subr.mxu0 0.0
  %3039 = vmatpush1.xpose.msra.mxu0 0.0
  %3040 = vmatprep.subr.mxu0 0.0
  %3041 = vmatpush1.xpose.msra.mxu0 0.0
  %3042 = vmatprep.subr.mxu0 0.0
  %3043 = vmatpush1.xpose.msra.mxu0 0.0
  %3044 = vmatprep.subr.mxu0 0.0
  %3045 = vmatpush1.xpose.msra.mxu0 0.0
  %3046 = vmatprep.subr.mxu0 0.0
  %3047 = vmatpush1.xpose.msra.mxu0 0.0
  %3048 = vmatprep.subr.mxu0 0.0
  %3049 = vmatpush1.xpose.msra.mxu0 0.0
  %3050 = vmatprep.subr.mxu0 0.0
  %3051 = vmatpush1.xpose.msra.mxu0 0.0
  %3052 = vmatprep.subr.mxu0 0.0
  %3053 = vmatpush1.xpose.msra.mxu0 0.0
  %3054 = vmatprep.subr.mxu0 0.0
  %3055 = vmatpush1.xpose.msra.mxu0 0.0
  %v3056 = vand.u32 %v27, 4294901760
  %v3057 = vsub.f32 %v27, %v3056
  %3058 = vmatprep.subr.mxu0 %v3057
  %v3059 = vand.u32 %v26, 4294901760
  %v3060 = vsub.f32 %v26, %v3059
  %3061 = vmatpush1.xpose.msra.mxu0 %v3060
  %3062 = vmatprep.subr.mxu0 0.0
  %3063 = vmatpush2.xpose.msra.mxu0 0.0
  %3064 = vmatprep.subr.mxu0 0.0
  %3065 = vmatpush2.xpose.msra.mxu0 0.0
  %3066 = vmatprep.subr.mxu0 0.0
  %3067 = vmatpush2.xpose.msra.mxu0 0.0
  %3068 = vmatprep.subr.mxu0 0.0
  %3069 = vmatpush2.xpose.msra.mxu0 0.0
  %3070 = vmatprep.subr.mxu0 0.0
  %3071 = vmatpush2.xpose.msra.mxu0 0.0
  %3072 = vmatprep.subr.mxu0 0.0
  %3073 = vmatpush2.xpose.msra.mxu0 0.0
  %3074 = vmatprep.subr.mxu0 0.0
  %3075 = vmatpush2.xpose.msra.mxu0 0.0
  %3076 = vmatprep.subr.mxu0 0.0
  %3077 = vmatpush2.xpose.msra.mxu0 0.0
  %3078 = vmatprep.subr.mxu0 0.0
  %3079 = vmatpush2.xpose.msra.mxu0 0.0
  %3080 = vmatprep.subr.mxu0 0.0
  %3081 = vmatpush2.xpose.msra.mxu0 0.0
  %3082 = vmatprep.subr.mxu0 0.0
  %3083 = vmatpush2.xpose.msra.mxu0 0.0
  %3084 = vmatprep.subr.mxu0 0.0
  %3085 = vmatpush2.xpose.msra.mxu0 0.0
  %3086 = vmatprep.subr.mxu0 0.0
  %3087 = vmatpush2.xpose.msra.mxu0 0.0
  %3088 = vmatprep.subr.mxu0 0.0
  %3089 = vmatpush2.xpose.msra.mxu0 0.0
  %3090 = vmatprep.subr.mxu0 0.0
  %3091 = vmatpush2.xpose.msra.mxu0 0.0
  %3092 = vmatprep.subr.mxu0 0.0
  %3093 = vmatpush2.xpose.msra.mxu0 0.0
  %v3094 = vand.u32 %v27, 4294901760
  %v3095 = vsub.f32 %v27, %v3094
  %3096 = vmatprep.mubr.f32.mxu0 %v3095
  %v3097 = vand.u32 %v26, 4294901760
  %v3098 = vsub.f32 %v26, %v3097
  %3099 = vmatmul.mubr.f32.gmra.mxu0 %v3098
  %v3100 = vpop.f32.mrf.mxu0
  %v3101 = vadd.f32 %v3023, %v3100
  %v3102 = vpop.f32.mrf.mxu0
  %3103 = vdwg.mxu0
  %3104 = vmatprep.subr.mxu0 0.0
  %3105 = vmatpush1.xpose.msra.mxu0 0.0
  %3106 = vmatprep.subr.mxu0 0.0
  %3107 = vmatpush1.xpose.msra.mxu0 0.0
  %3108 = vmatprep.subr.mxu0 0.0
  %3109 = vmatpush1.xpose.msra.mxu0 0.0
  %3110 = vmatprep.subr.mxu0 0.0
  %3111 = vmatpush1.xpose.msra.mxu0 0.0
  %3112 = vmatprep.subr.mxu0 0.0
  %3113 = vmatpush1.xpose.msra.mxu0 0.0
  %3114 = vmatprep.subr.mxu0 0.0
  %3115 = vmatpush1.xpose.msra.mxu0 0.0
  %3116 = vmatprep.subr.mxu0 0.0
  %3117 = vmatpush1.xpose.msra.mxu0 0.0
  %3118 = vmatprep.subr.mxu0 0.0
  %3119 = vmatpush1.xpose.msra.mxu0 0.0
  %3120 = vmatprep.subr.mxu0 0.0
  %3121 = vmatpush1.xpose.msra.mxu0 0.0
  %3122 = vmatprep.subr.mxu0 0.0
  %3123 = vmatpush1.xpose.msra.mxu0 0.0
  %3124 = vmatprep.subr.mxu0 0.0
  %3125 = vmatpush1.xpose.msra.mxu0 0.0
  %3126 = vmatprep.subr.mxu0 0.0
  %3127 = vmatpush1.xpose.msra.mxu0 0.0
  %3128 = vmatprep.subr.mxu0 0.0
  %3129 = vmatpush1.xpose.msra.mxu0 0.0
  %3130 = vmatprep.subr.mxu0 0.0
  %3131 = vmatpush1.xpose.msra.mxu0 0.0
  %3132 = vmatprep.subr.mxu0 0.0
  %3133 = vmatpush1.xpose.msra.mxu0 0.0
  %v3134 = vand.u32 %v27, 4294901760
  %3135 = vmatprep.subr.mxu0 %v3134
  %v3136 = vand.u32 %v26, 4294901760
  %3137 = vmatpush1.xpose.msra.mxu0 %v3136
  %3138 = vmatprep.subr.mxu0 0.0
  %3139 = vmatpush2.xpose.msra.mxu0 0.0
  %3140 = vmatprep.subr.mxu0 0.0
  %3141 = vmatpush2.xpose.msra.mxu0 0.0
  %3142 = vmatprep.subr.mxu0 0.0
  %3143 = vmatpush2.xpose.msra.mxu0 0.0
  %3144 = vmatprep.subr.mxu0 0.0
  %3145 = vmatpush2.xpose.msra.mxu0 0.0
  %3146 = vmatprep.subr.mxu0 0.0
  %3147 = vmatpush2.xpose.msra.mxu0 0.0
  %3148 = vmatprep.subr.mxu0 0.0
  %3149 = vmatpush2.xpose.msra.mxu0 0.0
  %3150 = vmatprep.subr.mxu0 0.0
  %3151 = vmatpush2.xpose.msra.mxu0 0.0
  %3152 = vmatprep.subr.mxu0 0.0
  %3153 = vmatpush2.xpose.msra.mxu0 0.0
  %3154 = vmatprep.subr.mxu0 0.0
  %3155 = vmatpush2.xpose.msra.mxu0 0.0
  %3156 = vmatprep.subr.mxu0 0.0
  %3157 = vmatpush2.xpose.msra.mxu0 0.0
  %3158 = vmatprep.subr.mxu0 0.0
  %3159 = vmatpush2.xpose.msra.mxu0 0.0
  %3160 = vmatprep.subr.mxu0 0.0
  %3161 = vmatpush2.xpose.msra.mxu0 0.0
  %3162 = vmatprep.subr.mxu0 0.0
  %3163 = vmatpush2.xpose.msra.mxu0 0.0
  %3164 = vmatprep.subr.mxu0 0.0
  %3165 = vmatpush2.xpose.msra.mxu0 0.0
  %3166 = vmatprep.subr.mxu0 0.0
  %3167 = vmatpush2.xpose.msra.mxu0 0.0
  %3168 = vmatprep.subr.mxu0 0.0
  %3169 = vmatpush2.xpose.msra.mxu0 0.0
  %v3170 = vand.u32 %v27, 4294901760
  %v3171 = vsub.f32 %v27, %v3170
  %v3172 = vand.u32 %v3171, 4294901760
  %3173 = vmatprep.mubr.f32.mxu0 %v3172
  %v3174 = vand.u32 %v26, 4294901760
  %v3175 = vsub.f32 %v26, %v3174
  %v3176 = vand.u32 %v3175, 4294901760
  %3177 = vmatmul.mubr.f32.gmra.mxu0 %v3176
  %v3178 = vpop.f32.mrf.mxu0
  %v3179 = vadd.f32 %v3101, %v3178
  %v3180 = vpop.f32.mrf.mxu0
  %3181 = vdwg.mxu0
  %3182 = vmatprep.subr.mxu0 0.0
  %3183 = vmatpush1.xpose.msra.mxu0 0.0
  %3184 = vmatprep.subr.mxu0 0.0
  %3185 = vmatpush1.xpose.msra.mxu0 0.0
  %3186 = vmatprep.subr.mxu0 0.0
  %3187 = vmatpush1.xpose.msra.mxu0 0.0
  %3188 = vmatprep.subr.mxu0 0.0
  %3189 = vmatpush1.xpose.msra.mxu0 0.0
  %3190 = vmatprep.subr.mxu0 0.0
  %3191 = vmatpush1.xpose.msra.mxu0 0.0
  %3192 = vmatprep.subr.mxu0 0.0
  %3193 = vmatpush1.xpose.msra.mxu0 0.0
  %3194 = vmatprep.subr.mxu0 0.0
  %3195 = vmatpush1.xpose.msra.mxu0 0.0
  %3196 = vmatprep.subr.mxu0 0.0
  %3197 = vmatpush1.xpose.msra.mxu0 0.0
  %3198 = vmatprep.subr.mxu0 0.0
  %3199 = vmatpush1.xpose.msra.mxu0 0.0
  %3200 = vmatprep.subr.mxu0 0.0
  %3201 = vmatpush1.xpose.msra.mxu0 0.0
  %3202 = vmatprep.subr.mxu0 0.0
  %3203 = vmatpush1.xpose.msra.mxu0 0.0
  %3204 = vmatprep.subr.mxu0 0.0
  %3205 = vmatpush1.xpose.msra.mxu0 0.0
  %3206 = vmatprep.subr.mxu0 0.0
  %3207 = vmatpush1.xpose.msra.mxu0 0.0
  %3208 = vmatprep.subr.mxu0 0.0
  %3209 = vmatpush1.xpose.msra.mxu0 0.0
  %3210 = vmatprep.subr.mxu0 0.0
  %3211 = vmatpush1.xpose.msra.mxu0 0.0
  %v3212 = vand.u32 %v27, 4294901760
  %v3213 = vsub.f32 %v27, %v3212
  %v3214 = vand.u32 %v3213, 4294901760
  %3215 = vmatprep.subr.mxu0 %v3214
  %v3216 = vand.u32 %v26, 4294901760
  %v3217 = vsub.f32 %v26, %v3216
  %v3218 = vand.u32 %v3217, 4294901760
  %3219 = vmatpush1.xpose.msra.mxu0 %v3218
  %3220 = vmatprep.subr.mxu0 0.0
  %3221 = vmatpush2.xpose.msra.mxu0 0.0
  %3222 = vmatprep.subr.mxu0 0.0
  %3223 = vmatpush2.xpose.msra.mxu0 0.0
  %3224 = vmatprep.subr.mxu0 0.0
  %3225 = vmatpush2.xpose.msra.mxu0 0.0
  %3226 = vmatprep.subr.mxu0 0.0
  %3227 = vmatpush2.xpose.msra.mxu0 0.0
  %3228 = vmatprep.subr.mxu0 0.0
  %3229 = vmatpush2.xpose.msra.mxu0 0.0
  %3230 = vmatprep.subr.mxu0 0.0
  %3231 = vmatpush2.xpose.msra.mxu0 0.0
  %3232 = vmatprep.subr.mxu0 0.0
  %3233 = vmatpush2.xpose.msra.mxu0 0.0
  %3234 = vmatprep.subr.mxu0 0.0
  %3235 = vmatpush2.xpose.msra.mxu0 0.0
  %3236 = vmatprep.subr.mxu0 0.0
  %3237 = vmatpush2.xpose.msra.mxu0 0.0
  %3238 = vmatprep.subr.mxu0 0.0
  %3239 = vmatpush2.xpose.msra.mxu0 0.0
  %3240 = vmatprep.subr.mxu0 0.0
  %3241 = vmatpush2.xpose.msra.mxu0 0.0
  %3242 = vmatprep.subr.mxu0 0.0
  %3243 = vmatpush2.xpose.msra.mxu0 0.0
  %3244 = vmatprep.subr.mxu0 0.0
  %3245 = vmatpush2.xpose.msra.mxu0 0.0
  %3246 = vmatprep.subr.mxu0 0.0
  %3247 = vmatpush2.xpose.msra.mxu0 0.0
  %3248 = vmatprep.subr.mxu0 0.0
  %3249 = vmatpush2.xpose.msra.mxu0 0.0
  %3250 = vmatprep.subr.mxu0 0.0
  %3251 = vmatpush2.xpose.msra.mxu0 0.0
  %v3252 = vand.u32 %v27, 4294901760
  %3253 = vmatprep.mubr.f32.mxu0 %v3252
  %v3254 = vand.u32 %v26, 4294901760
  %3255 = vmatmul.mubr.f32.gmra.mxu0 %v3254
  %v3256 = vpop.f32.mrf.mxu0
  %v3257 = vadd.f32 %v3179, %v3256
  %v3258 = vpop.f32.mrf.mxu0
  %3259 = vdwg.mxu0
  %3260 = vmatprep.subr.mxu0 0.0
  %3261 = vmatpush1.xpose.msra.mxu0 0.0
  %3262 = vmatprep.subr.mxu0 0.0
  %3263 = vmatpush1.xpose.msra.mxu0 0.0
  %3264 = vmatprep.subr.mxu0 0.0
  %3265 = vmatpush1.xpose.msra.mxu0 0.0
  %3266 = vmatprep.subr.mxu0 0.0
  %3267 = vmatpush1.xpose.msra.mxu0 0.0
  %3268 = vmatprep.subr.mxu0 0.0
  %3269 = vmatpush1.xpose.msra.mxu0 0.0
  %3270 = vmatprep.subr.mxu0 0.0
  %3271 = vmatpush1.xpose.msra.mxu0 0.0
  %3272 = vmatprep.subr.mxu0 0.0
  %3273 = vmatpush1.xpose.msra.mxu0 0.0
  %3274 = vmatprep.subr.mxu0 0.0
  %3275 = vmatpush1.xpose.msra.mxu0 0.0
  %3276 = vmatprep.subr.mxu0 0.0
  %3277 = vmatpush1.xpose.msra.mxu0 0.0
  %3278 = vmatprep.subr.mxu0 0.0
  %3279 = vmatpush1.xpose.msra.mxu0 0.0
  %3280 = vmatprep.subr.mxu0 0.0
  %3281 = vmatpush1.xpose.msra.mxu0 0.0
  %3282 = vmatprep.subr.mxu0 0.0
  %3283 = vmatpush1.xpose.msra.mxu0 0.0
  %3284 = vmatprep.subr.mxu0 0.0
  %3285 = vmatpush1.xpose.msra.mxu0 0.0
  %3286 = vmatprep.subr.mxu0 0.0
  %3287 = vmatpush1.xpose.msra.mxu0 0.0
  %3288 = vmatprep.subr.mxu0 0.0
  %3289 = vmatpush1.xpose.msra.mxu0 0.0
  %v3290 = vand.u32 %v27, 4294901760
  %3291 = vmatprep.subr.mxu0 %v3290
  %v3292 = vand.u32 %v26, 4294901760
  %3293 = vmatpush1.xpose.msra.mxu0 %v3292
  %3294 = vmatprep.subr.mxu0 0.0
  %3295 = vmatpush2.xpose.msra.mxu0 0.0
  %3296 = vmatprep.subr.mxu0 0.0
  %3297 = vmatpush2.xpose.msra.mxu0 0.0
  %3298 = vmatprep.subr.mxu0 0.0
  %3299 = vmatpush2.xpose.msra.mxu0 0.0
  %3300 = vmatprep.subr.mxu0 0.0
  %3301 = vmatpush2.xpose.msra.mxu0 0.0
  %3302 = vmatprep.subr.mxu0 0.0
  %3303 = vmatpush2.xpose.msra.mxu0 0.0
  %3304 = vmatprep.subr.mxu0 0.0
  %3305 = vmatpush2.xpose.msra.mxu0 0.0
  %3306 = vmatprep.subr.mxu0 0.0
  %3307 = vmatpush2.xpose.msra.mxu0 0.0
  %3308 = vmatprep.subr.mxu0 0.0
  %3309 = vmatpush2.xpose.msra.mxu0 0.0
  %3310 = vmatprep.subr.mxu0 0.0
  %3311 = vmatpush2.xpose.msra.mxu0 0.0
  %3312 = vmatprep.subr.mxu0 0.0
  %3313 = vmatpush2.xpose.msra.mxu0 0.0
  %3314 = vmatprep.subr.mxu0 0.0
  %3315 = vmatpush2.xpose.msra.mxu0 0.0
  %3316 = vmatprep.subr.mxu0 0.0
  %3317 = vmatpush2.xpose.msra.mxu0 0.0
  %3318 = vmatprep.subr.mxu0 0.0
  %3319 = vmatpush2.xpose.msra.mxu0 0.0
  %3320 = vmatprep.subr.mxu0 0.0
  %3321 = vmatpush2.xpose.msra.mxu0 0.0
  %3322 = vmatprep.subr.mxu0 0.0
  %3323 = vmatpush2.xpose.msra.mxu0 0.0
  %3324 = vmatprep.subr.mxu0 0.0
  %3325 = vmatpush2.xpose.msra.mxu0 0.0
  %v3326 = vand.u32 %v27, 4294901760
  %3327 = vmatprep.mubr.f32.mxu0 %v3326
  %v3328 = vand.u32 %v26, 4294901760
  %3329 = vmatmul.mubr.f32.gmra.mxu0 %v3328
  %v3330 = vpop.f32.mrf.mxu0
  %v3331 = vadd.f32 %v3257, %v3330
  %v3332 = vpop.f32.mrf.mxu0
  %3333 = vdwg.mxu0
  %3334 = vmatprep.subr.mxu0 0.0
  %3335 = vmatpush1.xpose.msra.mxu0 0.0
  %3336 = vmatprep.subr.mxu0 0.0
  %3337 = vmatpush1.xpose.msra.mxu0 0.0
  %3338 = vmatprep.subr.mxu0 0.0
  %3339 = vmatpush1.xpose.msra.mxu0 0.0
  %3340 = vmatprep.subr.mxu0 0.0
  %3341 = vmatpush1.xpose.msra.mxu0 0.0
  %3342 = vmatprep.subr.mxu0 0.0
  %3343 = vmatpush1.xpose.msra.mxu0 0.0
  %3344 = vmatprep.subr.mxu0 0.0
  %3345 = vmatpush1.xpose.msra.mxu0 0.0
  %3346 = vmatprep.subr.mxu0 0.0
  %3347 = vmatpush1.xpose.msra.mxu0 0.0
  %3348 = vmatprep.subr.mxu0 0.0
  %3349 = vmatpush1.xpose.msra.mxu0 0.0
  %3350 = vmatprep.subr.mxu0 0.0
  %3351 = vmatpush1.xpose.msra.mxu0 0.0
  %3352 = vmatprep.subr.mxu0 0.0
  %3353 = vmatpush1.xpose.msra.mxu0 0.0
  %3354 = vmatprep.subr.mxu0 0.0
  %3355 = vmatpush1.xpose.msra.mxu0 0.0
  %3356 = vmatprep.subr.mxu0 0.0
  %3357 = vmatpush1.xpose.msra.mxu0 0.0
  %3358 = vmatprep.subr.mxu0 0.0
  %3359 = vmatpush1.xpose.msra.mxu0 0.0
  %3360 = vmatprep.subr.mxu0 0.0
  %3361 = vmatpush1.xpose.msra.mxu0 0.0
  %3362 = vmatprep.subr.mxu0 0.0
  %3363 = vmatpush1.xpose.msra.mxu0 0.0
  %v3364 = vand.u32 %v29, 4294901760
  %3365 = vmatprep.subr.mxu0 %v3364
  %v3366 = vand.u32 %v28, 4294901760
  %3367 = vmatpush1.xpose.msra.mxu0 %v3366
  %3368 = vmatprep.subr.mxu0 0.0
  %3369 = vmatpush2.xpose.msra.mxu0 0.0
  %3370 = vmatprep.subr.mxu0 0.0
  %3371 = vmatpush2.xpose.msra.mxu0 0.0
  %3372 = vmatprep.subr.mxu0 0.0
  %3373 = vmatpush2.xpose.msra.mxu0 0.0
  %3374 = vmatprep.subr.mxu0 0.0
  %3375 = vmatpush2.xpose.msra.mxu0 0.0
  %3376 = vmatprep.subr.mxu0 0.0
  %3377 = vmatpush2.xpose.msra.mxu0 0.0
  %3378 = vmatprep.subr.mxu0 0.0
  %3379 = vmatpush2.xpose.msra.mxu0 0.0
  %3380 = vmatprep.subr.mxu0 0.0
  %3381 = vmatpush2.xpose.msra.mxu0 0.0
  %3382 = vmatprep.subr.mxu0 0.0
  %3383 = vmatpush2.xpose.msra.mxu0 0.0
  %3384 = vmatprep.subr.mxu0 0.0
  %3385 = vmatpush2.xpose.msra.mxu0 0.0
  %3386 = vmatprep.subr.mxu0 0.0
  %3387 = vmatpush2.xpose.msra.mxu0 0.0
  %3388 = vmatprep.subr.mxu0 0.0
  %3389 = vmatpush2.xpose.msra.mxu0 0.0
  %3390 = vmatprep.subr.mxu0 0.0
  %3391 = vmatpush2.xpose.msra.mxu0 0.0
  %3392 = vmatprep.subr.mxu0 0.0
  %3393 = vmatpush2.xpose.msra.mxu0 0.0
  %3394 = vmatprep.subr.mxu0 0.0
  %3395 = vmatpush2.xpose.msra.mxu0 0.0
  %3396 = vmatprep.subr.mxu0 0.0
  %3397 = vmatpush2.xpose.msra.mxu0 0.0
  %3398 = vmatprep.subr.mxu0 0.0
  %3399 = vmatpush2.xpose.msra.mxu0 0.0
  %v3400 = vand.u32 %v29, 4294901760
  %v3401 = vsub.f32 %v29, %v3400
  %v3402 = vand.u32 %v3401, 4294901760
  %v3403 = vsub.f32 %v3401, %v3402
  %v3404 = vand.u32 %v3403, 4294901760
  %3405 = vmatprep.mubr.f32.mxu0 %v3404
  %v3406 = vand.u32 %v28, 4294901760
  %v3407 = vsub.f32 %v28, %v3406
  %v3408 = vand.u32 %v3407, 4294901760
  %v3409 = vsub.f32 %v3407, %v3408
  %v3410 = vand.u32 %v3409, 4294901760
  %3411 = vmatmul.mubr.f32.gmra.mxu0 %v3410
  %v3412 = vpop.f32.mrf.mxu0
  %v3413 = vadd.f32 0.0, %v3412
  %v3414 = vpop.f32.mrf.mxu0
  %3415 = vdwg.mxu0
  %3416 = vmatprep.subr.mxu0 0.0
  %3417 = vmatpush1.xpose.msra.mxu0 0.0
  %3418 = vmatprep.subr.mxu0 0.0
  %3419 = vmatpush1.xpose.msra.mxu0 0.0
  %3420 = vmatprep.subr.mxu0 0.0
  %3421 = vmatpush1.xpose.msra.mxu0 0.0
  %3422 = vmatprep.subr.mxu0 0.0
  %3423 = vmatpush1.xpose.msra.mxu0 0.0
  %3424 = vmatprep.subr.mxu0 0.0
  %3425 = vmatpush1.xpose.msra.mxu0 0.0
  %3426 = vmatprep.subr.mxu0 0.0
  %3427 = vmatpush1.xpose.msra.mxu0 0.0
  %3428 = vmatprep.subr.mxu0 0.0
  %3429 = vmatpush1.xpose.msra.mxu0 0.0
  %3430 = vmatprep.subr.mxu0 0.0
  %3431 = vmatpush1.xpose.msra.mxu0 0.0
  %3432 = vmatprep.subr.mxu0 0.0
  %3433 = vmatpush1.xpose.msra.mxu0 0.0
  %3434 = vmatprep.subr.mxu0 0.0
  %3435 = vmatpush1.xpose.msra.mxu0 0.0
  %3436 = vmatprep.subr.mxu0 0.0
  %3437 = vmatpush1.xpose.msra.mxu0 0.0
  %3438 = vmatprep.subr.mxu0 0.0
  %3439 = vmatpush1.xpose.msra.mxu0 0.0
  %3440 = vmatprep.subr.mxu0 0.0
  %3441 = vmatpush1.xpose.msra.mxu0 0.0
  %3442 = vmatprep.subr.mxu0 0.0
  %3443 = vmatpush1.xpose.msra.mxu0 0.0
  %3444 = vmatprep.subr.mxu0 0.0
  %3445 = vmatpush1.xpose.msra.mxu0 0.0
  %v3446 = vand.u32 %v29, 4294901760
  %v3447 = vsub.f32 %v29, %v3446
  %v3448 = vand.u32 %v3447, 4294901760
  %v3449 = vsub.f32 %v3447, %v3448
  %v3450 = vand.u32 %v3449, 4294901760
  %3451 = vmatprep.subr.mxu0 %v3450
  %v3452 = vand.u32 %v28, 4294901760
  %v3453 = vsub.f32 %v28, %v3452
  %v3454 = vand.u32 %v3453, 4294901760
  %v3455 = vsub.f32 %v3453, %v3454
  %v3456 = vand.u32 %v3455, 4294901760
  %3457 = vmatpush1.xpose.msra.mxu0 %v3456
  %3458 = vmatprep.subr.mxu0 0.0
  %3459 = vmatpush2.xpose.msra.mxu0 0.0
  %3460 = vmatprep.subr.mxu0 0.0
  %3461 = vmatpush2.xpose.msra.mxu0 0.0
  %3462 = vmatprep.subr.mxu0 0.0
  %3463 = vmatpush2.xpose.msra.mxu0 0.0
  %3464 = vmatprep.subr.mxu0 0.0
  %3465 = vmatpush2.xpose.msra.mxu0 0.0
  %3466 = vmatprep.subr.mxu0 0.0
  %3467 = vmatpush2.xpose.msra.mxu0 0.0
  %3468 = vmatprep.subr.mxu0 0.0
  %3469 = vmatpush2.xpose.msra.mxu0 0.0
  %3470 = vmatprep.subr.mxu0 0.0
  %3471 = vmatpush2.xpose.msra.mxu0 0.0
  %3472 = vmatprep.subr.mxu0 0.0
  %3473 = vmatpush2.xpose.msra.mxu0 0.0
  %3474 = vmatprep.subr.mxu0 0.0
  %3475 = vmatpush2.xpose.msra.mxu0 0.0
  %3476 = vmatprep.subr.mxu0 0.0
  %3477 = vmatpush2.xpose.msra.mxu0 0.0
  %3478 = vmatprep.subr.mxu0 0.0
  %3479 = vmatpush2.xpose.msra.mxu0 0.0
  %3480 = vmatprep.subr.mxu0 0.0
  %3481 = vmatpush2.xpose.msra.mxu0 0.0
  %3482 = vmatprep.subr.mxu0 0.0
  %3483 = vmatpush2.xpose.msra.mxu0 0.0
  %3484 = vmatprep.subr.mxu0 0.0
  %3485 = vmatpush2.xpose.msra.mxu0 0.0
  %3486 = vmatprep.subr.mxu0 0.0
  %3487 = vmatpush2.xpose.msra.mxu0 0.0
  %3488 = vmatprep.subr.mxu0 0.0
  %3489 = vmatpush2.xpose.msra.mxu0 0.0
  %v3490 = vand.u32 %v29, 4294901760
  %3491 = vmatprep.mubr.f32.mxu0 %v3490
  %v3492 = vand.u32 %v28, 4294901760
  %3493 = vmatmul.mubr.f32.gmra.mxu0 %v3492
  %v3494 = vpop.f32.mrf.mxu0
  %v3495 = vadd.f32 %v3413, %v3494
  %v3496 = vpop.f32.mrf.mxu0
  %3497 = vdwg.mxu0
  %3498 = vmatprep.subr.mxu0 0.0
  %3499 = vmatpush1.xpose.msra.mxu0 0.0
  %3500 = vmatprep.subr.mxu0 0.0
  %3501 = vmatpush1.xpose.msra.mxu0 0.0
  %3502 = vmatprep.subr.mxu0 0.0
  %3503 = vmatpush1.xpose.msra.mxu0 0.0
  %3504 = vmatprep.subr.mxu0 0.0
  %3505 = vmatpush1.xpose.msra.mxu0 0.0
  %3506 = vmatprep.subr.mxu0 0.0
  %3507 = vmatpush1.xpose.msra.mxu0 0.0
  %3508 = vmatprep.subr.mxu0 0.0
  %3509 = vmatpush1.xpose.msra.mxu0 0.0
  %3510 = vmatprep.subr.mxu0 0.0
  %3511 = vmatpush1.xpose.msra.mxu0 0.0
  %3512 = vmatprep.subr.mxu0 0.0
  %3513 = vmatpush1.xpose.msra.mxu0 0.0
  %3514 = vmatprep.subr.mxu0 0.0
  %3515 = vmatpush1.xpose.msra.mxu0 0.0
  %3516 = vmatprep.subr.mxu0 0.0
  %3517 = vmatpush1.xpose.msra.mxu0 0.0
  %3518 = vmatprep.subr.mxu0 0.0
  %3519 = vmatpush1.xpose.msra.mxu0 0.0
  %3520 = vmatprep.subr.mxu0 0.0
  %3521 = vmatpush1.xpose.msra.mxu0 0.0
  %3522 = vmatprep.subr.mxu0 0.0
  %3523 = vmatpush1.xpose.msra.mxu0 0.0
  %3524 = vmatprep.subr.mxu0 0.0
  %3525 = vmatpush1.xpose.msra.mxu0 0.0
  %3526 = vmatprep.subr.mxu0 0.0
  %3527 = vmatpush1.xpose.msra.mxu0 0.0
  %v3528 = vand.u32 %v29, 4294901760
  %v3529 = vsub.f32 %v29, %v3528
  %3530 = vmatprep.subr.mxu0 %v3529
  %v3531 = vand.u32 %v28, 4294901760
  %v3532 = vsub.f32 %v28, %v3531
  %3533 = vmatpush1.xpose.msra.mxu0 %v3532
  %3534 = vmatprep.subr.mxu0 0.0
  %3535 = vmatpush2.xpose.msra.mxu0 0.0
  %3536 = vmatprep.subr.mxu0 0.0
  %3537 = vmatpush2.xpose.msra.mxu0 0.0
  %3538 = vmatprep.subr.mxu0 0.0
  %3539 = vmatpush2.xpose.msra.mxu0 0.0
  %3540 = vmatprep.subr.mxu0 0.0
  %3541 = vmatpush2.xpose.msra.mxu0 0.0
  %3542 = vmatprep.subr.mxu0 0.0
  %3543 = vmatpush2.xpose.msra.mxu0 0.0
  %3544 = vmatprep.subr.mxu0 0.0
  %3545 = vmatpush2.xpose.msra.mxu0 0.0
  %3546 = vmatprep.subr.mxu0 0.0
  %3547 = vmatpush2.xpose.msra.mxu0 0.0
  %3548 = vmatprep.subr.mxu0 0.0
  %3549 = vmatpush2.xpose.msra.mxu0 0.0
  %3550 = vmatprep.subr.mxu0 0.0
  %3551 = vmatpush2.xpose.msra.mxu0 0.0
  %3552 = vmatprep.subr.mxu0 0.0
  %3553 = vmatpush2.xpose.msra.mxu0 0.0
  %3554 = vmatprep.subr.mxu0 0.0
  %3555 = vmatpush2.xpose.msra.mxu0 0.0
  %3556 = vmatprep.subr.mxu0 0.0
  %3557 = vmatpush2.xpose.msra.mxu0 0.0
  %3558 = vmatprep.subr.mxu0 0.0
  %3559 = vmatpush2.xpose.msra.mxu0 0.0
  %3560 = vmatprep.subr.mxu0 0.0
  %3561 = vmatpush2.xpose.msra.mxu0 0.0
  %3562 = vmatprep.subr.mxu0 0.0
  %3563 = vmatpush2.xpose.msra.mxu0 0.0
  %3564 = vmatprep.subr.mxu0 0.0
  %3565 = vmatpush2.xpose.msra.mxu0 0.0
  %v3566 = vand.u32 %v29, 4294901760
  %v3567 = vsub.f32 %v29, %v3566
  %3568 = vmatprep.mubr.f32.mxu0 %v3567
  %v3569 = vand.u32 %v28, 4294901760
  %v3570 = vsub.f32 %v28, %v3569
  %3571 = vmatmul.mubr.f32.gmra.mxu0 %v3570
  %v3572 = vpop.f32.mrf.mxu0
  %v3573 = vadd.f32 %v3495, %v3572
  %v3574 = vpop.f32.mrf.mxu0
  %3575 = vdwg.mxu0
  %3576 = vmatprep.subr.mxu0 0.0
  %3577 = vmatpush1.xpose.msra.mxu0 0.0
  %3578 = vmatprep.subr.mxu0 0.0
  %3579 = vmatpush1.xpose.msra.mxu0 0.0
  %3580 = vmatprep.subr.mxu0 0.0
  %3581 = vmatpush1.xpose.msra.mxu0 0.0
  %3582 = vmatprep.subr.mxu0 0.0
  %3583 = vmatpush1.xpose.msra.mxu0 0.0
  %3584 = vmatprep.subr.mxu0 0.0
  %3585 = vmatpush1.xpose.msra.mxu0 0.0
  %3586 = vmatprep.subr.mxu0 0.0
  %3587 = vmatpush1.xpose.msra.mxu0 0.0
  %3588 = vmatprep.subr.mxu0 0.0
  %3589 = vmatpush1.xpose.msra.mxu0 0.0
  %3590 = vmatprep.subr.mxu0 0.0
  %3591 = vmatpush1.xpose.msra.mxu0 0.0
  %3592 = vmatprep.subr.mxu0 0.0
  %3593 = vmatpush1.xpose.msra.mxu0 0.0
  %3594 = vmatprep.subr.mxu0 0.0
  %3595 = vmatpush1.xpose.msra.mxu0 0.0
  %3596 = vmatprep.subr.mxu0 0.0
  %3597 = vmatpush1.xpose.msra.mxu0 0.0
  %3598 = vmatprep.subr.mxu0 0.0
  %3599 = vmatpush1.xpose.msra.mxu0 0.0
  %3600 = vmatprep.subr.mxu0 0.0
  %3601 = vmatpush1.xpose.msra.mxu0 0.0
  %3602 = vmatprep.subr.mxu0 0.0
  %3603 = vmatpush1.xpose.msra.mxu0 0.0
  %3604 = vmatprep.subr.mxu0 0.0
  %3605 = vmatpush1.xpose.msra.mxu0 0.0
  %v3606 = vand.u32 %v29, 4294901760
  %3607 = vmatprep.subr.mxu0 %v3606
  %v3608 = vand.u32 %v28, 4294901760
  %3609 = vmatpush1.xpose.msra.mxu0 %v3608
  %3610 = vmatprep.subr.mxu0 0.0
  %3611 = vmatpush2.xpose.msra.mxu0 0.0
  %3612 = vmatprep.subr.mxu0 0.0
  %3613 = vmatpush2.xpose.msra.mxu0 0.0
  %3614 = vmatprep.subr.mxu0 0.0
  %3615 = vmatpush2.xpose.msra.mxu0 0.0
  %3616 = vmatprep.subr.mxu0 0.0
  %3617 = vmatpush2.xpose.msra.mxu0 0.0
  %3618 = vmatprep.subr.mxu0 0.0
  %3619 = vmatpush2.xpose.msra.mxu0 0.0
  %3620 = vmatprep.subr.mxu0 0.0
  %3621 = vmatpush2.xpose.msra.mxu0 0.0
  %3622 = vmatprep.subr.mxu0 0.0
  %3623 = vmatpush2.xpose.msra.mxu0 0.0
  %3624 = vmatprep.subr.mxu0 0.0
  %3625 = vmatpush2.xpose.msra.mxu0 0.0
  %3626 = vmatprep.subr.mxu0 0.0
  %3627 = vmatpush2.xpose.msra.mxu0 0.0
  %3628 = vmatprep.subr.mxu0 0.0
  %3629 = vmatpush2.xpose.msra.mxu0 0.0
  %3630 = vmatprep.subr.mxu0 0.0
  %3631 = vmatpush2.xpose.msra.mxu0 0.0
  %3632 = vmatprep.subr.mxu0 0.0
  %3633 = vmatpush2.xpose.msra.mxu0 0.0
  %3634 = vmatprep.subr.mxu0 0.0
  %3635 = vmatpush2.xpose.msra.mxu0 0.0
  %3636 = vmatprep.subr.mxu0 0.0
  %3637 = vmatpush2.xpose.msra.mxu0 0.0
  %3638 = vmatprep.subr.mxu0 0.0
  %3639 = vmatpush2.xpose.msra.mxu0 0.0
  %3640 = vmatprep.subr.mxu0 0.0
  %3641 = vmatpush2.xpose.msra.mxu0 0.0
  %v3642 = vand.u32 %v29, 4294901760
  %v3643 = vsub.f32 %v29, %v3642
  %v3644 = vand.u32 %v3643, 4294901760
  %3645 = vmatprep.mubr.f32.mxu0 %v3644
  %v3646 = vand.u32 %v28, 4294901760
  %v3647 = vsub.f32 %v28, %v3646
  %v3648 = vand.u32 %v3647, 4294901760
  %3649 = vmatmul.mubr.f32.gmra.mxu0 %v3648
  %v3650 = vpop.f32.mrf.mxu0
  %v3651 = vadd.f32 %v3573, %v3650
  %v3652 = vpop.f32.mrf.mxu0
  %3653 = vdwg.mxu0
  %3654 = vmatprep.subr.mxu0 0.0
  %3655 = vmatpush1.xpose.msra.mxu0 0.0
  %3656 = vmatprep.subr.mxu0 0.0
  %3657 = vmatpush1.xpose.msra.mxu0 0.0
  %3658 = vmatprep.subr.mxu0 0.0
  %3659 = vmatpush1.xpose.msra.mxu0 0.0
  %3660 = vmatprep.subr.mxu0 0.0
  %3661 = vmatpush1.xpose.msra.mxu0 0.0
  %3662 = vmatprep.subr.mxu0 0.0
  %3663 = vmatpush1.xpose.msra.mxu0 0.0
  %3664 = vmatprep.subr.mxu0 0.0
  %3665 = vmatpush1.xpose.msra.mxu0 0.0
  %3666 = vmatprep.subr.mxu0 0.0
  %3667 = vmatpush1.xpose.msra.mxu0 0.0
  %3668 = vmatprep.subr.mxu0 0.0
  %3669 = vmatpush1.xpose.msra.mxu0 0.0
  %3670 = vmatprep.subr.mxu0 0.0
  %3671 = vmatpush1.xpose.msra.mxu0 0.0
  %3672 = vmatprep.subr.mxu0 0.0
  %3673 = vmatpush1.xpose.msra.mxu0 0.0
  %3674 = vmatprep.subr.mxu0 0.0
  %3675 = vmatpush1.xpose.msra.mxu0 0.0
  %3676 = vmatprep.subr.mxu0 0.0
  %3677 = vmatpush1.xpose.msra.mxu0 0.0
  %3678 = vmatprep.subr.mxu0 0.0
  %3679 = vmatpush1.xpose.msra.mxu0 0.0
  %3680 = vmatprep.subr.mxu0 0.0
  %3681 = vmatpush1.xpose.msra.mxu0 0.0
  %3682 = vmatprep.subr.mxu0 0.0
  %3683 = vmatpush1.xpose.msra.mxu0 0.0
  %v3684 = vand.u32 %v29, 4294901760
  %v3685 = vsub.f32 %v29, %v3684
  %v3686 = vand.u32 %v3685, 4294901760
  %3687 = vmatprep.subr.mxu0 %v3686
  %v3688 = vand.u32 %v28, 4294901760
  %v3689 = vsub.f32 %v28, %v3688
  %v3690 = vand.u32 %v3689, 4294901760
  %3691 = vmatpush1.xpose.msra.mxu0 %v3690
  %3692 = vmatprep.subr.mxu0 0.0
  %3693 = vmatpush2.xpose.msra.mxu0 0.0
  %3694 = vmatprep.subr.mxu0 0.0
  %3695 = vmatpush2.xpose.msra.mxu0 0.0
  %3696 = vmatprep.subr.mxu0 0.0
  %3697 = vmatpush2.xpose.msra.mxu0 0.0
  %3698 = vmatprep.subr.mxu0 0.0
  %3699 = vmatpush2.xpose.msra.mxu0 0.0
  %3700 = vmatprep.subr.mxu0 0.0
  %3701 = vmatpush2.xpose.msra.mxu0 0.0
  %3702 = vmatprep.subr.mxu0 0.0
  %3703 = vmatpush2.xpose.msra.mxu0 0.0
  %3704 = vmatprep.subr.mxu0 0.0
  %3705 = vmatpush2.xpose.msra.mxu0 0.0
  %3706 = vmatprep.subr.mxu0 0.0
  %3707 = vmatpush2.xpose.msra.mxu0 0.0
  %3708 = vmatprep.subr.mxu0 0.0
  %3709 = vmatpush2.xpose.msra.mxu0 0.0
  %3710 = vmatprep.subr.mxu0 0.0
  %3711 = vmatpush2.xpose.msra.mxu0 0.0
  %3712 = vmatprep.subr.mxu0 0.0
  %3713 = vmatpush2.xpose.msra.mxu0 0.0
  %3714 = vmatprep.subr.mxu0 0.0
  %3715 = vmatpush2.xpose.msra.mxu0 0.0
  %3716 = vmatprep.subr.mxu0 0.0
  %3717 = vmatpush2.xpose.msra.mxu0 0.0
  %3718 = vmatprep.subr.mxu0 0.0
  %3719 = vmatpush2.xpose.msra.mxu0 0.0
  %3720 = vmatprep.subr.mxu0 0.0
  %3721 = vmatpush2.xpose.msra.mxu0 0.0
  %3722 = vmatprep.subr.mxu0 0.0
  %3723 = vmatpush2.xpose.msra.mxu0 0.0
  %v3724 = vand.u32 %v29, 4294901760
  %3725 = vmatprep.mubr.f32.mxu0 %v3724
  %v3726 = vand.u32 %v28, 4294901760
  %3727 = vmatmul.mubr.f32.gmra.mxu0 %v3726
  %v3728 = vpop.f32.mrf.mxu0
  %v3729 = vadd.f32 %v3651, %v3728
  %v3730 = vpop.f32.mrf.mxu0
  %3731 = vdwg.mxu0
  %3732 = vmatprep.subr.mxu0 0.0
  %3733 = vmatpush1.xpose.msra.mxu0 0.0
  %3734 = vmatprep.subr.mxu0 0.0
  %3735 = vmatpush1.xpose.msra.mxu0 0.0
  %3736 = vmatprep.subr.mxu0 0.0
  %3737 = vmatpush1.xpose.msra.mxu0 0.0
  %3738 = vmatprep.subr.mxu0 0.0
  %3739 = vmatpush1.xpose.msra.mxu0 0.0
  %3740 = vmatprep.subr.mxu0 0.0
  %3741 = vmatpush1.xpose.msra.mxu0 0.0
  %3742 = vmatprep.subr.mxu0 0.0
  %3743 = vmatpush1.xpose.msra.mxu0 0.0
  %3744 = vmatprep.subr.mxu0 0.0
  %3745 = vmatpush1.xpose.msra.mxu0 0.0
  %3746 = vmatprep.subr.mxu0 0.0
  %3747 = vmatpush1.xpose.msra.mxu0 0.0
  %3748 = vmatprep.subr.mxu0 0.0
  %3749 = vmatpush1.xpose.msra.mxu0 0.0
  %3750 = vmatprep.subr.mxu0 0.0
  %3751 = vmatpush1.xpose.msra.mxu0 0.0
  %3752 = vmatprep.subr.mxu0 0.0
  %3753 = vmatpush1.xpose.msra.mxu0 0.0
  %3754 = vmatprep.subr.mxu0 0.0
  %3755 = vmatpush1.xpose.msra.mxu0 0.0
  %3756 = vmatprep.subr.mxu0 0.0
  %3757 = vmatpush1.xpose.msra.mxu0 0.0
  %3758 = vmatprep.subr.mxu0 0.0
  %3759 = vmatpush1.xpose.msra.mxu0 0.0
  %3760 = vmatprep.subr.mxu0 0.0
  %3761 = vmatpush1.xpose.msra.mxu0 0.0
  %v3762 = vand.u32 %v29, 4294901760
  %3763 = vmatprep.subr.mxu0 %v3762
  %v3764 = vand.u32 %v28, 4294901760
  %3765 = vmatpush1.xpose.msra.mxu0 %v3764
  %3766 = vmatprep.subr.mxu0 0.0
  %3767 = vmatpush2.xpose.msra.mxu0 0.0
  %3768 = vmatprep.subr.mxu0 0.0
  %3769 = vmatpush2.xpose.msra.mxu0 0.0
  %3770 = vmatprep.subr.mxu0 0.0
  %3771 = vmatpush2.xpose.msra.mxu0 0.0
  %3772 = vmatprep.subr.mxu0 0.0
  %3773 = vmatpush2.xpose.msra.mxu0 0.0
  %3774 = vmatprep.subr.mxu0 0.0
  %3775 = vmatpush2.xpose.msra.mxu0 0.0
  %3776 = vmatprep.subr.mxu0 0.0
  %3777 = vmatpush2.xpose.msra.mxu0 0.0
  %3778 = vmatprep.subr.mxu0 0.0
  %3779 = vmatpush2.xpose.msra.mxu0 0.0
  %3780 = vmatprep.subr.mxu0 0.0
  %3781 = vmatpush2.xpose.msra.mxu0 0.0
  %3782 = vmatprep.subr.mxu0 0.0
  %3783 = vmatpush2.xpose.msra.mxu0 0.0
  %3784 = vmatprep.subr.mxu0 0.0
  %3785 = vmatpush2.xpose.msra.mxu0 0.0
  %3786 = vmatprep.subr.mxu0 0.0
  %3787 = vmatpush2.xpose.msra.mxu0 0.0
  %3788 = vmatprep.subr.mxu0 0.0
  %3789 = vmatpush2.xpose.msra.mxu0 0.0
  %3790 = vmatprep.subr.mxu0 0.0
  %3791 = vmatpush2.xpose.msra.mxu0 0.0
  %3792 = vmatprep.subr.mxu0 0.0
  %3793 = vmatpush2.xpose.msra.mxu0 0.0
  %3794 = vmatprep.subr.mxu0 0.0
  %3795 = vmatpush2.xpose.msra.mxu0 0.0
  %3796 = vmatprep.subr.mxu0 0.0
  %3797 = vmatpush2.xpose.msra.mxu0 0.0
  %v3798 = vand.u32 %v29, 4294901760
  %3799 = vmatprep.mubr.f32.mxu0 %v3798
  %v3800 = vand.u32 %v28, 4294901760
  %3801 = vmatmul.mubr.f32.gmra.mxu0 %v3800
  %v3802 = vpop.f32.mrf.mxu0
  %v3803 = vadd.f32 %v3729, %v3802
  %v3804 = vpop.f32.mrf.mxu0
  %3805 = vdwg.mxu0
  %vm3806 = vcmask 64512
  %v3807 = vsel %vm3806, %v499, 0.0
  %v3808 = vsel %vm3806, %v971, 0.0
  %v3809 = vadd.f32 %v3807, %v3808
  %v3810 = vsel %vm3806, %v1443, 0.0
  %v3811 = vadd.f32 %v3809, %v3810
  %v3812 = vsel %vm3806, %v1915, 0.0
  %v3813 = vadd.f32 %v3811, %v3812
  %v3814 = vsel %vm3806, %v2387, 0.0
  %v3815 = vadd.f32 %v3813, %v3814
  %v3816 = vsel %vm3806, %v2859, 0.0
  %v3817 = vadd.f32 %v3815, %v3816
  %v3818 = vsel %vm3806, %v3331, 0.0
  %v3819 = vadd.f32 %v3817, %v3818
  %v3820 = vsel %vm3806, %v3803, 0.0
  %v3821 = vadd.f32 %v3819, %v3820
  %v3822 = vld [vmem:[%s1] sm:$0xff]
  %v3823 = vld [vmem:[%s2] sm:$0xff]
  %3825 = vset.pattern.permute.xlu0 0
  %3826 = vperm.xlu0 %3825, %v3823
  %v3827 = vpop.permute.xlu0 %3826
  %v3830 = vsel %vm3806, %v3822, 0
  %3832 = vmatprep.subr.mxu0 0.0
  %3833 = vmatpush1.msra.mxu0 0.0
  %3834 = vmatprep.subr.mxu0 0.0
  %3835 = vmatpush1.msra.mxu0 0.0
  %3836 = vmatprep.subr.mxu0 0.0
  %3837 = vmatpush1.msra.mxu0 0.0
  %3838 = vmatprep.subr.mxu0 0.0
  %3839 = vmatpush1.msra.mxu0 0.0
  %3840 = vmatprep.subr.mxu0 0.0
  %3841 = vmatpush1.msra.mxu0 0.0
  %3842 = vmatprep.subr.mxu0 0.0
  %3843 = vmatpush1.msra.mxu0 0.0
  %3844 = vmatprep.subr.mxu0 0.0
  %3845 = vmatpush1.msra.mxu0 0.0
  %3846 = vmatprep.subr.mxu0 0.0
  %3847 = vmatpush1.msra.mxu0 0.0
  %3848 = vmatprep.subr.mxu0 0.0
  %3849 = vmatpush1.msra.mxu0 0.0
  %3850 = vmatprep.subr.mxu0 0.0
  %3851 = vmatpush1.msra.mxu0 0.0
  %3852 = vmatprep.subr.mxu0 0.0
  %3853 = vmatpush1.msra.mxu0 0.0
  %3854 = vmatprep.subr.mxu0 0.0
  %3855 = vmatpush1.msra.mxu0 0.0
  %3856 = vmatprep.subr.mxu0 0.0
  %3857 = vmatpush1.msra.mxu0 0.0
  %3858 = vmatprep.subr.mxu0 0.0
  %3859 = vmatpush1.msra.mxu0 0.0
  %3860 = vmatprep.subr.mxu0 0.0
  %3861 = vmatpush1.msra.mxu0 0.0
  %3862 = vmatprep.subr.mxu0 0.0
  %v3863 = vand.u32 %v3821, 4294901760
  %3864 = vmatpush1.msra.mxu0 %v3863
  %3865 = vmatprep.subr.mxu0 0.0
  %3866 = vmatpush2.msra.mxu0 0.0
  %3867 = vmatprep.subr.mxu0 0.0
  %3868 = vmatpush2.msra.mxu0 0.0
  %3869 = vmatprep.subr.mxu0 0.0
  %3870 = vmatpush2.msra.mxu0 0.0
  %3871 = vmatprep.subr.mxu0 0.0
  %3872 = vmatpush2.msra.mxu0 0.0
  %3873 = vmatprep.subr.mxu0 0.0
  %3874 = vmatpush2.msra.mxu0 0.0
  %3875 = vmatprep.subr.mxu0 0.0
  %3876 = vmatpush2.msra.mxu0 0.0
  %3877 = vmatprep.subr.mxu0 0.0
  %3878 = vmatpush2.msra.mxu0 0.0
  %3879 = vmatprep.subr.mxu0 0.0
  %3880 = vmatpush2.msra.mxu0 0.0
  %3881 = vmatprep.subr.mxu0 0.0
  %3882 = vmatpush2.msra.mxu0 0.0
  %3883 = vmatprep.subr.mxu0 0.0
  %3884 = vmatpush2.msra.mxu0 0.0
  %3885 = vmatprep.subr.mxu0 0.0
  %3886 = vmatpush2.msra.mxu0 0.0
  %3887 = vmatprep.subr.mxu0 0.0
  %3888 = vmatpush2.msra.mxu0 0.0
  %3889 = vmatprep.subr.mxu0 0.0
  %3890 = vmatpush2.msra.mxu0 0.0
  %3891 = vmatprep.subr.mxu0 0.0
  %3892 = vmatpush2.msra.mxu0 0.0
  %3893 = vmatprep.subr.mxu0 0.0
  %3894 = vmatpush2.msra.mxu0 0.0
  %3895 = vmatprep.subr.mxu0 0.0
  %3896 = vmatpush2.msra.mxu0 0.0
  %3897 = vmatprep.mubr.f32.mxu0 0.0
  %v3898 = vand.u32 %v3830, 4294901760
  %v3899 = vsub.f32 %v3830, %v3898
  %v3900 = vand.u32 %v3899, 4294901760
  %v3901 = vsub.f32 %v3899, %v3900
  %v3902 = vand.u32 %v3901, 4294901760
  %3903 = vmatmul.mubr.f32.gmra.mxu0 %v3902
  %v3904 = vpop.f32.mrf.mxu0
  %v3905 = vadd.f32 %v3827, %v3904
  %v3906 = vpop.f32.mrf.mxu0
  %3907 = vdwg.mxu0
  %3908 = vmatprep.subr.mxu0 0.0
  %3909 = vmatpush1.msra.mxu0 0.0
  %3910 = vmatprep.subr.mxu0 0.0
  %3911 = vmatpush1.msra.mxu0 0.0
  %3912 = vmatprep.subr.mxu0 0.0
  %3913 = vmatpush1.msra.mxu0 0.0
  %3914 = vmatprep.subr.mxu0 0.0
  %3915 = vmatpush1.msra.mxu0 0.0
  %3916 = vmatprep.subr.mxu0 0.0
  %3917 = vmatpush1.msra.mxu0 0.0
  %3918 = vmatprep.subr.mxu0 0.0
  %3919 = vmatpush1.msra.mxu0 0.0
  %3920 = vmatprep.subr.mxu0 0.0
  %3921 = vmatpush1.msra.mxu0 0.0
  %3922 = vmatprep.subr.mxu0 0.0
  %3923 = vmatpush1.msra.mxu0 0.0
  %3924 = vmatprep.subr.mxu0 0.0
  %3925 = vmatpush1.msra.mxu0 0.0
  %3926 = vmatprep.subr.mxu0 0.0
  %3927 = vmatpush1.msra.mxu0 0.0
  %3928 = vmatprep.subr.mxu0 0.0
  %3929 = vmatpush1.msra.mxu0 0.0
  %3930 = vmatprep.subr.mxu0 0.0
  %3931 = vmatpush1.msra.mxu0 0.0
  %3932 = vmatprep.subr.mxu0 0.0
  %3933 = vmatpush1.msra.mxu0 0.0
  %3934 = vmatprep.subr.mxu0 0.0
  %3935 = vmatpush1.msra.mxu0 0.0
  %3936 = vmatprep.subr.mxu0 0.0
  %3937 = vmatpush1.msra.mxu0 0.0
  %3938 = vmatprep.subr.mxu0 0.0
  %v3939 = vand.u32 %v3821, 4294901760
  %v3940 = vsub.f32 %v3821, %v3939
  %v3941 = vand.u32 %v3940, 4294901760
  %v3942 = vsub.f32 %v3940, %v3941
  %v3943 = vand.u32 %v3942, 4294901760
  %3944 = vmatpush1.msra.mxu0 %v3943
  %3945 = vmatprep.subr.mxu0 0.0
  %3946 = vmatpush2.msra.mxu0 0.0
  %3947 = vmatprep.subr.mxu0 0.0
  %3948 = vmatpush2.msra.mxu0 0.0
  %3949 = vmatprep.subr.mxu0 0.0
  %3950 = vmatpush2.msra.mxu0 0.0
  %3951 = vmatprep.subr.mxu0 0.0
  %3952 = vmatpush2.msra.mxu0 0.0
  %3953 = vmatprep.subr.mxu0 0.0
  %3954 = vmatpush2.msra.mxu0 0.0
  %3955 = vmatprep.subr.mxu0 0.0
  %3956 = vmatpush2.msra.mxu0 0.0
  %3957 = vmatprep.subr.mxu0 0.0
  %3958 = vmatpush2.msra.mxu0 0.0
  %3959 = vmatprep.subr.mxu0 0.0
  %3960 = vmatpush2.msra.mxu0 0.0
  %3961 = vmatprep.subr.mxu0 0.0
  %3962 = vmatpush2.msra.mxu0 0.0
  %3963 = vmatprep.subr.mxu0 0.0
  %3964 = vmatpush2.msra.mxu0 0.0
  %3965 = vmatprep.subr.mxu0 0.0
  %3966 = vmatpush2.msra.mxu0 0.0
  %3967 = vmatprep.subr.mxu0 0.0
  %3968 = vmatpush2.msra.mxu0 0.0
  %3969 = vmatprep.subr.mxu0 0.0
  %3970 = vmatpush2.msra.mxu0 0.0
  %3971 = vmatprep.subr.mxu0 0.0
  %3972 = vmatpush2.msra.mxu0 0.0
  %3973 = vmatprep.subr.mxu0 0.0
  %3974 = vmatpush2.msra.mxu0 0.0
  %3975 = vmatprep.subr.mxu0 0.0
  %3976 = vmatpush2.msra.mxu0 0.0
  %3977 = vmatprep.mubr.f32.mxu0 0.0
  %v3978 = vand.u32 %v3830, 4294901760
  %3979 = vmatmul.mubr.f32.gmra.mxu0 %v3978
  %v3980 = vpop.f32.mrf.mxu0
  %v3981 = vadd.f32 %v3905, %v3980
  %v3982 = vpop.f32.mrf.mxu0
  %3983 = vdwg.mxu0
  %3984 = vmatprep.subr.mxu0 0.0
  %3985 = vmatpush1.msra.mxu0 0.0
  %3986 = vmatprep.subr.mxu0 0.0
  %3987 = vmatpush1.msra.mxu0 0.0
  %3988 = vmatprep.subr.mxu0 0.0
  %3989 = vmatpush1.msra.mxu0 0.0
  %3990 = vmatprep.subr.mxu0 0.0
  %3991 = vmatpush1.msra.mxu0 0.0
  %3992 = vmatprep.subr.mxu0 0.0
  %3993 = vmatpush1.msra.mxu0 0.0
  %3994 = vmatprep.subr.mxu0 0.0
  %3995 = vmatpush1.msra.mxu0 0.0
  %3996 = vmatprep.subr.mxu0 0.0
  %3997 = vmatpush1.msra.mxu0 0.0
  %3998 = vmatprep.subr.mxu0 0.0
  %3999 = vmatpush1.msra.mxu0 0.0
  %4000 = vmatprep.subr.mxu0 0.0
  %4001 = vmatpush1.msra.mxu0 0.0
  %4002 = vmatprep.subr.mxu0 0.0
  %4003 = vmatpush1.msra.mxu0 0.0
  %4004 = vmatprep.subr.mxu0 0.0
  %4005 = vmatpush1.msra.mxu0 0.0
  %4006 = vmatprep.subr.mxu0 0.0
  %4007 = vmatpush1.msra.mxu0 0.0
  %4008 = vmatprep.subr.mxu0 0.0
  %4009 = vmatpush1.msra.mxu0 0.0
  %4010 = vmatprep.subr.mxu0 0.0
  %4011 = vmatpush1.msra.mxu0 0.0
  %4012 = vmatprep.subr.mxu0 0.0
  %4013 = vmatpush1.msra.mxu0 0.0
  %4014 = vmatprep.subr.mxu0 0.0
  %v4015 = vand.u32 %v3821, 4294901760
  %v4016 = vsub.f32 %v3821, %v4015
  %4017 = vmatpush1.msra.mxu0 %v4016
  %4018 = vmatprep.subr.mxu0 0.0
  %4019 = vmatpush2.msra.mxu0 0.0
  %4020 = vmatprep.subr.mxu0 0.0
  %4021 = vmatpush2.msra.mxu0 0.0
  %4022 = vmatprep.subr.mxu0 0.0
  %4023 = vmatpush2.msra.mxu0 0.0
  %4024 = vmatprep.subr.mxu0 0.0
  %4025 = vmatpush2.msra.mxu0 0.0
  %4026 = vmatprep.subr.mxu0 0.0
  %4027 = vmatpush2.msra.mxu0 0.0
  %4028 = vmatprep.subr.mxu0 0.0
  %4029 = vmatpush2.msra.mxu0 0.0
  %4030 = vmatprep.subr.mxu0 0.0
  %4031 = vmatpush2.msra.mxu0 0.0
  %4032 = vmatprep.subr.mxu0 0.0
  %4033 = vmatpush2.msra.mxu0 0.0
  %4034 = vmatprep.subr.mxu0 0.0
  %4035 = vmatpush2.msra.mxu0 0.0
  %4036 = vmatprep.subr.mxu0 0.0
  %4037 = vmatpush2.msra.mxu0 0.0
  %4038 = vmatprep.subr.mxu0 0.0
  %4039 = vmatpush2.msra.mxu0 0.0
  %4040 = vmatprep.subr.mxu0 0.0
  %4041 = vmatpush2.msra.mxu0 0.0
  %4042 = vmatprep.subr.mxu0 0.0
  %4043 = vmatpush2.msra.mxu0 0.0
  %4044 = vmatprep.subr.mxu0 0.0
  %4045 = vmatpush2.msra.mxu0 0.0
  %4046 = vmatprep.subr.mxu0 0.0
  %4047 = vmatpush2.msra.mxu0 0.0
  %4048 = vmatprep.subr.mxu0 0.0
  %4049 = vmatpush2.msra.mxu0 0.0
  %4050 = vmatprep.mubr.f32.mxu0 0.0
  %v4051 = vand.u32 %v3830, 4294901760
  %v4052 = vsub.f32 %v3830, %v4051
  %4053 = vmatmul.mubr.f32.gmra.mxu0 %v4052
  %v4054 = vpop.f32.mrf.mxu0
  %v4055 = vadd.f32 %v3981, %v4054
  %v4056 = vpop.f32.mrf.mxu0
  %4057 = vdwg.mxu0
  %4058 = vmatprep.subr.mxu0 0.0
  %4059 = vmatpush1.msra.mxu0 0.0
  %4060 = vmatprep.subr.mxu0 0.0
  %4061 = vmatpush1.msra.mxu0 0.0
  %4062 = vmatprep.subr.mxu0 0.0
  %4063 = vmatpush1.msra.mxu0 0.0
  %4064 = vmatprep.subr.mxu0 0.0
  %4065 = vmatpush1.msra.mxu0 0.0
  %4066 = vmatprep.subr.mxu0 0.0
  %4067 = vmatpush1.msra.mxu0 0.0
  %4068 = vmatprep.subr.mxu0 0.0
  %4069 = vmatpush1.msra.mxu0 0.0
  %4070 = vmatprep.subr.mxu0 0.0
  %4071 = vmatpush1.msra.mxu0 0.0
  %4072 = vmatprep.subr.mxu0 0.0
  %4073 = vmatpush1.msra.mxu0 0.0
  %4074 = vmatprep.subr.mxu0 0.0
  %4075 = vmatpush1.msra.mxu0 0.0
  %4076 = vmatprep.subr.mxu0 0.0
  %4077 = vmatpush1.msra.mxu0 0.0
  %4078 = vmatprep.subr.mxu0 0.0
  %4079 = vmatpush1.msra.mxu0 0.0
  %4080 = vmatprep.subr.mxu0 0.0
  %4081 = vmatpush1.msra.mxu0 0.0
  %4082 = vmatprep.subr.mxu0 0.0
  %4083 = vmatpush1.msra.mxu0 0.0
  %4084 = vmatprep.subr.mxu0 0.0
  %4085 = vmatpush1.msra.mxu0 0.0
  %4086 = vmatprep.subr.mxu0 0.0
  %4087 = vmatpush1.msra.mxu0 0.0
  %4088 = vmatprep.subr.mxu0 0.0
  %v4089 = vand.u32 %v3821, 4294901760
  %4090 = vmatpush1.msra.mxu0 %v4089
  %4091 = vmatprep.subr.mxu0 0.0
  %4092 = vmatpush2.msra.mxu0 0.0
  %4093 = vmatprep.subr.mxu0 0.0
  %4094 = vmatpush2.msra.mxu0 0.0
  %4095 = vmatprep.subr.mxu0 0.0
  %4096 = vmatpush2.msra.mxu0 0.0
  %4097 = vmatprep.subr.mxu0 0.0
  %4098 = vmatpush2.msra.mxu0 0.0
  %4099 = vmatprep.subr.mxu0 0.0
  %4100 = vmatpush2.msra.mxu0 0.0
  %4101 = vmatprep.subr.mxu0 0.0
  %4102 = vmatpush2.msra.mxu0 0.0
  %4103 = vmatprep.subr.mxu0 0.0
  %4104 = vmatpush2.msra.mxu0 0.0
  %4105 = vmatprep.subr.mxu0 0.0
  %4106 = vmatpush2.msra.mxu0 0.0
  %4107 = vmatprep.subr.mxu0 0.0
  %4108 = vmatpush2.msra.mxu0 0.0
  %4109 = vmatprep.subr.mxu0 0.0
  %4110 = vmatpush2.msra.mxu0 0.0
  %4111 = vmatprep.subr.mxu0 0.0
  %4112 = vmatpush2.msra.mxu0 0.0
  %4113 = vmatprep.subr.mxu0 0.0
  %4114 = vmatpush2.msra.mxu0 0.0
  %4115 = vmatprep.subr.mxu0 0.0
  %4116 = vmatpush2.msra.mxu0 0.0
  %4117 = vmatprep.subr.mxu0 0.0
  %4118 = vmatpush2.msra.mxu0 0.0
  %4119 = vmatprep.subr.mxu0 0.0
  %4120 = vmatpush2.msra.mxu0 0.0
  %4121 = vmatprep.subr.mxu0 0.0
  %4122 = vmatpush2.msra.mxu0 0.0
  %4123 = vmatprep.mubr.f32.mxu0 0.0
  %v4124 = vand.u32 %v3830, 4294901760
  %v4125 = vsub.f32 %v3830, %v4124
  %v4126 = vand.u32 %v4125, 4294901760
  %4127 = vmatmul.mubr.f32.gmra.mxu0 %v4126
  %v4128 = vpop.f32.mrf.mxu0
  %v4129 = vadd.f32 %v4055, %v4128
  %v4130 = vpop.f32.mrf.mxu0
  %4131 = vdwg.mxu0
  %4132 = vmatprep.subr.mxu0 0.0
  %4133 = vmatpush1.msra.mxu0 0.0
  %4134 = vmatprep.subr.mxu0 0.0
  %4135 = vmatpush1.msra.mxu0 0.0
  %4136 = vmatprep.subr.mxu0 0.0
  %4137 = vmatpush1.msra.mxu0 0.0
  %4138 = vmatprep.subr.mxu0 0.0
  %4139 = vmatpush1.msra.mxu0 0.0
  %4140 = vmatprep.subr.mxu0 0.0
  %4141 = vmatpush1.msra.mxu0 0.0
  %4142 = vmatprep.subr.mxu0 0.0
  %4143 = vmatpush1.msra.mxu0 0.0
  %4144 = vmatprep.subr.mxu0 0.0
  %4145 = vmatpush1.msra.mxu0 0.0
  %4146 = vmatprep.subr.mxu0 0.0
  %4147 = vmatpush1.msra.mxu0 0.0
  %4148 = vmatprep.subr.mxu0 0.0
  %4149 = vmatpush1.msra.mxu0 0.0
  %4150 = vmatprep.subr.mxu0 0.0
  %4151 = vmatpush1.msra.mxu0 0.0
  %4152 = vmatprep.subr.mxu0 0.0
  %4153 = vmatpush1.msra.mxu0 0.0
  %4154 = vmatprep.subr.mxu0 0.0
  %4155 = vmatpush1.msra.mxu0 0.0
  %4156 = vmatprep.subr.mxu0 0.0
  %4157 = vmatpush1.msra.mxu0 0.0
  %4158 = vmatprep.subr.mxu0 0.0
  %4159 = vmatpush1.msra.mxu0 0.0
  %4160 = vmatprep.subr.mxu0 0.0
  %4161 = vmatpush1.msra.mxu0 0.0
  %4162 = vmatprep.subr.mxu0 0.0
  %v4163 = vand.u32 %v3821, 4294901760
  %v4164 = vsub.f32 %v3821, %v4163
  %v4165 = vand.u32 %v4164, 4294901760
  %4166 = vmatpush1.msra.mxu0 %v4165
  %4167 = vmatprep.subr.mxu0 0.0
  %4168 = vmatpush2.msra.mxu0 0.0
  %4169 = vmatprep.subr.mxu0 0.0
  %4170 = vmatpush2.msra.mxu0 0.0
  %4171 = vmatprep.subr.mxu0 0.0
  %4172 = vmatpush2.msra.mxu0 0.0
  %4173 = vmatprep.subr.mxu0 0.0
  %4174 = vmatpush2.msra.mxu0 0.0
  %4175 = vmatprep.subr.mxu0 0.0
  %4176 = vmatpush2.msra.mxu0 0.0
  %4177 = vmatprep.subr.mxu0 0.0
  %4178 = vmatpush2.msra.mxu0 0.0
  %4179 = vmatprep.subr.mxu0 0.0
  %4180 = vmatpush2.msra.mxu0 0.0
  %4181 = vmatprep.subr.mxu0 0.0
  %4182 = vmatpush2.msra.mxu0 0.0
  %4183 = vmatprep.subr.mxu0 0.0
  %4184 = vmatpush2.msra.mxu0 0.0
  %4185 = vmatprep.subr.mxu0 0.0
  %4186 = vmatpush2.msra.mxu0 0.0
  %4187 = vmatprep.subr.mxu0 0.0
  %4188 = vmatpush2.msra.mxu0 0.0
  %4189 = vmatprep.subr.mxu0 0.0
  %4190 = vmatpush2.msra.mxu0 0.0
  %4191 = vmatprep.subr.mxu0 0.0
  %4192 = vmatpush2.msra.mxu0 0.0
  %4193 = vmatprep.subr.mxu0 0.0
  %4194 = vmatpush2.msra.mxu0 0.0
  %4195 = vmatprep.subr.mxu0 0.0
  %4196 = vmatpush2.msra.mxu0 0.0
  %4197 = vmatprep.subr.mxu0 0.0
  %4198 = vmatpush2.msra.mxu0 0.0
  %4199 = vmatprep.mubr.f32.mxu0 0.0
  %v4200 = vand.u32 %v3830, 4294901760
  %4201 = vmatmul.mubr.f32.gmra.mxu0 %v4200
  %v4202 = vpop.f32.mrf.mxu0
  %v4203 = vadd.f32 %v4129, %v4202
  %v4204 = vpop.f32.mrf.mxu0
  %4205 = vdwg.mxu0
  %4206 = vmatprep.subr.mxu0 0.0
  %4207 = vmatpush1.msra.mxu0 0.0
  %4208 = vmatprep.subr.mxu0 0.0
  %4209 = vmatpush1.msra.mxu0 0.0
  %4210 = vmatprep.subr.mxu0 0.0
  %4211 = vmatpush1.msra.mxu0 0.0
  %4212 = vmatprep.subr.mxu0 0.0
  %4213 = vmatpush1.msra.mxu0 0.0
  %4214 = vmatprep.subr.mxu0 0.0
  %4215 = vmatpush1.msra.mxu0 0.0
  %4216 = vmatprep.subr.mxu0 0.0
  %4217 = vmatpush1.msra.mxu0 0.0
  %4218 = vmatprep.subr.mxu0 0.0
  %4219 = vmatpush1.msra.mxu0 0.0
  %4220 = vmatprep.subr.mxu0 0.0
  %4221 = vmatpush1.msra.mxu0 0.0
  %4222 = vmatprep.subr.mxu0 0.0
  %4223 = vmatpush1.msra.mxu0 0.0
  %4224 = vmatprep.subr.mxu0 0.0
  %4225 = vmatpush1.msra.mxu0 0.0
  %4226 = vmatprep.subr.mxu0 0.0
  %4227 = vmatpush1.msra.mxu0 0.0
  %4228 = vmatprep.subr.mxu0 0.0
  %4229 = vmatpush1.msra.mxu0 0.0
  %4230 = vmatprep.subr.mxu0 0.0
  %4231 = vmatpush1.msra.mxu0 0.0
  %4232 = vmatprep.subr.mxu0 0.0
  %4233 = vmatpush1.msra.mxu0 0.0
  %4234 = vmatprep.subr.mxu0 0.0
  %4235 = vmatpush1.msra.mxu0 0.0
  %4236 = vmatprep.subr.mxu0 0.0
  %v4237 = vand.u32 %v3821, 4294901760
  %4238 = vmatpush1.msra.mxu0 %v4237
  %4239 = vmatprep.subr.mxu0 0.0
  %4240 = vmatpush2.msra.mxu0 0.0
  %4241 = vmatprep.subr.mxu0 0.0
  %4242 = vmatpush2.msra.mxu0 0.0
  %4243 = vmatprep.subr.mxu0 0.0
  %4244 = vmatpush2.msra.mxu0 0.0
  %4245 = vmatprep.subr.mxu0 0.0
  %4246 = vmatpush2.msra.mxu0 0.0
  %4247 = vmatprep.subr.mxu0 0.0
  %4248 = vmatpush2.msra.mxu0 0.0
  %4249 = vmatprep.subr.mxu0 0.0
  %4250 = vmatpush2.msra.mxu0 0.0
  %4251 = vmatprep.subr.mxu0 0.0
  %4252 = vmatpush2.msra.mxu0 0.0
  %4253 = vmatprep.subr.mxu0 0.0
  %4254 = vmatpush2.msra.mxu0 0.0
  %4255 = vmatprep.subr.mxu0 0.0
  %4256 = vmatpush2.msra.mxu0 0.0
  %4257 = vmatprep.subr.mxu0 0.0
  %4258 = vmatpush2.msra.mxu0 0.0
  %4259 = vmatprep.subr.mxu0 0.0
  %4260 = vmatpush2.msra.mxu0 0.0
  %4261 = vmatprep.subr.mxu0 0.0
  %4262 = vmatpush2.msra.mxu0 0.0
  %4263 = vmatprep.subr.mxu0 0.0
  %4264 = vmatpush2.msra.mxu0 0.0
  %4265 = vmatprep.subr.mxu0 0.0
  %4266 = vmatpush2.msra.mxu0 0.0
  %4267 = vmatprep.subr.mxu0 0.0
  %4268 = vmatpush2.msra.mxu0 0.0
  %4269 = vmatprep.subr.mxu0 0.0
  %4270 = vmatpush2.msra.mxu0 0.0
  %4271 = vmatprep.mubr.f32.mxu0 0.0
  %v4272 = vand.u32 %v3830, 4294901760
  %4273 = vmatmul.mubr.f32.gmra.mxu0 %v4272
  %v4274 = vpop.f32.mrf.mxu0
  %v4275 = vadd.f32 %v4203, %v4274
  %v4276 = vpop.f32.mrf.mxu0
  %4277 = vdwg.mxu0
  %v4279 = vsel %vm3806, %v4275, 0
  %4281 = vmatprep.subr.mxu0 0.0
  %4282 = vmatpush1.msra.mxu0 0.0
  %4283 = vmatprep.subr.mxu0 0.0
  %4284 = vmatpush1.msra.mxu0 0.0
  %4285 = vmatprep.subr.mxu0 0.0
  %4286 = vmatpush1.msra.mxu0 0.0
  %4287 = vmatprep.subr.mxu0 0.0
  %4288 = vmatpush1.msra.mxu0 0.0
  %4289 = vmatprep.subr.mxu0 0.0
  %4290 = vmatpush1.msra.mxu0 0.0
  %4291 = vmatprep.subr.mxu0 0.0
  %4292 = vmatpush1.msra.mxu0 0.0
  %4293 = vmatprep.subr.mxu0 0.0
  %4294 = vmatpush1.msra.mxu0 0.0
  %4295 = vmatprep.subr.mxu0 0.0
  %4296 = vmatpush1.msra.mxu0 0.0
  %4297 = vmatprep.subr.mxu0 0.0
  %4298 = vmatpush1.msra.mxu0 0.0
  %4299 = vmatprep.subr.mxu0 0.0
  %4300 = vmatpush1.msra.mxu0 0.0
  %4301 = vmatprep.subr.mxu0 0.0
  %4302 = vmatpush1.msra.mxu0 0.0
  %4303 = vmatprep.subr.mxu0 0.0
  %4304 = vmatpush1.msra.mxu0 0.0
  %4305 = vmatprep.subr.mxu0 0.0
  %4306 = vmatpush1.msra.mxu0 0.0
  %4307 = vmatprep.subr.mxu0 0.0
  %4308 = vmatpush1.msra.mxu0 0.0
  %4309 = vmatprep.subr.mxu0 0.0
  %4310 = vmatpush1.msra.mxu0 0.0
  %v4311 = vand.u32 %v15, 4294901760
  %4312 = vmatprep.subr.mxu0 %v4311
  %v4313 = vand.u32 %v14, 4294901760
  %4314 = vmatpush1.msra.mxu0 %v4313
  %4315 = vmatprep.subr.mxu0 0.0
  %4316 = vmatpush2.msra.mxu0 0.0
  %4317 = vmatprep.subr.mxu0 0.0
  %4318 = vmatpush2.msra.mxu0 0.0
  %4319 = vmatprep.subr.mxu0 0.0
  %4320 = vmatpush2.msra.mxu0 0.0
  %4321 = vmatprep.subr.mxu0 0.0
  %4322 = vmatpush2.msra.mxu0 0.0
  %4323 = vmatprep.subr.mxu0 0.0
  %4324 = vmatpush2.msra.mxu0 0.0
  %4325 = vmatprep.subr.mxu0 0.0
  %4326 = vmatpush2.msra.mxu0 0.0
  %4327 = vmatprep.subr.mxu0 0.0
  %4328 = vmatpush2.msra.mxu0 0.0
  %4329 = vmatprep.subr.mxu0 0.0
  %4330 = vmatpush2.msra.mxu0 0.0
  %4331 = vmatprep.subr.mxu0 0.0
  %4332 = vmatpush2.msra.mxu0 0.0
  %4333 = vmatprep.subr.mxu0 0.0
  %4334 = vmatpush2.msra.mxu0 0.0
  %4335 = vmatprep.subr.mxu0 0.0
  %4336 = vmatpush2.msra.mxu0 0.0
  %4337 = vmatprep.subr.mxu0 0.0
  %4338 = vmatpush2.msra.mxu0 0.0
  %4339 = vmatprep.subr.mxu0 0.0
  %4340 = vmatpush2.msra.mxu0 0.0
  %4341 = vmatprep.subr.mxu0 0.0
  %4342 = vmatpush2.msra.mxu0 0.0
  %4343 = vmatprep.subr.mxu0 0.0
  %4344 = vmatpush2.msra.mxu0 0.0
  %4345 = vmatprep.subr.mxu0 0.0
  %4346 = vmatpush2.msra.mxu0 0.0
  %4347 = vmatprep.mubr.f32.mxu0 0.0
  %v4348 = vand.u32 %v4279, 4294901760
  %v4349 = vsub.f32 %v4279, %v4348
  %v4350 = vand.u32 %v4349, 4294901760
  %v4351 = vsub.f32 %v4349, %v4350
  %v4352 = vand.u32 %v4351, 4294901760
  %4353 = vmatmul.mubr.f32.gmra.mxu0 %v4352
  %v4354 = vpop.f32.mrf.mxu0
  %v4355 = vadd.f32 0.0, %v4354
  %v4356 = vpop.f32.mrf.mxu0
  %v4357 = vadd.f32 0.0, %v4356
  %4358 = vdwg.mxu0
  %4359 = vmatprep.subr.mxu0 0.0
  %4360 = vmatpush1.msra.mxu0 0.0
  %4361 = vmatprep.subr.mxu0 0.0
  %4362 = vmatpush1.msra.mxu0 0.0
  %4363 = vmatprep.subr.mxu0 0.0
  %4364 = vmatpush1.msra.mxu0 0.0
  %4365 = vmatprep.subr.mxu0 0.0
  %4366 = vmatpush1.msra.mxu0 0.0
  %4367 = vmatprep.subr.mxu0 0.0
  %4368 = vmatpush1.msra.mxu0 0.0
  %4369 = vmatprep.subr.mxu0 0.0
  %4370 = vmatpush1.msra.mxu0 0.0
  %4371 = vmatprep.subr.mxu0 0.0
  %4372 = vmatpush1.msra.mxu0 0.0
  %4373 = vmatprep.subr.mxu0 0.0
  %4374 = vmatpush1.msra.mxu0 0.0
  %4375 = vmatprep.subr.mxu0 0.0
  %4376 = vmatpush1.msra.mxu0 0.0
  %4377 = vmatprep.subr.mxu0 0.0
  %4378 = vmatpush1.msra.mxu0 0.0
  %4379 = vmatprep.subr.mxu0 0.0
  %4380 = vmatpush1.msra.mxu0 0.0
  %4381 = vmatprep.subr.mxu0 0.0
  %4382 = vmatpush1.msra.mxu0 0.0
  %4383 = vmatprep.subr.mxu0 0.0
  %4384 = vmatpush1.msra.mxu0 0.0
  %4385 = vmatprep.subr.mxu0 0.0
  %4386 = vmatpush1.msra.mxu0 0.0
  %4387 = vmatprep.subr.mxu0 0.0
  %4388 = vmatpush1.msra.mxu0 0.0
  %v4389 = vand.u32 %v15, 4294901760
  %v4390 = vsub.f32 %v15, %v4389
  %v4391 = vand.u32 %v4390, 4294901760
  %v4392 = vsub.f32 %v4390, %v4391
  %v4393 = vand.u32 %v4392, 4294901760
  %4394 = vmatprep.subr.mxu0 %v4393
  %v4395 = vand.u32 %v14, 4294901760
  %v4396 = vsub.f32 %v14, %v4395
  %v4397 = vand.u32 %v4396, 4294901760
  %v4398 = vsub.f32 %v4396, %v4397
  %v4399 = vand.u32 %v4398, 4294901760
  %4400 = vmatpush1.msra.mxu0 %v4399
  %4401 = vmatprep.subr.mxu0 0.0
  %4402 = vmatpush2.msra.mxu0 0.0
  %4403 = vmatprep.subr.mxu0 0.0
  %4404 = vmatpush2.msra.mxu0 0.0
  %4405 = vmatprep.subr.mxu0 0.0
  %4406 = vmatpush2.msra.mxu0 0.0
  %4407 = vmatprep.subr.mxu0 0.0
  %4408 = vmatpush2.msra.mxu0 0.0
  %4409 = vmatprep.subr.mxu0 0.0
  %4410 = vmatpush2.msra.mxu0 0.0
  %4411 = vmatprep.subr.mxu0 0.0
  %4412 = vmatpush2.msra.mxu0 0.0
  %4413 = vmatprep.subr.mxu0 0.0
  %4414 = vmatpush2.msra.mxu0 0.0
  %4415 = vmatprep.subr.mxu0 0.0
  %4416 = vmatpush2.msra.mxu0 0.0
  %4417 = vmatprep.subr.mxu0 0.0
  %4418 = vmatpush2.msra.mxu0 0.0
  %4419 = vmatprep.subr.mxu0 0.0
  %4420 = vmatpush2.msra.mxu0 0.0
  %4421 = vmatprep.subr.mxu0 0.0
  %4422 = vmatpush2.msra.mxu0 0.0
  %4423 = vmatprep.subr.mxu0 0.0
  %4424 = vmatpush2.msra.mxu0 0.0
  %4425 = vmatprep.subr.mxu0 0.0
  %4426 = vmatpush2.msra.mxu0 0.0
  %4427 = vmatprep.subr.mxu0 0.0
  %4428 = vmatpush2.msra.mxu0 0.0
  %4429 = vmatprep.subr.mxu0 0.0
  %4430 = vmatpush2.msra.mxu0 0.0
  %4431 = vmatprep.subr.mxu0 0.0
  %4432 = vmatpush2.msra.mxu0 0.0
  %4433 = vmatprep.mubr.f32.mxu0 0.0
  %v4434 = vand.u32 %v4279, 4294901760
  %4435 = vmatmul.mubr.f32.gmra.mxu0 %v4434
  %v4436 = vpop.f32.mrf.mxu0
  %v4437 = vadd.f32 %v4355, %v4436
  %v4438 = vpop.f32.mrf.mxu0
  %v4439 = vadd.f32 %v4357, %v4438
  %4440 = vdwg.mxu0
  %4441 = vmatprep.subr.mxu0 0.0
  %4442 = vmatpush1.msra.mxu0 0.0
  %4443 = vmatprep.subr.mxu0 0.0
  %4444 = vmatpush1.msra.mxu0 0.0
  %4445 = vmatprep.subr.mxu0 0.0
  %4446 = vmatpush1.msra.mxu0 0.0
  %4447 = vmatprep.subr.mxu0 0.0
  %4448 = vmatpush1.msra.mxu0 0.0
  %4449 = vmatprep.subr.mxu0 0.0
  %4450 = vmatpush1.msra.mxu0 0.0
  %4451 = vmatprep.subr.mxu0 0.0
  %4452 = vmatpush1.msra.mxu0 0.0
  %4453 = vmatprep.subr.mxu0 0.0
  %4454 = vmatpush1.msra.mxu0 0.0
  %4455 = vmatprep.subr.mxu0 0.0
  %4456 = vmatpush1.msra.mxu0 0.0
  %4457 = vmatprep.subr.mxu0 0.0
  %4458 = vmatpush1.msra.mxu0 0.0
  %4459 = vmatprep.subr.mxu0 0.0
  %4460 = vmatpush1.msra.mxu0 0.0
  %4461 = vmatprep.subr.mxu0 0.0
  %4462 = vmatpush1.msra.mxu0 0.0
  %4463 = vmatprep.subr.mxu0 0.0
  %4464 = vmatpush1.msra.mxu0 0.0
  %4465 = vmatprep.subr.mxu0 0.0
  %4466 = vmatpush1.msra.mxu0 0.0
  %4467 = vmatprep.subr.mxu0 0.0
  %4468 = vmatpush1.msra.mxu0 0.0
  %4469 = vmatprep.subr.mxu0 0.0
  %4470 = vmatpush1.msra.mxu0 0.0
  %v4471 = vand.u32 %v15, 4294901760
  %v4472 = vsub.f32 %v15, %v4471
  %4473 = vmatprep.subr.mxu0 %v4472
  %v4474 = vand.u32 %v14, 4294901760
  %v4475 = vsub.f32 %v14, %v4474
  %4476 = vmatpush1.msra.mxu0 %v4475
  %4477 = vmatprep.subr.mxu0 0.0
  %4478 = vmatpush2.msra.mxu0 0.0
  %4479 = vmatprep.subr.mxu0 0.0
  %4480 = vmatpush2.msra.mxu0 0.0
  %4481 = vmatprep.subr.mxu0 0.0
  %4482 = vmatpush2.msra.mxu0 0.0
  %4483 = vmatprep.subr.mxu0 0.0
  %4484 = vmatpush2.msra.mxu0 0.0
  %4485 = vmatprep.subr.mxu0 0.0
  %4486 = vmatpush2.msra.mxu0 0.0
  %4487 = vmatprep.subr.mxu0 0.0
  %4488 = vmatpush2.msra.mxu0 0.0
  %4489 = vmatprep.subr.mxu0 0.0
  %4490 = vmatpush2.msra.mxu0 0.0
  %4491 = vmatprep.subr.mxu0 0.0
  %4492 = vmatpush2.msra.mxu0 0.0
  %4493 = vmatprep.subr.mxu0 0.0
  %4494 = vmatpush2.msra.mxu0 0.0
  %4495 = vmatprep.subr.mxu0 0.0
  %4496 = vmatpush2.msra.mxu0 0.0
  %4497 = vmatprep.subr.mxu0 0.0
  %4498 = vmatpush2.msra.mxu0 0.0
  %4499 = vmatprep.subr.mxu0 0.0
  %4500 = vmatpush2.msra.mxu0 0.0
  %4501 = vmatprep.subr.mxu0 0.0
  %4502 = vmatpush2.msra.mxu0 0.0
  %4503 = vmatprep.subr.mxu0 0.0
  %4504 = vmatpush2.msra.mxu0 0.0
  %4505 = vmatprep.subr.mxu0 0.0
  %4506 = vmatpush2.msra.mxu0 0.0
  %4507 = vmatprep.subr.mxu0 0.0
  %4508 = vmatpush2.msra.mxu0 0.0
  %4509 = vmatprep.mubr.f32.mxu0 0.0
  %v4510 = vand.u32 %v4279, 4294901760
  %v4511 = vsub.f32 %v4279, %v4510
  %4512 = vmatmul.mubr.f32.gmra.mxu0 %v4511
  %v4513 = vpop.f32.mrf.mxu0
  %v4514 = vadd.f32 %v4437, %v4513
  %v4515 = vpop.f32.mrf.mxu0
  %v4516 = vadd.f32 %v4439, %v4515
  %4517 = vdwg.mxu0
  %4518 = vmatprep.subr.mxu0 0.0
  %4519 = vmatpush1.msra.mxu0 0.0
  %4520 = vmatprep.subr.mxu0 0.0
  %4521 = vmatpush1.msra.mxu0 0.0
  %4522 = vmatprep.subr.mxu0 0.0
  %4523 = vmatpush1.msra.mxu0 0.0
  %4524 = vmatprep.subr.mxu0 0.0
  %4525 = vmatpush1.msra.mxu0 0.0
  %4526 = vmatprep.subr.mxu0 0.0
  %4527 = vmatpush1.msra.mxu0 0.0
  %4528 = vmatprep.subr.mxu0 0.0
  %4529 = vmatpush1.msra.mxu0 0.0
  %4530 = vmatprep.subr.mxu0 0.0
  %4531 = vmatpush1.msra.mxu0 0.0
  %4532 = vmatprep.subr.mxu0 0.0
  %4533 = vmatpush1.msra.mxu0 0.0
  %4534 = vmatprep.subr.mxu0 0.0
  %4535 = vmatpush1.msra.mxu0 0.0
  %4536 = vmatprep.subr.mxu0 0.0
  %4537 = vmatpush1.msra.mxu0 0.0
  %4538 = vmatprep.subr.mxu0 0.0
  %4539 = vmatpush1.msra.mxu0 0.0
  %4540 = vmatprep.subr.mxu0 0.0
  %4541 = vmatpush1.msra.mxu0 0.0
  %4542 = vmatprep.subr.mxu0 0.0
  %4543 = vmatpush1.msra.mxu0 0.0
  %4544 = vmatprep.subr.mxu0 0.0
  %4545 = vmatpush1.msra.mxu0 0.0
  %4546 = vmatprep.subr.mxu0 0.0
  %4547 = vmatpush1.msra.mxu0 0.0
  %v4548 = vand.u32 %v15, 4294901760
  %4549 = vmatprep.subr.mxu0 %v4548
  %v4550 = vand.u32 %v14, 4294901760
  %4551 = vmatpush1.msra.mxu0 %v4550
  %4552 = vmatprep.subr.mxu0 0.0
  %4553 = vmatpush2.msra.mxu0 0.0
  %4554 = vmatprep.subr.mxu0 0.0
  %4555 = vmatpush2.msra.mxu0 0.0
  %4556 = vmatprep.subr.mxu0 0.0
  %4557 = vmatpush2.msra.mxu0 0.0
  %4558 = vmatprep.subr.mxu0 0.0
  %4559 = vmatpush2.msra.mxu0 0.0
  %4560 = vmatprep.subr.mxu0 0.0
  %4561 = vmatpush2.msra.mxu0 0.0
  %4562 = vmatprep.subr.mxu0 0.0
  %4563 = vmatpush2.msra.mxu0 0.0
  %4564 = vmatprep.subr.mxu0 0.0
  %4565 = vmatpush2.msra.mxu0 0.0
  %4566 = vmatprep.subr.mxu0 0.0
  %4567 = vmatpush2.msra.mxu0 0.0
  %4568 = vmatprep.subr.mxu0 0.0
  %4569 = vmatpush2.msra.mxu0 0.0
  %4570 = vmatprep.subr.mxu0 0.0
  %4571 = vmatpush2.msra.mxu0 0.0
  %4572 = vmatprep.subr.mxu0 0.0
  %4573 = vmatpush2.msra.mxu0 0.0
  %4574 = vmatprep.subr.mxu0 0.0
  %4575 = vmatpush2.msra.mxu0 0.0
  %4576 = vmatprep.subr.mxu0 0.0
  %4577 = vmatpush2.msra.mxu0 0.0
  %4578 = vmatprep.subr.mxu0 0.0
  %4579 = vmatpush2.msra.mxu0 0.0
  %4580 = vmatprep.subr.mxu0 0.0
  %4581 = vmatpush2.msra.mxu0 0.0
  %4582 = vmatprep.subr.mxu0 0.0
  %4583 = vmatpush2.msra.mxu0 0.0
  %4584 = vmatprep.mubr.f32.mxu0 0.0
  %v4585 = vand.u32 %v4279, 4294901760
  %v4586 = vsub.f32 %v4279, %v4585
  %v4587 = vand.u32 %v4586, 4294901760
  %4588 = vmatmul.mubr.f32.gmra.mxu0 %v4587
  %v4589 = vpop.f32.mrf.mxu0
  %v4590 = vadd.f32 %v4514, %v4589
  %v4591 = vpop.f32.mrf.mxu0
  %v4592 = vadd.f32 %v4516, %v4591
  %4593 = vdwg.mxu0
  %4594 = vmatprep.subr.mxu0 0.0
  %4595 = vmatpush1.msra.mxu0 0.0
  %4596 = vmatprep.subr.mxu0 0.0
  %4597 = vmatpush1.msra.mxu0 0.0
  %4598 = vmatprep.subr.mxu0 0.0
  %4599 = vmatpush1.msra.mxu0 0.0
  %4600 = vmatprep.subr.mxu0 0.0
  %4601 = vmatpush1.msra.mxu0 0.0
  %4602 = vmatprep.subr.mxu0 0.0
  %4603 = vmatpush1.msra.mxu0 0.0
  %4604 = vmatprep.subr.mxu0 0.0
  %4605 = vmatpush1.msra.mxu0 0.0
  %4606 = vmatprep.subr.mxu0 0.0
  %4607 = vmatpush1.msra.mxu0 0.0
  %4608 = vmatprep.subr.mxu0 0.0
  %4609 = vmatpush1.msra.mxu0 0.0
  %4610 = vmatprep.subr.mxu0 0.0
  %4611 = vmatpush1.msra.mxu0 0.0
  %4612 = vmatprep.subr.mxu0 0.0
  %4613 = vmatpush1.msra.mxu0 0.0
  %4614 = vmatprep.subr.mxu0 0.0
  %4615 = vmatpush1.msra.mxu0 0.0
  %4616 = vmatprep.subr.mxu0 0.0
  %4617 = vmatpush1.msra.mxu0 0.0
  %4618 = vmatprep.subr.mxu0 0.0
  %4619 = vmatpush1.msra.mxu0 0.0
  %4620 = vmatprep.subr.mxu0 0.0
  %4621 = vmatpush1.msra.mxu0 0.0
  %4622 = vmatprep.subr.mxu0 0.0
  %4623 = vmatpush1.msra.mxu0 0.0
  %v4624 = vand.u32 %v15, 4294901760
  %v4625 = vsub.f32 %v15, %v4624
  %v4626 = vand.u32 %v4625, 4294901760
  %4627 = vmatprep.subr.mxu0 %v4626
  %v4628 = vand.u32 %v14, 4294901760
  %v4629 = vsub.f32 %v14, %v4628
  %v4630 = vand.u32 %v4629, 4294901760
  %4631 = vmatpush1.msra.mxu0 %v4630
  %4632 = vmatprep.subr.mxu0 0.0
  %4633 = vmatpush2.msra.mxu0 0.0
  %4634 = vmatprep.subr.mxu0 0.0
  %4635 = vmatpush2.msra.mxu0 0.0
  %4636 = vmatprep.subr.mxu0 0.0
  %4637 = vmatpush2.msra.mxu0 0.0
  %4638 = vmatprep.subr.mxu0 0.0
  %4639 = vmatpush2.msra.mxu0 0.0
  %4640 = vmatprep.subr.mxu0 0.0
  %4641 = vmatpush2.msra.mxu0 0.0
  %4642 = vmatprep.subr.mxu0 0.0
  %4643 = vmatpush2.msra.mxu0 0.0
  %4644 = vmatprep.subr.mxu0 0.0
  %4645 = vmatpush2.msra.mxu0 0.0
  %4646 = vmatprep.subr.mxu0 0.0
  %4647 = vmatpush2.msra.mxu0 0.0
  %4648 = vmatprep.subr.mxu0 0.0
  %4649 = vmatpush2.msra.mxu0 0.0
  %4650 = vmatprep.subr.mxu0 0.0
  %4651 = vmatpush2.msra.mxu0 0.0
  %4652 = vmatprep.subr.mxu0 0.0
  %4653 = vmatpush2.msra.mxu0 0.0
  %4654 = vmatprep.subr.mxu0 0.0
  %4655 = vmatpush2.msra.mxu0 0.0
  %4656 = vmatprep.subr.mxu0 0.0
  %4657 = vmatpush2.msra.mxu0 0.0
  %4658 = vmatprep.subr.mxu0 0.0
  %4659 = vmatpush2.msra.mxu0 0.0
  %4660 = vmatprep.subr.mxu0 0.0
  %4661 = vmatpush2.msra.mxu0 0.0
  %4662 = vmatprep.subr.mxu0 0.0
  %4663 = vmatpush2.msra.mxu0 0.0
  %4664 = vmatprep.mubr.f32.mxu0 0.0
  %v4665 = vand.u32 %v4279, 4294901760
  %4666 = vmatmul.mubr.f32.gmra.mxu0 %v4665
  %v4667 = vpop.f32.mrf.mxu0
  %v4668 = vadd.f32 %v4590, %v4667
  %v4669 = vpop.f32.mrf.mxu0
  %v4670 = vadd.f32 %v4592, %v4669
  %4671 = vdwg.mxu0
  %4672 = vmatprep.subr.mxu0 0.0
  %4673 = vmatpush1.msra.mxu0 0.0
  %4674 = vmatprep.subr.mxu0 0.0
  %4675 = vmatpush1.msra.mxu0 0.0
  %4676 = vmatprep.subr.mxu0 0.0
  %4677 = vmatpush1.msra.mxu0 0.0
  %4678 = vmatprep.subr.mxu0 0.0
  %4679 = vmatpush1.msra.mxu0 0.0
  %4680 = vmatprep.subr.mxu0 0.0
  %4681 = vmatpush1.msra.mxu0 0.0
  %4682 = vmatprep.subr.mxu0 0.0
  %4683 = vmatpush1.msra.mxu0 0.0
  %4684 = vmatprep.subr.mxu0 0.0
  %4685 = vmatpush1.msra.mxu0 0.0
  %4686 = vmatprep.subr.mxu0 0.0
  %4687 = vmatpush1.msra.mxu0 0.0
  %4688 = vmatprep.subr.mxu0 0.0
  %4689 = vmatpush1.msra.mxu0 0.0
  %4690 = vmatprep.subr.mxu0 0.0
  %4691 = vmatpush1.msra.mxu0 0.0
  %4692 = vmatprep.subr.mxu0 0.0
  %4693 = vmatpush1.msra.mxu0 0.0
  %4694 = vmatprep.subr.mxu0 0.0
  %4695 = vmatpush1.msra.mxu0 0.0
  %4696 = vmatprep.subr.mxu0 0.0
  %4697 = vmatpush1.msra.mxu0 0.0
  %4698 = vmatprep.subr.mxu0 0.0
  %4699 = vmatpush1.msra.mxu0 0.0
  %4700 = vmatprep.subr.mxu0 0.0
  %4701 = vmatpush1.msra.mxu0 0.0
  %v4702 = vand.u32 %v15, 4294901760
  %4703 = vmatprep.subr.mxu0 %v4702
  %v4704 = vand.u32 %v14, 4294901760
  %4705 = vmatpush1.msra.mxu0 %v4704
  %4706 = vmatprep.subr.mxu0 0.0
  %4707 = vmatpush2.msra.mxu0 0.0
  %4708 = vmatprep.subr.mxu0 0.0
  %4709 = vmatpush2.msra.mxu0 0.0
  %4710 = vmatprep.subr.mxu0 0.0
  %4711 = vmatpush2.msra.mxu0 0.0
  %4712 = vmatprep.subr.mxu0 0.0
  %4713 = vmatpush2.msra.mxu0 0.0
  %4714 = vmatprep.subr.mxu0 0.0
  %4715 = vmatpush2.msra.mxu0 0.0
  %4716 = vmatprep.subr.mxu0 0.0
  %4717 = vmatpush2.msra.mxu0 0.0
  %4718 = vmatprep.subr.mxu0 0.0
  %4719 = vmatpush2.msra.mxu0 0.0
  %4720 = vmatprep.subr.mxu0 0.0
  %4721 = vmatpush2.msra.mxu0 0.0
  %4722 = vmatprep.subr.mxu0 0.0
  %4723 = vmatpush2.msra.mxu0 0.0
  %4724 = vmatprep.subr.mxu0 0.0
  %4725 = vmatpush2.msra.mxu0 0.0
  %4726 = vmatprep.subr.mxu0 0.0
  %4727 = vmatpush2.msra.mxu0 0.0
  %4728 = vmatprep.subr.mxu0 0.0
  %4729 = vmatpush2.msra.mxu0 0.0
  %4730 = vmatprep.subr.mxu0 0.0
  %4731 = vmatpush2.msra.mxu0 0.0
  %4732 = vmatprep.subr.mxu0 0.0
  %4733 = vmatpush2.msra.mxu0 0.0
  %4734 = vmatprep.subr.mxu0 0.0
  %4735 = vmatpush2.msra.mxu0 0.0
  %4736 = vmatprep.subr.mxu0 0.0
  %4737 = vmatpush2.msra.mxu0 0.0
  %4738 = vmatprep.mubr.f32.mxu0 0.0
  %v4739 = vand.u32 %v4279, 4294901760
  %4740 = vmatmul.mubr.f32.gmra.mxu0 %v4739
  %v4741 = vpop.f32.mrf.mxu0
  %v4742 = vadd.f32 %v4668, %v4741
  %v4743 = vpop.f32.mrf.mxu0
  %v4744 = vadd.f32 %v4670, %v4743
  %4745 = vdwg.mxu0
  %4746 = vmatprep.subr.mxu0 0.0
  %4747 = vmatpush1.msra.mxu0 0.0
  %4748 = vmatprep.subr.mxu0 0.0
  %4749 = vmatpush1.msra.mxu0 0.0
  %4750 = vmatprep.subr.mxu0 0.0
  %4751 = vmatpush1.msra.mxu0 0.0
  %4752 = vmatprep.subr.mxu0 0.0
  %4753 = vmatpush1.msra.mxu0 0.0
  %4754 = vmatprep.subr.mxu0 0.0
  %4755 = vmatpush1.msra.mxu0 0.0
  %4756 = vmatprep.subr.mxu0 0.0
  %4757 = vmatpush1.msra.mxu0 0.0
  %4758 = vmatprep.subr.mxu0 0.0
  %4759 = vmatpush1.msra.mxu0 0.0
  %4760 = vmatprep.subr.mxu0 0.0
  %4761 = vmatpush1.msra.mxu0 0.0
  %4762 = vmatprep.subr.mxu0 0.0
  %4763 = vmatpush1.msra.mxu0 0.0
  %4764 = vmatprep.subr.mxu0 0.0
  %4765 = vmatpush1.msra.mxu0 0.0
  %4766 = vmatprep.subr.mxu0 0.0
  %4767 = vmatpush1.msra.mxu0 0.0
  %4768 = vmatprep.subr.mxu0 0.0
  %4769 = vmatpush1.msra.mxu0 0.0
  %4770 = vmatprep.subr.mxu0 0.0
  %4771 = vmatpush1.msra.mxu0 0.0
  %4772 = vmatprep.subr.mxu0 0.0
  %4773 = vmatpush1.msra.mxu0 0.0
  %4774 = vmatprep.subr.mxu0 0.0
  %4775 = vmatpush1.msra.mxu0 0.0
  %v4776 = vand.u32 %v17, 4294901760
  %4777 = vmatprep.subr.mxu0 %v4776
  %v4778 = vand.u32 %v16, 4294901760
  %4779 = vmatpush1.msra.mxu0 %v4778
  %4780 = vmatprep.subr.mxu0 0.0
  %4781 = vmatpush2.msra.mxu0 0.0
  %4782 = vmatprep.subr.mxu0 0.0
  %4783 = vmatpush2.msra.mxu0 0.0
  %4784 = vmatprep.subr.mxu0 0.0
  %4785 = vmatpush2.msra.mxu0 0.0
  %4786 = vmatprep.subr.mxu0 0.0
  %4787 = vmatpush2.msra.mxu0 0.0
  %4788 = vmatprep.subr.mxu0 0.0
  %4789 = vmatpush2.msra.mxu0 0.0
  %4790 = vmatprep.subr.mxu0 0.0
  %4791 = vmatpush2.msra.mxu0 0.0
  %4792 = vmatprep.subr.mxu0 0.0
  %4793 = vmatpush2.msra.mxu0 0.0
  %4794 = vmatprep.subr.mxu0 0.0
  %4795 = vmatpush2.msra.mxu0 0.0
  %4796 = vmatprep.subr.mxu0 0.0
  %4797 = vmatpush2.msra.mxu0 0.0
  %4798 = vmatprep.subr.mxu0 0.0
  %4799 = vmatpush2.msra.mxu0 0.0
  %4800 = vmatprep.subr.mxu0 0.0
  %4801 = vmatpush2.msra.mxu0 0.0
  %4802 = vmatprep.subr.mxu0 0.0
  %4803 = vmatpush2.msra.mxu0 0.0
  %4804 = vmatprep.subr.mxu0 0.0
  %4805 = vmatpush2.msra.mxu0 0.0
  %4806 = vmatprep.subr.mxu0 0.0
  %4807 = vmatpush2.msra.mxu0 0.0
  %4808 = vmatprep.subr.mxu0 0.0
  %4809 = vmatpush2.msra.mxu0 0.0
  %4810 = vmatprep.subr.mxu0 0.0
  %4811 = vmatpush2.msra.mxu0 0.0
  %4812 = vmatprep.mubr.f32.mxu0 0.0
  %v4813 = vand.u32 %v4279, 4294901760
  %v4814 = vsub.f32 %v4279, %v4813
  %v4815 = vand.u32 %v4814, 4294901760
  %v4816 = vsub.f32 %v4814, %v4815
  %v4817 = vand.u32 %v4816, 4294901760
  %4818 = vmatmul.mubr.f32.gmra.mxu0 %v4817
  %v4819 = vpop.f32.mrf.mxu0
  %v4820 = vadd.f32 0.0, %v4819
  %v4821 = vpop.f32.mrf.mxu0
  %v4822 = vadd.f32 0.0, %v4821
  %4823 = vdwg.mxu0
  %4824 = vmatprep.subr.mxu0 0.0
  %4825 = vmatpush1.msra.mxu0 0.0
  %4826 = vmatprep.subr.mxu0 0.0
  %4827 = vmatpush1.msra.mxu0 0.0
  %4828 = vmatprep.subr.mxu0 0.0
  %4829 = vmatpush1.msra.mxu0 0.0
  %4830 = vmatprep.subr.mxu0 0.0
  %4831 = vmatpush1.msra.mxu0 0.0
  %4832 = vmatprep.subr.mxu0 0.0
  %4833 = vmatpush1.msra.mxu0 0.0
  %4834 = vmatprep.subr.mxu0 0.0
  %4835 = vmatpush1.msra.mxu0 0.0
  %4836 = vmatprep.subr.mxu0 0.0
  %4837 = vmatpush1.msra.mxu0 0.0
  %4838 = vmatprep.subr.mxu0 0.0
  %4839 = vmatpush1.msra.mxu0 0.0
  %4840 = vmatprep.subr.mxu0 0.0
  %4841 = vmatpush1.msra.mxu0 0.0
  %4842 = vmatprep.subr.mxu0 0.0
  %4843 = vmatpush1.msra.mxu0 0.0
  %4844 = vmatprep.subr.mxu0 0.0
  %4845 = vmatpush1.msra.mxu0 0.0
  %4846 = vmatprep.subr.mxu0 0.0
  %4847 = vmatpush1.msra.mxu0 0.0
  %4848 = vmatprep.subr.mxu0 0.0
  %4849 = vmatpush1.msra.mxu0 0.0
  %4850 = vmatprep.subr.mxu0 0.0
  %4851 = vmatpush1.msra.mxu0 0.0
  %4852 = vmatprep.subr.mxu0 0.0
  %4853 = vmatpush1.msra.mxu0 0.0
  %v4854 = vand.u32 %v17, 4294901760
  %v4855 = vsub.f32 %v17, %v4854
  %v4856 = vand.u32 %v4855, 4294901760
  %v4857 = vsub.f32 %v4855, %v4856
  %v4858 = vand.u32 %v4857, 4294901760
  %4859 = vmatprep.subr.mxu0 %v4858
  %v4860 = vand.u32 %v16, 4294901760
  %v4861 = vsub.f32 %v16, %v4860
  %v4862 = vand.u32 %v4861, 4294901760
  %v4863 = vsub.f32 %v4861, %v4862
  %v4864 = vand.u32 %v4863, 4294901760
  %4865 = vmatpush1.msra.mxu0 %v4864
  %4866 = vmatprep.subr.mxu0 0.0
  %4867 = vmatpush2.msra.mxu0 0.0
  %4868 = vmatprep.subr.mxu0 0.0
  %4869 = vmatpush2.msra.mxu0 0.0
  %4870 = vmatprep.subr.mxu0 0.0
  %4871 = vmatpush2.msra.mxu0 0.0
  %4872 = vmatprep.subr.mxu0 0.0
  %4873 = vmatpush2.msra.mxu0 0.0
  %4874 = vmatprep.subr.mxu0 0.0
  %4875 = vmatpush2.msra.mxu0 0.0
  %4876 = vmatprep.subr.mxu0 0.0
  %4877 = vmatpush2.msra.mxu0 0.0
  %4878 = vmatprep.subr.mxu0 0.0
  %4879 = vmatpush2.msra.mxu0 0.0
  %4880 = vmatprep.subr.mxu0 0.0
  %4881 = vmatpush2.msra.mxu0 0.0
  %4882 = vmatprep.subr.mxu0 0.0
  %4883 = vmatpush2.msra.mxu0 0.0
  %4884 = vmatprep.subr.mxu0 0.0
  %4885 = vmatpush2.msra.mxu0 0.0
  %4886 = vmatprep.subr.mxu0 0.0
  %4887 = vmatpush2.msra.mxu0 0.0
  %4888 = vmatprep.subr.mxu0 0.0
  %4889 = vmatpush2.msra.mxu0 0.0
  %4890 = vmatprep.subr.mxu0 0.0
  %4891 = vmatpush2.msra.mxu0 0.0
  %4892 = vmatprep.subr.mxu0 0.0
  %4893 = vmatpush2.msra.mxu0 0.0
  %4894 = vmatprep.subr.mxu0 0.0
  %4895 = vmatpush2.msra.mxu0 0.0
  %4896 = vmatprep.subr.mxu0 0.0
  %4897 = vmatpush2.msra.mxu0 0.0
  %4898 = vmatprep.mubr.f32.mxu0 0.0
  %v4899 = vand.u32 %v4279, 4294901760
  %4900 = vmatmul.mubr.f32.gmra.mxu0 %v4899
  %v4901 = vpop.f32.mrf.mxu0
  %v4902 = vadd.f32 %v4820, %v4901
  %v4903 = vpop.f32.mrf.mxu0
  %v4904 = vadd.f32 %v4822, %v4903
  %4905 = vdwg.mxu0
  %4906 = vmatprep.subr.mxu0 0.0
  %4907 = vmatpush1.msra.mxu0 0.0
  %4908 = vmatprep.subr.mxu0 0.0
  %4909 = vmatpush1.msra.mxu0 0.0
  %4910 = vmatprep.subr.mxu0 0.0
  %4911 = vmatpush1.msra.mxu0 0.0
  %4912 = vmatprep.subr.mxu0 0.0
  %4913 = vmatpush1.msra.mxu0 0.0
  %4914 = vmatprep.subr.mxu0 0.0
  %4915 = vmatpush1.msra.mxu0 0.0
  %4916 = vmatprep.subr.mxu0 0.0
  %4917 = vmatpush1.msra.mxu0 0.0
  %4918 = vmatprep.subr.mxu0 0.0
  %4919 = vmatpush1.msra.mxu0 0.0
  %4920 = vmatprep.subr.mxu0 0.0
  %4921 = vmatpush1.msra.mxu0 0.0
  %4922 = vmatprep.subr.mxu0 0.0
  %4923 = vmatpush1.msra.mxu0 0.0
  %4924 = vmatprep.subr.mxu0 0.0
  %4925 = vmatpush1.msra.mxu0 0.0
  %4926 = vmatprep.subr.mxu0 0.0
  %4927 = vmatpush1.msra.mxu0 0.0
  %4928 = vmatprep.subr.mxu0 0.0
  %4929 = vmatpush1.msra.mxu0 0.0
  %4930 = vmatprep.subr.mxu0 0.0
  %4931 = vmatpush1.msra.mxu0 0.0
  %4932 = vmatprep.subr.mxu0 0.0
  %4933 = vmatpush1.msra.mxu0 0.0
  %4934 = vmatprep.subr.mxu0 0.0
  %4935 = vmatpush1.msra.mxu0 0.0
  %v4936 = vand.u32 %v17, 4294901760
  %v4937 = vsub.f32 %v17, %v4936
  %4938 = vmatprep.subr.mxu0 %v4937
  %v4939 = vand.u32 %v16, 4294901760
  %v4940 = vsub.f32 %v16, %v4939
  %4941 = vmatpush1.msra.mxu0 %v4940
  %4942 = vmatprep.subr.mxu0 0.0
  %4943 = vmatpush2.msra.mxu0 0.0
  %4944 = vmatprep.subr.mxu0 0.0
  %4945 = vmatpush2.msra.mxu0 0.0
  %4946 = vmatprep.subr.mxu0 0.0
  %4947 = vmatpush2.msra.mxu0 0.0
  %4948 = vmatprep.subr.mxu0 0.0
  %4949 = vmatpush2.msra.mxu0 0.0
  %4950 = vmatprep.subr.mxu0 0.0
  %4951 = vmatpush2.msra.mxu0 0.0
  %4952 = vmatprep.subr.mxu0 0.0
  %4953 = vmatpush2.msra.mxu0 0.0
  %4954 = vmatprep.subr.mxu0 0.0
  %4955 = vmatpush2.msra.mxu0 0.0
  %4956 = vmatprep.subr.mxu0 0.0
  %4957 = vmatpush2.msra.mxu0 0.0
  %4958 = vmatprep.subr.mxu0 0.0
  %4959 = vmatpush2.msra.mxu0 0.0
  %4960 = vmatprep.subr.mxu0 0.0
  %4961 = vmatpush2.msra.mxu0 0.0
  %4962 = vmatprep.subr.mxu0 0.0
  %4963 = vmatpush2.msra.mxu0 0.0
  %4964 = vmatprep.subr.mxu0 0.0
  %4965 = vmatpush2.msra.mxu0 0.0
  %4966 = vmatprep.subr.mxu0 0.0
  %4967 = vmatpush2.msra.mxu0 0.0
  %4968 = vmatprep.subr.mxu0 0.0
  %4969 = vmatpush2.msra.mxu0 0.0
  %4970 = vmatprep.subr.mxu0 0.0
  %4971 = vmatpush2.msra.mxu0 0.0
  %4972 = vmatprep.subr.mxu0 0.0
  %4973 = vmatpush2.msra.mxu0 0.0
  %4974 = vmatprep.mubr.f32.mxu0 0.0
  %v4975 = vand.u32 %v4279, 4294901760
  %v4976 = vsub.f32 %v4279, %v4975
  %4977 = vmatmul.mubr.f32.gmra.mxu0 %v4976
  %v4978 = vpop.f32.mrf.mxu0
  %v4979 = vadd.f32 %v4902, %v4978
  %v4980 = vpop.f32.mrf.mxu0
  %v4981 = vadd.f32 %v4904, %v4980
  %4982 = vdwg.mxu0
  %4983 = vmatprep.subr.mxu0 0.0
  %4984 = vmatpush1.msra.mxu0 0.0
  %4985 = vmatprep.subr.mxu0 0.0
  %4986 = vmatpush1.msra.mxu0 0.0
  %4987 = vmatprep.subr.mxu0 0.0
  %4988 = vmatpush1.msra.mxu0 0.0
  %4989 = vmatprep.subr.mxu0 0.0
  %4990 = vmatpush1.msra.mxu0 0.0
  %4991 = vmatprep.subr.mxu0 0.0
  %4992 = vmatpush1.msra.mxu0 0.0
  %4993 = vmatprep.subr.mxu0 0.0
  %4994 = vmatpush1.msra.mxu0 0.0
  %4995 = vmatprep.subr.mxu0 0.0
  %4996 = vmatpush1.msra.mxu0 0.0
  %4997 = vmatprep.subr.mxu0 0.0
  %4998 = vmatpush1.msra.mxu0 0.0
  %4999 = vmatprep.subr.mxu0 0.0
  %5000 = vmatpush1.msra.mxu0 0.0
  %5001 = vmatprep.subr.mxu0 0.0
  %5002 = vmatpush1.msra.mxu0 0.0
  %5003 = vmatprep.subr.mxu0 0.0
  %5004 = vmatpush1.msra.mxu0 0.0
  %5005 = vmatprep.subr.mxu0 0.0
  %5006 = vmatpush1.msra.mxu0 0.0
  %5007 = vmatprep.subr.mxu0 0.0
  %5008 = vmatpush1.msra.mxu0 0.0
  %5009 = vmatprep.subr.mxu0 0.0
  %5010 = vmatpush1.msra.mxu0 0.0
  %5011 = vmatprep.subr.mxu0 0.0
  %5012 = vmatpush1.msra.mxu0 0.0
  %v5013 = vand.u32 %v17, 4294901760
  %5014 = vmatprep.subr.mxu0 %v5013
  %v5015 = vand.u32 %v16, 4294901760
  %5016 = vmatpush1.msra.mxu0 %v5015
  %5017 = vmatprep.subr.mxu0 0.0
  %5018 = vmatpush2.msra.mxu0 0.0
  %5019 = vmatprep.subr.mxu0 0.0
  %5020 = vmatpush2.msra.mxu0 0.0
  %5021 = vmatprep.subr.mxu0 0.0
  %5022 = vmatpush2.msra.mxu0 0.0
  %5023 = vmatprep.subr.mxu0 0.0
  %5024 = vmatpush2.msra.mxu0 0.0
  %5025 = vmatprep.subr.mxu0 0.0
  %5026 = vmatpush2.msra.mxu0 0.0
  %5027 = vmatprep.subr.mxu0 0.0
  %5028 = vmatpush2.msra.mxu0 0.0
  %5029 = vmatprep.subr.mxu0 0.0
  %5030 = vmatpush2.msra.mxu0 0.0
  %5031 = vmatprep.subr.mxu0 0.0
  %5032 = vmatpush2.msra.mxu0 0.0
  %5033 = vmatprep.subr.mxu0 0.0
  %5034 = vmatpush2.msra.mxu0 0.0
  %5035 = vmatprep.subr.mxu0 0.0
  %5036 = vmatpush2.msra.mxu0 0.0
  %5037 = vmatprep.subr.mxu0 0.0
  %5038 = vmatpush2.msra.mxu0 0.0
  %5039 = vmatprep.subr.mxu0 0.0
  %5040 = vmatpush2.msra.mxu0 0.0
  %5041 = vmatprep.subr.mxu0 0.0
  %5042 = vmatpush2.msra.mxu0 0.0
  %5043 = vmatprep.subr.mxu0 0.0
  %5044 = vmatpush2.msra.mxu0 0.0
  %5045 = vmatprep.subr.mxu0 0.0
  %5046 = vmatpush2.msra.mxu0 0.0
  %5047 = vmatprep.subr.mxu0 0.0
  %5048 = vmatpush2.msra.mxu0 0.0
  %5049 = vmatprep.mubr.f32.mxu0 0.0
  %v5050 = vand.u32 %v4279, 4294901760
  %v5051 = vsub.f32 %v4279, %v5050
  %v5052 = vand.u32 %v5051, 4294901760
  %5053 = vmatmul.mubr.f32.gmra.mxu0 %v5052
  %v5054 = vpop.f32.mrf.mxu0
  %v5055 = vadd.f32 %v4979, %v5054
  %v5056 = vpop.f32.mrf.mxu0
  %v5057 = vadd.f32 %v4981, %v5056
  %5058 = vdwg.mxu0
  %5059 = vmatprep.subr.mxu0 0.0
  %5060 = vmatpush1.msra.mxu0 0.0
  %5061 = vmatprep.subr.mxu0 0.0
  %5062 = vmatpush1.msra.mxu0 0.0
  %5063 = vmatprep.subr.mxu0 0.0
  %5064 = vmatpush1.msra.mxu0 0.0
  %5065 = vmatprep.subr.mxu0 0.0
  %5066 = vmatpush1.msra.mxu0 0.0
  %5067 = vmatprep.subr.mxu0 0.0
  %5068 = vmatpush1.msra.mxu0 0.0
  %5069 = vmatprep.subr.mxu0 0.0
  %5070 = vmatpush1.msra.mxu0 0.0
  %5071 = vmatprep.subr.mxu0 0.0
  %5072 = vmatpush1.msra.mxu0 0.0
  %5073 = vmatprep.subr.mxu0 0.0
  %5074 = vmatpush1.msra.mxu0 0.0
  %5075 = vmatprep.subr.mxu0 0.0
  %5076 = vmatpush1.msra.mxu0 0.0
  %5077 = vmatprep.subr.mxu0 0.0
  %5078 = vmatpush1.msra.mxu0 0.0
  %5079 = vmatprep.subr.mxu0 0.0
  %5080 = vmatpush1.msra.mxu0 0.0
  %5081 = vmatprep.subr.mxu0 0.0
  %5082 = vmatpush1.msra.mxu0 0.0
  %5083 = vmatprep.subr.mxu0 0.0
  %5084 = vmatpush1.msra.mxu0 0.0
  %5085 = vmatprep.subr.mxu0 0.0
  %5086 = vmatpush1.msra.mxu0 0.0
  %5087 = vmatprep.subr.mxu0 0.0
  %5088 = vmatpush1.msra.mxu0 0.0
  %v5089 = vand.u32 %v17, 4294901760
  %v5090 = vsub.f32 %v17, %v5089
  %v5091 = vand.u32 %v5090, 4294901760
  %5092 = vmatprep.subr.mxu0 %v5091
  %v5093 = vand.u32 %v16, 4294901760
  %v5094 = vsub.f32 %v16, %v5093
  %v5095 = vand.u32 %v5094, 4294901760
  %5096 = vmatpush1.msra.mxu0 %v5095
  %5097 = vmatprep.subr.mxu0 0.0
  %5098 = vmatpush2.msra.mxu0 0.0
  %5099 = vmatprep.subr.mxu0 0.0
  %5100 = vmatpush2.msra.mxu0 0.0
  %5101 = vmatprep.subr.mxu0 0.0
  %5102 = vmatpush2.msra.mxu0 0.0
  %5103 = vmatprep.subr.mxu0 0.0
  %5104 = vmatpush2.msra.mxu0 0.0
  %5105 = vmatprep.subr.mxu0 0.0
  %5106 = vmatpush2.msra.mxu0 0.0
  %5107 = vmatprep.subr.mxu0 0.0
  %5108 = vmatpush2.msra.mxu0 0.0
  %5109 = vmatprep.subr.mxu0 0.0
  %5110 = vmatpush2.msra.mxu0 0.0
  %5111 = vmatprep.subr.mxu0 0.0
  %5112 = vmatpush2.msra.mxu0 0.0
  %5113 = vmatprep.subr.mxu0 0.0
  %5114 = vmatpush2.msra.mxu0 0.0
  %5115 = vmatprep.subr.mxu0 0.0
  %5116 = vmatpush2.msra.mxu0 0.0
  %5117 = vmatprep.subr.mxu0 0.0
  %5118 = vmatpush2.msra.mxu0 0.0
  %5119 = vmatprep.subr.mxu0 0.0
  %5120 = vmatpush2.msra.mxu0 0.0
  %5121 = vmatprep.subr.mxu0 0.0
  %5122 = vmatpush2.msra.mxu0 0.0
  %5123 = vmatprep.subr.mxu0 0.0
  %5124 = vmatpush2.msra.mxu0 0.0
  %5125 = vmatprep.subr.mxu0 0.0
  %5126 = vmatpush2.msra.mxu0 0.0
  %5127 = vmatprep.subr.mxu0 0.0
  %5128 = vmatpush2.msra.mxu0 0.0
  %5129 = vmatprep.mubr.f32.mxu0 0.0
  %v5130 = vand.u32 %v4279, 4294901760
  %5131 = vmatmul.mubr.f32.gmra.mxu0 %v5130
  %v5132 = vpop.f32.mrf.mxu0
  %v5133 = vadd.f32 %v5055, %v5132
  %v5134 = vpop.f32.mrf.mxu0
  %v5135 = vadd.f32 %v5057, %v5134
  %5136 = vdwg.mxu0
  %5137 = vmatprep.subr.mxu0 0.0
  %5138 = vmatpush1.msra.mxu0 0.0
  %5139 = vmatprep.subr.mxu0 0.0
  %5140 = vmatpush1.msra.mxu0 0.0
  %5141 = vmatprep.subr.mxu0 0.0
  %5142 = vmatpush1.msra.mxu0 0.0
  %5143 = vmatprep.subr.mxu0 0.0
  %5144 = vmatpush1.msra.mxu0 0.0
  %5145 = vmatprep.subr.mxu0 0.0
  %5146 = vmatpush1.msra.mxu0 0.0
  %5147 = vmatprep.subr.mxu0 0.0
  %5148 = vmatpush1.msra.mxu0 0.0
  %5149 = vmatprep.subr.mxu0 0.0
  %5150 = vmatpush1.msra.mxu0 0.0
  %5151 = vmatprep.subr.mxu0 0.0
  %5152 = vmatpush1.msra.mxu0 0.0
  %5153 = vmatprep.subr.mxu0 0.0
  %5154 = vmatpush1.msra.mxu0 0.0
  %5155 = vmatprep.subr.mxu0 0.0
  %5156 = vmatpush1.msra.mxu0 0.0
  %5157 = vmatprep.subr.mxu0 0.0
  %5158 = vmatpush1.msra.mxu0 0.0
  %5159 = vmatprep.subr.mxu0 0.0
  %5160 = vmatpush1.msra.mxu0 0.0
  %5161 = vmatprep.subr.mxu0 0.0
  %5162 = vmatpush1.msra.mxu0 0.0
  %5163 = vmatprep.subr.mxu0 0.0
  %5164 = vmatpush1.msra.mxu0 0.0
  %5165 = vmatprep.subr.mxu0 0.0
  %5166 = vmatpush1.msra.mxu0 0.0
  %v5167 = vand.u32 %v17, 4294901760
  %5168 = vmatprep.subr.mxu0 %v5167
  %v5169 = vand.u32 %v16, 4294901760
  %5170 = vmatpush1.msra.mxu0 %v5169
  %5171 = vmatprep.subr.mxu0 0.0
  %5172 = vmatpush2.msra.mxu0 0.0
  %5173 = vmatprep.subr.mxu0 0.0
  %5174 = vmatpush2.msra.mxu0 0.0
  %5175 = vmatprep.subr.mxu0 0.0
  %5176 = vmatpush2.msra.mxu0 0.0
  %5177 = vmatprep.subr.mxu0 0.0
  %5178 = vmatpush2.msra.mxu0 0.0
  %5179 = vmatprep.subr.mxu0 0.0
  %5180 = vmatpush2.msra.mxu0 0.0
  %5181 = vmatprep.subr.mxu0 0.0
  %5182 = vmatpush2.msra.mxu0 0.0
  %5183 = vmatprep.subr.mxu0 0.0
  %5184 = vmatpush2.msra.mxu0 0.0
  %5185 = vmatprep.subr.mxu0 0.0
  %5186 = vmatpush2.msra.mxu0 0.0
  %5187 = vmatprep.subr.mxu0 0.0
  %5188 = vmatpush2.msra.mxu0 0.0
  %5189 = vmatprep.subr.mxu0 0.0
  %5190 = vmatpush2.msra.mxu0 0.0
  %5191 = vmatprep.subr.mxu0 0.0
  %5192 = vmatpush2.msra.mxu0 0.0
  %5193 = vmatprep.subr.mxu0 0.0
  %5194 = vmatpush2.msra.mxu0 0.0
  %5195 = vmatprep.subr.mxu0 0.0
  %5196 = vmatpush2.msra.mxu0 0.0
  %5197 = vmatprep.subr.mxu0 0.0
  %5198 = vmatpush2.msra.mxu0 0.0
  %5199 = vmatprep.subr.mxu0 0.0
  %5200 = vmatpush2.msra.mxu0 0.0
  %5201 = vmatprep.subr.mxu0 0.0
  %5202 = vmatpush2.msra.mxu0 0.0
  %5203 = vmatprep.mubr.f32.mxu0 0.0
  %v5204 = vand.u32 %v4279, 4294901760
  %5205 = vmatmul.mubr.f32.gmra.mxu0 %v5204
  %v5206 = vpop.f32.mrf.mxu0
  %v5207 = vadd.f32 %v5133, %v5206
  %v5208 = vpop.f32.mrf.mxu0
  %v5209 = vadd.f32 %v5135, %v5208
  %5210 = vdwg.mxu0
  %5211 = vmatprep.subr.mxu0 0.0
  %5212 = vmatpush1.msra.mxu0 0.0
  %5213 = vmatprep.subr.mxu0 0.0
  %5214 = vmatpush1.msra.mxu0 0.0
  %5215 = vmatprep.subr.mxu0 0.0
  %5216 = vmatpush1.msra.mxu0 0.0
  %5217 = vmatprep.subr.mxu0 0.0
  %5218 = vmatpush1.msra.mxu0 0.0
  %5219 = vmatprep.subr.mxu0 0.0
  %5220 = vmatpush1.msra.mxu0 0.0
  %5221 = vmatprep.subr.mxu0 0.0
  %5222 = vmatpush1.msra.mxu0 0.0
  %5223 = vmatprep.subr.mxu0 0.0
  %5224 = vmatpush1.msra.mxu0 0.0
  %5225 = vmatprep.subr.mxu0 0.0
  %5226 = vmatpush1.msra.mxu0 0.0
  %5227 = vmatprep.subr.mxu0 0.0
  %5228 = vmatpush1.msra.mxu0 0.0
  %5229 = vmatprep.subr.mxu0 0.0
  %5230 = vmatpush1.msra.mxu0 0.0
  %5231 = vmatprep.subr.mxu0 0.0
  %5232 = vmatpush1.msra.mxu0 0.0
  %5233 = vmatprep.subr.mxu0 0.0
  %5234 = vmatpush1.msra.mxu0 0.0
  %5235 = vmatprep.subr.mxu0 0.0
  %5236 = vmatpush1.msra.mxu0 0.0
  %5237 = vmatprep.subr.mxu0 0.0
  %5238 = vmatpush1.msra.mxu0 0.0
  %5239 = vmatprep.subr.mxu0 0.0
  %5240 = vmatpush1.msra.mxu0 0.0
  %v5241 = vand.u32 %v19, 4294901760
  %5242 = vmatprep.subr.mxu0 %v5241
  %v5243 = vand.u32 %v18, 4294901760
  %5244 = vmatpush1.msra.mxu0 %v5243
  %5245 = vmatprep.subr.mxu0 0.0
  %5246 = vmatpush2.msra.mxu0 0.0
  %5247 = vmatprep.subr.mxu0 0.0
  %5248 = vmatpush2.msra.mxu0 0.0
  %5249 = vmatprep.subr.mxu0 0.0
  %5250 = vmatpush2.msra.mxu0 0.0
  %5251 = vmatprep.subr.mxu0 0.0
  %5252 = vmatpush2.msra.mxu0 0.0
  %5253 = vmatprep.subr.mxu0 0.0
  %5254 = vmatpush2.msra.mxu0 0.0
  %5255 = vmatprep.subr.mxu0 0.0
  %5256 = vmatpush2.msra.mxu0 0.0
  %5257 = vmatprep.subr.mxu0 0.0
  %5258 = vmatpush2.msra.mxu0 0.0
  %5259 = vmatprep.subr.mxu0 0.0
  %5260 = vmatpush2.msra.mxu0 0.0
  %5261 = vmatprep.subr.mxu0 0.0
  %5262 = vmatpush2.msra.mxu0 0.0
  %5263 = vmatprep.subr.mxu0 0.0
  %5264 = vmatpush2.msra.mxu0 0.0
  %5265 = vmatprep.subr.mxu0 0.0
  %5266 = vmatpush2.msra.mxu0 0.0
  %5267 = vmatprep.subr.mxu0 0.0
  %5268 = vmatpush2.msra.mxu0 0.0
  %5269 = vmatprep.subr.mxu0 0.0
  %5270 = vmatpush2.msra.mxu0 0.0
  %5271 = vmatprep.subr.mxu0 0.0
  %5272 = vmatpush2.msra.mxu0 0.0
  %5273 = vmatprep.subr.mxu0 0.0
  %5274 = vmatpush2.msra.mxu0 0.0
  %5275 = vmatprep.subr.mxu0 0.0
  %5276 = vmatpush2.msra.mxu0 0.0
  %5277 = vmatprep.mubr.f32.mxu0 0.0
  %v5278 = vand.u32 %v4279, 4294901760
  %v5279 = vsub.f32 %v4279, %v5278
  %v5280 = vand.u32 %v5279, 4294901760
  %v5281 = vsub.f32 %v5279, %v5280
  %v5282 = vand.u32 %v5281, 4294901760
  %5283 = vmatmul.mubr.f32.gmra.mxu0 %v5282
  %v5284 = vpop.f32.mrf.mxu0
  %v5285 = vadd.f32 0.0, %v5284
  %v5286 = vpop.f32.mrf.mxu0
  %v5287 = vadd.f32 0.0, %v5286
  %5288 = vdwg.mxu0
  %5289 = vmatprep.subr.mxu0 0.0
  %5290 = vmatpush1.msra.mxu0 0.0
  %5291 = vmatprep.subr.mxu0 0.0
  %5292 = vmatpush1.msra.mxu0 0.0
  %5293 = vmatprep.subr.mxu0 0.0
  %5294 = vmatpush1.msra.mxu0 0.0
  %5295 = vmatprep.subr.mxu0 0.0
  %5296 = vmatpush1.msra.mxu0 0.0
  %5297 = vmatprep.subr.mxu0 0.0
  %5298 = vmatpush1.msra.mxu0 0.0
  %5299 = vmatprep.subr.mxu0 0.0
  %5300 = vmatpush1.msra.mxu0 0.0
  %5301 = vmatprep.subr.mxu0 0.0
  %5302 = vmatpush1.msra.mxu0 0.0
  %5303 = vmatprep.subr.mxu0 0.0
  %5304 = vmatpush1.msra.mxu0 0.0
  %5305 = vmatprep.subr.mxu0 0.0
  %5306 = vmatpush1.msra.mxu0 0.0
  %5307 = vmatprep.subr.mxu0 0.0
  %5308 = vmatpush1.msra.mxu0 0.0
  %5309 = vmatprep.subr.mxu0 0.0
  %5310 = vmatpush1.msra.mxu0 0.0
  %5311 = vmatprep.subr.mxu0 0.0
  %5312 = vmatpush1.msra.mxu0 0.0
  %5313 = vmatprep.subr.mxu0 0.0
  %5314 = vmatpush1.msra.mxu0 0.0
  %5315 = vmatprep.subr.mxu0 0.0
  %5316 = vmatpush1.msra.mxu0 0.0
  %5317 = vmatprep.subr.mxu0 0.0
  %5318 = vmatpush1.msra.mxu0 0.0
  %v5319 = vand.u32 %v19, 4294901760
  %v5320 = vsub.f32 %v19, %v5319
  %v5321 = vand.u32 %v5320, 4294901760
  %v5322 = vsub.f32 %v5320, %v5321
  %v5323 = vand.u32 %v5322, 4294901760
  %5324 = vmatprep.subr.mxu0 %v5323
  %v5325 = vand.u32 %v18, 4294901760
  %v5326 = vsub.f32 %v18, %v5325
  %v5327 = vand.u32 %v5326, 4294901760
  %v5328 = vsub.f32 %v5326, %v5327
  %v5329 = vand.u32 %v5328, 4294901760
  %5330 = vmatpush1.msra.mxu0 %v5329
  %5331 = vmatprep.subr.mxu0 0.0
  %5332 = vmatpush2.msra.mxu0 0.0
  %5333 = vmatprep.subr.mxu0 0.0
  %5334 = vmatpush2.msra.mxu0 0.0
  %5335 = vmatprep.subr.mxu0 0.0
  %5336 = vmatpush2.msra.mxu0 0.0
  %5337 = vmatprep.subr.mxu0 0.0
  %5338 = vmatpush2.msra.mxu0 0.0
  %5339 = vmatprep.subr.mxu0 0.0
  %5340 = vmatpush2.msra.mxu0 0.0
  %5341 = vmatprep.subr.mxu0 0.0
  %5342 = vmatpush2.msra.mxu0 0.0
  %5343 = vmatprep.subr.mxu0 0.0
  %5344 = vmatpush2.msra.mxu0 0.0
  %5345 = vmatprep.subr.mxu0 0.0
  %5346 = vmatpush2.msra.mxu0 0.0
  %5347 = vmatprep.subr.mxu0 0.0
  %5348 = vmatpush2.msra.mxu0 0.0
  %5349 = vmatprep.subr.mxu0 0.0
  %5350 = vmatpush2.msra.mxu0 0.0
  %5351 = vmatprep.subr.mxu0 0.0
  %5352 = vmatpush2.msra.mxu0 0.0
  %5353 = vmatprep.subr.mxu0 0.0
  %5354 = vmatpush2.msra.mxu0 0.0
  %5355 = vmatprep.subr.mxu0 0.0
  %5356 = vmatpush2.msra.mxu0 0.0
  %5357 = vmatprep.subr.mxu0 0.0
  %5358 = vmatpush2.msra.mxu0 0.0
  %5359 = vmatprep.subr.mxu0 0.0
  %5360 = vmatpush2.msra.mxu0 0.0
  %5361 = vmatprep.subr.mxu0 0.0
  %5362 = vmatpush2.msra.mxu0 0.0
  %5363 = vmatprep.mubr.f32.mxu0 0.0
  %v5364 = vand.u32 %v4279, 4294901760
  %5365 = vmatmul.mubr.f32.gmra.mxu0 %v5364
  %v5366 = vpop.f32.mrf.mxu0
  %v5367 = vadd.f32 %v5285, %v5366
  %v5368 = vpop.f32.mrf.mxu0
  %v5369 = vadd.f32 %v5287, %v5368
  %5370 = vdwg.mxu0
  %5371 = vmatprep.subr.mxu0 0.0
  %5372 = vmatpush1.msra.mxu0 0.0
  %5373 = vmatprep.subr.mxu0 0.0
  %5374 = vmatpush1.msra.mxu0 0.0
  %5375 = vmatprep.subr.mxu0 0.0
  %5376 = vmatpush1.msra.mxu0 0.0
  %5377 = vmatprep.subr.mxu0 0.0
  %5378 = vmatpush1.msra.mxu0 0.0
  %5379 = vmatprep.subr.mxu0 0.0
  %5380 = vmatpush1.msra.mxu0 0.0
  %5381 = vmatprep.subr.mxu0 0.0
  %5382 = vmatpush1.msra.mxu0 0.0
  %5383 = vmatprep.subr.mxu0 0.0
  %5384 = vmatpush1.msra.mxu0 0.0
  %5385 = vmatprep.subr.mxu0 0.0
  %5386 = vmatpush1.msra.mxu0 0.0
  %5387 = vmatprep.subr.mxu0 0.0
  %5388 = vmatpush1.msra.mxu0 0.0
  %5389 = vmatprep.subr.mxu0 0.0
  %5390 = vmatpush1.msra.mxu0 0.0
  %5391 = vmatprep.subr.mxu0 0.0
  %5392 = vmatpush1.msra.mxu0 0.0
  %5393 = vmatprep.subr.mxu0 0.0
  %5394 = vmatpush1.msra.mxu0 0.0
  %5395 = vmatprep.subr.mxu0 0.0
  %5396 = vmatpush1.msra.mxu0 0.0
  %5397 = vmatprep.subr.mxu0 0.0
  %5398 = vmatpush1.msra.mxu0 0.0
  %5399 = vmatprep.subr.mxu0 0.0
  %5400 = vmatpush1.msra.mxu0 0.0
  %v5401 = vand.u32 %v19, 4294901760
  %v5402 = vsub.f32 %v19, %v5401
  %5403 = vmatprep.subr.mxu0 %v5402
  %v5404 = vand.u32 %v18, 4294901760
  %v5405 = vsub.f32 %v18, %v5404
  %5406 = vmatpush1.msra.mxu0 %v5405
  %5407 = vmatprep.subr.mxu0 0.0
  %5408 = vmatpush2.msra.mxu0 0.0
  %5409 = vmatprep.subr.mxu0 0.0
  %5410 = vmatpush2.msra.mxu0 0.0
  %5411 = vmatprep.subr.mxu0 0.0
  %5412 = vmatpush2.msra.mxu0 0.0
  %5413 = vmatprep.subr.mxu0 0.0
  %5414 = vmatpush2.msra.mxu0 0.0
  %5415 = vmatprep.subr.mxu0 0.0
  %5416 = vmatpush2.msra.mxu0 0.0
  %5417 = vmatprep.subr.mxu0 0.0
  %5418 = vmatpush2.msra.mxu0 0.0
  %5419 = vmatprep.subr.mxu0 0.0
  %5420 = vmatpush2.msra.mxu0 0.0
  %5421 = vmatprep.subr.mxu0 0.0
  %5422 = vmatpush2.msra.mxu0 0.0
  %5423 = vmatprep.subr.mxu0 0.0
  %5424 = vmatpush2.msra.mxu0 0.0
  %5425 = vmatprep.subr.mxu0 0.0
  %5426 = vmatpush2.msra.mxu0 0.0
  %5427 = vmatprep.subr.mxu0 0.0
  %5428 = vmatpush2.msra.mxu0 0.0
  %5429 = vmatprep.subr.mxu0 0.0
  %5430 = vmatpush2.msra.mxu0 0.0
  %5431 = vmatprep.subr.mxu0 0.0
  %5432 = vmatpush2.msra.mxu0 0.0
  %5433 = vmatprep.subr.mxu0 0.0
  %5434 = vmatpush2.msra.mxu0 0.0
  %5435 = vmatprep.subr.mxu0 0.0
  %5436 = vmatpush2.msra.mxu0 0.0
  %5437 = vmatprep.subr.mxu0 0.0
  %5438 = vmatpush2.msra.mxu0 0.0
  %5439 = vmatprep.mubr.f32.mxu0 0.0
  %v5440 = vand.u32 %v4279, 4294901760
  %v5441 = vsub.f32 %v4279, %v5440
  %5442 = vmatmul.mubr.f32.gmra.mxu0 %v5441
  %v5443 = vpop.f32.mrf.mxu0
  %v5444 = vadd.f32 %v5367, %v5443
  %v5445 = vpop.f32.mrf.mxu0
  %v5446 = vadd.f32 %v5369, %v5445
  %5447 = vdwg.mxu0
  %5448 = vmatprep.subr.mxu0 0.0
  %5449 = vmatpush1.msra.mxu0 0.0
  %5450 = vmatprep.subr.mxu0 0.0
  %5451 = vmatpush1.msra.mxu0 0.0
  %5452 = vmatprep.subr.mxu0 0.0
  %5453 = vmatpush1.msra.mxu0 0.0
  %5454 = vmatprep.subr.mxu0 0.0
  %5455 = vmatpush1.msra.mxu0 0.0
  %5456 = vmatprep.subr.mxu0 0.0
  %5457 = vmatpush1.msra.mxu0 0.0
  %5458 = vmatprep.subr.mxu0 0.0
  %5459 = vmatpush1.msra.mxu0 0.0
  %5460 = vmatprep.subr.mxu0 0.0
  %5461 = vmatpush1.msra.mxu0 0.0
  %5462 = vmatprep.subr.mxu0 0.0
  %5463 = vmatpush1.msra.mxu0 0.0
  %5464 = vmatprep.subr.mxu0 0.0
  %5465 = vmatpush1.msra.mxu0 0.0
  %5466 = vmatprep.subr.mxu0 0.0
  %5467 = vmatpush1.msra.mxu0 0.0
  %5468 = vmatprep.subr.mxu0 0.0
  %5469 = vmatpush1.msra.mxu0 0.0
  %5470 = vmatprep.subr.mxu0 0.0
  %5471 = vmatpush1.msra.mxu0 0.0
  %5472 = vmatprep.subr.mxu0 0.0
  %5473 = vmatpush1.msra.mxu0 0.0
  %5474 = vmatprep.subr.mxu0 0.0
  %5475 = vmatpush1.msra.mxu0 0.0
  %5476 = vmatprep.subr.mxu0 0.0
  %5477 = vmatpush1.msra.mxu0 0.0
  %v5478 = vand.u32 %v19, 4294901760
  %5479 = vmatprep.subr.mxu0 %v5478
  %v5480 = vand.u32 %v18, 4294901760
  %5481 = vmatpush1.msra.mxu0 %v5480
  %5482 = vmatprep.subr.mxu0 0.0
  %5483 = vmatpush2.msra.mxu0 0.0
  %5484 = vmatprep.subr.mxu0 0.0
  %5485 = vmatpush2.msra.mxu0 0.0
  %5486 = vmatprep.subr.mxu0 0.0
  %5487 = vmatpush2.msra.mxu0 0.0
  %5488 = vmatprep.subr.mxu0 0.0
  %5489 = vmatpush2.msra.mxu0 0.0
  %5490 = vmatprep.subr.mxu0 0.0
  %5491 = vmatpush2.msra.mxu0 0.0
  %5492 = vmatprep.subr.mxu0 0.0
  %5493 = vmatpush2.msra.mxu0 0.0
  %5494 = vmatprep.subr.mxu0 0.0
  %5495 = vmatpush2.msra.mxu0 0.0
  %5496 = vmatprep.subr.mxu0 0.0
  %5497 = vmatpush2.msra.mxu0 0.0
  %5498 = vmatprep.subr.mxu0 0.0
  %5499 = vmatpush2.msra.mxu0 0.0
  %5500 = vmatprep.subr.mxu0 0.0
  %5501 = vmatpush2.msra.mxu0 0.0
  %5502 = vmatprep.subr.mxu0 0.0
  %5503 = vmatpush2.msra.mxu0 0.0
  %5504 = vmatprep.subr.mxu0 0.0
  %5505 = vmatpush2.msra.mxu0 0.0
  %5506 = vmatprep.subr.mxu0 0.0
  %5507 = vmatpush2.msra.mxu0 0.0
  %5508 = vmatprep.subr.mxu0 0.0
  %5509 = vmatpush2.msra.mxu0 0.0
  %5510 = vmatprep.subr.mxu0 0.0
  %5511 = vmatpush2.msra.mxu0 0.0
  %5512 = vmatprep.subr.mxu0 0.0
  %5513 = vmatpush2.msra.mxu0 0.0
  %5514 = vmatprep.mubr.f32.mxu0 0.0
  %v5515 = vand.u32 %v4279, 4294901760
  %v5516 = vsub.f32 %v4279, %v5515
  %v5517 = vand.u32 %v5516, 4294901760
  %5518 = vmatmul.mubr.f32.gmra.mxu0 %v5517
  %v5519 = vpop.f32.mrf.mxu0
  %v5520 = vadd.f32 %v5444, %v5519
  %v5521 = vpop.f32.mrf.mxu0
  %v5522 = vadd.f32 %v5446, %v5521
  %5523 = vdwg.mxu0
  %5524 = vmatprep.subr.mxu0 0.0
  %5525 = vmatpush1.msra.mxu0 0.0
  %5526 = vmatprep.subr.mxu0 0.0
  %5527 = vmatpush1.msra.mxu0 0.0
  %5528 = vmatprep.subr.mxu0 0.0
  %5529 = vmatpush1.msra.mxu0 0.0
  %5530 = vmatprep.subr.mxu0 0.0
  %5531 = vmatpush1.msra.mxu0 0.0
  %5532 = vmatprep.subr.mxu0 0.0
  %5533 = vmatpush1.msra.mxu0 0.0
  %5534 = vmatprep.subr.mxu0 0.0
  %5535 = vmatpush1.msra.mxu0 0.0
  %5536 = vmatprep.subr.mxu0 0.0
  %5537 = vmatpush1.msra.mxu0 0.0
  %5538 = vmatprep.subr.mxu0 0.0
  %5539 = vmatpush1.msra.mxu0 0.0
  %5540 = vmatprep.subr.mxu0 0.0
  %5541 = vmatpush1.msra.mxu0 0.0
  %5542 = vmatprep.subr.mxu0 0.0
  %5543 = vmatpush1.msra.mxu0 0.0
  %5544 = vmatprep.subr.mxu0 0.0
  %5545 = vmatpush1.msra.mxu0 0.0
  %5546 = vmatprep.subr.mxu0 0.0
  %5547 = vmatpush1.msra.mxu0 0.0
  %5548 = vmatprep.subr.mxu0 0.0
  %5549 = vmatpush1.msra.mxu0 0.0
  %5550 = vmatprep.subr.mxu0 0.0
  %5551 = vmatpush1.msra.mxu0 0.0
  %5552 = vmatprep.subr.mxu0 0.0
  %5553 = vmatpush1.msra.mxu0 0.0
  %v5554 = vand.u32 %v19, 4294901760
  %v5555 = vsub.f32 %v19, %v5554
  %v5556 = vand.u32 %v5555, 4294901760
  %5557 = vmatprep.subr.mxu0 %v5556
  %v5558 = vand.u32 %v18, 4294901760
  %v5559 = vsub.f32 %v18, %v5558
  %v5560 = vand.u32 %v5559, 4294901760
  %5561 = vmatpush1.msra.mxu0 %v5560
  %5562 = vmatprep.subr.mxu0 0.0
  %5563 = vmatpush2.msra.mxu0 0.0
  %5564 = vmatprep.subr.mxu0 0.0
  %5565 = vmatpush2.msra.mxu0 0.0
  %5566 = vmatprep.subr.mxu0 0.0
  %5567 = vmatpush2.msra.mxu0 0.0
  %5568 = vmatprep.subr.mxu0 0.0
  %5569 = vmatpush2.msra.mxu0 0.0
  %5570 = vmatprep.subr.mxu0 0.0
  %5571 = vmatpush2.msra.mxu0 0.0
  %5572 = vmatprep.subr.mxu0 0.0
  %5573 = vmatpush2.msra.mxu0 0.0
  %5574 = vmatprep.subr.mxu0 0.0
  %5575 = vmatpush2.msra.mxu0 0.0
  %5576 = vmatprep.subr.mxu0 0.0
  %5577 = vmatpush2.msra.mxu0 0.0
  %5578 = vmatprep.subr.mxu0 0.0
  %5579 = vmatpush2.msra.mxu0 0.0
  %5580 = vmatprep.subr.mxu0 0.0
  %5581 = vmatpush2.msra.mxu0 0.0
  %5582 = vmatprep.subr.mxu0 0.0
  %5583 = vmatpush2.msra.mxu0 0.0
  %5584 = vmatprep.subr.mxu0 0.0
  %5585 = vmatpush2.msra.mxu0 0.0
  %5586 = vmatprep.subr.mxu0 0.0
  %5587 = vmatpush2.msra.mxu0 0.0
  %5588 = vmatprep.subr.mxu0 0.0
  %5589 = vmatpush2.msra.mxu0 0.0
  %5590 = vmatprep.subr.mxu0 0.0
  %5591 = vmatpush2.msra.mxu0 0.0
  %5592 = vmatprep.subr.mxu0 0.0
  %5593 = vmatpush2.msra.mxu0 0.0
  %5594 = vmatprep.mubr.f32.mxu0 0.0
  %v5595 = vand.u32 %v4279, 4294901760
  %5596 = vmatmul.mubr.f32.gmra.mxu0 %v5595
  %v5597 = vpop.f32.mrf.mxu0
  %v5598 = vadd.f32 %v5520, %v5597
  %v5599 = vpop.f32.mrf.mxu0
  %v5600 = vadd.f32 %v5522, %v5599
  %5601 = vdwg.mxu0
  %5602 = vmatprep.subr.mxu0 0.0
  %5603 = vmatpush1.msra.mxu0 0.0
  %5604 = vmatprep.subr.mxu0 0.0
  %5605 = vmatpush1.msra.mxu0 0.0
  %5606 = vmatprep.subr.mxu0 0.0
  %5607 = vmatpush1.msra.mxu0 0.0
  %5608 = vmatprep.subr.mxu0 0.0
  %5609 = vmatpush1.msra.mxu0 0.0
  %5610 = vmatprep.subr.mxu0 0.0
  %5611 = vmatpush1.msra.mxu0 0.0
  %5612 = vmatprep.subr.mxu0 0.0
  %5613 = vmatpush1.msra.mxu0 0.0
  %5614 = vmatprep.subr.mxu0 0.0
  %5615 = vmatpush1.msra.mxu0 0.0
  %5616 = vmatprep.subr.mxu0 0.0
  %5617 = vmatpush1.msra.mxu0 0.0
  %5618 = vmatprep.subr.mxu0 0.0
  %5619 = vmatpush1.msra.mxu0 0.0
  %5620 = vmatprep.subr.mxu0 0.0
  %5621 = vmatpush1.msra.mxu0 0.0
  %5622 = vmatprep.subr.mxu0 0.0
  %5623 = vmatpush1.msra.mxu0 0.0
  %5624 = vmatprep.subr.mxu0 0.0
  %5625 = vmatpush1.msra.mxu0 0.0
  %5626 = vmatprep.subr.mxu0 0.0
  %5627 = vmatpush1.msra.mxu0 0.0
  %5628 = vmatprep.subr.mxu0 0.0
  %5629 = vmatpush1.msra.mxu0 0.0
  %5630 = vmatprep.subr.mxu0 0.0
  %5631 = vmatpush1.msra.mxu0 0.0
  %v5632 = vand.u32 %v19, 4294901760
  %5633 = vmatprep.subr.mxu0 %v5632
  %v5634 = vand.u32 %v18, 4294901760
  %5635 = vmatpush1.msra.mxu0 %v5634
  %5636 = vmatprep.subr.mxu0 0.0
  %5637 = vmatpush2.msra.mxu0 0.0
  %5638 = vmatprep.subr.mxu0 0.0
  %5639 = vmatpush2.msra.mxu0 0.0
  %5640 = vmatprep.subr.mxu0 0.0
  %5641 = vmatpush2.msra.mxu0 0.0
  %5642 = vmatprep.subr.mxu0 0.0
  %5643 = vmatpush2.msra.mxu0 0.0
  %5644 = vmatprep.subr.mxu0 0.0
  %5645 = vmatpush2.msra.mxu0 0.0
  %5646 = vmatprep.subr.mxu0 0.0
  %5647 = vmatpush2.msra.mxu0 0.0
  %5648 = vmatprep.subr.mxu0 0.0
  %5649 = vmatpush2.msra.mxu0 0.0
  %5650 = vmatprep.subr.mxu0 0.0
  %5651 = vmatpush2.msra.mxu0 0.0
  %5652 = vmatprep.subr.mxu0 0.0
  %5653 = vmatpush2.msra.mxu0 0.0
  %5654 = vmatprep.subr.mxu0 0.0
  %5655 = vmatpush2.msra.mxu0 0.0
  %5656 = vmatprep.subr.mxu0 0.0
  %5657 = vmatpush2.msra.mxu0 0.0
  %5658 = vmatprep.subr.mxu0 0.0
  %5659 = vmatpush2.msra.mxu0 0.0
  %5660 = vmatprep.subr.mxu0 0.0
  %5661 = vmatpush2.msra.mxu0 0.0
  %5662 = vmatprep.subr.mxu0 0.0
  %5663 = vmatpush2.msra.mxu0 0.0
  %5664 = vmatprep.subr.mxu0 0.0
  %5665 = vmatpush2.msra.mxu0 0.0
  %5666 = vmatprep.subr.mxu0 0.0
  %5667 = vmatpush2.msra.mxu0 0.0
  %5668 = vmatprep.mubr.f32.mxu0 0.0
  %v5669 = vand.u32 %v4279, 4294901760
  %5670 = vmatmul.mubr.f32.gmra.mxu0 %v5669
  %v5671 = vpop.f32.mrf.mxu0
  %v5672 = vadd.f32 %v5598, %v5671
  %v5673 = vpop.f32.mrf.mxu0
  %v5674 = vadd.f32 %v5600, %v5673
  %5675 = vdwg.mxu0
  %5676 = vmatprep.subr.mxu0 0.0
  %5677 = vmatpush1.msra.mxu0 0.0
  %5678 = vmatprep.subr.mxu0 0.0
  %5679 = vmatpush1.msra.mxu0 0.0
  %5680 = vmatprep.subr.mxu0 0.0
  %5681 = vmatpush1.msra.mxu0 0.0
  %5682 = vmatprep.subr.mxu0 0.0
  %5683 = vmatpush1.msra.mxu0 0.0
  %5684 = vmatprep.subr.mxu0 0.0
  %5685 = vmatpush1.msra.mxu0 0.0
  %5686 = vmatprep.subr.mxu0 0.0
  %5687 = vmatpush1.msra.mxu0 0.0
  %5688 = vmatprep.subr.mxu0 0.0
  %5689 = vmatpush1.msra.mxu0 0.0
  %5690 = vmatprep.subr.mxu0 0.0
  %5691 = vmatpush1.msra.mxu0 0.0
  %5692 = vmatprep.subr.mxu0 0.0
  %5693 = vmatpush1.msra.mxu0 0.0
  %5694 = vmatprep.subr.mxu0 0.0
  %5695 = vmatpush1.msra.mxu0 0.0
  %5696 = vmatprep.subr.mxu0 0.0
  %5697 = vmatpush1.msra.mxu0 0.0
  %5698 = vmatprep.subr.mxu0 0.0
  %5699 = vmatpush1.msra.mxu0 0.0
  %5700 = vmatprep.subr.mxu0 0.0
  %5701 = vmatpush1.msra.mxu0 0.0
  %5702 = vmatprep.subr.mxu0 0.0
  %5703 = vmatpush1.msra.mxu0 0.0
  %5704 = vmatprep.subr.mxu0 0.0
  %5705 = vmatpush1.msra.mxu0 0.0
  %v5706 = vand.u32 %v21, 4294901760
  %5707 = vmatprep.subr.mxu0 %v5706
  %v5708 = vand.u32 %v20, 4294901760
  %5709 = vmatpush1.msra.mxu0 %v5708
  %5710 = vmatprep.subr.mxu0 0.0
  %5711 = vmatpush2.msra.mxu0 0.0
  %5712 = vmatprep.subr.mxu0 0.0
  %5713 = vmatpush2.msra.mxu0 0.0
  %5714 = vmatprep.subr.mxu0 0.0
  %5715 = vmatpush2.msra.mxu0 0.0
  %5716 = vmatprep.subr.mxu0 0.0
  %5717 = vmatpush2.msra.mxu0 0.0
  %5718 = vmatprep.subr.mxu0 0.0
  %5719 = vmatpush2.msra.mxu0 0.0
  %5720 = vmatprep.subr.mxu0 0.0
  %5721 = vmatpush2.msra.mxu0 0.0
  %5722 = vmatprep.subr.mxu0 0.0
  %5723 = vmatpush2.msra.mxu0 0.0
  %5724 = vmatprep.subr.mxu0 0.0
  %5725 = vmatpush2.msra.mxu0 0.0
  %5726 = vmatprep.subr.mxu0 0.0
  %5727 = vmatpush2.msra.mxu0 0.0
  %5728 = vmatprep.subr.mxu0 0.0
  %5729 = vmatpush2.msra.mxu0 0.0
  %5730 = vmatprep.subr.mxu0 0.0
  %5731 = vmatpush2.msra.mxu0 0.0
  %5732 = vmatprep.subr.mxu0 0.0
  %5733 = vmatpush2.msra.mxu0 0.0
  %5734 = vmatprep.subr.mxu0 0.0
  %5735 = vmatpush2.msra.mxu0 0.0
  %5736 = vmatprep.subr.mxu0 0.0
  %5737 = vmatpush2.msra.mxu0 0.0
  %5738 = vmatprep.subr.mxu0 0.0
  %5739 = vmatpush2.msra.mxu0 0.0
  %5740 = vmatprep.subr.mxu0 0.0
  %5741 = vmatpush2.msra.mxu0 0.0
  %5742 = vmatprep.mubr.f32.mxu0 0.0
  %v5743 = vand.u32 %v4279, 4294901760
  %v5744 = vsub.f32 %v4279, %v5743
  %v5745 = vand.u32 %v5744, 4294901760
  %v5746 = vsub.f32 %v5744, %v5745
  %v5747 = vand.u32 %v5746, 4294901760
  %5748 = vmatmul.mubr.f32.gmra.mxu0 %v5747
  %v5749 = vpop.f32.mrf.mxu0
  %v5750 = vadd.f32 0.0, %v5749
  %v5751 = vpop.f32.mrf.mxu0
  %v5752 = vadd.f32 0.0, %v5751
  %5753 = vdwg.mxu0
  %5754 = vmatprep.subr.mxu0 0.0
  %5755 = vmatpush1.msra.mxu0 0.0
  %5756 = vmatprep.subr.mxu0 0.0
  %5757 = vmatpush1.msra.mxu0 0.0
  %5758 = vmatprep.subr.mxu0 0.0
  %5759 = vmatpush1.msra.mxu0 0.0
  %5760 = vmatprep.subr.mxu0 0.0
  %5761 = vmatpush1.msra.mxu0 0.0
  %5762 = vmatprep.subr.mxu0 0.0
  %5763 = vmatpush1.msra.mxu0 0.0
  %5764 = vmatprep.subr.mxu0 0.0
  %5765 = vmatpush1.msra.mxu0 0.0
  %5766 = vmatprep.subr.mxu0 0.0
  %5767 = vmatpush1.msra.mxu0 0.0
  %5768 = vmatprep.subr.mxu0 0.0
  %5769 = vmatpush1.msra.mxu0 0.0
  %5770 = vmatprep.subr.mxu0 0.0
  %5771 = vmatpush1.msra.mxu0 0.0
  %5772 = vmatprep.subr.mxu0 0.0
  %5773 = vmatpush1.msra.mxu0 0.0
  %5774 = vmatprep.subr.mxu0 0.0
  %5775 = vmatpush1.msra.mxu0 0.0
  %5776 = vmatprep.subr.mxu0 0.0
  %5777 = vmatpush1.msra.mxu0 0.0
  %5778 = vmatprep.subr.mxu0 0.0
  %5779 = vmatpush1.msra.mxu0 0.0
  %5780 = vmatprep.subr.mxu0 0.0
  %5781 = vmatpush1.msra.mxu0 0.0
  %5782 = vmatprep.subr.mxu0 0.0
  %5783 = vmatpush1.msra.mxu0 0.0
  %v5784 = vand.u32 %v21, 4294901760
  %v5785 = vsub.f32 %v21, %v5784
  %v5786 = vand.u32 %v5785, 4294901760
  %v5787 = vsub.f32 %v5785, %v5786
  %v5788 = vand.u32 %v5787, 4294901760
  %5789 = vmatprep.subr.mxu0 %v5788
  %v5790 = vand.u32 %v20, 4294901760
  %v5791 = vsub.f32 %v20, %v5790
  %v5792 = vand.u32 %v5791, 4294901760
  %v5793 = vsub.f32 %v5791, %v5792
  %v5794 = vand.u32 %v5793, 4294901760
  %5795 = vmatpush1.msra.mxu0 %v5794
  %5796 = vmatprep.subr.mxu0 0.0
  %5797 = vmatpush2.msra.mxu0 0.0
  %5798 = vmatprep.subr.mxu0 0.0
  %5799 = vmatpush2.msra.mxu0 0.0
  %5800 = vmatprep.subr.mxu0 0.0
  %5801 = vmatpush2.msra.mxu0 0.0
  %5802 = vmatprep.subr.mxu0 0.0
  %5803 = vmatpush2.msra.mxu0 0.0
  %5804 = vmatprep.subr.mxu0 0.0
  %5805 = vmatpush2.msra.mxu0 0.0
  %5806 = vmatprep.subr.mxu0 0.0
  %5807 = vmatpush2.msra.mxu0 0.0
  %5808 = vmatprep.subr.mxu0 0.0
  %5809 = vmatpush2.msra.mxu0 0.0
  %5810 = vmatprep.subr.mxu0 0.0
  %5811 = vmatpush2.msra.mxu0 0.0
  %5812 = vmatprep.subr.mxu0 0.0
  %5813 = vmatpush2.msra.mxu0 0.0
  %5814 = vmatprep.subr.mxu0 0.0
  %5815 = vmatpush2.msra.mxu0 0.0
  %5816 = vmatprep.subr.mxu0 0.0
  %5817 = vmatpush2.msra.mxu0 0.0
  %5818 = vmatprep.subr.mxu0 0.0
  %5819 = vmatpush2.msra.mxu0 0.0
  %5820 = vmatprep.subr.mxu0 0.0
  %5821 = vmatpush2.msra.mxu0 0.0
  %5822 = vmatprep.subr.mxu0 0.0
  %5823 = vmatpush2.msra.mxu0 0.0
  %5824 = vmatprep.subr.mxu0 0.0
  %5825 = vmatpush2.msra.mxu0 0.0
  %5826 = vmatprep.subr.mxu0 0.0
  %5827 = vmatpush2.msra.mxu0 0.0
  %5828 = vmatprep.mubr.f32.mxu0 0.0
  %v5829 = vand.u32 %v4279, 4294901760
  %5830 = vmatmul.mubr.f32.gmra.mxu0 %v5829
  %v5831 = vpop.f32.mrf.mxu0
  %v5832 = vadd.f32 %v5750, %v5831
  %v5833 = vpop.f32.mrf.mxu0
  %v5834 = vadd.f32 %v5752, %v5833
  %5835 = vdwg.mxu0
  %5836 = vmatprep.subr.mxu0 0.0
  %5837 = vmatpush1.msra.mxu0 0.0
  %5838 = vmatprep.subr.mxu0 0.0
  %5839 = vmatpush1.msra.mxu0 0.0
  %5840 = vmatprep.subr.mxu0 0.0
  %5841 = vmatpush1.msra.mxu0 0.0
  %5842 = vmatprep.subr.mxu0 0.0
  %5843 = vmatpush1.msra.mxu0 0.0
  %5844 = vmatprep.subr.mxu0 0.0
  %5845 = vmatpush1.msra.mxu0 0.0
  %5846 = vmatprep.subr.mxu0 0.0
  %5847 = vmatpush1.msra.mxu0 0.0
  %5848 = vmatprep.subr.mxu0 0.0
  %5849 = vmatpush1.msra.mxu0 0.0
  %5850 = vmatprep.subr.mxu0 0.0
  %5851 = vmatpush1.msra.mxu0 0.0
  %5852 = vmatprep.subr.mxu0 0.0
  %5853 = vmatpush1.msra.mxu0 0.0
  %5854 = vmatprep.subr.mxu0 0.0
  %5855 = vmatpush1.msra.mxu0 0.0
  %5856 = vmatprep.subr.mxu0 0.0
  %5857 = vmatpush1.msra.mxu0 0.0
  %5858 = vmatprep.subr.mxu0 0.0
  %5859 = vmatpush1.msra.mxu0 0.0
  %5860 = vmatprep.subr.mxu0 0.0
  %5861 = vmatpush1.msra.mxu0 0.0
  %5862 = vmatprep.subr.mxu0 0.0
  %5863 = vmatpush1.msra.mxu0 0.0
  %5864 = vmatprep.subr.mxu0 0.0
  %5865 = vmatpush1.msra.mxu0 0.0
  %v5866 = vand.u32 %v21, 4294901760
  %v5867 = vsub.f32 %v21, %v5866
  %5868 = vmatprep.subr.mxu0 %v5867
  %v5869 = vand.u32 %v20, 4294901760
  %v5870 = vsub.f32 %v20, %v5869
  %5871 = vmatpush1.msra.mxu0 %v5870
  %5872 = vmatprep.subr.mxu0 0.0
  %5873 = vmatpush2.msra.mxu0 0.0
  %5874 = vmatprep.subr.mxu0 0.0
  %5875 = vmatpush2.msra.mxu0 0.0
  %5876 = vmatprep.subr.mxu0 0.0
  %5877 = vmatpush2.msra.mxu0 0.0
  %5878 = vmatprep.subr.mxu0 0.0
  %5879 = vmatpush2.msra.mxu0 0.0
  %5880 = vmatprep.subr.mxu0 0.0
  %5881 = vmatpush2.msra.mxu0 0.0
  %5882 = vmatprep.subr.mxu0 0.0
  %5883 = vmatpush2.msra.mxu0 0.0
  %5884 = vmatprep.subr.mxu0 0.0
  %5885 = vmatpush2.msra.mxu0 0.0
  %5886 = vmatprep.subr.mxu0 0.0
  %5887 = vmatpush2.msra.mxu0 0.0
  %5888 = vmatprep.subr.mxu0 0.0
  %5889 = vmatpush2.msra.mxu0 0.0
  %5890 = vmatprep.subr.mxu0 0.0
  %5891 = vmatpush2.msra.mxu0 0.0
  %5892 = vmatprep.subr.mxu0 0.0
  %5893 = vmatpush2.msra.mxu0 0.0
  %5894 = vmatprep.subr.mxu0 0.0
  %5895 = vmatpush2.msra.mxu0 0.0
  %5896 = vmatprep.subr.mxu0 0.0
  %5897 = vmatpush2.msra.mxu0 0.0
  %5898 = vmatprep.subr.mxu0 0.0
  %5899 = vmatpush2.msra.mxu0 0.0
  %5900 = vmatprep.subr.mxu0 0.0
  %5901 = vmatpush2.msra.mxu0 0.0
  %5902 = vmatprep.subr.mxu0 0.0
  %5903 = vmatpush2.msra.mxu0 0.0
  %5904 = vmatprep.mubr.f32.mxu0 0.0
  %v5905 = vand.u32 %v4279, 4294901760
  %v5906 = vsub.f32 %v4279, %v5905
  %5907 = vmatmul.mubr.f32.gmra.mxu0 %v5906
  %v5908 = vpop.f32.mrf.mxu0
  %v5909 = vadd.f32 %v5832, %v5908
  %v5910 = vpop.f32.mrf.mxu0
  %v5911 = vadd.f32 %v5834, %v5910
  %5912 = vdwg.mxu0
  %5913 = vmatprep.subr.mxu0 0.0
  %5914 = vmatpush1.msra.mxu0 0.0
  %5915 = vmatprep.subr.mxu0 0.0
  %5916 = vmatpush1.msra.mxu0 0.0
  %5917 = vmatprep.subr.mxu0 0.0
  %5918 = vmatpush1.msra.mxu0 0.0
  %5919 = vmatprep.subr.mxu0 0.0
  %5920 = vmatpush1.msra.mxu0 0.0
  %5921 = vmatprep.subr.mxu0 0.0
  %5922 = vmatpush1.msra.mxu0 0.0
  %5923 = vmatprep.subr.mxu0 0.0
  %5924 = vmatpush1.msra.mxu0 0.0
  %5925 = vmatprep.subr.mxu0 0.0
  %5926 = vmatpush1.msra.mxu0 0.0
  %5927 = vmatprep.subr.mxu0 0.0
  %5928 = vmatpush1.msra.mxu0 0.0
  %5929 = vmatprep.subr.mxu0 0.0
  %5930 = vmatpush1.msra.mxu0 0.0
  %5931 = vmatprep.subr.mxu0 0.0
  %5932 = vmatpush1.msra.mxu0 0.0
  %5933 = vmatprep.subr.mxu0 0.0
  %5934 = vmatpush1.msra.mxu0 0.0
  %5935 = vmatprep.subr.mxu0 0.0
  %5936 = vmatpush1.msra.mxu0 0.0
  %5937 = vmatprep.subr.mxu0 0.0
  %5938 = vmatpush1.msra.mxu0 0.0
  %5939 = vmatprep.subr.mxu0 0.0
  %5940 = vmatpush1.msra.mxu0 0.0
  %5941 = vmatprep.subr.mxu0 0.0
  %5942 = vmatpush1.msra.mxu0 0.0
  %v5943 = vand.u32 %v21, 4294901760
  %5944 = vmatprep.subr.mxu0 %v5943
  %v5945 = vand.u32 %v20, 4294901760
  %5946 = vmatpush1.msra.mxu0 %v5945
  %5947 = vmatprep.subr.mxu0 0.0
  %5948 = vmatpush2.msra.mxu0 0.0
  %5949 = vmatprep.subr.mxu0 0.0
  %5950 = vmatpush2.msra.mxu0 0.0
  %5951 = vmatprep.subr.mxu0 0.0
  %5952 = vmatpush2.msra.mxu0 0.0
  %5953 = vmatprep.subr.mxu0 0.0
  %5954 = vmatpush2.msra.mxu0 0.0
  %5955 = vmatprep.subr.mxu0 0.0
  %5956 = vmatpush2.msra.mxu0 0.0
  %5957 = vmatprep.subr.mxu0 0.0
  %5958 = vmatpush2.msra.mxu0 0.0
  %5959 = vmatprep.subr.mxu0 0.0
  %5960 = vmatpush2.msra.mxu0 0.0
  %5961 = vmatprep.subr.mxu0 0.0
  %5962 = vmatpush2.msra.mxu0 0.0
  %5963 = vmatprep.subr.mxu0 0.0
  %5964 = vmatpush2.msra.mxu0 0.0
  %5965 = vmatprep.subr.mxu0 0.0
  %5966 = vmatpush2.msra.mxu0 0.0
  %5967 = vmatprep.subr.mxu0 0.0
  %5968 = vmatpush2.msra.mxu0 0.0
  %5969 = vmatprep.subr.mxu0 0.0
  %5970 = vmatpush2.msra.mxu0 0.0
  %5971 = vmatprep.subr.mxu0 0.0
  %5972 = vmatpush2.msra.mxu0 0.0
  %5973 = vmatprep.subr.mxu0 0.0
  %5974 = vmatpush2.msra.mxu0 0.0
  %5975 = vmatprep.subr.mxu0 0.0
  %5976 = vmatpush2.msra.mxu0 0.0
  %5977 = vmatprep.subr.mxu0 0.0
  %5978 = vmatpush2.msra.mxu0 0.0
  %5979 = vmatprep.mubr.f32.mxu0 0.0
  %v5980 = vand.u32 %v4279, 4294901760
  %v5981 = vsub.f32 %v4279, %v5980
  %v5982 = vand.u32 %v5981, 4294901760
  %5983 = vmatmul.mubr.f32.gmra.mxu0 %v5982
  %v5984 = vpop.f32.mrf.mxu0
  %v5985 = vadd.f32 %v5909, %v5984
  %v5986 = vpop.f32.mrf.mxu0
  %v5987 = vadd.f32 %v5911, %v5986
  %5988 = vdwg.mxu0
  %5989 = vmatprep.subr.mxu0 0.0
  %5990 = vmatpush1.msra.mxu0 0.0
  %5991 = vmatprep.subr.mxu0 0.0
  %5992 = vmatpush1.msra.mxu0 0.0
  %5993 = vmatprep.subr.mxu0 0.0
  %5994 = vmatpush1.msra.mxu0 0.0
  %5995 = vmatprep.subr.mxu0 0.0
  %5996 = vmatpush1.msra.mxu0 0.0
  %5997 = vmatprep.subr.mxu0 0.0
  %5998 = vmatpush1.msra.mxu0 0.0
  %5999 = vmatprep.subr.mxu0 0.0
  %6000 = vmatpush1.msra.mxu0 0.0
  %6001 = vmatprep.subr.mxu0 0.0
  %6002 = vmatpush1.msra.mxu0 0.0
  %6003 = vmatprep.subr.mxu0 0.0
  %6004 = vmatpush1.msra.mxu0 0.0
  %6005 = vmatprep.subr.mxu0 0.0
  %6006 = vmatpush1.msra.mxu0 0.0
  %6007 = vmatprep.subr.mxu0 0.0
  %6008 = vmatpush1.msra.mxu0 0.0
  %6009 = vmatprep.subr.mxu0 0.0
  %6010 = vmatpush1.msra.mxu0 0.0
  %6011 = vmatprep.subr.mxu0 0.0
  %6012 = vmatpush1.msra.mxu0 0.0
  %6013 = vmatprep.subr.mxu0 0.0
  %6014 = vmatpush1.msra.mxu0 0.0
  %6015 = vmatprep.subr.mxu0 0.0
  %6016 = vmatpush1.msra.mxu0 0.0
  %6017 = vmatprep.subr.mxu0 0.0
  %6018 = vmatpush1.msra.mxu0 0.0
  %v6019 = vand.u32 %v21, 4294901760
  %v6020 = vsub.f32 %v21, %v6019
  %v6021 = vand.u32 %v6020, 4294901760
  %6022 = vmatprep.subr.mxu0 %v6021
  %v6023 = vand.u32 %v20, 4294901760
  %v6024 = vsub.f32 %v20, %v6023
  %v6025 = vand.u32 %v6024, 4294901760
  %6026 = vmatpush1.msra.mxu0 %v6025
  %6027 = vmatprep.subr.mxu0 0.0
  %6028 = vmatpush2.msra.mxu0 0.0
  %6029 = vmatprep.subr.mxu0 0.0
  %6030 = vmatpush2.msra.mxu0 0.0
  %6031 = vmatprep.subr.mxu0 0.0
  %6032 = vmatpush2.msra.mxu0 0.0
  %6033 = vmatprep.subr.mxu0 0.0
  %6034 = vmatpush2.msra.mxu0 0.0
  %6035 = vmatprep.subr.mxu0 0.0
  %6036 = vmatpush2.msra.mxu0 0.0
  %6037 = vmatprep.subr.mxu0 0.0
  %6038 = vmatpush2.msra.mxu0 0.0
  %6039 = vmatprep.subr.mxu0 0.0
  %6040 = vmatpush2.msra.mxu0 0.0
  %6041 = vmatprep.subr.mxu0 0.0
  %6042 = vmatpush2.msra.mxu0 0.0
  %6043 = vmatprep.subr.mxu0 0.0
  %6044 = vmatpush2.msra.mxu0 0.0
  %6045 = vmatprep.subr.mxu0 0.0
  %6046 = vmatpush2.msra.mxu0 0.0
  %6047 = vmatprep.subr.mxu0 0.0
  %6048 = vmatpush2.msra.mxu0 0.0
  %6049 = vmatprep.subr.mxu0 0.0
  %6050 = vmatpush2.msra.mxu0 0.0
  %6051 = vmatprep.subr.mxu0 0.0
  %6052 = vmatpush2.msra.mxu0 0.0
  %6053 = vmatprep.subr.mxu0 0.0
  %6054 = vmatpush2.msra.mxu0 0.0
  %6055 = vmatprep.subr.mxu0 0.0
  %6056 = vmatpush2.msra.mxu0 0.0
  %6057 = vmatprep.subr.mxu0 0.0
  %6058 = vmatpush2.msra.mxu0 0.0
  %6059 = vmatprep.mubr.f32.mxu0 0.0
  %v6060 = vand.u32 %v4279, 4294901760
  %6061 = vmatmul.mubr.f32.gmra.mxu0 %v6060
  %v6062 = vpop.f32.mrf.mxu0
  %v6063 = vadd.f32 %v5985, %v6062
  %v6064 = vpop.f32.mrf.mxu0
  %v6065 = vadd.f32 %v5987, %v6064
  %6066 = vdwg.mxu0
  %6067 = vmatprep.subr.mxu0 0.0
  %6068 = vmatpush1.msra.mxu0 0.0
  %6069 = vmatprep.subr.mxu0 0.0
  %6070 = vmatpush1.msra.mxu0 0.0
  %6071 = vmatprep.subr.mxu0 0.0
  %6072 = vmatpush1.msra.mxu0 0.0
  %6073 = vmatprep.subr.mxu0 0.0
  %6074 = vmatpush1.msra.mxu0 0.0
  %6075 = vmatprep.subr.mxu0 0.0
  %6076 = vmatpush1.msra.mxu0 0.0
  %6077 = vmatprep.subr.mxu0 0.0
  %6078 = vmatpush1.msra.mxu0 0.0
  %6079 = vmatprep.subr.mxu0 0.0
  %6080 = vmatpush1.msra.mxu0 0.0
  %6081 = vmatprep.subr.mxu0 0.0
  %6082 = vmatpush1.msra.mxu0 0.0
  %6083 = vmatprep.subr.mxu0 0.0
  %6084 = vmatpush1.msra.mxu0 0.0
  %6085 = vmatprep.subr.mxu0 0.0
  %6086 = vmatpush1.msra.mxu0 0.0
  %6087 = vmatprep.subr.mxu0 0.0
  %6088 = vmatpush1.msra.mxu0 0.0
  %6089 = vmatprep.subr.mxu0 0.0
  %6090 = vmatpush1.msra.mxu0 0.0
  %6091 = vmatprep.subr.mxu0 0.0
  %6092 = vmatpush1.msra.mxu0 0.0
  %6093 = vmatprep.subr.mxu0 0.0
  %6094 = vmatpush1.msra.mxu0 0.0
  %6095 = vmatprep.subr.mxu0 0.0
  %6096 = vmatpush1.msra.mxu0 0.0
  %v6097 = vand.u32 %v21, 4294901760
  %6098 = vmatprep.subr.mxu0 %v6097
  %v6099 = vand.u32 %v20, 4294901760
  %6100 = vmatpush1.msra.mxu0 %v6099
  %6101 = vmatprep.subr.mxu0 0.0
  %6102 = vmatpush2.msra.mxu0 0.0
  %6103 = vmatprep.subr.mxu0 0.0
  %6104 = vmatpush2.msra.mxu0 0.0
  %6105 = vmatprep.subr.mxu0 0.0
  %6106 = vmatpush2.msra.mxu0 0.0
  %6107 = vmatprep.subr.mxu0 0.0
  %6108 = vmatpush2.msra.mxu0 0.0
  %6109 = vmatprep.subr.mxu0 0.0
  %6110 = vmatpush2.msra.mxu0 0.0
  %6111 = vmatprep.subr.mxu0 0.0
  %6112 = vmatpush2.msra.mxu0 0.0
  %6113 = vmatprep.subr.mxu0 0.0
  %6114 = vmatpush2.msra.mxu0 0.0
  %6115 = vmatprep.subr.mxu0 0.0
  %6116 = vmatpush2.msra.mxu0 0.0
  %6117 = vmatprep.subr.mxu0 0.0
  %6118 = vmatpush2.msra.mxu0 0.0
  %6119 = vmatprep.subr.mxu0 0.0
  %6120 = vmatpush2.msra.mxu0 0.0
  %6121 = vmatprep.subr.mxu0 0.0
  %6122 = vmatpush2.msra.mxu0 0.0
  %6123 = vmatprep.subr.mxu0 0.0
  %6124 = vmatpush2.msra.mxu0 0.0
  %6125 = vmatprep.subr.mxu0 0.0
  %6126 = vmatpush2.msra.mxu0 0.0
  %6127 = vmatprep.subr.mxu0 0.0
  %6128 = vmatpush2.msra.mxu0 0.0
  %6129 = vmatprep.subr.mxu0 0.0
  %6130 = vmatpush2.msra.mxu0 0.0
  %6131 = vmatprep.subr.mxu0 0.0
  %6132 = vmatpush2.msra.mxu0 0.0
  %6133 = vmatprep.mubr.f32.mxu0 0.0
  %v6134 = vand.u32 %v4279, 4294901760
  %6135 = vmatmul.mubr.f32.gmra.mxu0 %v6134
  %v6136 = vpop.f32.mrf.mxu0
  %v6137 = vadd.f32 %v6063, %v6136
  %v6138 = vpop.f32.mrf.mxu0
  %v6139 = vadd.f32 %v6065, %v6138
  %6140 = vdwg.mxu0
  %6141 = vmatprep.subr.mxu0 0.0
  %6142 = vmatpush1.msra.mxu0 0.0
  %6143 = vmatprep.subr.mxu0 0.0
  %6144 = vmatpush1.msra.mxu0 0.0
  %6145 = vmatprep.subr.mxu0 0.0
  %6146 = vmatpush1.msra.mxu0 0.0
  %6147 = vmatprep.subr.mxu0 0.0
  %6148 = vmatpush1.msra.mxu0 0.0
  %6149 = vmatprep.subr.mxu0 0.0
  %6150 = vmatpush1.msra.mxu0 0.0
  %6151 = vmatprep.subr.mxu0 0.0
  %6152 = vmatpush1.msra.mxu0 0.0
  %6153 = vmatprep.subr.mxu0 0.0
  %6154 = vmatpush1.msra.mxu0 0.0
  %6155 = vmatprep.subr.mxu0 0.0
  %6156 = vmatpush1.msra.mxu0 0.0
  %6157 = vmatprep.subr.mxu0 0.0
  %6158 = vmatpush1.msra.mxu0 0.0
  %6159 = vmatprep.subr.mxu0 0.0
  %6160 = vmatpush1.msra.mxu0 0.0
  %6161 = vmatprep.subr.mxu0 0.0
  %6162 = vmatpush1.msra.mxu0 0.0
  %6163 = vmatprep.subr.mxu0 0.0
  %6164 = vmatpush1.msra.mxu0 0.0
  %6165 = vmatprep.subr.mxu0 0.0
  %6166 = vmatpush1.msra.mxu0 0.0
  %6167 = vmatprep.subr.mxu0 0.0
  %6168 = vmatpush1.msra.mxu0 0.0
  %6169 = vmatprep.subr.mxu0 0.0
  %6170 = vmatpush1.msra.mxu0 0.0
  %v6171 = vand.u32 %v23, 4294901760
  %6172 = vmatprep.subr.mxu0 %v6171
  %v6173 = vand.u32 %v22, 4294901760
  %6174 = vmatpush1.msra.mxu0 %v6173
  %6175 = vmatprep.subr.mxu0 0.0
  %6176 = vmatpush2.msra.mxu0 0.0
  %6177 = vmatprep.subr.mxu0 0.0
  %6178 = vmatpush2.msra.mxu0 0.0
  %6179 = vmatprep.subr.mxu0 0.0
  %6180 = vmatpush2.msra.mxu0 0.0
  %6181 = vmatprep.subr.mxu0 0.0
  %6182 = vmatpush2.msra.mxu0 0.0
  %6183 = vmatprep.subr.mxu0 0.0
  %6184 = vmatpush2.msra.mxu0 0.0
  %6185 = vmatprep.subr.mxu0 0.0
  %6186 = vmatpush2.msra.mxu0 0.0
  %6187 = vmatprep.subr.mxu0 0.0
  %6188 = vmatpush2.msra.mxu0 0.0
  %6189 = vmatprep.subr.mxu0 0.0
  %6190 = vmatpush2.msra.mxu0 0.0
  %6191 = vmatprep.subr.mxu0 0.0
  %6192 = vmatpush2.msra.mxu0 0.0
  %6193 = vmatprep.subr.mxu0 0.0
  %6194 = vmatpush2.msra.mxu0 0.0
  %6195 = vmatprep.subr.mxu0 0.0
  %6196 = vmatpush2.msra.mxu0 0.0
  %6197 = vmatprep.subr.mxu0 0.0
  %6198 = vmatpush2.msra.mxu0 0.0
  %6199 = vmatprep.subr.mxu0 0.0
  %6200 = vmatpush2.msra.mxu0 0.0
  %6201 = vmatprep.subr.mxu0 0.0
  %6202 = vmatpush2.msra.mxu0 0.0
  %6203 = vmatprep.subr.mxu0 0.0
  %6204 = vmatpush2.msra.mxu0 0.0
  %6205 = vmatprep.subr.mxu0 0.0
  %6206 = vmatpush2.msra.mxu0 0.0
  %6207 = vmatprep.mubr.f32.mxu0 0.0
  %v6208 = vand.u32 %v4279, 4294901760
  %v6209 = vsub.f32 %v4279, %v6208
  %v6210 = vand.u32 %v6209, 4294901760
  %v6211 = vsub.f32 %v6209, %v6210
  %v6212 = vand.u32 %v6211, 4294901760
  %6213 = vmatmul.mubr.f32.gmra.mxu0 %v6212
  %v6214 = vpop.f32.mrf.mxu0
  %v6215 = vadd.f32 0.0, %v6214
  %v6216 = vpop.f32.mrf.mxu0
  %v6217 = vadd.f32 0.0, %v6216
  %6218 = vdwg.mxu0
  %6219 = vmatprep.subr.mxu0 0.0
  %6220 = vmatpush1.msra.mxu0 0.0
  %6221 = vmatprep.subr.mxu0 0.0
  %6222 = vmatpush1.msra.mxu0 0.0
  %6223 = vmatprep.subr.mxu0 0.0
  %6224 = vmatpush1.msra.mxu0 0.0
  %6225 = vmatprep.subr.mxu0 0.0
  %6226 = vmatpush1.msra.mxu0 0.0
  %6227 = vmatprep.subr.mxu0 0.0
  %6228 = vmatpush1.msra.mxu0 0.0
  %6229 = vmatprep.subr.mxu0 0.0
  %6230 = vmatpush1.msra.mxu0 0.0
  %6231 = vmatprep.subr.mxu0 0.0
  %6232 = vmatpush1.msra.mxu0 0.0
  %6233 = vmatprep.subr.mxu0 0.0
  %6234 = vmatpush1.msra.mxu0 0.0
  %6235 = vmatprep.subr.mxu0 0.0
  %6236 = vmatpush1.msra.mxu0 0.0
  %6237 = vmatprep.subr.mxu0 0.0
  %6238 = vmatpush1.msra.mxu0 0.0
  %6239 = vmatprep.subr.mxu0 0.0
  %6240 = vmatpush1.msra.mxu0 0.0
  %6241 = vmatprep.subr.mxu0 0.0
  %6242 = vmatpush1.msra.mxu0 0.0
  %6243 = vmatprep.subr.mxu0 0.0
  %6244 = vmatpush1.msra.mxu0 0.0
  %6245 = vmatprep.subr.mxu0 0.0
  %6246 = vmatpush1.msra.mxu0 0.0
  %6247 = vmatprep.subr.mxu0 0.0
  %6248 = vmatpush1.msra.mxu0 0.0
  %v6249 = vand.u32 %v23, 4294901760
  %v6250 = vsub.f32 %v23, %v6249
  %v6251 = vand.u32 %v6250, 4294901760
  %v6252 = vsub.f32 %v6250, %v6251
  %v6253 = vand.u32 %v6252, 4294901760
  %6254 = vmatprep.subr.mxu0 %v6253
  %v6255 = vand.u32 %v22, 4294901760
  %v6256 = vsub.f32 %v22, %v6255
  %v6257 = vand.u32 %v6256, 4294901760
  %v6258 = vsub.f32 %v6256, %v6257
  %v6259 = vand.u32 %v6258, 4294901760
  %6260 = vmatpush1.msra.mxu0 %v6259
  %6261 = vmatprep.subr.mxu0 0.0
  %6262 = vmatpush2.msra.mxu0 0.0
  %6263 = vmatprep.subr.mxu0 0.0
  %6264 = vmatpush2.msra.mxu0 0.0
  %6265 = vmatprep.subr.mxu0 0.0
  %6266 = vmatpush2.msra.mxu0 0.0
  %6267 = vmatprep.subr.mxu0 0.0
  %6268 = vmatpush2.msra.mxu0 0.0
  %6269 = vmatprep.subr.mxu0 0.0
  %6270 = vmatpush2.msra.mxu0 0.0
  %6271 = vmatprep.subr.mxu0 0.0
  %6272 = vmatpush2.msra.mxu0 0.0
  %6273 = vmatprep.subr.mxu0 0.0
  %6274 = vmatpush2.msra.mxu0 0.0
  %6275 = vmatprep.subr.mxu0 0.0
  %6276 = vmatpush2.msra.mxu0 0.0
  %6277 = vmatprep.subr.mxu0 0.0
  %6278 = vmatpush2.msra.mxu0 0.0
  %6279 = vmatprep.subr.mxu0 0.0
  %6280 = vmatpush2.msra.mxu0 0.0
  %6281 = vmatprep.subr.mxu0 0.0
  %6282 = vmatpush2.msra.mxu0 0.0
  %6283 = vmatprep.subr.mxu0 0.0
  %6284 = vmatpush2.msra.mxu0 0.0
  %6285 = vmatprep.subr.mxu0 0.0
  %6286 = vmatpush2.msra.mxu0 0.0
  %6287 = vmatprep.subr.mxu0 0.0
  %6288 = vmatpush2.msra.mxu0 0.0
  %6289 = vmatprep.subr.mxu0 0.0
  %6290 = vmatpush2.msra.mxu0 0.0
  %6291 = vmatprep.subr.mxu0 0.0
  %6292 = vmatpush2.msra.mxu0 0.0
  %6293 = vmatprep.mubr.f32.mxu0 0.0
  %v6294 = vand.u32 %v4279, 4294901760
  %6295 = vmatmul.mubr.f32.gmra.mxu0 %v6294
  %v6296 = vpop.f32.mrf.mxu0
  %v6297 = vadd.f32 %v6215, %v6296
  %v6298 = vpop.f32.mrf.mxu0
  %v6299 = vadd.f32 %v6217, %v6298
  %6300 = vdwg.mxu0
  %6301 = vmatprep.subr.mxu0 0.0
  %6302 = vmatpush1.msra.mxu0 0.0
  %6303 = vmatprep.subr.mxu0 0.0
  %6304 = vmatpush1.msra.mxu0 0.0
  %6305 = vmatprep.subr.mxu0 0.0
  %6306 = vmatpush1.msra.mxu0 0.0
  %6307 = vmatprep.subr.mxu0 0.0
  %6308 = vmatpush1.msra.mxu0 0.0
  %6309 = vmatprep.subr.mxu0 0.0
  %6310 = vmatpush1.msra.mxu0 0.0
  %6311 = vmatprep.subr.mxu0 0.0
  %6312 = vmatpush1.msra.mxu0 0.0
  %6313 = vmatprep.subr.mxu0 0.0
  %6314 = vmatpush1.msra.mxu0 0.0
  %6315 = vmatprep.subr.mxu0 0.0
  %6316 = vmatpush1.msra.mxu0 0.0
  %6317 = vmatprep.subr.mxu0 0.0
  %6318 = vmatpush1.msra.mxu0 0.0
  %6319 = vmatprep.subr.mxu0 0.0
  %6320 = vmatpush1.msra.mxu0 0.0
  %6321 = vmatprep.subr.mxu0 0.0
  %6322 = vmatpush1.msra.mxu0 0.0
  %6323 = vmatprep.subr.mxu0 0.0
  %6324 = vmatpush1.msra.mxu0 0.0
  %6325 = vmatprep.subr.mxu0 0.0
  %6326 = vmatpush1.msra.mxu0 0.0
  %6327 = vmatprep.subr.mxu0 0.0
  %6328 = vmatpush1.msra.mxu0 0.0
  %6329 = vmatprep.subr.mxu0 0.0
  %6330 = vmatpush1.msra.mxu0 0.0
  %v6331 = vand.u32 %v23, 4294901760
  %v6332 = vsub.f32 %v23, %v6331
  %6333 = vmatprep.subr.mxu0 %v6332
  %v6334 = vand.u32 %v22, 4294901760
  %v6335 = vsub.f32 %v22, %v6334
  %6336 = vmatpush1.msra.mxu0 %v6335
  %6337 = vmatprep.subr.mxu0 0.0
  %6338 = vmatpush2.msra.mxu0 0.0
  %6339 = vmatprep.subr.mxu0 0.0
  %6340 = vmatpush2.msra.mxu0 0.0
  %6341 = vmatprep.subr.mxu0 0.0
  %6342 = vmatpush2.msra.mxu0 0.0
  %6343 = vmatprep.subr.mxu0 0.0
  %6344 = vmatpush2.msra.mxu0 0.0
  %6345 = vmatprep.subr.mxu0 0.0
  %6346 = vmatpush2.msra.mxu0 0.0
  %6347 = vmatprep.subr.mxu0 0.0
  %6348 = vmatpush2.msra.mxu0 0.0
  %6349 = vmatprep.subr.mxu0 0.0
  %6350 = vmatpush2.msra.mxu0 0.0
  %6351 = vmatprep.subr.mxu0 0.0
  %6352 = vmatpush2.msra.mxu0 0.0
  %6353 = vmatprep.subr.mxu0 0.0
  %6354 = vmatpush2.msra.mxu0 0.0
  %6355 = vmatprep.subr.mxu0 0.0
  %6356 = vmatpush2.msra.mxu0 0.0
  %6357 = vmatprep.subr.mxu0 0.0
  %6358 = vmatpush2.msra.mxu0 0.0
  %6359 = vmatprep.subr.mxu0 0.0
  %6360 = vmatpush2.msra.mxu0 0.0
  %6361 = vmatprep.subr.mxu0 0.0
  %6362 = vmatpush2.msra.mxu0 0.0
  %6363 = vmatprep.subr.mxu0 0.0
  %6364 = vmatpush2.msra.mxu0 0.0
  %6365 = vmatprep.subr.mxu0 0.0
  %6366 = vmatpush2.msra.mxu0 0.0
  %6367 = vmatprep.subr.mxu0 0.0
  %6368 = vmatpush2.msra.mxu0 0.0
  %6369 = vmatprep.mubr.f32.mxu0 0.0
  %v6370 = vand.u32 %v4279, 4294901760
  %v6371 = vsub.f32 %v4279, %v6370
  %6372 = vmatmul.mubr.f32.gmra.mxu0 %v6371
  %v6373 = vpop.f32.mrf.mxu0
  %v6374 = vadd.f32 %v6297, %v6373
  %v6375 = vpop.f32.mrf.mxu0
  %v6376 = vadd.f32 %v6299, %v6375
  %6377 = vdwg.mxu0
  %6378 = vmatprep.subr.mxu0 0.0
  %6379 = vmatpush1.msra.mxu0 0.0
  %6380 = vmatprep.subr.mxu0 0.0
  %6381 = vmatpush1.msra.mxu0 0.0
  %6382 = vmatprep.subr.mxu0 0.0
  %6383 = vmatpush1.msra.mxu0 0.0
  %6384 = vmatprep.subr.mxu0 0.0
  %6385 = vmatpush1.msra.mxu0 0.0
  %6386 = vmatprep.subr.mxu0 0.0
  %6387 = vmatpush1.msra.mxu0 0.0
  %6388 = vmatprep.subr.mxu0 0.0
  %6389 = vmatpush1.msra.mxu0 0.0
  %6390 = vmatprep.subr.mxu0 0.0
  %6391 = vmatpush1.msra.mxu0 0.0
  %6392 = vmatprep.subr.mxu0 0.0
  %6393 = vmatpush1.msra.mxu0 0.0
  %6394 = vmatprep.subr.mxu0 0.0
  %6395 = vmatpush1.msra.mxu0 0.0
  %6396 = vmatprep.subr.mxu0 0.0
  %6397 = vmatpush1.msra.mxu0 0.0
  %6398 = vmatprep.subr.mxu0 0.0
  %6399 = vmatpush1.msra.mxu0 0.0
  %6400 = vmatprep.subr.mxu0 0.0
  %6401 = vmatpush1.msra.mxu0 0.0
  %6402 = vmatprep.subr.mxu0 0.0
  %6403 = vmatpush1.msra.mxu0 0.0
  %6404 = vmatprep.subr.mxu0 0.0
  %6405 = vmatpush1.msra.mxu0 0.0
  %6406 = vmatprep.subr.mxu0 0.0
  %6407 = vmatpush1.msra.mxu0 0.0
  %v6408 = vand.u32 %v23, 4294901760
  %6409 = vmatprep.subr.mxu0 %v6408
  %v6410 = vand.u32 %v22, 4294901760
  %6411 = vmatpush1.msra.mxu0 %v6410
  %6412 = vmatprep.subr.mxu0 0.0
  %6413 = vmatpush2.msra.mxu0 0.0
  %6414 = vmatprep.subr.mxu0 0.0
  %6415 = vmatpush2.msra.mxu0 0.0
  %6416 = vmatprep.subr.mxu0 0.0
  %6417 = vmatpush2.msra.mxu0 0.0
  %6418 = vmatprep.subr.mxu0 0.0
  %6419 = vmatpush2.msra.mxu0 0.0
  %6420 = vmatprep.subr.mxu0 0.0
  %6421 = vmatpush2.msra.mxu0 0.0
  %6422 = vmatprep.subr.mxu0 0.0
  %6423 = vmatpush2.msra.mxu0 0.0
  %6424 = vmatprep.subr.mxu0 0.0
  %6425 = vmatpush2.msra.mxu0 0.0
  %6426 = vmatprep.subr.mxu0 0.0
  %6427 = vmatpush2.msra.mxu0 0.0
  %6428 = vmatprep.subr.mxu0 0.0
  %6429 = vmatpush2.msra.mxu0 0.0
  %6430 = vmatprep.subr.mxu0 0.0
  %6431 = vmatpush2.msra.mxu0 0.0
  %6432 = vmatprep.subr.mxu0 0.0
  %6433 = vmatpush2.msra.mxu0 0.0
  %6434 = vmatprep.subr.mxu0 0.0
  %6435 = vmatpush2.msra.mxu0 0.0
  %6436 = vmatprep.subr.mxu0 0.0
  %6437 = vmatpush2.msra.mxu0 0.0
  %6438 = vmatprep.subr.mxu0 0.0
  %6439 = vmatpush2.msra.mxu0 0.0
  %6440 = vmatprep.subr.mxu0 0.0
  %6441 = vmatpush2.msra.mxu0 0.0
  %6442 = vmatprep.subr.mxu0 0.0
  %6443 = vmatpush2.msra.mxu0 0.0
  %6444 = vmatprep.mubr.f32.mxu0 0.0
  %v6445 = vand.u32 %v4279, 4294901760
  %v6446 = vsub.f32 %v4279, %v6445
  %v6447 = vand.u32 %v6446, 4294901760
  %6448 = vmatmul.mubr.f32.gmra.mxu0 %v6447
  %v6449 = vpop.f32.mrf.mxu0
  %v6450 = vadd.f32 %v6374, %v6449
  %v6451 = vpop.f32.mrf.mxu0
  %v6452 = vadd.f32 %v6376, %v6451
  %6453 = vdwg.mxu0
  %6454 = vmatprep.subr.mxu0 0.0
  %6455 = vmatpush1.msra.mxu0 0.0
  %6456 = vmatprep.subr.mxu0 0.0
  %6457 = vmatpush1.msra.mxu0 0.0
  %6458 = vmatprep.subr.mxu0 0.0
  %6459 = vmatpush1.msra.mxu0 0.0
  %6460 = vmatprep.subr.mxu0 0.0
  %6461 = vmatpush1.msra.mxu0 0.0
  %6462 = vmatprep.subr.mxu0 0.0
  %6463 = vmatpush1.msra.mxu0 0.0
  %6464 = vmatprep.subr.mxu0 0.0
  %6465 = vmatpush1.msra.mxu0 0.0
  %6466 = vmatprep.subr.mxu0 0.0
  %6467 = vmatpush1.msra.mxu0 0.0
  %6468 = vmatprep.subr.mxu0 0.0
  %6469 = vmatpush1.msra.mxu0 0.0
  %6470 = vmatprep.subr.mxu0 0.0
  %6471 = vmatpush1.msra.mxu0 0.0
  %6472 = vmatprep.subr.mxu0 0.0
  %6473 = vmatpush1.msra.mxu0 0.0
  %6474 = vmatprep.subr.mxu0 0.0
  %6475 = vmatpush1.msra.mxu0 0.0
  %6476 = vmatprep.subr.mxu0 0.0
  %6477 = vmatpush1.msra.mxu0 0.0
  %6478 = vmatprep.subr.mxu0 0.0
  %6479 = vmatpush1.msra.mxu0 0.0
  %6480 = vmatprep.subr.mxu0 0.0
  %6481 = vmatpush1.msra.mxu0 0.0
  %6482 = vmatprep.subr.mxu0 0.0
  %6483 = vmatpush1.msra.mxu0 0.0
  %v6484 = vand.u32 %v23, 4294901760
  %v6485 = vsub.f32 %v23, %v6484
  %v6486 = vand.u32 %v6485, 4294901760
  %6487 = vmatprep.subr.mxu0 %v6486
  %v6488 = vand.u32 %v22, 4294901760
  %v6489 = vsub.f32 %v22, %v6488
  %v6490 = vand.u32 %v6489, 4294901760
  %6491 = vmatpush1.msra.mxu0 %v6490
  %6492 = vmatprep.subr.mxu0 0.0
  %6493 = vmatpush2.msra.mxu0 0.0
  %6494 = vmatprep.subr.mxu0 0.0
  %6495 = vmatpush2.msra.mxu0 0.0
  %6496 = vmatprep.subr.mxu0 0.0
  %6497 = vmatpush2.msra.mxu0 0.0
  %6498 = vmatprep.subr.mxu0 0.0
  %6499 = vmatpush2.msra.mxu0 0.0
  %6500 = vmatprep.subr.mxu0 0.0
  %6501 = vmatpush2.msra.mxu0 0.0
  %6502 = vmatprep.subr.mxu0 0.0
  %6503 = vmatpush2.msra.mxu0 0.0
  %6504 = vmatprep.subr.mxu0 0.0
  %6505 = vmatpush2.msra.mxu0 0.0
  %6506 = vmatprep.subr.mxu0 0.0
  %6507 = vmatpush2.msra.mxu0 0.0
  %6508 = vmatprep.subr.mxu0 0.0
  %6509 = vmatpush2.msra.mxu0 0.0
  %6510 = vmatprep.subr.mxu0 0.0
  %6511 = vmatpush2.msra.mxu0 0.0
  %6512 = vmatprep.subr.mxu0 0.0
  %6513 = vmatpush2.msra.mxu0 0.0
  %6514 = vmatprep.subr.mxu0 0.0
  %6515 = vmatpush2.msra.mxu0 0.0
  %6516 = vmatprep.subr.mxu0 0.0
  %6517 = vmatpush2.msra.mxu0 0.0
  %6518 = vmatprep.subr.mxu0 0.0
  %6519 = vmatpush2.msra.mxu0 0.0
  %6520 = vmatprep.subr.mxu0 0.0
  %6521 = vmatpush2.msra.mxu0 0.0
  %6522 = vmatprep.subr.mxu0 0.0
  %6523 = vmatpush2.msra.mxu0 0.0
  %6524 = vmatprep.mubr.f32.mxu0 0.0
  %v6525 = vand.u32 %v4279, 4294901760
  %6526 = vmatmul.mubr.f32.gmra.mxu0 %v6525
  %v6527 = vpop.f32.mrf.mxu0
  %v6528 = vadd.f32 %v6450, %v6527
  %v6529 = vpop.f32.mrf.mxu0
  %v6530 = vadd.f32 %v6452, %v6529
  %6531 = vdwg.mxu0
  %6532 = vmatprep.subr.mxu0 0.0
  %6533 = vmatpush1.msra.mxu0 0.0
  %6534 = vmatprep.subr.mxu0 0.0
  %6535 = vmatpush1.msra.mxu0 0.0
  %6536 = vmatprep.subr.mxu0 0.0
  %6537 = vmatpush1.msra.mxu0 0.0
  %6538 = vmatprep.subr.mxu0 0.0
  %6539 = vmatpush1.msra.mxu0 0.0
  %6540 = vmatprep.subr.mxu0 0.0
  %6541 = vmatpush1.msra.mxu0 0.0
  %6542 = vmatprep.subr.mxu0 0.0
  %6543 = vmatpush1.msra.mxu0 0.0
  %6544 = vmatprep.subr.mxu0 0.0
  %6545 = vmatpush1.msra.mxu0 0.0
  %6546 = vmatprep.subr.mxu0 0.0
  %6547 = vmatpush1.msra.mxu0 0.0
  %6548 = vmatprep.subr.mxu0 0.0
  %6549 = vmatpush1.msra.mxu0 0.0
  %6550 = vmatprep.subr.mxu0 0.0
  %6551 = vmatpush1.msra.mxu0 0.0
  %6552 = vmatprep.subr.mxu0 0.0
  %6553 = vmatpush1.msra.mxu0 0.0
  %6554 = vmatprep.subr.mxu0 0.0
  %6555 = vmatpush1.msra.mxu0 0.0
  %6556 = vmatprep.subr.mxu0 0.0
  %6557 = vmatpush1.msra.mxu0 0.0
  %6558 = vmatprep.subr.mxu0 0.0
  %6559 = vmatpush1.msra.mxu0 0.0
  %6560 = vmatprep.subr.mxu0 0.0
  %6561 = vmatpush1.msra.mxu0 0.0
  %v6562 = vand.u32 %v23, 4294901760
  %6563 = vmatprep.subr.mxu0 %v6562
  %v6564 = vand.u32 %v22, 4294901760
  %6565 = vmatpush1.msra.mxu0 %v6564
  %6566 = vmatprep.subr.mxu0 0.0
  %6567 = vmatpush2.msra.mxu0 0.0
  %6568 = vmatprep.subr.mxu0 0.0
  %6569 = vmatpush2.msra.mxu0 0.0
  %6570 = vmatprep.subr.mxu0 0.0
  %6571 = vmatpush2.msra.mxu0 0.0
  %6572 = vmatprep.subr.mxu0 0.0
  %6573 = vmatpush2.msra.mxu0 0.0
  %6574 = vmatprep.subr.mxu0 0.0
  %6575 = vmatpush2.msra.mxu0 0.0
  %6576 = vmatprep.subr.mxu0 0.0
  %6577 = vmatpush2.msra.mxu0 0.0
  %6578 = vmatprep.subr.mxu0 0.0
  %6579 = vmatpush2.msra.mxu0 0.0
  %6580 = vmatprep.subr.mxu0 0.0
  %6581 = vmatpush2.msra.mxu0 0.0
  %6582 = vmatprep.subr.mxu0 0.0
  %6583 = vmatpush2.msra.mxu0 0.0
  %6584 = vmatprep.subr.mxu0 0.0
  %6585 = vmatpush2.msra.mxu0 0.0
  %6586 = vmatprep.subr.mxu0 0.0
  %6587 = vmatpush2.msra.mxu0 0.0
  %6588 = vmatprep.subr.mxu0 0.0
  %6589 = vmatpush2.msra.mxu0 0.0
  %6590 = vmatprep.subr.mxu0 0.0
  %6591 = vmatpush2.msra.mxu0 0.0
  %6592 = vmatprep.subr.mxu0 0.0
  %6593 = vmatpush2.msra.mxu0 0.0
  %6594 = vmatprep.subr.mxu0 0.0
  %6595 = vmatpush2.msra.mxu0 0.0
  %6596 = vmatprep.subr.mxu0 0.0
  %6597 = vmatpush2.msra.mxu0 0.0
  %6598 = vmatprep.mubr.f32.mxu0 0.0
  %v6599 = vand.u32 %v4279, 4294901760
  %6600 = vmatmul.mubr.f32.gmra.mxu0 %v6599
  %v6601 = vpop.f32.mrf.mxu0
  %v6602 = vadd.f32 %v6528, %v6601
  %v6603 = vpop.f32.mrf.mxu0
  %v6604 = vadd.f32 %v6530, %v6603
  %6605 = vdwg.mxu0
  %6606 = vmatprep.subr.mxu0 0.0
  %6607 = vmatpush1.msra.mxu0 0.0
  %6608 = vmatprep.subr.mxu0 0.0
  %6609 = vmatpush1.msra.mxu0 0.0
  %6610 = vmatprep.subr.mxu0 0.0
  %6611 = vmatpush1.msra.mxu0 0.0
  %6612 = vmatprep.subr.mxu0 0.0
  %6613 = vmatpush1.msra.mxu0 0.0
  %6614 = vmatprep.subr.mxu0 0.0
  %6615 = vmatpush1.msra.mxu0 0.0
  %6616 = vmatprep.subr.mxu0 0.0
  %6617 = vmatpush1.msra.mxu0 0.0
  %6618 = vmatprep.subr.mxu0 0.0
  %6619 = vmatpush1.msra.mxu0 0.0
  %6620 = vmatprep.subr.mxu0 0.0
  %6621 = vmatpush1.msra.mxu0 0.0
  %6622 = vmatprep.subr.mxu0 0.0
  %6623 = vmatpush1.msra.mxu0 0.0
  %6624 = vmatprep.subr.mxu0 0.0
  %6625 = vmatpush1.msra.mxu0 0.0
  %6626 = vmatprep.subr.mxu0 0.0
  %6627 = vmatpush1.msra.mxu0 0.0
  %6628 = vmatprep.subr.mxu0 0.0
  %6629 = vmatpush1.msra.mxu0 0.0
  %6630 = vmatprep.subr.mxu0 0.0
  %6631 = vmatpush1.msra.mxu0 0.0
  %6632 = vmatprep.subr.mxu0 0.0
  %6633 = vmatpush1.msra.mxu0 0.0
  %6634 = vmatprep.subr.mxu0 0.0
  %6635 = vmatpush1.msra.mxu0 0.0
  %v6636 = vand.u32 %v25, 4294901760
  %6637 = vmatprep.subr.mxu0 %v6636
  %v6638 = vand.u32 %v24, 4294901760
  %6639 = vmatpush1.msra.mxu0 %v6638
  %6640 = vmatprep.subr.mxu0 0.0
  %6641 = vmatpush2.msra.mxu0 0.0
  %6642 = vmatprep.subr.mxu0 0.0
  %6643 = vmatpush2.msra.mxu0 0.0
  %6644 = vmatprep.subr.mxu0 0.0
  %6645 = vmatpush2.msra.mxu0 0.0
  %6646 = vmatprep.subr.mxu0 0.0
  %6647 = vmatpush2.msra.mxu0 0.0
  %6648 = vmatprep.subr.mxu0 0.0
  %6649 = vmatpush2.msra.mxu0 0.0
  %6650 = vmatprep.subr.mxu0 0.0
  %6651 = vmatpush2.msra.mxu0 0.0
  %6652 = vmatprep.subr.mxu0 0.0
  %6653 = vmatpush2.msra.mxu0 0.0
  %6654 = vmatprep.subr.mxu0 0.0
  %6655 = vmatpush2.msra.mxu0 0.0
  %6656 = vmatprep.subr.mxu0 0.0
  %6657 = vmatpush2.msra.mxu0 0.0
  %6658 = vmatprep.subr.mxu0 0.0
  %6659 = vmatpush2.msra.mxu0 0.0
  %6660 = vmatprep.subr.mxu0 0.0
  %6661 = vmatpush2.msra.mxu0 0.0
  %6662 = vmatprep.subr.mxu0 0.0
  %6663 = vmatpush2.msra.mxu0 0.0
  %6664 = vmatprep.subr.mxu0 0.0
  %6665 = vmatpush2.msra.mxu0 0.0
  %6666 = vmatprep.subr.mxu0 0.0
  %6667 = vmatpush2.msra.mxu0 0.0
  %6668 = vmatprep.subr.mxu0 0.0
  %6669 = vmatpush2.msra.mxu0 0.0
  %6670 = vmatprep.subr.mxu0 0.0
  %6671 = vmatpush2.msra.mxu0 0.0
  %6672 = vmatprep.mubr.f32.mxu0 0.0
  %v6673 = vand.u32 %v4279, 4294901760
  %v6674 = vsub.f32 %v4279, %v6673
  %v6675 = vand.u32 %v6674, 4294901760
  %v6676 = vsub.f32 %v6674, %v6675
  %v6677 = vand.u32 %v6676, 4294901760
  %6678 = vmatmul.mubr.f32.gmra.mxu0 %v6677
  %v6679 = vpop.f32.mrf.mxu0
  %v6680 = vadd.f32 0.0, %v6679
  %v6681 = vpop.f32.mrf.mxu0
  %v6682 = vadd.f32 0.0, %v6681
  %6683 = vdwg.mxu0
  %6684 = vmatprep.subr.mxu0 0.0
  %6685 = vmatpush1.msra.mxu0 0.0
  %6686 = vmatprep.subr.mxu0 0.0
  %6687 = vmatpush1.msra.mxu0 0.0
  %6688 = vmatprep.subr.mxu0 0.0
  %6689 = vmatpush1.msra.mxu0 0.0
  %6690 = vmatprep.subr.mxu0 0.0
  %6691 = vmatpush1.msra.mxu0 0.0
  %6692 = vmatprep.subr.mxu0 0.0
  %6693 = vmatpush1.msra.mxu0 0.0
  %6694 = vmatprep.subr.mxu0 0.0
  %6695 = vmatpush1.msra.mxu0 0.0
  %6696 = vmatprep.subr.mxu0 0.0
  %6697 = vmatpush1.msra.mxu0 0.0
  %6698 = vmatprep.subr.mxu0 0.0
  %6699 = vmatpush1.msra.mxu0 0.0
  %6700 = vmatprep.subr.mxu0 0.0
  %6701 = vmatpush1.msra.mxu0 0.0
  %6702 = vmatprep.subr.mxu0 0.0
  %6703 = vmatpush1.msra.mxu0 0.0
  %6704 = vmatprep.subr.mxu0 0.0
  %6705 = vmatpush1.msra.mxu0 0.0
  %6706 = vmatprep.subr.mxu0 0.0
  %6707 = vmatpush1.msra.mxu0 0.0
  %6708 = vmatprep.subr.mxu0 0.0
  %6709 = vmatpush1.msra.mxu0 0.0
  %6710 = vmatprep.subr.mxu0 0.0
  %6711 = vmatpush1.msra.mxu0 0.0
  %6712 = vmatprep.subr.mxu0 0.0
  %6713 = vmatpush1.msra.mxu0 0.0
  %v6714 = vand.u32 %v25, 4294901760
  %v6715 = vsub.f32 %v25, %v6714
  %v6716 = vand.u32 %v6715, 4294901760
  %v6717 = vsub.f32 %v6715, %v6716
  %v6718 = vand.u32 %v6717, 4294901760
  %6719 = vmatprep.subr.mxu0 %v6718
  %v6720 = vand.u32 %v24, 4294901760
  %v6721 = vsub.f32 %v24, %v6720
  %v6722 = vand.u32 %v6721, 4294901760
  %v6723 = vsub.f32 %v6721, %v6722
  %v6724 = vand.u32 %v6723, 4294901760
  %6725 = vmatpush1.msra.mxu0 %v6724
  %6726 = vmatprep.subr.mxu0 0.0
  %6727 = vmatpush2.msra.mxu0 0.0
  %6728 = vmatprep.subr.mxu0 0.0
  %6729 = vmatpush2.msra.mxu0 0.0
  %6730 = vmatprep.subr.mxu0 0.0
  %6731 = vmatpush2.msra.mxu0 0.0
  %6732 = vmatprep.subr.mxu0 0.0
  %6733 = vmatpush2.msra.mxu0 0.0
  %6734 = vmatprep.subr.mxu0 0.0
  %6735 = vmatpush2.msra.mxu0 0.0
  %6736 = vmatprep.subr.mxu0 0.0
  %6737 = vmatpush2.msra.mxu0 0.0
  %6738 = vmatprep.subr.mxu0 0.0
  %6739 = vmatpush2.msra.mxu0 0.0
  %6740 = vmatprep.subr.mxu0 0.0
  %6741 = vmatpush2.msra.mxu0 0.0
  %6742 = vmatprep.subr.mxu0 0.0
  %6743 = vmatpush2.msra.mxu0 0.0
  %6744 = vmatprep.subr.mxu0 0.0
  %6745 = vmatpush2.msra.mxu0 0.0
  %6746 = vmatprep.subr.mxu0 0.0
  %6747 = vmatpush2.msra.mxu0 0.0
  %6748 = vmatprep.subr.mxu0 0.0
  %6749 = vmatpush2.msra.mxu0 0.0
  %6750 = vmatprep.subr.mxu0 0.0
  %6751 = vmatpush2.msra.mxu0 0.0
  %6752 = vmatprep.subr.mxu0 0.0
  %6753 = vmatpush2.msra.mxu0 0.0
  %6754 = vmatprep.subr.mxu0 0.0
  %6755 = vmatpush2.msra.mxu0 0.0
  %6756 = vmatprep.subr.mxu0 0.0
  %6757 = vmatpush2.msra.mxu0 0.0
  %6758 = vmatprep.mubr.f32.mxu0 0.0
  %v6759 = vand.u32 %v4279, 4294901760
  %6760 = vmatmul.mubr.f32.gmra.mxu0 %v6759
  %v6761 = vpop.f32.mrf.mxu0
  %v6762 = vadd.f32 %v6680, %v6761
  %v6763 = vpop.f32.mrf.mxu0
  %v6764 = vadd.f32 %v6682, %v6763
  %6765 = vdwg.mxu0
  %6766 = vmatprep.subr.mxu0 0.0
  %6767 = vmatpush1.msra.mxu0 0.0
  %6768 = vmatprep.subr.mxu0 0.0
  %6769 = vmatpush1.msra.mxu0 0.0
  %6770 = vmatprep.subr.mxu0 0.0
  %6771 = vmatpush1.msra.mxu0 0.0
  %6772 = vmatprep.subr.mxu0 0.0
  %6773 = vmatpush1.msra.mxu0 0.0
  %6774 = vmatprep.subr.mxu0 0.0
  %6775 = vmatpush1.msra.mxu0 0.0
  %6776 = vmatprep.subr.mxu0 0.0
  %6777 = vmatpush1.msra.mxu0 0.0
  %6778 = vmatprep.subr.mxu0 0.0
  %6779 = vmatpush1.msra.mxu0 0.0
  %6780 = vmatprep.subr.mxu0 0.0
  %6781 = vmatpush1.msra.mxu0 0.0
  %6782 = vmatprep.subr.mxu0 0.0
  %6783 = vmatpush1.msra.mxu0 0.0
  %6784 = vmatprep.subr.mxu0 0.0
  %6785 = vmatpush1.msra.mxu0 0.0
  %6786 = vmatprep.subr.mxu0 0.0
  %6787 = vmatpush1.msra.mxu0 0.0
  %6788 = vmatprep.subr.mxu0 0.0
  %6789 = vmatpush1.msra.mxu0 0.0
  %6790 = vmatprep.subr.mxu0 0.0
  %6791 = vmatpush1.msra.mxu0 0.0
  %6792 = vmatprep.subr.mxu0 0.0
  %6793 = vmatpush1.msra.mxu0 0.0
  %6794 = vmatprep.subr.mxu0 0.0
  %6795 = vmatpush1.msra.mxu0 0.0
  %v6796 = vand.u32 %v25, 4294901760
  %v6797 = vsub.f32 %v25, %v6796
  %6798 = vmatprep.subr.mxu0 %v6797
  %v6799 = vand.u32 %v24, 4294901760
  %v6800 = vsub.f32 %v24, %v6799
  %6801 = vmatpush1.msra.mxu0 %v6800
  %6802 = vmatprep.subr.mxu0 0.0
  %6803 = vmatpush2.msra.mxu0 0.0
  %6804 = vmatprep.subr.mxu0 0.0
  %6805 = vmatpush2.msra.mxu0 0.0
  %6806 = vmatprep.subr.mxu0 0.0
  %6807 = vmatpush2.msra.mxu0 0.0
  %6808 = vmatprep.subr.mxu0 0.0
  %6809 = vmatpush2.msra.mxu0 0.0
  %6810 = vmatprep.subr.mxu0 0.0
  %6811 = vmatpush2.msra.mxu0 0.0
  %6812 = vmatprep.subr.mxu0 0.0
  %6813 = vmatpush2.msra.mxu0 0.0
  %6814 = vmatprep.subr.mxu0 0.0
  %6815 = vmatpush2.msra.mxu0 0.0
  %6816 = vmatprep.subr.mxu0 0.0
  %6817 = vmatpush2.msra.mxu0 0.0
  %6818 = vmatprep.subr.mxu0 0.0
  %6819 = vmatpush2.msra.mxu0 0.0
  %6820 = vmatprep.subr.mxu0 0.0
  %6821 = vmatpush2.msra.mxu0 0.0
  %6822 = vmatprep.subr.mxu0 0.0
  %6823 = vmatpush2.msra.mxu0 0.0
  %6824 = vmatprep.subr.mxu0 0.0
  %6825 = vmatpush2.msra.mxu0 0.0
  %6826 = vmatprep.subr.mxu0 0.0
  %6827 = vmatpush2.msra.mxu0 0.0
  %6828 = vmatprep.subr.mxu0 0.0
  %6829 = vmatpush2.msra.mxu0 0.0
  %6830 = vmatprep.subr.mxu0 0.0
  %6831 = vmatpush2.msra.mxu0 0.0
  %6832 = vmatprep.subr.mxu0 0.0
  %6833 = vmatpush2.msra.mxu0 0.0
  %6834 = vmatprep.mubr.f32.mxu0 0.0
  %v6835 = vand.u32 %v4279, 4294901760
  %v6836 = vsub.f32 %v4279, %v6835
  %6837 = vmatmul.mubr.f32.gmra.mxu0 %v6836
  %v6838 = vpop.f32.mrf.mxu0
  %v6839 = vadd.f32 %v6762, %v6838
  %v6840 = vpop.f32.mrf.mxu0
  %v6841 = vadd.f32 %v6764, %v6840
  %6842 = vdwg.mxu0
  %6843 = vmatprep.subr.mxu0 0.0
  %6844 = vmatpush1.msra.mxu0 0.0
  %6845 = vmatprep.subr.mxu0 0.0
  %6846 = vmatpush1.msra.mxu0 0.0
  %6847 = vmatprep.subr.mxu0 0.0
  %6848 = vmatpush1.msra.mxu0 0.0
  %6849 = vmatprep.subr.mxu0 0.0
  %6850 = vmatpush1.msra.mxu0 0.0
  %6851 = vmatprep.subr.mxu0 0.0
  %6852 = vmatpush1.msra.mxu0 0.0
  %6853 = vmatprep.subr.mxu0 0.0
  %6854 = vmatpush1.msra.mxu0 0.0
  %6855 = vmatprep.subr.mxu0 0.0
  %6856 = vmatpush1.msra.mxu0 0.0
  %6857 = vmatprep.subr.mxu0 0.0
  %6858 = vmatpush1.msra.mxu0 0.0
  %6859 = vmatprep.subr.mxu0 0.0
  %6860 = vmatpush1.msra.mxu0 0.0
  %6861 = vmatprep.subr.mxu0 0.0
  %6862 = vmatpush1.msra.mxu0 0.0
  %6863 = vmatprep.subr.mxu0 0.0
  %6864 = vmatpush1.msra.mxu0 0.0
  %6865 = vmatprep.subr.mxu0 0.0
  %6866 = vmatpush1.msra.mxu0 0.0
  %6867 = vmatprep.subr.mxu0 0.0
  %6868 = vmatpush1.msra.mxu0 0.0
  %6869 = vmatprep.subr.mxu0 0.0
  %6870 = vmatpush1.msra.mxu0 0.0
  %6871 = vmatprep.subr.mxu0 0.0
  %6872 = vmatpush1.msra.mxu0 0.0
  %v6873 = vand.u32 %v25, 4294901760
  %6874 = vmatprep.subr.mxu0 %v6873
  %v6875 = vand.u32 %v24, 4294901760
  %6876 = vmatpush1.msra.mxu0 %v6875
  %6877 = vmatprep.subr.mxu0 0.0
  %6878 = vmatpush2.msra.mxu0 0.0
  %6879 = vmatprep.subr.mxu0 0.0
  %6880 = vmatpush2.msra.mxu0 0.0
  %6881 = vmatprep.subr.mxu0 0.0
  %6882 = vmatpush2.msra.mxu0 0.0
  %6883 = vmatprep.subr.mxu0 0.0
  %6884 = vmatpush2.msra.mxu0 0.0
  %6885 = vmatprep.subr.mxu0 0.0
  %6886 = vmatpush2.msra.mxu0 0.0
  %6887 = vmatprep.subr.mxu0 0.0
  %6888 = vmatpush2.msra.mxu0 0.0
  %6889 = vmatprep.subr.mxu0 0.0
  %6890 = vmatpush2.msra.mxu0 0.0
  %6891 = vmatprep.subr.mxu0 0.0
  %6892 = vmatpush2.msra.mxu0 0.0
  %6893 = vmatprep.subr.mxu0 0.0
  %6894 = vmatpush2.msra.mxu0 0.0
  %6895 = vmatprep.subr.mxu0 0.0
  %6896 = vmatpush2.msra.mxu0 0.0
  %6897 = vmatprep.subr.mxu0 0.0
  %6898 = vmatpush2.msra.mxu0 0.0
  %6899 = vmatprep.subr.mxu0 0.0
  %6900 = vmatpush2.msra.mxu0 0.0
  %6901 = vmatprep.subr.mxu0 0.0
  %6902 = vmatpush2.msra.mxu0 0.0
  %6903 = vmatprep.subr.mxu0 0.0
  %6904 = vmatpush2.msra.mxu0 0.0
  %6905 = vmatprep.subr.mxu0 0.0
  %6906 = vmatpush2.msra.mxu0 0.0
  %6907 = vmatprep.subr.mxu0 0.0
  %6908 = vmatpush2.msra.mxu0 0.0
  %6909 = vmatprep.mubr.f32.mxu0 0.0
  %v6910 = vand.u32 %v4279, 4294901760
  %v6911 = vsub.f32 %v4279, %v6910
  %v6912 = vand.u32 %v6911, 4294901760
  %6913 = vmatmul.mubr.f32.gmra.mxu0 %v6912
  %v6914 = vpop.f32.mrf.mxu0
  %v6915 = vadd.f32 %v6839, %v6914
  %v6916 = vpop.f32.mrf.mxu0
  %v6917 = vadd.f32 %v6841, %v6916
  %6918 = vdwg.mxu0
  %6919 = vmatprep.subr.mxu0 0.0
  %6920 = vmatpush1.msra.mxu0 0.0
  %6921 = vmatprep.subr.mxu0 0.0
  %6922 = vmatpush1.msra.mxu0 0.0
  %6923 = vmatprep.subr.mxu0 0.0
  %6924 = vmatpush1.msra.mxu0 0.0
  %6925 = vmatprep.subr.mxu0 0.0
  %6926 = vmatpush1.msra.mxu0 0.0
  %6927 = vmatprep.subr.mxu0 0.0
  %6928 = vmatpush1.msra.mxu0 0.0
  %6929 = vmatprep.subr.mxu0 0.0
  %6930 = vmatpush1.msra.mxu0 0.0
  %6931 = vmatprep.subr.mxu0 0.0
  %6932 = vmatpush1.msra.mxu0 0.0
  %6933 = vmatprep.subr.mxu0 0.0
  %6934 = vmatpush1.msra.mxu0 0.0
  %6935 = vmatprep.subr.mxu0 0.0
  %6936 = vmatpush1.msra.mxu0 0.0
  %6937 = vmatprep.subr.mxu0 0.0
  %6938 = vmatpush1.msra.mxu0 0.0
  %6939 = vmatprep.subr.mxu0 0.0
  %6940 = vmatpush1.msra.mxu0 0.0
  %6941 = vmatprep.subr.mxu0 0.0
  %6942 = vmatpush1.msra.mxu0 0.0
  %6943 = vmatprep.subr.mxu0 0.0
  %6944 = vmatpush1.msra.mxu0 0.0
  %6945 = vmatprep.subr.mxu0 0.0
  %6946 = vmatpush1.msra.mxu0 0.0
  %6947 = vmatprep.subr.mxu0 0.0
  %6948 = vmatpush1.msra.mxu0 0.0
  %v6949 = vand.u32 %v25, 4294901760
  %v6950 = vsub.f32 %v25, %v6949
  %v6951 = vand.u32 %v6950, 4294901760
  %6952 = vmatprep.subr.mxu0 %v6951
  %v6953 = vand.u32 %v24, 4294901760
  %v6954 = vsub.f32 %v24, %v6953
  %v6955 = vand.u32 %v6954, 4294901760
  %6956 = vmatpush1.msra.mxu0 %v6955
  %6957 = vmatprep.subr.mxu0 0.0
  %6958 = vmatpush2.msra.mxu0 0.0
  %6959 = vmatprep.subr.mxu0 0.0
  %6960 = vmatpush2.msra.mxu0 0.0
  %6961 = vmatprep.subr.mxu0 0.0
  %6962 = vmatpush2.msra.mxu0 0.0
  %6963 = vmatprep.subr.mxu0 0.0
  %6964 = vmatpush2.msra.mxu0 0.0
  %6965 = vmatprep.subr.mxu0 0.0
  %6966 = vmatpush2.msra.mxu0 0.0
  %6967 = vmatprep.subr.mxu0 0.0
  %6968 = vmatpush2.msra.mxu0 0.0
  %6969 = vmatprep.subr.mxu0 0.0
  %6970 = vmatpush2.msra.mxu0 0.0
  %6971 = vmatprep.subr.mxu0 0.0
  %6972 = vmatpush2.msra.mxu0 0.0
  %6973 = vmatprep.subr.mxu0 0.0
  %6974 = vmatpush2.msra.mxu0 0.0
  %6975 = vmatprep.subr.mxu0 0.0
  %6976 = vmatpush2.msra.mxu0 0.0
  %6977 = vmatprep.subr.mxu0 0.0
  %6978 = vmatpush2.msra.mxu0 0.0
  %6979 = vmatprep.subr.mxu0 0.0
  %6980 = vmatpush2.msra.mxu0 0.0
  %6981 = vmatprep.subr.mxu0 0.0
  %6982 = vmatpush2.msra.mxu0 0.0
  %6983 = vmatprep.subr.mxu0 0.0
  %6984 = vmatpush2.msra.mxu0 0.0
  %6985 = vmatprep.subr.mxu0 0.0
  %6986 = vmatpush2.msra.mxu0 0.0
  %6987 = vmatprep.subr.mxu0 0.0
  %6988 = vmatpush2.msra.mxu0 0.0
  %6989 = vmatprep.mubr.f32.mxu0 0.0
  %v6990 = vand.u32 %v4279, 4294901760
  %6991 = vmatmul.mubr.f32.gmra.mxu0 %v6990
  %v6992 = vpop.f32.mrf.mxu0
  %v6993 = vadd.f32 %v6915, %v6992
  %v6994 = vpop.f32.mrf.mxu0
  %v6995 = vadd.f32 %v6917, %v6994
  %6996 = vdwg.mxu0
  %6997 = vmatprep.subr.mxu0 0.0
  %6998 = vmatpush1.msra.mxu0 0.0
  %6999 = vmatprep.subr.mxu0 0.0
  %7000 = vmatpush1.msra.mxu0 0.0
  %7001 = vmatprep.subr.mxu0 0.0
  %7002 = vmatpush1.msra.mxu0 0.0
  %7003 = vmatprep.subr.mxu0 0.0
  %7004 = vmatpush1.msra.mxu0 0.0
  %7005 = vmatprep.subr.mxu0 0.0
  %7006 = vmatpush1.msra.mxu0 0.0
  %7007 = vmatprep.subr.mxu0 0.0
  %7008 = vmatpush1.msra.mxu0 0.0
  %7009 = vmatprep.subr.mxu0 0.0
  %7010 = vmatpush1.msra.mxu0 0.0
  %7011 = vmatprep.subr.mxu0 0.0
  %7012 = vmatpush1.msra.mxu0 0.0
  %7013 = vmatprep.subr.mxu0 0.0
  %7014 = vmatpush1.msra.mxu0 0.0
  %7015 = vmatprep.subr.mxu0 0.0
  %7016 = vmatpush1.msra.mxu0 0.0
  %7017 = vmatprep.subr.mxu0 0.0
  %7018 = vmatpush1.msra.mxu0 0.0
  %7019 = vmatprep.subr.mxu0 0.0
  %7020 = vmatpush1.msra.mxu0 0.0
  %7021 = vmatprep.subr.mxu0 0.0
  %7022 = vmatpush1.msra.mxu0 0.0
  %7023 = vmatprep.subr.mxu0 0.0
  %7024 = vmatpush1.msra.mxu0 0.0
  %7025 = vmatprep.subr.mxu0 0.0
  %7026 = vmatpush1.msra.mxu0 0.0
  %v7027 = vand.u32 %v25, 4294901760
  %7028 = vmatprep.subr.mxu0 %v7027
  %v7029 = vand.u32 %v24, 4294901760
  %7030 = vmatpush1.msra.mxu0 %v7029
  %7031 = vmatprep.subr.mxu0 0.0
  %7032 = vmatpush2.msra.mxu0 0.0
  %7033 = vmatprep.subr.mxu0 0.0
  %7034 = vmatpush2.msra.mxu0 0.0
  %7035 = vmatprep.subr.mxu0 0.0
  %7036 = vmatpush2.msra.mxu0 0.0
  %7037 = vmatprep.subr.mxu0 0.0
  %7038 = vmatpush2.msra.mxu0 0.0
  %7039 = vmatprep.subr.mxu0 0.0
  %7040 = vmatpush2.msra.mxu0 0.0
  %7041 = vmatprep.subr.mxu0 0.0
  %7042 = vmatpush2.msra.mxu0 0.0
  %7043 = vmatprep.subr.mxu0 0.0
  %7044 = vmatpush2.msra.mxu0 0.0
  %7045 = vmatprep.subr.mxu0 0.0
  %7046 = vmatpush2.msra.mxu0 0.0
  %7047 = vmatprep.subr.mxu0 0.0
  %7048 = vmatpush2.msra.mxu0 0.0
  %7049 = vmatprep.subr.mxu0 0.0
  %7050 = vmatpush2.msra.mxu0 0.0
  %7051 = vmatprep.subr.mxu0 0.0
  %7052 = vmatpush2.msra.mxu0 0.0
  %7053 = vmatprep.subr.mxu0 0.0
  %7054 = vmatpush2.msra.mxu0 0.0
  %7055 = vmatprep.subr.mxu0 0.0
  %7056 = vmatpush2.msra.mxu0 0.0
  %7057 = vmatprep.subr.mxu0 0.0
  %7058 = vmatpush2.msra.mxu0 0.0
  %7059 = vmatprep.subr.mxu0 0.0
  %7060 = vmatpush2.msra.mxu0 0.0
  %7061 = vmatprep.subr.mxu0 0.0
  %7062 = vmatpush2.msra.mxu0 0.0
  %7063 = vmatprep.mubr.f32.mxu0 0.0
  %v7064 = vand.u32 %v4279, 4294901760
  %7065 = vmatmul.mubr.f32.gmra.mxu0 %v7064
  %v7066 = vpop.f32.mrf.mxu0
  %v7067 = vadd.f32 %v6993, %v7066
  %v7068 = vpop.f32.mrf.mxu0
  %v7069 = vadd.f32 %v6995, %v7068
  %7070 = vdwg.mxu0
  %7071 = vmatprep.subr.mxu0 0.0
  %7072 = vmatpush1.msra.mxu0 0.0
  %7073 = vmatprep.subr.mxu0 0.0
  %7074 = vmatpush1.msra.mxu0 0.0
  %7075 = vmatprep.subr.mxu0 0.0
  %7076 = vmatpush1.msra.mxu0 0.0
  %7077 = vmatprep.subr.mxu0 0.0
  %7078 = vmatpush1.msra.mxu0 0.0
  %7079 = vmatprep.subr.mxu0 0.0
  %7080 = vmatpush1.msra.mxu0 0.0
  %7081 = vmatprep.subr.mxu0 0.0
  %7082 = vmatpush1.msra.mxu0 0.0
  %7083 = vmatprep.subr.mxu0 0.0
  %7084 = vmatpush1.msra.mxu0 0.0
  %7085 = vmatprep.subr.mxu0 0.0
  %7086 = vmatpush1.msra.mxu0 0.0
  %7087 = vmatprep.subr.mxu0 0.0
  %7088 = vmatpush1.msra.mxu0 0.0
  %7089 = vmatprep.subr.mxu0 0.0
  %7090 = vmatpush1.msra.mxu0 0.0
  %7091 = vmatprep.subr.mxu0 0.0
  %7092 = vmatpush1.msra.mxu0 0.0
  %7093 = vmatprep.subr.mxu0 0.0
  %7094 = vmatpush1.msra.mxu0 0.0
  %7095 = vmatprep.subr.mxu0 0.0
  %7096 = vmatpush1.msra.mxu0 0.0
  %7097 = vmatprep.subr.mxu0 0.0
  %7098 = vmatpush1.msra.mxu0 0.0
  %7099 = vmatprep.subr.mxu0 0.0
  %7100 = vmatpush1.msra.mxu0 0.0
  %v7101 = vand.u32 %v27, 4294901760
  %7102 = vmatprep.subr.mxu0 %v7101
  %v7103 = vand.u32 %v26, 4294901760
  %7104 = vmatpush1.msra.mxu0 %v7103
  %7105 = vmatprep.subr.mxu0 0.0
  %7106 = vmatpush2.msra.mxu0 0.0
  %7107 = vmatprep.subr.mxu0 0.0
  %7108 = vmatpush2.msra.mxu0 0.0
  %7109 = vmatprep.subr.mxu0 0.0
  %7110 = vmatpush2.msra.mxu0 0.0
  %7111 = vmatprep.subr.mxu0 0.0
  %7112 = vmatpush2.msra.mxu0 0.0
  %7113 = vmatprep.subr.mxu0 0.0
  %7114 = vmatpush2.msra.mxu0 0.0
  %7115 = vmatprep.subr.mxu0 0.0
  %7116 = vmatpush2.msra.mxu0 0.0
  %7117 = vmatprep.subr.mxu0 0.0
  %7118 = vmatpush2.msra.mxu0 0.0
  %7119 = vmatprep.subr.mxu0 0.0
  %7120 = vmatpush2.msra.mxu0 0.0
  %7121 = vmatprep.subr.mxu0 0.0
  %7122 = vmatpush2.msra.mxu0 0.0
  %7123 = vmatprep.subr.mxu0 0.0
  %7124 = vmatpush2.msra.mxu0 0.0
  %7125 = vmatprep.subr.mxu0 0.0
  %7126 = vmatpush2.msra.mxu0 0.0
  %7127 = vmatprep.subr.mxu0 0.0
  %7128 = vmatpush2.msra.mxu0 0.0
  %7129 = vmatprep.subr.mxu0 0.0
  %7130 = vmatpush2.msra.mxu0 0.0
  %7131 = vmatprep.subr.mxu0 0.0
  %7132 = vmatpush2.msra.mxu0 0.0
  %7133 = vmatprep.subr.mxu0 0.0
  %7134 = vmatpush2.msra.mxu0 0.0
  %7135 = vmatprep.subr.mxu0 0.0
  %7136 = vmatpush2.msra.mxu0 0.0
  %7137 = vmatprep.mubr.f32.mxu0 0.0
  %v7138 = vand.u32 %v4279, 4294901760
  %v7139 = vsub.f32 %v4279, %v7138
  %v7140 = vand.u32 %v7139, 4294901760
  %v7141 = vsub.f32 %v7139, %v7140
  %v7142 = vand.u32 %v7141, 4294901760
  %7143 = vmatmul.mubr.f32.gmra.mxu0 %v7142
  %v7144 = vpop.f32.mrf.mxu0
  %v7145 = vadd.f32 0.0, %v7144
  %v7146 = vpop.f32.mrf.mxu0
  %v7147 = vadd.f32 0.0, %v7146
  %7148 = vdwg.mxu0
  %7149 = vmatprep.subr.mxu0 0.0
  %7150 = vmatpush1.msra.mxu0 0.0
  %7151 = vmatprep.subr.mxu0 0.0
  %7152 = vmatpush1.msra.mxu0 0.0
  %7153 = vmatprep.subr.mxu0 0.0
  %7154 = vmatpush1.msra.mxu0 0.0
  %7155 = vmatprep.subr.mxu0 0.0
  %7156 = vmatpush1.msra.mxu0 0.0
  %7157 = vmatprep.subr.mxu0 0.0
  %7158 = vmatpush1.msra.mxu0 0.0
  %7159 = vmatprep.subr.mxu0 0.0
  %7160 = vmatpush1.msra.mxu0 0.0
  %7161 = vmatprep.subr.mxu0 0.0
  %7162 = vmatpush1.msra.mxu0 0.0
  %7163 = vmatprep.subr.mxu0 0.0
  %7164 = vmatpush1.msra.mxu0 0.0
  %7165 = vmatprep.subr.mxu0 0.0
  %7166 = vmatpush1.msra.mxu0 0.0
  %7167 = vmatprep.subr.mxu0 0.0
  %7168 = vmatpush1.msra.mxu0 0.0
  %7169 = vmatprep.subr.mxu0 0.0
  %7170 = vmatpush1.msra.mxu0 0.0
  %7171 = vmatprep.subr.mxu0 0.0
  %7172 = vmatpush1.msra.mxu0 0.0
  %7173 = vmatprep.subr.mxu0 0.0
  %7174 = vmatpush1.msra.mxu0 0.0
  %7175 = vmatprep.subr.mxu0 0.0
  %7176 = vmatpush1.msra.mxu0 0.0
  %7177 = vmatprep.subr.mxu0 0.0
  %7178 = vmatpush1.msra.mxu0 0.0
  %v7179 = vand.u32 %v27, 4294901760
  %v7180 = vsub.f32 %v27, %v7179
  %v7181 = vand.u32 %v7180, 4294901760
  %v7182 = vsub.f32 %v7180, %v7181
  %v7183 = vand.u32 %v7182, 4294901760
  %7184 = vmatprep.subr.mxu0 %v7183
  %v7185 = vand.u32 %v26, 4294901760
  %v7186 = vsub.f32 %v26, %v7185
  %v7187 = vand.u32 %v7186, 4294901760
  %v7188 = vsub.f32 %v7186, %v7187
  %v7189 = vand.u32 %v7188, 4294901760
  %7190 = vmatpush1.msra.mxu0 %v7189
  %7191 = vmatprep.subr.mxu0 0.0
  %7192 = vmatpush2.msra.mxu0 0.0
  %7193 = vmatprep.subr.mxu0 0.0
  %7194 = vmatpush2.msra.mxu0 0.0
  %7195 = vmatprep.subr.mxu0 0.0
  %7196 = vmatpush2.msra.mxu0 0.0
  %7197 = vmatprep.subr.mxu0 0.0
  %7198 = vmatpush2.msra.mxu0 0.0
  %7199 = vmatprep.subr.mxu0 0.0
  %7200 = vmatpush2.msra.mxu0 0.0
  %7201 = vmatprep.subr.mxu0 0.0
  %7202 = vmatpush2.msra.mxu0 0.0
  %7203 = vmatprep.subr.mxu0 0.0
  %7204 = vmatpush2.msra.mxu0 0.0
  %7205 = vmatprep.subr.mxu0 0.0
  %7206 = vmatpush2.msra.mxu0 0.0
  %7207 = vmatprep.subr.mxu0 0.0
  %7208 = vmatpush2.msra.mxu0 0.0
  %7209 = vmatprep.subr.mxu0 0.0
  %7210 = vmatpush2.msra.mxu0 0.0
  %7211 = vmatprep.subr.mxu0 0.0
  %7212 = vmatpush2.msra.mxu0 0.0
  %7213 = vmatprep.subr.mxu0 0.0
  %7214 = vmatpush2.msra.mxu0 0.0
  %7215 = vmatprep.subr.mxu0 0.0
  %7216 = vmatpush2.msra.mxu0 0.0
  %7217 = vmatprep.subr.mxu0 0.0
  %7218 = vmatpush2.msra.mxu0 0.0
  %7219 = vmatprep.subr.mxu0 0.0
  %7220 = vmatpush2.msra.mxu0 0.0
  %7221 = vmatprep.subr.mxu0 0.0
  %7222 = vmatpush2.msra.mxu0 0.0
  %7223 = vmatprep.mubr.f32.mxu0 0.0
  %v7224 = vand.u32 %v4279, 4294901760
  %7225 = vmatmul.mubr.f32.gmra.mxu0 %v7224
  %v7226 = vpop.f32.mrf.mxu0
  %v7227 = vadd.f32 %v7145, %v7226
  %v7228 = vpop.f32.mrf.mxu0
  %v7229 = vadd.f32 %v7147, %v7228
  %7230 = vdwg.mxu0
  %7231 = vmatprep.subr.mxu0 0.0
  %7232 = vmatpush1.msra.mxu0 0.0
  %7233 = vmatprep.subr.mxu0 0.0
  %7234 = vmatpush1.msra.mxu0 0.0
  %7235 = vmatprep.subr.mxu0 0.0
  %7236 = vmatpush1.msra.mxu0 0.0
  %7237 = vmatprep.subr.mxu0 0.0
  %7238 = vmatpush1.msra.mxu0 0.0
  %7239 = vmatprep.subr.mxu0 0.0
  %7240 = vmatpush1.msra.mxu0 0.0
  %7241 = vmatprep.subr.mxu0 0.0
  %7242 = vmatpush1.msra.mxu0 0.0
  %7243 = vmatprep.subr.mxu0 0.0
  %7244 = vmatpush1.msra.mxu0 0.0
  %7245 = vmatprep.subr.mxu0 0.0
  %7246 = vmatpush1.msra.mxu0 0.0
  %7247 = vmatprep.subr.mxu0 0.0
  %7248 = vmatpush1.msra.mxu0 0.0
  %7249 = vmatprep.subr.mxu0 0.0
  %7250 = vmatpush1.msra.mxu0 0.0
  %7251 = vmatprep.subr.mxu0 0.0
  %7252 = vmatpush1.msra.mxu0 0.0
  %7253 = vmatprep.subr.mxu0 0.0
  %7254 = vmatpush1.msra.mxu0 0.0
  %7255 = vmatprep.subr.mxu0 0.0
  %7256 = vmatpush1.msra.mxu0 0.0
  %7257 = vmatprep.subr.mxu0 0.0
  %7258 = vmatpush1.msra.mxu0 0.0
  %7259 = vmatprep.subr.mxu0 0.0
  %7260 = vmatpush1.msra.mxu0 0.0
  %v7261 = vand.u32 %v27, 4294901760
  %v7262 = vsub.f32 %v27, %v7261
  %7263 = vmatprep.subr.mxu0 %v7262
  %v7264 = vand.u32 %v26, 4294901760
  %v7265 = vsub.f32 %v26, %v7264
  %7266 = vmatpush1.msra.mxu0 %v7265
  %7267 = vmatprep.subr.mxu0 0.0
  %7268 = vmatpush2.msra.mxu0 0.0
  %7269 = vmatprep.subr.mxu0 0.0
  %7270 = vmatpush2.msra.mxu0 0.0
  %7271 = vmatprep.subr.mxu0 0.0
  %7272 = vmatpush2.msra.mxu0 0.0
  %7273 = vmatprep.subr.mxu0 0.0
  %7274 = vmatpush2.msra.mxu0 0.0
  %7275 = vmatprep.subr.mxu0 0.0
  %7276 = vmatpush2.msra.mxu0 0.0
  %7277 = vmatprep.subr.mxu0 0.0
  %7278 = vmatpush2.msra.mxu0 0.0
  %7279 = vmatprep.subr.mxu0 0.0
  %7280 = vmatpush2.msra.mxu0 0.0
  %7281 = vmatprep.subr.mxu0 0.0
  %7282 = vmatpush2.msra.mxu0 0.0
  %7283 = vmatprep.subr.mxu0 0.0
  %7284 = vmatpush2.msra.mxu0 0.0
  %7285 = vmatprep.subr.mxu0 0.0
  %7286 = vmatpush2.msra.mxu0 0.0
  %7287 = vmatprep.subr.mxu0 0.0
  %7288 = vmatpush2.msra.mxu0 0.0
  %7289 = vmatprep.subr.mxu0 0.0
  %7290 = vmatpush2.msra.mxu0 0.0
  %7291 = vmatprep.subr.mxu0 0.0
  %7292 = vmatpush2.msra.mxu0 0.0
  %7293 = vmatprep.subr.mxu0 0.0
  %7294 = vmatpush2.msra.mxu0 0.0
  %7295 = vmatprep.subr.mxu0 0.0
  %7296 = vmatpush2.msra.mxu0 0.0
  %7297 = vmatprep.subr.mxu0 0.0
  %7298 = vmatpush2.msra.mxu0 0.0
  %7299 = vmatprep.mubr.f32.mxu0 0.0
  %v7300 = vand.u32 %v4279, 4294901760
  %v7301 = vsub.f32 %v4279, %v7300
  %7302 = vmatmul.mubr.f32.gmra.mxu0 %v7301
  %v7303 = vpop.f32.mrf.mxu0
  %v7304 = vadd.f32 %v7227, %v7303
  %v7305 = vpop.f32.mrf.mxu0
  %v7306 = vadd.f32 %v7229, %v7305
  %7307 = vdwg.mxu0
  %7308 = vmatprep.subr.mxu0 0.0
  %7309 = vmatpush1.msra.mxu0 0.0
  %7310 = vmatprep.subr.mxu0 0.0
  %7311 = vmatpush1.msra.mxu0 0.0
  %7312 = vmatprep.subr.mxu0 0.0
  %7313 = vmatpush1.msra.mxu0 0.0
  %7314 = vmatprep.subr.mxu0 0.0
  %7315 = vmatpush1.msra.mxu0 0.0
  %7316 = vmatprep.subr.mxu0 0.0
  %7317 = vmatpush1.msra.mxu0 0.0
  %7318 = vmatprep.subr.mxu0 0.0
  %7319 = vmatpush1.msra.mxu0 0.0
  %7320 = vmatprep.subr.mxu0 0.0
  %7321 = vmatpush1.msra.mxu0 0.0
  %7322 = vmatprep.subr.mxu0 0.0
  %7323 = vmatpush1.msra.mxu0 0.0
  %7324 = vmatprep.subr.mxu0 0.0
  %7325 = vmatpush1.msra.mxu0 0.0
  %7326 = vmatprep.subr.mxu0 0.0
  %7327 = vmatpush1.msra.mxu0 0.0
  %7328 = vmatprep.subr.mxu0 0.0
  %7329 = vmatpush1.msra.mxu0 0.0
  %7330 = vmatprep.subr.mxu0 0.0
  %7331 = vmatpush1.msra.mxu0 0.0
  %7332 = vmatprep.subr.mxu0 0.0
  %7333 = vmatpush1.msra.mxu0 0.0
  %7334 = vmatprep.subr.mxu0 0.0
  %7335 = vmatpush1.msra.mxu0 0.0
  %7336 = vmatprep.subr.mxu0 0.0
  %7337 = vmatpush1.msra.mxu0 0.0
  %v7338 = vand.u32 %v27, 4294901760
  %7339 = vmatprep.subr.mxu0 %v7338
  %v7340 = vand.u32 %v26, 4294901760
  %7341 = vmatpush1.msra.mxu0 %v7340
  %7342 = vmatprep.subr.mxu0 0.0
  %7343 = vmatpush2.msra.mxu0 0.0
  %7344 = vmatprep.subr.mxu0 0.0
  %7345 = vmatpush2.msra.mxu0 0.0
  %7346 = vmatprep.subr.mxu0 0.0
  %7347 = vmatpush2.msra.mxu0 0.0
  %7348 = vmatprep.subr.mxu0 0.0
  %7349 = vmatpush2.msra.mxu0 0.0
  %7350 = vmatprep.subr.mxu0 0.0
  %7351 = vmatpush2.msra.mxu0 0.0
  %7352 = vmatprep.subr.mxu0 0.0
  %7353 = vmatpush2.msra.mxu0 0.0
  %7354 = vmatprep.subr.mxu0 0.0
  %7355 = vmatpush2.msra.mxu0 0.0
  %7356 = vmatprep.subr.mxu0 0.0
  %7357 = vmatpush2.msra.mxu0 0.0
  %7358 = vmatprep.subr.mxu0 0.0
  %7359 = vmatpush2.msra.mxu0 0.0
  %7360 = vmatprep.subr.mxu0 0.0
  %7361 = vmatpush2.msra.mxu0 0.0
  %7362 = vmatprep.subr.mxu0 0.0
  %7363 = vmatpush2.msra.mxu0 0.0
  %7364 = vmatprep.subr.mxu0 0.0
  %7365 = vmatpush2.msra.mxu0 0.0
  %7366 = vmatprep.subr.mxu0 0.0
  %7367 = vmatpush2.msra.mxu0 0.0
  %7368 = vmatprep.subr.mxu0 0.0
  %7369 = vmatpush2.msra.mxu0 0.0
  %7370 = vmatprep.subr.mxu0 0.0
  %7371 = vmatpush2.msra.mxu0 0.0
  %7372 = vmatprep.subr.mxu0 0.0
  %7373 = vmatpush2.msra.mxu0 0.0
  %7374 = vmatprep.mubr.f32.mxu0 0.0
  %v7375 = vand.u32 %v4279, 4294901760
  %v7376 = vsub.f32 %v4279, %v7375
  %v7377 = vand.u32 %v7376, 4294901760
  %7378 = vmatmul.mubr.f32.gmra.mxu0 %v7377
  %v7379 = vpop.f32.mrf.mxu0
  %v7380 = vadd.f32 %v7304, %v7379
  %v7381 = vpop.f32.mrf.mxu0
  %v7382 = vadd.f32 %v7306, %v7381
  %7383 = vdwg.mxu0
  %7384 = vmatprep.subr.mxu0 0.0
  %7385 = vmatpush1.msra.mxu0 0.0
  %7386 = vmatprep.subr.mxu0 0.0
  %7387 = vmatpush1.msra.mxu0 0.0
  %7388 = vmatprep.subr.mxu0 0.0
  %7389 = vmatpush1.msra.mxu0 0.0
  %7390 = vmatprep.subr.mxu0 0.0
  %7391 = vmatpush1.msra.mxu0 0.0
  %7392 = vmatprep.subr.mxu0 0.0
  %7393 = vmatpush1.msra.mxu0 0.0
  %7394 = vmatprep.subr.mxu0 0.0
  %7395 = vmatpush1.msra.mxu0 0.0
  %7396 = vmatprep.subr.mxu0 0.0
  %7397 = vmatpush1.msra.mxu0 0.0
  %7398 = vmatprep.subr.mxu0 0.0
  %7399 = vmatpush1.msra.mxu0 0.0
  %7400 = vmatprep.subr.mxu0 0.0
  %7401 = vmatpush1.msra.mxu0 0.0
  %7402 = vmatprep.subr.mxu0 0.0
  %7403 = vmatpush1.msra.mxu0 0.0
  %7404 = vmatprep.subr.mxu0 0.0
  %7405 = vmatpush1.msra.mxu0 0.0
  %7406 = vmatprep.subr.mxu0 0.0
  %7407 = vmatpush1.msra.mxu0 0.0
  %7408 = vmatprep.subr.mxu0 0.0
  %7409 = vmatpush1.msra.mxu0 0.0
  %7410 = vmatprep.subr.mxu0 0.0
  %7411 = vmatpush1.msra.mxu0 0.0
  %7412 = vmatprep.subr.mxu0 0.0
  %7413 = vmatpush1.msra.mxu0 0.0
  %v7414 = vand.u32 %v27, 4294901760
  %v7415 = vsub.f32 %v27, %v7414
  %v7416 = vand.u32 %v7415, 4294901760
  %7417 = vmatprep.subr.mxu0 %v7416
  %v7418 = vand.u32 %v26, 4294901760
  %v7419 = vsub.f32 %v26, %v7418
  %v7420 = vand.u32 %v7419, 4294901760
  %7421 = vmatpush1.msra.mxu0 %v7420
  %7422 = vmatprep.subr.mxu0 0.0
  %7423 = vmatpush2.msra.mxu0 0.0
  %7424 = vmatprep.subr.mxu0 0.0
  %7425 = vmatpush2.msra.mxu0 0.0
  %7426 = vmatprep.subr.mxu0 0.0
  %7427 = vmatpush2.msra.mxu0 0.0
  %7428 = vmatprep.subr.mxu0 0.0
  %7429 = vmatpush2.msra.mxu0 0.0
  %7430 = vmatprep.subr.mxu0 0.0
  %7431 = vmatpush2.msra.mxu0 0.0
  %7432 = vmatprep.subr.mxu0 0.0
  %7433 = vmatpush2.msra.mxu0 0.0
  %7434 = vmatprep.subr.mxu0 0.0
  %7435 = vmatpush2.msra.mxu0 0.0
  %7436 = vmatprep.subr.mxu0 0.0
  %7437 = vmatpush2.msra.mxu0 0.0
  %7438 = vmatprep.subr.mxu0 0.0
  %7439 = vmatpush2.msra.mxu0 0.0
  %7440 = vmatprep.subr.mxu0 0.0
  %7441 = vmatpush2.msra.mxu0 0.0
  %7442 = vmatprep.subr.mxu0 0.0
  %7443 = vmatpush2.msra.mxu0 0.0
  %7444 = vmatprep.subr.mxu0 0.0
  %7445 = vmatpush2.msra.mxu0 0.0
  %7446 = vmatprep.subr.mxu0 0.0
  %7447 = vmatpush2.msra.mxu0 0.0
  %7448 = vmatprep.subr.mxu0 0.0
  %7449 = vmatpush2.msra.mxu0 0.0
  %7450 = vmatprep.subr.mxu0 0.0
  %7451 = vmatpush2.msra.mxu0 0.0
  %7452 = vmatprep.subr.mxu0 0.0
  %7453 = vmatpush2.msra.mxu0 0.0
  %7454 = vmatprep.mubr.f32.mxu0 0.0
  %v7455 = vand.u32 %v4279, 4294901760
  %7456 = vmatmul.mubr.f32.gmra.mxu0 %v7455
  %v7457 = vpop.f32.mrf.mxu0
  %v7458 = vadd.f32 %v7380, %v7457
  %v7459 = vpop.f32.mrf.mxu0
  %v7460 = vadd.f32 %v7382, %v7459
  %7461 = vdwg.mxu0
  %7462 = vmatprep.subr.mxu0 0.0
  %7463 = vmatpush1.msra.mxu0 0.0
  %7464 = vmatprep.subr.mxu0 0.0
  %7465 = vmatpush1.msra.mxu0 0.0
  %7466 = vmatprep.subr.mxu0 0.0
  %7467 = vmatpush1.msra.mxu0 0.0
  %7468 = vmatprep.subr.mxu0 0.0
  %7469 = vmatpush1.msra.mxu0 0.0
  %7470 = vmatprep.subr.mxu0 0.0
  %7471 = vmatpush1.msra.mxu0 0.0
  %7472 = vmatprep.subr.mxu0 0.0
  %7473 = vmatpush1.msra.mxu0 0.0
  %7474 = vmatprep.subr.mxu0 0.0
  %7475 = vmatpush1.msra.mxu0 0.0
  %7476 = vmatprep.subr.mxu0 0.0
  %7477 = vmatpush1.msra.mxu0 0.0
  %7478 = vmatprep.subr.mxu0 0.0
  %7479 = vmatpush1.msra.mxu0 0.0
  %7480 = vmatprep.subr.mxu0 0.0
  %7481 = vmatpush1.msra.mxu0 0.0
  %7482 = vmatprep.subr.mxu0 0.0
  %7483 = vmatpush1.msra.mxu0 0.0
  %7484 = vmatprep.subr.mxu0 0.0
  %7485 = vmatpush1.msra.mxu0 0.0
  %7486 = vmatprep.subr.mxu0 0.0
  %7487 = vmatpush1.msra.mxu0 0.0
  %7488 = vmatprep.subr.mxu0 0.0
  %7489 = vmatpush1.msra.mxu0 0.0
  %7490 = vmatprep.subr.mxu0 0.0
  %7491 = vmatpush1.msra.mxu0 0.0
  %v7492 = vand.u32 %v27, 4294901760
  %7493 = vmatprep.subr.mxu0 %v7492
  %v7494 = vand.u32 %v26, 4294901760
  %7495 = vmatpush1.msra.mxu0 %v7494
  %7496 = vmatprep.subr.mxu0 0.0
  %7497 = vmatpush2.msra.mxu0 0.0
  %7498 = vmatprep.subr.mxu0 0.0
  %7499 = vmatpush2.msra.mxu0 0.0
  %7500 = vmatprep.subr.mxu0 0.0
  %7501 = vmatpush2.msra.mxu0 0.0
  %7502 = vmatprep.subr.mxu0 0.0
  %7503 = vmatpush2.msra.mxu0 0.0
  %7504 = vmatprep.subr.mxu0 0.0
  %7505 = vmatpush2.msra.mxu0 0.0
  %7506 = vmatprep.subr.mxu0 0.0
  %7507 = vmatpush2.msra.mxu0 0.0
  %7508 = vmatprep.subr.mxu0 0.0
  %7509 = vmatpush2.msra.mxu0 0.0
  %7510 = vmatprep.subr.mxu0 0.0
  %7511 = vmatpush2.msra.mxu0 0.0
  %7512 = vmatprep.subr.mxu0 0.0
  %7513 = vmatpush2.msra.mxu0 0.0
  %7514 = vmatprep.subr.mxu0 0.0
  %7515 = vmatpush2.msra.mxu0 0.0
  %7516 = vmatprep.subr.mxu0 0.0
  %7517 = vmatpush2.msra.mxu0 0.0
  %7518 = vmatprep.subr.mxu0 0.0
  %7519 = vmatpush2.msra.mxu0 0.0
  %7520 = vmatprep.subr.mxu0 0.0
  %7521 = vmatpush2.msra.mxu0 0.0
  %7522 = vmatprep.subr.mxu0 0.0
  %7523 = vmatpush2.msra.mxu0 0.0
  %7524 = vmatprep.subr.mxu0 0.0
  %7525 = vmatpush2.msra.mxu0 0.0
  %7526 = vmatprep.subr.mxu0 0.0
  %7527 = vmatpush2.msra.mxu0 0.0
  %7528 = vmatprep.mubr.f32.mxu0 0.0
  %v7529 = vand.u32 %v4279, 4294901760
  %7530 = vmatmul.mubr.f32.gmra.mxu0 %v7529
  %v7531 = vpop.f32.mrf.mxu0
  %v7532 = vadd.f32 %v7458, %v7531
  %v7533 = vpop.f32.mrf.mxu0
  %v7534 = vadd.f32 %v7460, %v7533
  %7535 = vdwg.mxu0
  %7536 = vmatprep.subr.mxu0 0.0
  %7537 = vmatpush1.msra.mxu0 0.0
  %7538 = vmatprep.subr.mxu0 0.0
  %7539 = vmatpush1.msra.mxu0 0.0
  %7540 = vmatprep.subr.mxu0 0.0
  %7541 = vmatpush1.msra.mxu0 0.0
  %7542 = vmatprep.subr.mxu0 0.0
  %7543 = vmatpush1.msra.mxu0 0.0
  %7544 = vmatprep.subr.mxu0 0.0
  %7545 = vmatpush1.msra.mxu0 0.0
  %7546 = vmatprep.subr.mxu0 0.0
  %7547 = vmatpush1.msra.mxu0 0.0
  %7548 = vmatprep.subr.mxu0 0.0
  %7549 = vmatpush1.msra.mxu0 0.0
  %7550 = vmatprep.subr.mxu0 0.0
  %7551 = vmatpush1.msra.mxu0 0.0
  %7552 = vmatprep.subr.mxu0 0.0
  %7553 = vmatpush1.msra.mxu0 0.0
  %7554 = vmatprep.subr.mxu0 0.0
  %7555 = vmatpush1.msra.mxu0 0.0
  %7556 = vmatprep.subr.mxu0 0.0
  %7557 = vmatpush1.msra.mxu0 0.0
  %7558 = vmatprep.subr.mxu0 0.0
  %7559 = vmatpush1.msra.mxu0 0.0
  %7560 = vmatprep.subr.mxu0 0.0
  %7561 = vmatpush1.msra.mxu0 0.0
  %7562 = vmatprep.subr.mxu0 0.0
  %7563 = vmatpush1.msra.mxu0 0.0
  %7564 = vmatprep.subr.mxu0 0.0
  %7565 = vmatpush1.msra.mxu0 0.0
  %v7566 = vand.u32 %v29, 4294901760
  %7567 = vmatprep.subr.mxu0 %v7566
  %v7568 = vand.u32 %v28, 4294901760
  %7569 = vmatpush1.msra.mxu0 %v7568
  %7570 = vmatprep.subr.mxu0 0.0
  %7571 = vmatpush2.msra.mxu0 0.0
  %7572 = vmatprep.subr.mxu0 0.0
  %7573 = vmatpush2.msra.mxu0 0.0
  %7574 = vmatprep.subr.mxu0 0.0
  %7575 = vmatpush2.msra.mxu0 0.0
  %7576 = vmatprep.subr.mxu0 0.0
  %7577 = vmatpush2.msra.mxu0 0.0
  %7578 = vmatprep.subr.mxu0 0.0
  %7579 = vmatpush2.msra.mxu0 0.0
  %7580 = vmatprep.subr.mxu0 0.0
  %7581 = vmatpush2.msra.mxu0 0.0
  %7582 = vmatprep.subr.mxu0 0.0
  %7583 = vmatpush2.msra.mxu0 0.0
  %7584 = vmatprep.subr.mxu0 0.0
  %7585 = vmatpush2.msra.mxu0 0.0
  %7586 = vmatprep.subr.mxu0 0.0
  %7587 = vmatpush2.msra.mxu0 0.0
  %7588 = vmatprep.subr.mxu0 0.0
  %7589 = vmatpush2.msra.mxu0 0.0
  %7590 = vmatprep.subr.mxu0 0.0
  %7591 = vmatpush2.msra.mxu0 0.0
  %7592 = vmatprep.subr.mxu0 0.0
  %7593 = vmatpush2.msra.mxu0 0.0
  %7594 = vmatprep.subr.mxu0 0.0
  %7595 = vmatpush2.msra.mxu0 0.0
  %7596 = vmatprep.subr.mxu0 0.0
  %7597 = vmatpush2.msra.mxu0 0.0
  %7598 = vmatprep.subr.mxu0 0.0
  %7599 = vmatpush2.msra.mxu0 0.0
  %7600 = vmatprep.subr.mxu0 0.0
  %7601 = vmatpush2.msra.mxu0 0.0
  %7602 = vmatprep.mubr.f32.mxu0 0.0
  %v7603 = vand.u32 %v4279, 4294901760
  %v7604 = vsub.f32 %v4279, %v7603
  %v7605 = vand.u32 %v7604, 4294901760
  %v7606 = vsub.f32 %v7604, %v7605
  %v7607 = vand.u32 %v7606, 4294901760
  %7608 = vmatmul.mubr.f32.gmra.mxu0 %v7607
  %v7609 = vpop.f32.mrf.mxu0
  %v7610 = vadd.f32 0.0, %v7609
  %v7611 = vpop.f32.mrf.mxu0
  %v7612 = vadd.f32 0.0, %v7611
  %7613 = vdwg.mxu0
  %7614 = vmatprep.subr.mxu0 0.0
  %7615 = vmatpush1.msra.mxu0 0.0
  %7616 = vmatprep.subr.mxu0 0.0
  %7617 = vmatpush1.msra.mxu0 0.0
  %7618 = vmatprep.subr.mxu0 0.0
  %7619 = vmatpush1.msra.mxu0 0.0
  %7620 = vmatprep.subr.mxu0 0.0
  %7621 = vmatpush1.msra.mxu0 0.0
  %7622 = vmatprep.subr.mxu0 0.0
  %7623 = vmatpush1.msra.mxu0 0.0
  %7624 = vmatprep.subr.mxu0 0.0
  %7625 = vmatpush1.msra.mxu0 0.0
  %7626 = vmatprep.subr.mxu0 0.0
  %7627 = vmatpush1.msra.mxu0 0.0
  %7628 = vmatprep.subr.mxu0 0.0
  %7629 = vmatpush1.msra.mxu0 0.0
  %7630 = vmatprep.subr.mxu0 0.0
  %7631 = vmatpush1.msra.mxu0 0.0
  %7632 = vmatprep.subr.mxu0 0.0
  %7633 = vmatpush1.msra.mxu0 0.0
  %7634 = vmatprep.subr.mxu0 0.0
  %7635 = vmatpush1.msra.mxu0 0.0
  %7636 = vmatprep.subr.mxu0 0.0
  %7637 = vmatpush1.msra.mxu0 0.0
  %7638 = vmatprep.subr.mxu0 0.0
  %7639 = vmatpush1.msra.mxu0 0.0
  %7640 = vmatprep.subr.mxu0 0.0
  %7641 = vmatpush1.msra.mxu0 0.0
  %7642 = vmatprep.subr.mxu0 0.0
  %7643 = vmatpush1.msra.mxu0 0.0
  %v7644 = vand.u32 %v29, 4294901760
  %v7645 = vsub.f32 %v29, %v7644
  %v7646 = vand.u32 %v7645, 4294901760
  %v7647 = vsub.f32 %v7645, %v7646
  %v7648 = vand.u32 %v7647, 4294901760
  %7649 = vmatprep.subr.mxu0 %v7648
  %v7650 = vand.u32 %v28, 4294901760
  %v7651 = vsub.f32 %v28, %v7650
  %v7652 = vand.u32 %v7651, 4294901760
  %v7653 = vsub.f32 %v7651, %v7652
  %v7654 = vand.u32 %v7653, 4294901760
  %7655 = vmatpush1.msra.mxu0 %v7654
  %7656 = vmatprep.subr.mxu0 0.0
  %7657 = vmatpush2.msra.mxu0 0.0
  %7658 = vmatprep.subr.mxu0 0.0
  %7659 = vmatpush2.msra.mxu0 0.0
  %7660 = vmatprep.subr.mxu0 0.0
  %7661 = vmatpush2.msra.mxu0 0.0
  %7662 = vmatprep.subr.mxu0 0.0
  %7663 = vmatpush2.msra.mxu0 0.0
  %7664 = vmatprep.subr.mxu0 0.0
  %7665 = vmatpush2.msra.mxu0 0.0
  %7666 = vmatprep.subr.mxu0 0.0
  %7667 = vmatpush2.msra.mxu0 0.0
  %7668 = vmatprep.subr.mxu0 0.0
  %7669 = vmatpush2.msra.mxu0 0.0
  %7670 = vmatprep.subr.mxu0 0.0
  %7671 = vmatpush2.msra.mxu0 0.0
  %7672 = vmatprep.subr.mxu0 0.0
  %7673 = vmatpush2.msra.mxu0 0.0
  %7674 = vmatprep.subr.mxu0 0.0
  %7675 = vmatpush2.msra.mxu0 0.0
  %7676 = vmatprep.subr.mxu0 0.0
  %7677 = vmatpush2.msra.mxu0 0.0
  %7678 = vmatprep.subr.mxu0 0.0
  %7679 = vmatpush2.msra.mxu0 0.0
  %7680 = vmatprep.subr.mxu0 0.0
  %7681 = vmatpush2.msra.mxu0 0.0
  %7682 = vmatprep.subr.mxu0 0.0
  %7683 = vmatpush2.msra.mxu0 0.0
  %7684 = vmatprep.subr.mxu0 0.0
  %7685 = vmatpush2.msra.mxu0 0.0
  %7686 = vmatprep.subr.mxu0 0.0
  %7687 = vmatpush2.msra.mxu0 0.0
  %7688 = vmatprep.mubr.f32.mxu0 0.0
  %v7689 = vand.u32 %v4279, 4294901760
  %7690 = vmatmul.mubr.f32.gmra.mxu0 %v7689
  %v7691 = vpop.f32.mrf.mxu0
  %v7692 = vadd.f32 %v7610, %v7691
  %v7693 = vpop.f32.mrf.mxu0
  %v7694 = vadd.f32 %v7612, %v7693
  %7695 = vdwg.mxu0
  %7696 = vmatprep.subr.mxu0 0.0
  %7697 = vmatpush1.msra.mxu0 0.0
  %7698 = vmatprep.subr.mxu0 0.0
  %7699 = vmatpush1.msra.mxu0 0.0
  %7700 = vmatprep.subr.mxu0 0.0
  %7701 = vmatpush1.msra.mxu0 0.0
  %7702 = vmatprep.subr.mxu0 0.0
  %7703 = vmatpush1.msra.mxu0 0.0
  %7704 = vmatprep.subr.mxu0 0.0
  %7705 = vmatpush1.msra.mxu0 0.0
  %7706 = vmatprep.subr.mxu0 0.0
  %7707 = vmatpush1.msra.mxu0 0.0
  %7708 = vmatprep.subr.mxu0 0.0
  %7709 = vmatpush1.msra.mxu0 0.0
  %7710 = vmatprep.subr.mxu0 0.0
  %7711 = vmatpush1.msra.mxu0 0.0
  %7712 = vmatprep.subr.mxu0 0.0
  %7713 = vmatpush1.msra.mxu0 0.0
  %7714 = vmatprep.subr.mxu0 0.0
  %7715 = vmatpush1.msra.mxu0 0.0
  %7716 = vmatprep.subr.mxu0 0.0
  %7717 = vmatpush1.msra.mxu0 0.0
  %7718 = vmatprep.subr.mxu0 0.0
  %7719 = vmatpush1.msra.mxu0 0.0
  %7720 = vmatprep.subr.mxu0 0.0
  %7721 = vmatpush1.msra.mxu0 0.0
  %7722 = vmatprep.subr.mxu0 0.0
  %7723 = vmatpush1.msra.mxu0 0.0
  %7724 = vmatprep.subr.mxu0 0.0
  %7725 = vmatpush1.msra.mxu0 0.0
  %v7726 = vand.u32 %v29, 4294901760
  %v7727 = vsub.f32 %v29, %v7726
  %7728 = vmatprep.subr.mxu0 %v7727
  %v7729 = vand.u32 %v28, 4294901760
  %v7730 = vsub.f32 %v28, %v7729
  %7731 = vmatpush1.msra.mxu0 %v7730
  %7732 = vmatprep.subr.mxu0 0.0
  %7733 = vmatpush2.msra.mxu0 0.0
  %7734 = vmatprep.subr.mxu0 0.0
  %7735 = vmatpush2.msra.mxu0 0.0
  %7736 = vmatprep.subr.mxu0 0.0
  %7737 = vmatpush2.msra.mxu0 0.0
  %7738 = vmatprep.subr.mxu0 0.0
  %7739 = vmatpush2.msra.mxu0 0.0
  %7740 = vmatprep.subr.mxu0 0.0
  %7741 = vmatpush2.msra.mxu0 0.0
  %7742 = vmatprep.subr.mxu0 0.0
  %7743 = vmatpush2.msra.mxu0 0.0
  %7744 = vmatprep.subr.mxu0 0.0
  %7745 = vmatpush2.msra.mxu0 0.0
  %7746 = vmatprep.subr.mxu0 0.0
  %7747 = vmatpush2.msra.mxu0 0.0
  %7748 = vmatprep.subr.mxu0 0.0
  %7749 = vmatpush2.msra.mxu0 0.0
  %7750 = vmatprep.subr.mxu0 0.0
  %7751 = vmatpush2.msra.mxu0 0.0
  %7752 = vmatprep.subr.mxu0 0.0
  %7753 = vmatpush2.msra.mxu0 0.0
  %7754 = vmatprep.subr.mxu0 0.0
  %7755 = vmatpush2.msra.mxu0 0.0
  %7756 = vmatprep.subr.mxu0 0.0
  %7757 = vmatpush2.msra.mxu0 0.0
  %7758 = vmatprep.subr.mxu0 0.0
  %7759 = vmatpush2.msra.mxu0 0.0
  %7760 = vmatprep.subr.mxu0 0.0
  %7761 = vmatpush2.msra.mxu0 0.0
  %7762 = vmatprep.subr.mxu0 0.0
  %7763 = vmatpush2.msra.mxu0 0.0
  %7764 = vmatprep.mubr.f32.mxu0 0.0
  %v7765 = vand.u32 %v4279, 4294901760
  %v7766 = vsub.f32 %v4279, %v7765
  %7767 = vmatmul.mubr.f32.gmra.mxu0 %v7766
  %v7768 = vpop.f32.mrf.mxu0
  %v7769 = vadd.f32 %v7692, %v7768
  %v7770 = vpop.f32.mrf.mxu0
  %v7771 = vadd.f32 %v7694, %v7770
  %7772 = vdwg.mxu0
  %7773 = vmatprep.subr.mxu0 0.0
  %7774 = vmatpush1.msra.mxu0 0.0
  %7775 = vmatprep.subr.mxu0 0.0
  %7776 = vmatpush1.msra.mxu0 0.0
  %7777 = vmatprep.subr.mxu0 0.0
  %7778 = vmatpush1.msra.mxu0 0.0
  %7779 = vmatprep.subr.mxu0 0.0
  %7780 = vmatpush1.msra.mxu0 0.0
  %7781 = vmatprep.subr.mxu0 0.0
  %7782 = vmatpush1.msra.mxu0 0.0
  %7783 = vmatprep.subr.mxu0 0.0
  %7784 = vmatpush1.msra.mxu0 0.0
  %7785 = vmatprep.subr.mxu0 0.0
  %7786 = vmatpush1.msra.mxu0 0.0
  %7787 = vmatprep.subr.mxu0 0.0
  %7788 = vmatpush1.msra.mxu0 0.0
  %7789 = vmatprep.subr.mxu0 0.0
  %7790 = vmatpush1.msra.mxu0 0.0
  %7791 = vmatprep.subr.mxu0 0.0
  %7792 = vmatpush1.msra.mxu0 0.0
  %7793 = vmatprep.subr.mxu0 0.0
  %7794 = vmatpush1.msra.mxu0 0.0
  %7795 = vmatprep.subr.mxu0 0.0
  %7796 = vmatpush1.msra.mxu0 0.0
  %7797 = vmatprep.subr.mxu0 0.0
  %7798 = vmatpush1.msra.mxu0 0.0
  %7799 = vmatprep.subr.mxu0 0.0
  %7800 = vmatpush1.msra.mxu0 0.0
  %7801 = vmatprep.subr.mxu0 0.0
  %7802 = vmatpush1.msra.mxu0 0.0
  %v7803 = vand.u32 %v29, 4294901760
  %7804 = vmatprep.subr.mxu0 %v7803
  %v7805 = vand.u32 %v28, 4294901760
  %7806 = vmatpush1.msra.mxu0 %v7805
  %7807 = vmatprep.subr.mxu0 0.0
  %7808 = vmatpush2.msra.mxu0 0.0
  %7809 = vmatprep.subr.mxu0 0.0
  %7810 = vmatpush2.msra.mxu0 0.0
  %7811 = vmatprep.subr.mxu0 0.0
  %7812 = vmatpush2.msra.mxu0 0.0
  %7813 = vmatprep.subr.mxu0 0.0
  %7814 = vmatpush2.msra.mxu0 0.0
  %7815 = vmatprep.subr.mxu0 0.0
  %7816 = vmatpush2.msra.mxu0 0.0
  %7817 = vmatprep.subr.mxu0 0.0
  %7818 = vmatpush2.msra.mxu0 0.0
  %7819 = vmatprep.subr.mxu0 0.0
  %7820 = vmatpush2.msra.mxu0 0.0
  %7821 = vmatprep.subr.mxu0 0.0
  %7822 = vmatpush2.msra.mxu0 0.0
  %7823 = vmatprep.subr.mxu0 0.0
  %7824 = vmatpush2.msra.mxu0 0.0
  %7825 = vmatprep.subr.mxu0 0.0
  %7826 = vmatpush2.msra.mxu0 0.0
  %7827 = vmatprep.subr.mxu0 0.0
  %7828 = vmatpush2.msra.mxu0 0.0
  %7829 = vmatprep.subr.mxu0 0.0
  %7830 = vmatpush2.msra.mxu0 0.0
  %7831 = vmatprep.subr.mxu0 0.0
  %7832 = vmatpush2.msra.mxu0 0.0
  %7833 = vmatprep.subr.mxu0 0.0
  %7834 = vmatpush2.msra.mxu0 0.0
  %7835 = vmatprep.subr.mxu0 0.0
  %7836 = vmatpush2.msra.mxu0 0.0
  %7837 = vmatprep.subr.mxu0 0.0
  %7838 = vmatpush2.msra.mxu0 0.0
  %7839 = vmatprep.mubr.f32.mxu0 0.0
  %v7840 = vand.u32 %v4279, 4294901760
  %v7841 = vsub.f32 %v4279, %v7840
  %v7842 = vand.u32 %v7841, 4294901760
  %7843 = vmatmul.mubr.f32.gmra.mxu0 %v7842
  %v7844 = vpop.f32.mrf.mxu0
  %v7845 = vadd.f32 %v7769, %v7844
  %v7846 = vpop.f32.mrf.mxu0
  %v7847 = vadd.f32 %v7771, %v7846
  %7848 = vdwg.mxu0
  %7849 = vmatprep.subr.mxu0 0.0
  %7850 = vmatpush1.msra.mxu0 0.0
  %7851 = vmatprep.subr.mxu0 0.0
  %7852 = vmatpush1.msra.mxu0 0.0
  %7853 = vmatprep.subr.mxu0 0.0
  %7854 = vmatpush1.msra.mxu0 0.0
  %7855 = vmatprep.subr.mxu0 0.0
  %7856 = vmatpush1.msra.mxu0 0.0
  %7857 = vmatprep.subr.mxu0 0.0
  %7858 = vmatpush1.msra.mxu0 0.0
  %7859 = vmatprep.subr.mxu0 0.0
  %7860 = vmatpush1.msra.mxu0 0.0
  %7861 = vmatprep.subr.mxu0 0.0
  %7862 = vmatpush1.msra.mxu0 0.0
  %7863 = vmatprep.subr.mxu0 0.0
  %7864 = vmatpush1.msra.mxu0 0.0
  %7865 = vmatprep.subr.mxu0 0.0
  %7866 = vmatpush1.msra.mxu0 0.0
  %7867 = vmatprep.subr.mxu0 0.0
  %7868 = vmatpush1.msra.mxu0 0.0
  %7869 = vmatprep.subr.mxu0 0.0
  %7870 = vmatpush1.msra.mxu0 0.0
  %7871 = vmatprep.subr.mxu0 0.0
  %7872 = vmatpush1.msra.mxu0 0.0
  %7873 = vmatprep.subr.mxu0 0.0
  %7874 = vmatpush1.msra.mxu0 0.0
  %7875 = vmatprep.subr.mxu0 0.0
  %7876 = vmatpush1.msra.mxu0 0.0
  %7877 = vmatprep.subr.mxu0 0.0
  %7878 = vmatpush1.msra.mxu0 0.0
  %v7879 = vand.u32 %v29, 4294901760
  %v7880 = vsub.f32 %v29, %v7879
  %v7881 = vand.u32 %v7880, 4294901760
  %7882 = vmatprep.subr.mxu0 %v7881
  %v7883 = vand.u32 %v28, 4294901760
  %v7884 = vsub.f32 %v28, %v7883
  %v7885 = vand.u32 %v7884, 4294901760
  %7886 = vmatpush1.msra.mxu0 %v7885
  %7887 = vmatprep.subr.mxu0 0.0
  %7888 = vmatpush2.msra.mxu0 0.0
  %7889 = vmatprep.subr.mxu0 0.0
  %7890 = vmatpush2.msra.mxu0 0.0
  %7891 = vmatprep.subr.mxu0 0.0
  %7892 = vmatpush2.msra.mxu0 0.0
  %7893 = vmatprep.subr.mxu0 0.0
  %7894 = vmatpush2.msra.mxu0 0.0
  %7895 = vmatprep.subr.mxu0 0.0
  %7896 = vmatpush2.msra.mxu0 0.0
  %7897 = vmatprep.subr.mxu0 0.0
  %7898 = vmatpush2.msra.mxu0 0.0
  %7899 = vmatprep.subr.mxu0 0.0
  %7900 = vmatpush2.msra.mxu0 0.0
  %7901 = vmatprep.subr.mxu0 0.0
  %7902 = vmatpush2.msra.mxu0 0.0
  %7903 = vmatprep.subr.mxu0 0.0
  %7904 = vmatpush2.msra.mxu0 0.0
  %7905 = vmatprep.subr.mxu0 0.0
  %7906 = vmatpush2.msra.mxu0 0.0
  %7907 = vmatprep.subr.mxu0 0.0
  %7908 = vmatpush2.msra.mxu0 0.0
  %7909 = vmatprep.subr.mxu0 0.0
  %7910 = vmatpush2.msra.mxu0 0.0
  %7911 = vmatprep.subr.mxu0 0.0
  %7912 = vmatpush2.msra.mxu0 0.0
  %7913 = vmatprep.subr.mxu0 0.0
  %7914 = vmatpush2.msra.mxu0 0.0
  %7915 = vmatprep.subr.mxu0 0.0
  %7916 = vmatpush2.msra.mxu0 0.0
  %7917 = vmatprep.subr.mxu0 0.0
  %7918 = vmatpush2.msra.mxu0 0.0
  %7919 = vmatprep.mubr.f32.mxu0 0.0
  %v7920 = vand.u32 %v4279, 4294901760
  %7921 = vmatmul.mubr.f32.gmra.mxu0 %v7920
  %v7922 = vpop.f32.mrf.mxu0
  %v7923 = vadd.f32 %v7845, %v7922
  %v7924 = vpop.f32.mrf.mxu0
  %v7925 = vadd.f32 %v7847, %v7924
  %7926 = vdwg.mxu0
  %7927 = vmatprep.subr.mxu0 0.0
  %7928 = vmatpush1.msra.mxu0 0.0
  %7929 = vmatprep.subr.mxu0 0.0
  %7930 = vmatpush1.msra.mxu0 0.0
  %7931 = vmatprep.subr.mxu0 0.0
  %7932 = vmatpush1.msra.mxu0 0.0
  %7933 = vmatprep.subr.mxu0 0.0
  %7934 = vmatpush1.msra.mxu0 0.0
  %7935 = vmatprep.subr.mxu0 0.0
  %7936 = vmatpush1.msra.mxu0 0.0
  %7937 = vmatprep.subr.mxu0 0.0
  %7938 = vmatpush1.msra.mxu0 0.0
  %7939 = vmatprep.subr.mxu0 0.0
  %7940 = vmatpush1.msra.mxu0 0.0
  %7941 = vmatprep.subr.mxu0 0.0
  %7942 = vmatpush1.msra.mxu0 0.0
  %7943 = vmatprep.subr.mxu0 0.0
  %7944 = vmatpush1.msra.mxu0 0.0
  %7945 = vmatprep.subr.mxu0 0.0
  %7946 = vmatpush1.msra.mxu0 0.0
  %7947 = vmatprep.subr.mxu0 0.0
  %7948 = vmatpush1.msra.mxu0 0.0
  %7949 = vmatprep.subr.mxu0 0.0
  %7950 = vmatpush1.msra.mxu0 0.0
  %7951 = vmatprep.subr.mxu0 0.0
  %7952 = vmatpush1.msra.mxu0 0.0
  %7953 = vmatprep.subr.mxu0 0.0
  %7954 = vmatpush1.msra.mxu0 0.0
  %7955 = vmatprep.subr.mxu0 0.0
  %7956 = vmatpush1.msra.mxu0 0.0
  %v7957 = vand.u32 %v29, 4294901760
  %7958 = vmatprep.subr.mxu0 %v7957
  %v7959 = vand.u32 %v28, 4294901760
  %7960 = vmatpush1.msra.mxu0 %v7959
  %7961 = vmatprep.subr.mxu0 0.0
  %7962 = vmatpush2.msra.mxu0 0.0
  %7963 = vmatprep.subr.mxu0 0.0
  %7964 = vmatpush2.msra.mxu0 0.0
  %7965 = vmatprep.subr.mxu0 0.0
  %7966 = vmatpush2.msra.mxu0 0.0
  %7967 = vmatprep.subr.mxu0 0.0
  %7968 = vmatpush2.msra.mxu0 0.0
  %7969 = vmatprep.subr.mxu0 0.0
  %7970 = vmatpush2.msra.mxu0 0.0
  %7971 = vmatprep.subr.mxu0 0.0
  %7972 = vmatpush2.msra.mxu0 0.0
  %7973 = vmatprep.subr.mxu0 0.0
  %7974 = vmatpush2.msra.mxu0 0.0
  %7975 = vmatprep.subr.mxu0 0.0
  %7976 = vmatpush2.msra.mxu0 0.0
  %7977 = vmatprep.subr.mxu0 0.0
  %7978 = vmatpush2.msra.mxu0 0.0
  %7979 = vmatprep.subr.mxu0 0.0
  %7980 = vmatpush2.msra.mxu0 0.0
  %7981 = vmatprep.subr.mxu0 0.0
  %7982 = vmatpush2.msra.mxu0 0.0
  %7983 = vmatprep.subr.mxu0 0.0
  %7984 = vmatpush2.msra.mxu0 0.0
  %7985 = vmatprep.subr.mxu0 0.0
  %7986 = vmatpush2.msra.mxu0 0.0
  %7987 = vmatprep.subr.mxu0 0.0
  %7988 = vmatpush2.msra.mxu0 0.0
  %7989 = vmatprep.subr.mxu0 0.0
  %7990 = vmatpush2.msra.mxu0 0.0
  %7991 = vmatprep.subr.mxu0 0.0
  %7992 = vmatpush2.msra.mxu0 0.0
  %7993 = vmatprep.mubr.f32.mxu0 0.0
  %v7994 = vand.u32 %v4279, 4294901760
  %7995 = vmatmul.mubr.f32.gmra.mxu0 %v7994
  %v7996 = vpop.f32.mrf.mxu0
  %v7997 = vadd.f32 %v7923, %v7996
  %v7998 = vpop.f32.mrf.mxu0
  %v7999 = vadd.f32 %v7925, %v7998
  %8000 = vdwg.mxu0
  %v8001 = vsub.f32 0.0, %v4742
  %v8002 = vsub.f32 0.0, %v4744
  %v8003 = vsub.f32 0.0, %v5207
  %v8004 = vsub.f32 0.0, %v5209
  %v8005 = vsub.f32 0.0, %v5672
  %v8006 = vsub.f32 0.0, %v5674
  %v8007 = vsub.f32 0.0, %v6137
  %v8008 = vsub.f32 0.0, %v6139
  %v8009 = vsub.f32 0.0, %v6602
  %v8010 = vsub.f32 0.0, %v6604
  %v8011 = vsub.f32 0.0, %v7067
  %v8012 = vsub.f32 0.0, %v7069
  %v8013 = vsub.f32 0.0, %v7532
  %v8014 = vsub.f32 0.0, %v7534
  %v8015 = vsub.f32 0.0, %v7997
  %v8016 = vsub.f32 0.0, %v7999
  %v8017 = vmul.f32 %v8001, 1.442695
  %v8018 = vpow.pop %v8017
  %v8019 = vmul.f32 %v8002, 1.442695
  %v8020 = vpow.pop %v8019
  %v8021 = vmul.f32 %v8003, 1.442695
  %v8022 = vpow.pop %v8021
  %v8023 = vmul.f32 %v8004, 1.442695
  %v8024 = vpow.pop %v8023
  %v8025 = vmul.f32 %v8005, 1.442695
  %v8026 = vpow.pop %v8025
  %v8027 = vmul.f32 %v8006, 1.442695
  %v8028 = vpow.pop %v8027
  %v8029 = vmul.f32 %v8007, 1.442695
  %v8030 = vpow.pop %v8029
  %v8031 = vmul.f32 %v8008, 1.442695
  %v8032 = vpow.pop %v8031
  %v8033 = vmul.f32 %v8009, 1.442695
  %v8034 = vpow.pop %v8033
  %v8035 = vmul.f32 %v8010, 1.442695
  %v8036 = vpow.pop %v8035
  %v8037 = vmul.f32 %v8011, 1.442695
  %v8038 = vpow.pop %v8037
  %v8039 = vmul.f32 %v8012, 1.442695
  %v8040 = vpow.pop %v8039
  %v8041 = vmul.f32 %v8013, 1.442695
  %v8042 = vpow.pop %v8041
  %v8043 = vmul.f32 %v8014, 1.442695
  %v8044 = vpow.pop %v8043
  %v8045 = vmul.f32 %v8015, 1.442695
  %v8046 = vpow.pop %v8045
  %v8047 = vmul.f32 %v8016, 1.442695
  %v8048 = vpow.pop %v8047
  %v8049 = vadd.f32 %v8018, 1.0
  %v8050 = vadd.f32 %v8020, 1.0
  %v8051 = vadd.f32 %v8022, 1.0
  %v8052 = vadd.f32 %v8024, 1.0
  %v8053 = vadd.f32 %v8026, 1.0
  %v8054 = vadd.f32 %v8028, 1.0
  %v8055 = vadd.f32 %v8030, 1.0
  %v8056 = vadd.f32 %v8032, 1.0
  %v8057 = vadd.f32 %v8034, 1.0
  %v8058 = vadd.f32 %v8036, 1.0
  %v8059 = vadd.f32 %v8038, 1.0
  %v8060 = vadd.f32 %v8040, 1.0
  %v8061 = vadd.f32 %v8042, 1.0
  %v8062 = vadd.f32 %v8044, 1.0
  %v8063 = vadd.f32 %v8046, 1.0
  %v8064 = vadd.f32 %v8048, 1.0
  %v8065 = vrcp.pop %v8049
  %v8066 = vrcp.pop %v8050
  %v8067 = vrcp.pop %v8051
  %v8068 = vrcp.pop %v8052
  %v8069 = vrcp.pop %v8053
  %v8070 = vrcp.pop %v8054
  %v8071 = vrcp.pop %v8055
  %v8072 = vrcp.pop %v8056
  %v8073 = vrcp.pop %v8057
  %v8074 = vrcp.pop %v8058
  %v8075 = vrcp.pop %v8059
  %v8076 = vrcp.pop %v8060
  %v8077 = vrcp.pop %v8061
  %v8078 = vrcp.pop %v8062
  %v8079 = vrcp.pop %v8063
  %v8080 = vrcp.pop %v8064
  %8081 = vst [vmem:[%s3] sm:$0xff] %v8065
  %8082 = vst [vmem:[%s3 + $0x8] sm:$0xff] %v8066
  %8083 = vst [vmem:[%s3 + $0x10] sm:$0xff] %v8067
  %8084 = vst [vmem:[%s3 + $0x18] sm:$0xff] %v8068
  %8085 = vst [vmem:[%s3 + $0x20] sm:$0xff] %v8069
  %8086 = vst [vmem:[%s3 + $0x28] sm:$0xff] %v8070
  %8087 = vst [vmem:[%s3 + $0x30] sm:$0xff] %v8071
  %8088 = vst [vmem:[%s3 + $0x38] sm:$0xff] %v8072
  %8089 = vst [vmem:[%s3 + $0x40] sm:$0xff] %v8073
  %8090 = vst [vmem:[%s3 + $0x48] sm:$0xff] %v8074
  %8091 = vst [vmem:[%s3 + $0x50] sm:$0xff] %v8075
  %8092 = vst [vmem:[%s3 + $0x58] sm:$0xff] %v8076
  %8093 = vst [vmem:[%s3 + $0x60] sm:$0xff] %v8077
  %8094 = vst [vmem:[%s3 + $0x68] sm:$0xff] %v8078
  %8095 = vst [vmem:[%s3 + $0x70] sm:$0xff] %v8079
  %8096 = vst [vmem:[%s3 + $0x78] sm:$0xff] %v8080
  // Predicated region
  $region14: #{self_attention_pallas.1} parent=0 // pred_check
    _
  $region15: #{self_attention_pallas.1} parent=0 // pred_check_branch
    %8098 = sbr.rel (0) target = $region17
  $region16: #{self_attention_pallas.1} parent=0 // pred_region
    _
  $region17: #{self_attention_pallas.1} parent=0 // pred_fallthru
    _
  // Predicated region
  $region18: #{self_attention_pallas.1} parent=0 // pred_check
    _
  $region19: #{self_attention_pallas.1} parent=0 // pred_check_branch
    %8100 = sbr.rel (0) target = $region21
  $region20: #{self_attention_pallas.1} parent=0 // pred_region
    _
  $region21: #{self_attention_pallas.1} parent=0 // pred_fallthru
    _

</llo_original>
